<compile_context>
chip_gen: v7x
topology: tpu7x:2x2x1
jax: 0.10.0
libtpu: 0.0.40
codegen_flags: <defaults>
</compile_context>

<pallas_src>
import functools
from typing import NamedTuple

import jax
import jax.numpy as jnp
from jax.experimental import pallas as pl
from jax.experimental.pallas import tpu as pltpu

HIDDEN_PAD = 128          # lane-dense padded hidden width (hidden_size <= 128)
VOCAB_PAD = 128           # lane-dense padded vocab width of the message slab
SCORE_PAD = 128           # lane-dense padded width of the score slab
DEFAULT_BATCH_TILE = 256  # rows per grid step once B exceeds it (multiple of 8)

# MXU operand dtype. bf16 is MXU-native on v5e/v6e/v7x and halves resident
# weight bytes; accumulation (preferred_element_type) and elementwise stay f32.
MATMUL_DTYPE = jnp.bfloat16


class Dims(NamedTuple):
    num_objects: int
    obj_ext_len: int      # object_encoding_len + 1 (reward-matrix feature dim)
    obj_len: int          # object_encoding_len (game feature dim)
    embedding_dim: int
    vocab_size: int
    max_message_len: int
    num_views: int
    num_choices: int


# ---------------------------------------------------------------------------
# Fused forward kernel (one grid step = one batch tile; weights VMEM-resident)
# ---------------------------------------------------------------------------
def _fused_forward_kernel(
    rm_ref, msg_ref, games_ref,
    w1r_ref, b1r_ref, w2r_ref, b2r_ref,
    w1g_ref, b1g_ref, w2g_ref, b2g_ref,
    wim_ref, bim_ref,
    w1mr_ref, w1mi_ref, b1m_ref, w2m_ref, b2m_ref,
    wredr_ref, wredi_ref, bred_ref,
    tile_ref, seg_ref,
    msg_out_ref, scores_out_ref,
    *, dims: Dims):
    f32 = jnp.float32
    d = dims
    n_ctx = d.num_views * d.num_choices

    def dot(x, w_ref):
        # MXU matmul; operands in MATMUL_DTYPE (= w_ref.dtype), f32 accumulate.
        return jnp.dot(x.astype(w_ref.dtype), w_ref[...],
                       preferred_element_type=f32)

    rm = rm_ref[...]          # (TB, num_objects * obj_ext_len)
    msg = msg_ref[...]        # (TB, max_message_len * vocab)
    games = games_ref[...]    # (TB, n_ctx * obj_len)

    # --- reward-matrix embedding: one block-diagonal 2-layer MLP (all objects) ---
    hr = jnp.maximum(dot(rm, w1r_ref) + b1r_ref[...], 0.0)     # (TB, O*HIDDEN_PAD)
    rme = dot(hr, w2r_ref) + b2r_ref[...]                      # (TB, O*E)

    # --- input-message embedding: Linear(T*V -> T*V) ---
    ime = dot(msg, wim_ref) + bim_ref[...]                     # (TB, T*V)

    # --- continuous message head: block-diag MLP on emb = [rme | ime] ---
    # (the concat is folded into a row split of W1M: emb@W1M == rme@W1Mr + ime@W1Mi)
    hm = jnp.maximum(dot(rme, w1mr_ref) + dot(ime, w1mi_ref) + b1m_ref[...], 0.0)
    msg_out_ref[...] = (dot(hm, w2m_ref) + b2m_ref[...]).astype(msg_out_ref.dtype)

    # --- reduce emb -> E (same row-split trick), then tile to n_ctx*E on the MXU ---
    red = dot(rme, wredr_ref) + dot(ime, wredi_ref) + bred_ref[...]      # (TB, E)
    red_tiled = jnp.dot(red, tile_ref[...], preferred_element_type=f32)  # (TB, n_ctx*E)

    # --- listener context: one block-diagonal 2-layer MLP (all view/choice slots) ---
    hg = jnp.maximum(dot(games, w1g_ref) + b1g_ref[...], 0.0)
    ctx = dot(hg, w2g_ref) + b2g_ref[...]                      # (TB, n_ctx*E)

    # --- segmented E-contraction on the MXU: scores[:,k] = sum_e ctx[:,k*E+e]*red[:,e] ---
    scores = jnp.dot(ctx * red_tiled, seg_ref[...],
                     preferred_element_type=f32)               # (TB, SCORE_PAD)

    # --- per-view log-softmax over choices (num_views tiny slices), one dense store ---
    parts = []
    for v in range(d.num_views):
        s = scores[:, v * d.num_choices:(v + 1) * d.num_choices]   # (TB, C)
        m = jnp.max(s, axis=-1, keepdims=True)
        lse = jnp.log(jnp.sum(jnp.exp(s - m), axis=-1, keepdims=True)) + m
        parts.append(s - lse)
    parts.append(jnp.zeros((scores.shape[0], SCORE_PAD - n_ctx), f32))
    scores_out_ref[...] = jnp.concatenate(parts, axis=1).astype(scores_out_ref.dtype)


# ---------------------------------------------------------------------------
# Parameters (deterministic, torch-style uniform(-1/sqrt(fan_in), 1/sqrt(fan_in)))
# ---------------------------------------------------------------------------
def _linear_params(key, fan_in, fan_out):
    kw, kb = jax.random.split(key)
    bound = 1.0 / (fan_in ** 0.5)
    w = jax.random.uniform(kw, (fan_in, fan_out), jnp.float32, -bound, bound)
    b = jax.random.uniform(kb, (1, fan_out), jnp.float32, -bound, bound)
    return w, b


def init_params(key, dims: Dims, hidden_size=100):
    d = dims
    keys = jax.random.split(key, 8)
    emb_in = d.embedding_dim * d.num_objects + d.max_message_len * d.vocab_size
    assert emb_in % d.max_message_len == 0, "embedding must split evenly per position"
    return {
        "reward_matrix_embedding": (*_linear_params(keys[0], d.obj_ext_len, hidden_size),
                                    *_linear_params(keys[1], hidden_size, d.embedding_dim)),
        "games_embedding": (*_linear_params(keys[2], d.obj_len, hidden_size),
                            *_linear_params(keys[3], hidden_size, d.embedding_dim)),
        "input_message_embedding": _linear_params(keys[4], d.max_message_len * d.vocab_size,
                                                  d.max_message_len * d.vocab_size),
        "cont_comm_message_mlp": (*_linear_params(keys[5], emb_in // d.max_message_len, hidden_size),
                                  *_linear_params(keys[6], hidden_size, d.vocab_size)),
        "reduce_reward_matrix_and_input_message": _linear_params(keys[7], emb_in, d.embedding_dim),
    }


def _pad2(x, rows, cols):
    return jnp.pad(x, ((0, rows - x.shape[0]), (0, cols - x.shape[1])))


def _block_diag(block, n):
    # n copies of `block` on the diagonal (zero-padded everywhere else).
    return jnp.kron(jnp.eye(n, dtype=block.dtype), block)


def pack_params(params, dims: Dims, dtype=MATMUL_DTYPE):
    """Build block-diagonal, lane-dense weights plus tiling / segment-sum matrices."""
    d = dims
    w1r, b1r, w2r, b2r = params["reward_matrix_embedding"]
    w1g, b1g, w2g, b2g = params["games_embedding"]
    wim, bim = params["input_message_embedding"]
    w1m, b1m, w2m, b2m = params["cont_comm_message_mlp"]
    wred, bred = params["reduce_reward_matrix_and_input_message"]

    E = d.embedding_dim
    n_ctx = d.num_views * d.num_choices
    rme_w = d.num_objects * E                       # width of the rme part of emb
    hidden = w1r.shape[1]
    assert hidden <= HIDDEN_PAD and d.vocab_size <= VOCAB_PAD and n_ctx <= SCORE_PAD

    # reward-matrix MLP, block-diag over objects: (O*7, O*128) and (O*128, O*E)
    w1r_bd = _block_diag(_pad2(w1r, w1r.shape[0], HIDDEN_PAD), d.num_objects)
    b1r_bd = jnp.tile(_pad2(b1r, 1, HIDDEN_PAD), (1, d.num_objects))
    w2r_bd = _block_diag(_pad2(w2r, HIDDEN_PAD, E), d.num_objects)
    b2r_bd = jnp.tile(b2r, (1, d.num_objects))

    # games MLP, block-diag over (view, choice) slots
    w1g_bd = _block_diag(_pad2(w1g, w1g.shape[0], HIDDEN_PAD), n_ctx)
    b1g_bd = jnp.tile(_pad2(b1g, 1, HIDDEN_PAD), (1, n_ctx))
    w2g_bd = _block_diag(_pad2(w2g, HIDDEN_PAD, E), n_ctx)
    b2g_bd = jnp.tile(b2g, (1, n_ctx))

    # message head, block-diag over message positions; rows follow the exact
    # torch emb layout (9*64 rme cols then 4*40 ime cols), then split at the
    # rme/ime boundary so the kernel never concatenates emb lanes.
    w1m_bd = _block_diag(_pad2(w1m, w1m.shape[0], HIDDEN_PAD), d.max_message_len)
    b1m_bd = jnp.tile(_pad2(b1m, 1, HIDDEN_PAD), (1, d.max_message_len))
    w2m_bd = _block_diag(_pad2(w2m, HIDDEN_PAD, VOCAB_PAD), d.max_message_len)
    b2m_bd = jnp.tile(_pad2(b2m, 1, VOCAB_PAD), (1, d.max_message_len))

    # stacked identity (tiles red to n_ctx copies) and segment-sum matrix
    tile_mat = jnp.tile(jnp.eye(E, dtype=jnp.float32), (1, n_ctx))       # (E, n_ctx*E)
    rows = jnp.arange(n_ctx * E)
    seg = jnp.zeros((n_ctx * E, SCORE_PAD), jnp.float32).at[rows, rows // E].set(1.0)

    cast = lambda x: x.astype(dtype)
    return {
        "w1r": cast(w1r_bd), "b1r": b1r_bd, "w2r": cast(w2r_bd), "b2r": b2r_bd,
        "w1g": cast(w1g_bd), "b1g": b1g_bd, "w2g": cast(w2g_bd), "b2g": b2g_bd,
        "wim": cast(wim), "bim": bim,
        "w1m_r": cast(w1m_bd[:rme_w]), "w1m_i": cast(w1m_bd[rme_w:]),
        "b1m": b1m_bd, "w2m": cast(w2m_bd), "b2m": b2m_bd,
        "wred_r": cast(wred[:rme_w]), "wred_i": cast(wred[rme_w:]), "bred": bred,
        "tile": tile_mat, "seg": seg,
    }


# ---------------------------------------------------------------------------
# Forward pass (continuous-comm path): one fused pallas_call with a batch grid
# ---------------------------------------------------------------------------
@functools.partial(jax.jit, static_argnames=("dims",))
def _forward_core(packed, rm_flat, msg_flat, games_flat, *, dims: Dims):
    d = dims
    B = rm_flat.shape[0]
    n_ctx = d.num_views * d.num_choices

    # Batch tiling: single tile for small B, otherwise DEFAULT_BATCH_TILE rows
    # per grid step (auto double-buffered; "parallel" axis uses v7x's 2nd core).
    tb = B if B <= DEFAULT_BATCH_TILE else DEFAULT_BATCH_TILE
    b_pad = ((B + tb - 1) // tb) * tb
    if b_pad != B:
        pad = ((0, b_pad - B), (0, 0))
        rm_flat = jnp.pad(rm_flat, pad)
        msg_flat = jnp.pad(msg_flat, pad)
        games_flat = jnp.pad(games_flat, pad)

    def row_spec(width):
        return pl.BlockSpec((tb, width), lambda i: (i, 0))

    def const_spec(arr):
        return pl.BlockSpec(arr.shape, lambda i: (0, 0))

    w_names = ["w1r", "b1r", "w2r", "b2r", "w1g", "b1g", "w2g", "b2g",
               "wim", "bim", "w1m_r", "w1m_i", "b1m", "w2m", "b2m",
               "wred_r", "wred_i", "bred", "tile", "seg"]
    w_args = [packed[n] for n in w_names]

    kernel = functools.partial(_fused_forward_kernel, dims=d)
    msg_slab, scores_slab = pl.pallas_call(
        kernel,
        grid=(b_pad // tb,),
        out_shape=(
            jax.ShapeDtypeStruct((b_pad, d.max_message_len * VOCAB_PAD), jnp.float32),
            jax.ShapeDtypeStruct((b_pad, SCORE_PAD), jnp.float32),
        ),
        in_specs=[row_spec(rm_flat.shape[1]),
                  row_spec(msg_flat.shape[1]),
                  row_spec(games_flat.shape[1])] + [const_spec(w) for w in w_args],
        out_specs=(row_spec(d.max_message_len * VOCAB_PAD), row_spec(SCORE_PAD)),
        compiler_params=pltpu.CompilerParams(
            dimension_semantics=("parallel",),
            vmem_limit_bytes=32 * 1024 * 1024),
    )(rm_flat, msg_flat, games_flat, *w_args)

    output_lang = msg_slab[:B].reshape(B, d.max_message_len, VOCAB_PAD)[:, :, :d.vocab_size]
    scores = scores_slab[:B, :n_ctx].reshape(B, d.num_views, d.num_choices)
    return output_lang, scores


def language_agent_forward(packed_params, reward_matrices, input_lang, input_lang_len,
                           games, dims: Dims, greedy=False):
    del input_lang_len, greedy  # unused on the continuous-comm path
    B = reward_matrices.shape[0]
    if input_lang is None:
        input_lang = jnp.zeros((B, dims.max_message_len, dims.vocab_size), jnp.float32)

    rm_flat = reward_matrices.astype(jnp.float32).reshape(
        B, dims.num_objects * dims.obj_ext_len)
    msg_flat = input_lang.astype(jnp.float32).reshape(
        B, dims.max_message_len * dims.vocab_size)
    games_flat = games.astype(jnp.float32).reshape(
        B, dims.num_views * dims.num_choices * dims.obj_len)

    output_lang, scores = _forward_core(packed_params, rm_flat, msg_flat, games_flat,
                                        dims=dims)
    return output_lang, None, scores


# ---------------------------------------------------------------------------
# Pure-JAX reference (unpacked params, f32) for the correctness check
# ---------------------------------------------------------------------------
def reference_forward(params, reward_matrices, input_lang, games, dims: Dims):
    d = dims
    w1r, b1r, w2r, b2r = params["reward_matrix_embedding"]
    w1g, b1g, w2g, b2g = params["games_embedding"]
    wim, bim = params["input_message_embedding"]
    w1m, b1m, w2m, b2m = params["cont_comm_message_mlp"]
    wred, bred = params["reduce_reward_matrix_and_input_message"]

    def mlp(x, w1, b1, w2, b2):
        return jnp.maximum(x @ w1 + b1, 0.0) @ w2 + b2

    B = reward_matrices.shape[0]
    rme = mlp(reward_matrices.reshape(-1, d.obj_ext_len), w1r, b1r, w2r, b2r).reshape(B, -1)
    ime = input_lang.reshape(B, -1) @ wim + bim
    emb = jnp.concatenate([rme, ime], axis=1)
    chunk = emb.shape[1] // d.max_message_len
    msgs = mlp(emb.reshape(B * d.max_message_len, chunk), w1m, b1m, w2m, b2m)
    msgs = msgs.reshape(B, d.max_message_len, d.vocab_size)
    red = emb @ wred + bred
    ctx = mlp(games.astype(jnp.float32).reshape(-1, d.obj_len), w1g, b1g, w2g, b2g)
    ctx = ctx.reshape(B, d.num_views, d.num_choices, d.embedding_dim)
    sc = jnp.einsum("bvce,be->bvc", ctx, red)
    return msgs, jax.nn.log_softmax(sc, axis=-1)


# ---------------------------------------------------------------------------
if __name__ == "__main__":
    B = 2
    dims = Dims(num_objects=9, obj_ext_len=7, obj_len=6, embedding_dim=64,
                vocab_size=40, max_message_len=4, num_views=2, num_choices=3)
    hidden_size = 100

    root = jax.random.PRNGKey(0)
    k_params, k_rm, k_games, k_msg = jax.random.split(root, 4)

    params = init_params(k_params, dims, hidden_size=hidden_size)
    packed = pack_params(params, dims)

    reward_matrices = jax.random.normal(k_rm, (B, dims.num_objects, dims.obj_ext_len),
                                        jnp.float32)
    games = jax.random.normal(k_games, (B, dims.num_views, dims.num_choices, dims.obj_len),
                              jnp.float32)
    input_lang = jax.random.normal(k_msg, (B, dims.max_message_len, dims.vocab_size),
                                   jnp.float32)

    out_lang, out_lang_len, scores = language_agent_forward(
        packed, reward_matrices, input_lang, None, games, dims)
    jax.block_until_ready((out_lang, scores))

    assert out_lang.shape == (B, dims.max_message_len, dims.vocab_size)
    assert out_lang_len is None
    assert scores.shape == (B, dims.num_views, dims.num_choices)

    # Correctness check against the pure-JAX f32 reference.  Tight tolerance for
    # f32 matmuls; deliberately relaxed when MXU operands are cast to bf16.
    ref_msg, ref_scores = reference_forward(params, reward_matrices, input_lang, games, dims)
    tol = 2e-4 if MATMUL_DTYPE == jnp.float32 else 5e-2
    msg_err = float(jnp.max(jnp.abs(out_lang - ref_msg)))
    sc_err = float(jnp.max(jnp.abs(scores - ref_scores)))
    assert bool(jnp.allclose(out_lang, ref_msg, atol=tol, rtol=tol)), msg_err
    assert bool(jnp.allclose(scores, ref_scores, atol=tol, rtol=tol)), sc_err

    print("KERNEL_OK")
</pallas_src>

<mosaic_0001>
module attributes {stable_mosaic.version = 11 : i64} {
  func.func @_fused_forward_kernel(%arg0: i32, %arg1: memref<2x63xf32, #tpu.memory_space<vmem>>, %arg2: memref<2x160xf32, #tpu.memory_space<vmem>>, %arg3: memref<2x36xf32, #tpu.memory_space<vmem>>, %arg4: memref<63x1152xbf16, #tpu.memory_space<vmem>>, %arg5: memref<1x1152xf32, #tpu.memory_space<vmem>>, %arg6: memref<1152x576xbf16, #tpu.memory_space<vmem>>, %arg7: memref<1x576xf32, #tpu.memory_space<vmem>>, %arg8: memref<36x768xbf16, #tpu.memory_space<vmem>>, %arg9: memref<1x768xf32, #tpu.memory_space<vmem>>, %arg10: memref<768x384xbf16, #tpu.memory_space<vmem>>, %arg11: memref<1x384xf32, #tpu.memory_space<vmem>>, %arg12: memref<160x160xbf16, #tpu.memory_space<vmem>>, %arg13: memref<1x160xf32, #tpu.memory_space<vmem>>, %arg14: memref<576x512xbf16, #tpu.memory_space<vmem>>, %arg15: memref<160x512xbf16, #tpu.memory_space<vmem>>, %arg16: memref<1x512xf32, #tpu.memory_space<vmem>>, %arg17: memref<512x512xbf16, #tpu.memory_space<vmem>>, %arg18: memref<1x512xf32, #tpu.memory_space<vmem>>, %arg19: memref<576x64xbf16, #tpu.memory_space<vmem>>, %arg20: memref<160x64xbf16, #tpu.memory_space<vmem>>, %arg21: memref<1x64xf32, #tpu.memory_space<vmem>>, %arg22: memref<64x384xf32, #tpu.memory_space<vmem>>, %arg23: memref<384x128xf32, #tpu.memory_space<vmem>>, %arg24: memref<2x512xf32, #tpu.memory_space<vmem>>, %arg25: memref<2x128xf32, #tpu.memory_space<vmem>>) attributes {dimension_semantics = [#tpu.dimension_semantics<parallel>], iteration_bounds = array<i64: 1>, scalar_prefetch = 0 : i64, scratch_operands = 0 : i64, tpu.core_type = #tpu.core_type<tc>, window_params = [{transform_indices = @transform_0, window_bounds = array<i64: 2, 63>}, {transform_indices = @transform_1, window_bounds = array<i64: 2, 160>}, {transform_indices = @transform_2, window_bounds = array<i64: 2, 36>}, {pipeline_mode = #tpu.pipeline_mode<synchronous>, transform_indices = @transform_3, window_bounds = array<i64: 63, 1152>}, {pipeline_mode = #tpu.pipeline_mode<synchronous>, transform_indices = @transform_4, window_bounds = array<i64: 1, 1152>}, {pipeline_mode = #tpu.pipeline_mode<synchronous>, transform_indices = @transform_5, window_bounds = array<i64: 1152, 576>}, {pipeline_mode = #tpu.pipeline_mode<synchronous>, transform_indices = @transform_6, window_bounds = array<i64: 1, 576>}, {pipeline_mode = #tpu.pipeline_mode<synchronous>, transform_indices = @transform_7, window_bounds = array<i64: 36, 768>}, {pipeline_mode = #tpu.pipeline_mode<synchronous>, transform_indices = @transform_8, window_bounds = array<i64: 1, 768>}, {pipeline_mode = #tpu.pipeline_mode<synchronous>, transform_indices = @transform_9, window_bounds = array<i64: 768, 384>}, {pipeline_mode = #tpu.pipeline_mode<synchronous>, transform_indices = @transform_10, window_bounds = array<i64: 1, 384>}, {pipeline_mode = #tpu.pipeline_mode<synchronous>, transform_indices = @transform_11, window_bounds = array<i64: 160, 160>}, {pipeline_mode = #tpu.pipeline_mode<synchronous>, transform_indices = @transform_12, window_bounds = array<i64: 1, 160>}, {pipeline_mode = #tpu.pipeline_mode<synchronous>, transform_indices = @transform_13, window_bounds = array<i64: 576, 512>}, {pipeline_mode = #tpu.pipeline_mode<synchronous>, transform_indices = @transform_14, window_bounds = array<i64: 160, 512>}, {pipeline_mode = #tpu.pipeline_mode<synchronous>, transform_indices = @transform_15, window_bounds = array<i64: 1, 512>}, {pipeline_mode = #tpu.pipeline_mode<synchronous>, transform_indices = @transform_16, window_bounds = array<i64: 512, 512>}, {pipeline_mode = #tpu.pipeline_mode<synchronous>, transform_indices = @transform_17, window_bounds = array<i64: 1, 512>}, {pipeline_mode = #tpu.pipeline_mode<synchronous>, transform_indices = @transform_18, window_bounds = array<i64: 576, 64>}, {pipeline_mode = #tpu.pipeline_mode<synchronous>, transform_indices = @transform_19, window_bounds = array<i64: 160, 64>}, {pipeline_mode = #tpu.pipeline_mode<synchronous>, transform_indices = @transform_20, window_bounds = array<i64: 1, 64>}, {pipeline_mode = #tpu.pipeline_mode<synchronous>, transform_indices = @transform_21, window_bounds = array<i64: 64, 384>}, {pipeline_mode = #tpu.pipeline_mode<synchronous>, transform_indices = @transform_22, window_bounds = array<i64: 384, 128>}, {transform_indices = @transform_23, window_bounds = array<i64: 2, 512>}, {transform_indices = @transform_24, window_bounds = array<i64: 2, 128>}]} {
    %c0 = arith.constant 0 : index
    %c0_0 = arith.constant 0 : index
    %0 = vector.load %arg1[%c0, %c0_0] : memref<2x63xf32, #tpu.memory_space<vmem>>, vector<2x63xf32>
    %c0_1 = arith.constant 0 : index
    %c0_2 = arith.constant 0 : index
    %1 = vector.load %arg2[%c0_1, %c0_2] : memref<2x160xf32, #tpu.memory_space<vmem>>, vector<2x160xf32>
    %c0_3 = arith.constant 0 : index
    %c0_4 = arith.constant 0 : index
    %2 = vector.load %arg3[%c0_3, %c0_4] : memref<2x36xf32, #tpu.memory_space<vmem>>, vector<2x36xf32>
    %3 = arith.truncf %0 : vector<2x63xf32> to vector<2x63xbf16>
    %c0_5 = arith.constant 0 : index
    %c0_6 = arith.constant 0 : index
    %4 = vector.load %arg4[%c0_5, %c0_6] : memref<63x1152xbf16, #tpu.memory_space<vmem>>, vector<63x1152xbf16>
    %cst = arith.constant dense<0.000000e+00> : vector<2x1152xf32>
    %5 = tpu.matmul %3, %4, %cst {dimension_numbers = #tpu.dot_dimension_numbers<[1], [0], [0], [1], [0, 0, 1, 1], [], []>} : vector<2x63xbf16>, vector<63x1152xbf16>, vector<2x1152xf32> -> vector<2x1152xf32>
    %c0_7 = arith.constant 0 : index
    %c0_8 = arith.constant 0 : index
    %6 = vector.load %arg5[%c0_7, %c0_8] : memref<1x1152xf32, #tpu.memory_space<vmem>>, vector<1x1152xf32>
    %7 = vector.broadcast %6 : vector<1x1152xf32> to vector<2x1152xf32>
    %8 = arith.addf %5, %7 : vector<2x1152xf32>
    %cst_9 = arith.constant 0.000000e+00 : f32
    %9 = vector.broadcast %cst_9 : f32 to vector<2x1152xf32>
    %10 = arith.maximumf %8, %9 : vector<2x1152xf32>
    %11 = arith.truncf %10 : vector<2x1152xf32> to vector<2x1152xbf16>
    %c0_10 = arith.constant 0 : index
    %c0_11 = arith.constant 0 : index
    %12 = vector.load %arg6[%c0_10, %c0_11] : memref<1152x576xbf16, #tpu.memory_space<vmem>>, vector<1152x576xbf16>
    %cst_12 = arith.constant dense<0.000000e+00> : vector<2x576xf32>
    %13 = tpu.matmul %11, %12, %cst_12 {dimension_numbers = #tpu.dot_dimension_numbers<[1], [0], [0], [1], [0, 0, 1, 1], [], []>} : vector<2x1152xbf16>, vector<1152x576xbf16>, vector<2x576xf32> -> vector<2x576xf32>
    %c0_13 = arith.constant 0 : index
    %c0_14 = arith.constant 0 : index
    %14 = vector.load %arg7[%c0_13, %c0_14] : memref<1x576xf32, #tpu.memory_space<vmem>>, vector<1x576xf32>
    %15 = vector.broadcast %14 : vector<1x576xf32> to vector<2x576xf32>
    %16 = arith.addf %13, %15 : vector<2x576xf32>
    %17 = arith.truncf %1 : vector<2x160xf32> to vector<2x160xbf16>
    %c0_15 = arith.constant 0 : index
    %c0_16 = arith.constant 0 : index
    %18 = vector.load %arg12[%c0_15, %c0_16] : memref<160x160xbf16, #tpu.memory_space<vmem>>, vector<160x160xbf16>
    %cst_17 = arith.constant dense<0.000000e+00> : vector<2x160xf32>
    %19 = tpu.matmul %17, %18, %cst_17 {dimension_numbers = #tpu.dot_dimension_numbers<[1], [0], [0], [1], [0, 0, 1, 1], [], []>} : vector<2x160xbf16>, vector<160x160xbf16>, vector<2x160xf32> -> vector<2x160xf32>
    %c0_18 = arith.constant 0 : index
    %c0_19 = arith.constant 0 : index
    %20 = vector.load %arg13[%c0_18, %c0_19] : memref<1x160xf32, #tpu.memory_space<vmem>>, vector<1x160xf32>
    %21 = vector.broadcast %20 : vector<1x160xf32> to vector<2x160xf32>
    %22 = arith.addf %19, %21 : vector<2x160xf32>
    %23 = arith.truncf %16 : vector<2x576xf32> to vector<2x576xbf16>
    %c0_20 = arith.constant 0 : index
    %c0_21 = arith.constant 0 : index
    %24 = vector.load %arg14[%c0_20, %c0_21] : memref<576x512xbf16, #tpu.memory_space<vmem>>, vector<576x512xbf16>
    %cst_22 = arith.constant dense<0.000000e+00> : vector<2x512xf32>
    %25 = tpu.matmul %23, %24, %cst_22 {dimension_numbers = #tpu.dot_dimension_numbers<[1], [0], [0], [1], [0, 0, 1, 1], [], []>} : vector<2x576xbf16>, vector<576x512xbf16>, vector<2x512xf32> -> vector<2x512xf32>
    %26 = arith.truncf %22 : vector<2x160xf32> to vector<2x160xbf16>
    %c0_23 = arith.constant 0 : index
    %c0_24 = arith.constant 0 : index
    %27 = vector.load %arg15[%c0_23, %c0_24] : memref<160x512xbf16, #tpu.memory_space<vmem>>, vector<160x512xbf16>
    %cst_25 = arith.constant dense<0.000000e+00> : vector<2x512xf32>
    %28 = tpu.matmul %26, %27, %cst_25 {dimension_numbers = #tpu.dot_dimension_numbers<[1], [0], [0], [1], [0, 0, 1, 1], [], []>} : vector<2x160xbf16>, vector<160x512xbf16>, vector<2x512xf32> -> vector<2x512xf32>
    %29 = arith.addf %25, %28 : vector<2x512xf32>
    %c0_26 = arith.constant 0 : index
    %c0_27 = arith.constant 0 : index
    %30 = vector.load %arg16[%c0_26, %c0_27] : memref<1x512xf32, #tpu.memory_space<vmem>>, vector<1x512xf32>
    %31 = vector.broadcast %30 : vector<1x512xf32> to vector<2x512xf32>
    %32 = arith.addf %29, %31 : vector<2x512xf32>
    %cst_28 = arith.constant 0.000000e+00 : f32
    %33 = vector.broadcast %cst_28 : f32 to vector<2x512xf32>
    %34 = arith.maximumf %32, %33 : vector<2x512xf32>
    %35 = arith.truncf %34 : vector<2x512xf32> to vector<2x512xbf16>
    %c0_29 = arith.constant 0 : index
    %c0_30 = arith.constant 0 : index
    %36 = vector.load %arg17[%c0_29, %c0_30] : memref<512x512xbf16, #tpu.memory_space<vmem>>, vector<512x512xbf16>
    %cst_31 = arith.constant dense<0.000000e+00> : vector<2x512xf32>
    %37 = tpu.matmul %35, %36, %cst_31 {dimension_numbers = #tpu.dot_dimension_numbers<[1], [0], [0], [1], [0, 0, 1, 1], [], []>} : vector<2x512xbf16>, vector<512x512xbf16>, vector<2x512xf32> -> vector<2x512xf32>
    %c0_32 = arith.constant 0 : index
    %c0_33 = arith.constant 0 : index
    %38 = vector.load %arg18[%c0_32, %c0_33] : memref<1x512xf32, #tpu.memory_space<vmem>>, vector<1x512xf32>
    %39 = vector.broadcast %38 : vector<1x512xf32> to vector<2x512xf32>
    %40 = arith.addf %37, %39 : vector<2x512xf32>
    %c0_34 = arith.constant 0 : index
    %c0_35 = arith.constant 0 : index
    %41 = vector.load %arg24[%c0_34, %c0_35] : memref<2x512xf32, #tpu.memory_space<vmem>>, vector<2x512xf32>
    tpu.vector_store %arg24[%c0_34, %c0_35], %40 {strides = array<i32>} : memref<2x512xf32, #tpu.memory_space<vmem>>, vector<2x512xf32>,
    %42 = arith.truncf %16 : vector<2x576xf32> to vector<2x576xbf16>
    %c0_36 = arith.constant 0 : index
    %c0_37 = arith.constant 0 : index
    %43 = vector.load %arg19[%c0_36, %c0_37] : memref<576x64xbf16, #tpu.memory_space<vmem>>, vector<576x64xbf16>
    %cst_38 = arith.constant dense<0.000000e+00> : vector<2x64xf32>
    %44 = tpu.matmul %42, %43, %cst_38 {dimension_numbers = #tpu.dot_dimension_numbers<[1], [0], [0], [1], [0, 0, 1, 1], [], []>} : vector<2x576xbf16>, vector<576x64xbf16>, vector<2x64xf32> -> vector<2x64xf32>
    %45 = arith.truncf %22 : vector<2x160xf32> to vector<2x160xbf16>
    %c0_39 = arith.constant 0 : index
    %c0_40 = arith.constant 0 : index
    %46 = vector.load %arg20[%c0_39, %c0_40] : memref<160x64xbf16, #tpu.memory_space<vmem>>, vector<160x64xbf16>
    %cst_41 = arith.constant dense<0.000000e+00> : vector<2x64xf32>
    %47 = tpu.matmul %45, %46, %cst_41 {dimension_numbers = #tpu.dot_dimension_numbers<[1], [0], [0], [1], [0, 0, 1, 1], [], []>} : vector<2x160xbf16>, vector<160x64xbf16>, vector<2x64xf32> -> vector<2x64xf32>
    %48 = arith.addf %44, %47 : vector<2x64xf32>
    %c0_42 = arith.constant 0 : index
    %c0_43 = arith.constant 0 : index
    %49 = vector.load %arg21[%c0_42, %c0_43] : memref<1x64xf32, #tpu.memory_space<vmem>>, vector<1x64xf32>
    %50 = vector.broadcast %49 : vector<1x64xf32> to vector<2x64xf32>
    %51 = arith.addf %48, %50 : vector<2x64xf32>
    %c0_44 = arith.constant 0 : index
    %c0_45 = arith.constant 0 : index
    %52 = vector.load %arg22[%c0_44, %c0_45] : memref<64x384xf32, #tpu.memory_space<vmem>>, vector<64x384xf32>
    %cst_46 = arith.constant dense<0.000000e+00> : vector<2x384xf32>
    %53 = tpu.matmul %51, %52, %cst_46 {dimension_numbers = #tpu.dot_dimension_numbers<[1], [0], [0], [1], [0, 0, 1, 1], [], []>} : vector<2x64xf32>, vector<64x384xf32>, vector<2x384xf32> -> vector<2x384xf32>
    %54 = arith.truncf %2 : vector<2x36xf32> to vector<2x36xbf16>
    %c0_47 = arith.constant 0 : index
    %c0_48 = arith.constant 0 : index
    %55 = vector.load %arg8[%c0_47, %c0_48] : memref<36x768xbf16, #tpu.memory_space<vmem>>, vector<36x768xbf16>
    %cst_49 = arith.constant dense<0.000000e+00> : vector<2x768xf32>
    %56 = tpu.matmul %54, %55, %cst_49 {dimension_numbers = #tpu.dot_dimension_numbers<[1], [0], [0], [1], [0, 0, 1, 1], [], []>} : vector<2x36xbf16>, vector<36x768xbf16>, vector<2x768xf32> -> vector<2x768xf32>
    %c0_50 = arith.constant 0 : index
    %c0_51 = arith.constant 0 : index
    %57 = vector.load %arg9[%c0_50, %c0_51] : memref<1x768xf32, #tpu.memory_space<vmem>>, vector<1x768xf32>
    %58 = vector.broadcast %57 : vector<1x768xf32> to vector<2x768xf32>
    %59 = arith.addf %56, %58 : vector<2x768xf32>
    %cst_52 = arith.constant 0.000000e+00 : f32
    %60 = vector.broadcast %cst_52 : f32 to vector<2x768xf32>
    %61 = arith.maximumf %59, %60 : vector<2x768xf32>
    %62 = arith.truncf %61 : vector<2x768xf32> to vector<2x768xbf16>
    %c0_53 = arith.constant 0 : index
    %c0_54 = arith.constant 0 : index
    %63 = vector.load %arg10[%c0_53, %c0_54] : memref<768x384xbf16, #tpu.memory_space<vmem>>, vector<768x384xbf16>
    %cst_55 = arith.constant dense<0.000000e+00> : vector<2x384xf32>
    %64 = tpu.matmul %62, %63, %cst_55 {dimension_numbers = #tpu.dot_dimension_numbers<[1], [0], [0], [1], [0, 0, 1, 1], [], []>} : vector<2x768xbf16>, vector<768x384xbf16>, vector<2x384xf32> -> vector<2x384xf32>
    %c0_56 = arith.constant 0 : index
    %c0_57 = arith.constant 0 : index
    %65 = vector.load %arg11[%c0_56, %c0_57] : memref<1x384xf32, #tpu.memory_space<vmem>>, vector<1x384xf32>
    %66 = vector.broadcast %65 : vector<1x384xf32> to vector<2x384xf32>
    %67 = arith.addf %64, %66 : vector<2x384xf32>
    %68 = arith.mulf %67, %53 : vector<2x384xf32>
    %c0_58 = arith.constant 0 : index
    %c0_59 = arith.constant 0 : index
    %69 = vector.load %arg23[%c0_58, %c0_59] : memref<384x128xf32, #tpu.memory_space<vmem>>, vector<384x128xf32>
    %cst_60 = arith.constant dense<0.000000e+00> : vector<2x128xf32>
    %70 = tpu.matmul %68, %69, %cst_60 {dimension_numbers = #tpu.dot_dimension_numbers<[1], [0], [0], [1], [0, 0, 1, 1], [], []>} : vector<2x384xf32>, vector<384x128xf32>, vector<2x128xf32> -> vector<2x128xf32>
    %71 = vector.extract_strided_slice %70 {offsets = [0, 0], sizes = [2, 3], strides = [1, 1]} : vector<2x128xf32> to vector<2x3xf32>
    %cst_61 = arith.constant dense<0xFF800000> : vector<2xf32>
    %72 = vector.multi_reduction <maximumf>, %71, %cst_61 [1] : vector<2x3xf32> to vector<2xf32>
    %73 = vector.shape_cast %72 : vector<2xf32> to vector<2x1xf32>
    %74 = vector.broadcast %73 : vector<2x1xf32> to vector<2x3xf32>
    %75 = arith.subf %71, %74 : vector<2x3xf32>
    %76 = math.exp %75 : vector<2x3xf32>
    %cst_62 = arith.constant dense<0.000000e+00> : vector<2xf32>
    %77 = vector.multi_reduction <add>, %76, %cst_62 [1] : vector<2x3xf32> to vector<2xf32>
    %78 = vector.shape_cast %77 : vector<2xf32> to vector<2x1xf32>
    %79 = math.log %78 : vector<2x1xf32>
    %80 = arith.addf %79, %73 : vector<2x1xf32>
    %81 = vector.broadcast %80 : vector<2x1xf32> to vector<2x3xf32>
    %82 = arith.subf %71, %81 : vector<2x3xf32>
    %83 = vector.extract_strided_slice %70 {offsets = [0, 3], sizes = [2, 3], strides = [1, 1]} : vector<2x128xf32> to vector<2x3xf32>
    %cst_63 = arith.constant dense<0xFF800000> : vector<2xf32>
    %84 = vector.multi_reduction <maximumf>, %83, %cst_63 [1] : vector<2x3xf32> to vector<2xf32>
    %85 = vector.shape_cast %84 : vector<2xf32> to vector<2x1xf32>
    %86 = vector.broadcast %85 : vector<2x1xf32> to vector<2x3xf32>
    %87 = arith.subf %83, %86 : vector<2x3xf32>
    %88 = math.exp %87 : vector<2x3xf32>
    %cst_64 = arith.constant dense<0.000000e+00> : vector<2xf32>
    %89 = vector.multi_reduction <add>, %88, %cst_64 [1] : vector<2x3xf32> to vector<2xf32>
    %90 = vector.shape_cast %89 : vector<2xf32> to vector<2x1xf32>
    %91 = math.log %90 : vector<2x1xf32>
    %92 = arith.addf %91, %85 : vector<2x1xf32>
    %93 = vector.broadcast %92 : vector<2x1xf32> to vector<2x3xf32>
    %94 = arith.subf %83, %93 : vector<2x3xf32>
    %cst_65 = arith.constant 0.000000e+00 : f32
    %95 = vector.broadcast %cst_65 : f32 to vector<2x122xf32>
    %96 = tpu.concatenate %82, %94, %95 in 1 : vector<2x3xf32>, vector<2x3xf32>, vector<2x122xf32> -> vector<2x128xf32>
    %c0_66 = arith.constant 0 : index
    %c0_67 = arith.constant 0 : index
    %97 = vector.load %arg25[%c0_66, %c0_67] : memref<2x128xf32, #tpu.memory_space<vmem>>, vector<2x128xf32>
    tpu.vector_store %arg25[%c0_66, %c0_67], %96 {strides = array<i32>} : memref<2x128xf32, #tpu.memory_space<vmem>>, vector<2x128xf32>,
    return
  }
  func.func @transform_0(%arg0: i32) -> (i32, i32) {
    %c0_i32 = arith.constant 0 : i32
    %c0_i32_0 = arith.constant 0 : i32
    return %arg0, %c0_i32 : i32, i32
  }
  func.func @transform_1(%arg0: i32) -> (i32, i32) {
    %c0_i32 = arith.constant 0 : i32
    %c0_i32_0 = arith.constant 0 : i32
    return %arg0, %c0_i32 : i32, i32
  }
  func.func @transform_2(%arg0: i32) -> (i32, i32) {
    %c0_i32 = arith.constant 0 : i32
    %c0_i32_0 = arith.constant 0 : i32
    return %arg0, %c0_i32 : i32, i32
  }
  func.func @transform_3(%arg0: i32) -> (i32, i32) {
    %c0_i32 = arith.constant 0 : i32
    %c0_i32_0 = arith.constant 0 : i32
    %c0_i32_1 = arith.constant 0 : i32
    return %c0_i32, %c0_i32_0 : i32, i32
  }
  func.func @transform_4(%arg0: i32) -> (i32, i32) {
    %c0_i32 = arith.constant 0 : i32
    %c0_i32_0 = arith.constant 0 : i32
    %c0_i32_1 = arith.constant 0 : i32
    return %c0_i32, %c0_i32_0 : i32, i32
  }
  func.func @transform_5(%arg0: i32) -> (i32, i32) {
    %c0_i32 = arith.constant 0 : i32
    %c0_i32_0 = arith.constant 0 : i32
    %c0_i32_1 = arith.constant 0 : i32
    return %c0_i32, %c0_i32_0 : i32, i32
  }
  func.func @transform_6(%arg0: i32) -> (i32, i32) {
    %c0_i32 = arith.constant 0 : i32
    %c0_i32_0 = arith.constant 0 : i32
    %c0_i32_1 = arith.constant 0 : i32
    return %c0_i32, %c0_i32_0 : i32, i32
  }
  func.func @transform_7(%arg0: i32) -> (i32, i32) {
    %c0_i32 = arith.constant 0 : i32
    %c0_i32_0 = arith.constant 0 : i32
    %c0_i32_1 = arith.constant 0 : i32
    return %c0_i32, %c0_i32_0 : i32, i32
  }
  func.func @transform_8(%arg0: i32) -> (i32, i32) {
    %c0_i32 = arith.constant 0 : i32
    %c0_i32_0 = arith.constant 0 : i32
    %c0_i32_1 = arith.constant 0 : i32
    return %c0_i32, %c0_i32_0 : i32, i32
  }
  func.func @transform_9(%arg0: i32) -> (i32, i32) {
    %c0_i32 = arith.constant 0 : i32
    %c0_i32_0 = arith.constant 0 : i32
    %c0_i32_1 = arith.constant 0 : i32
    return %c0_i32, %c0_i32_0 : i32, i32
  }
  func.func @transform_10(%arg0: i32) -> (i32, i32) {
    %c0_i32 = arith.constant 0 : i32
    %c0_i32_0 = arith.constant 0 : i32
    %c0_i32_1 = arith.constant 0 : i32
    return %c0_i32, %c0_i32_0 : i32, i32
  }
  func.func @transform_11(%arg0: i32) -> (i32, i32) {
    %c0_i32 = arith.constant 0 : i32
    %c0_i32_0 = arith.constant 0 : i32
    %c0_i32_1 = arith.constant 0 : i32
    return %c0_i32, %c0_i32_0 : i32, i32
  }
  func.func @transform_12(%arg0: i32) -> (i32, i32) {
    %c0_i32 = arith.constant 0 : i32
    %c0_i32_0 = arith.constant 0 : i32
    %c0_i32_1 = arith.constant 0 : i32
    return %c0_i32, %c0_i32_0 : i32, i32
  }
  func.func @transform_13(%arg0: i32) -> (i32, i32) {
    %c0_i32 = arith.constant 0 : i32
    %c0_i32_0 = arith.constant 0 : i32
    %c0_i32_1 = arith.constant 0 : i32
    return %c0_i32, %c0_i32_0 : i32, i32
  }
  func.func @transform_14(%arg0: i32) -> (i32, i32) {
    %c0_i32 = arith.constant 0 : i32
    %c0_i32_0 = arith.constant 0 : i32
    %c0_i32_1 = arith.constant 0 : i32
    return %c0_i32, %c0_i32_0 : i32, i32
  }
  func.func @transform_15(%arg0: i32) -> (i32, i32) {
    %c0_i32 = arith.constant 0 : i32
    %c0_i32_0 = arith.constant 0 : i32
    %c0_i32_1 = arith.constant 0 : i32
    return %c0_i32, %c0_i32_0 : i32, i32
  }
  func.func @transform_16(%arg0: i32) -> (i32, i32) {
    %c0_i32 = arith.constant 0 : i32
    %c0_i32_0 = arith.constant 0 : i32
    %c0_i32_1 = arith.constant 0 : i32
    return %c0_i32, %c0_i32_0 : i32, i32
  }
  func.func @transform_17(%arg0: i32) -> (i32, i32) {
    %c0_i32 = arith.constant 0 : i32
    %c0_i32_0 = arith.constant 0 : i32
    %c0_i32_1 = arith.constant 0 : i32
    return %c0_i32, %c0_i32_0 : i32, i32
  }
  func.func @transform_18(%arg0: i32) -> (i32, i32) {
    %c0_i32 = arith.constant 0 : i32
    %c0_i32_0 = arith.constant 0 : i32
    %c0_i32_1 = arith.constant 0 : i32
    return %c0_i32, %c0_i32_0 : i32, i32
  }
  func.func @transform_19(%arg0: i32) -> (i32, i32) {
    %c0_i32 = arith.constant 0 : i32
    %c0_i32_0 = arith.constant 0 : i32
    %c0_i32_1 = arith.constant 0 : i32
    return %c0_i32, %c0_i32_0 : i32, i32
  }
  func.func @transform_20(%arg0: i32) -> (i32, i32) {
    %c0_i32 = arith.constant 0 : i32
    %c0_i32_0 = arith.constant 0 : i32
    %c0_i32_1 = arith.constant 0 : i32
    return %c0_i32, %c0_i32_0 : i32, i32
  }
  func.func @transform_21(%arg0: i32) -> (i32, i32) {
    %c0_i32 = arith.constant 0 : i32
    %c0_i32_0 = arith.constant 0 : i32
    %c0_i32_1 = arith.constant 0 : i32
    return %c0_i32, %c0_i32_0 : i32, i32
  }
  func.func @transform_22(%arg0: i32) -> (i32, i32) {
    %c0_i32 = arith.constant 0 : i32
    %c0_i32_0 = arith.constant 0 : i32
    %c0_i32_1 = arith.constant 0 : i32
    return %c0_i32, %c0_i32_0 : i32, i32
  }
  func.func @transform_23(%arg0: i32) -> (i32, i32) {
    %c0_i32 = arith.constant 0 : i32
    %c0_i32_0 = arith.constant 0 : i32
    return %arg0, %c0_i32 : i32, i32
  }
  func.func @transform_24(%arg0: i32) -> (i32, i32) {
    %c0_i32 = arith.constant 0 : i32
    %c0_i32_0 = arith.constant 0 : i32
    return %arg0, %c0_i32 : i32, i32
  }
}

</mosaic_0001>

<llo_original>
// kernel: _forward_core.1
$region0: #{_forward_core.1}
  #allocation0 [shape = 'u32[]', space=smem, size = 0x4, offset = 0x4, fixed_abs, tag = 'smem constant byte address 0x4 - core index']
  #allocation1 [shape = 'u32[144,128]{1,0:T(1,128)}', space=vmem, size = 0x12000, scoped, tag = 'internal scratch']
  %s0 = inlined_call_operand.vmem [shape: f32[2,63], index: 0, kind: input, shape index: {}]
  %s1 = inlined_call_operand.vmem [shape: f32[2,160], index: 1, kind: input, shape index: {}]
  %s2 = inlined_call_operand.vmem [shape: f32[2,36], index: 2, kind: input, shape index: {}]
  %s3 = inlined_call_operand.vmem [shape: bf16[63,1152], index: 3, kind: input, shape index: {}]
  %s4 = inlined_call_operand.vmem [shape: f32[1,1152], index: 4, kind: input, shape index: {}]
  %s5 = inlined_call_operand.vmem [shape: bf16[1152,576], index: 5, kind: input, shape index: {}]
  %s6 = inlined_call_operand.vmem [shape: f32[1,576], index: 6, kind: input, shape index: {}]
  %s7 = inlined_call_operand.vmem [shape: bf16[36,768], index: 7, kind: input, shape index: {}]
  %s8 = inlined_call_operand.vmem [shape: f32[1,768], index: 8, kind: input, shape index: {}]
  %s9 = inlined_call_operand.vmem [shape: bf16[768,384], index: 9, kind: input, shape index: {}]
  %s10 = inlined_call_operand.vmem [shape: f32[1,384], index: 10, kind: input, shape index: {}]
  %s11 = inlined_call_operand.vmem [shape: bf16[160,160], index: 11, kind: input, shape index: {}]
  %s12 = inlined_call_operand.vmem [shape: f32[1,160], index: 12, kind: input, shape index: {}]
  %s13 = inlined_call_operand.vmem [shape: bf16[576,512], index: 13, kind: input, shape index: {}]
  %s14 = inlined_call_operand.vmem [shape: bf16[160,512], index: 14, kind: input, shape index: {}]
  %s15 = inlined_call_operand.vmem [shape: f32[1,512], index: 15, kind: input, shape index: {}]
  %s16 = inlined_call_operand.vmem [shape: bf16[512,512], index: 16, kind: input, shape index: {}]
  %s17 = inlined_call_operand.vmem [shape: f32[1,512], index: 17, kind: input, shape index: {}]
  %s18 = inlined_call_operand.vmem [shape: bf16[576,64], index: 18, kind: input, shape index: {}]
  %s19 = inlined_call_operand.vmem [shape: bf16[160,64], index: 19, kind: input, shape index: {}]
  %s20 = inlined_call_operand.vmem [shape: f32[1,64], index: 20, kind: input, shape index: {}]
  %s21 = inlined_call_operand.vmem [shape: f32[64,384], index: 21, kind: input, shape index: {}]
  %s22 = inlined_call_operand.vmem [shape: f32[384,128], index: 22, kind: input, shape index: {}]
  %s23 = inlined_call_operand.vmem [shape: f32[2,512], index: 23, kind: output, shape index: {0}]
  %s24 = inlined_call_operand.vmem [shape: f32[2,128], index: 24, kind: output, shape index: {1}]
  %25 = xla_tuple %s23, %s24
  %s26 = sld [smem:[#allocation0]]
  $region110: #{_forward_core.1} parent=0
    _
  %s28 = ssub.s32 1, %s26
  %s29 = scalar_select 0, %s28, %s26
  // Predicated region
  $region2: #{_forward_core.1} parent=0 // pred_check
    _
  $region3: #{_forward_core.1} parent=0 // pred_check_branch
    %31 = sbr.rel (0) target = $region5
  $region4: #{_forward_core.1} parent=0 // pred_region
    _
  $region5: #{_forward_core.1} parent=0 // pred_fallthru
    _
  // Predicated region
  $region6: #{_forward_core.1} parent=0 // pred_check
    _
  $region7: #{_forward_core.1} parent=0 // pred_check_branch
    %33 = sbr.rel (0) target = $region9
  $region8: #{_forward_core.1} parent=0 // pred_region
    _
  $region9: #{_forward_core.1} parent=0 // pred_fallthru
    _
  // Predicated region
  $region10: #{_forward_core.1} parent=0 // pred_check
    _
  $region11: #{_forward_core.1} parent=0 // pred_check_branch
    %35 = sbr.rel (0) target = $region13
  $region12: #{_forward_core.1} parent=0 // pred_region
    _
  $region13: #{_forward_core.1} parent=0 // pred_fallthru
    _
  // Predicated region
  $region14: #{_forward_core.1} parent=0 // pred_check
    _
  $region15: #{_forward_core.1} parent=0 // pred_check_branch
    %37 = sbr.rel (0) target = $region17
  $region16: #{_forward_core.1} parent=0 // pred_region
    _
  $region17: #{_forward_core.1} parent=0 // pred_fallthru
    _
  // Predicated region
  $region18: #{_forward_core.1} parent=0 // pred_check
    _
  $region19: #{_forward_core.1} parent=0 // pred_check_branch
    %39 = sbr.rel (0) target = $region21
  $region20: #{_forward_core.1} parent=0 // pred_region
    _
  $region21: #{_forward_core.1} parent=0 // pred_fallthru
    _
  // Predicated region
  $region22: #{_forward_core.1} parent=0 // pred_check
    _
  $region23: #{_forward_core.1} parent=0 // pred_check_branch
    %41 = sbr.rel (0) target = $region25
  $region24: #{_forward_core.1} parent=0 // pred_region
    _
  $region25: #{_forward_core.1} parent=0 // pred_fallthru
    _
  // Predicated region
  $region26: #{_forward_core.1} parent=0 // pred_check
    _
  $region27: #{_forward_core.1} parent=0 // pred_check_branch
    %43 = sbr.rel (0) target = $region29
  $region28: #{_forward_core.1} parent=0 // pred_region
    _
  $region29: #{_forward_core.1} parent=0 // pred_fallthru
    _
  // Predicated region
  $region30: #{_forward_core.1} parent=0 // pred_check
    _
  $region31: #{_forward_core.1} parent=0 // pred_check_branch
    %45 = sbr.rel (0) target = $region33
  $region32: #{_forward_core.1} parent=0 // pred_region
    _
  $region33: #{_forward_core.1} parent=0 // pred_fallthru
    _
  // Predicated region
  $region34: #{_forward_core.1} parent=0 // pred_check
    _
  $region35: #{_forward_core.1} parent=0 // pred_check_branch
    %47 = sbr.rel (0) target = $region37
  $region36: #{_forward_core.1} parent=0 // pred_region
    _
  $region37: #{_forward_core.1} parent=0 // pred_fallthru
    _
  // Predicated region
  $region38: #{_forward_core.1} parent=0 // pred_check
    _
  $region39: #{_forward_core.1} parent=0 // pred_check_branch
    %49 = sbr.rel (0) target = $region41
  $region40: #{_forward_core.1} parent=0 // pred_region
    _
  $region41: #{_forward_core.1} parent=0 // pred_fallthru
    _
  // Predicated region
  $region42: #{_forward_core.1} parent=0 // pred_check
    _
  $region43: #{_forward_core.1} parent=0 // pred_check_branch
    %51 = sbr.rel (0) target = $region45
  $region44: #{_forward_core.1} parent=0 // pred_region
    _
  $region45: #{_forward_core.1} parent=0 // pred_fallthru
    _
  // Predicated region
  $region46: #{_forward_core.1} parent=0 // pred_check
    _
  $region47: #{_forward_core.1} parent=0 // pred_check_branch
    %53 = sbr.rel (0) target = $region49
  $region48: #{_forward_core.1} parent=0 // pred_region
    _
  $region49: #{_forward_core.1} parent=0 // pred_fallthru
    _
  // Predicated region
  $region50: #{_forward_core.1} parent=0 // pred_check
    _
  $region51: #{_forward_core.1} parent=0 // pred_check_branch
    %55 = sbr.rel (0) target = $region53
  $region52: #{_forward_core.1} parent=0 // pred_region
    _
  $region53: #{_forward_core.1} parent=0 // pred_fallthru
    _
  // Predicated region
  $region54: #{_forward_core.1} parent=0 // pred_check
    _
  $region55: #{_forward_core.1} parent=0 // pred_check_branch
    %57 = sbr.rel (0) target = $region57
  $region56: #{_forward_core.1} parent=0 // pred_region
    _
  $region57: #{_forward_core.1} parent=0 // pred_fallthru
    _
  // Predicated region
  $region58: #{_forward_core.1} parent=0 // pred_check
    _
  $region59: #{_forward_core.1} parent=0 // pred_check_branch
    %59 = sbr.rel (0) target = $region61
  $region60: #{_forward_core.1} parent=0 // pred_region
    _
  $region61: #{_forward_core.1} parent=0 // pred_fallthru
    _
  // Predicated region
  $region62: #{_forward_core.1} parent=0 // pred_check
    _
  $region63: #{_forward_core.1} parent=0 // pred_check_branch
    %61 = sbr.rel (0) target = $region65
  $region64: #{_forward_core.1} parent=0 // pred_region
    _
  $region65: #{_forward_core.1} parent=0 // pred_fallthru
    _
  // Predicated region
  $region66: #{_forward_core.1} parent=0 // pred_check
    _
  $region67: #{_forward_core.1} parent=0 // pred_check_branch
    %63 = sbr.rel (0) target = $region69
  $region68: #{_forward_core.1} parent=0 // pred_region
    _
  $region69: #{_forward_core.1} parent=0 // pred_fallthru
    _
  // Predicated region
  $region70: #{_forward_core.1} parent=0 // pred_check
    _
  $region71: #{_forward_core.1} parent=0 // pred_check_branch
    %65 = sbr.rel (0) target = $region73
  $region72: #{_forward_core.1} parent=0 // pred_region
    _
  $region73: #{_forward_core.1} parent=0 // pred_fallthru
    _
  // Predicated region
  $region74: #{_forward_core.1} parent=0 // pred_check
    _
  $region75: #{_forward_core.1} parent=0 // pred_check_branch
    %67 = sbr.rel (0) target = $region77
  $region76: #{_forward_core.1} parent=0 // pred_region
    _
  $region77: #{_forward_core.1} parent=0 // pred_fallthru
    _
  // Predicated region
  $region78: #{_forward_core.1} parent=0 // pred_check
    _
  $region79: #{_forward_core.1} parent=0 // pred_check_branch
    %69 = sbr.rel (0) target = $region81
  $region80: #{_forward_core.1} parent=0 // pred_region
    _
  $region81: #{_forward_core.1} parent=0 // pred_fallthru
    _
  // Predicated region
  $region82: #{_forward_core.1} parent=0 // pred_check
    _
  $region83: #{_forward_core.1} parent=0 // pred_check_branch
    %71 = sbr.rel (0) target = $region85
  $region84: #{_forward_core.1} parent=0 // pred_region
    _
  $region85: #{_forward_core.1} parent=0 // pred_fallthru
    _
  // Predicated region
  $region86: #{_forward_core.1} parent=0 // pred_check
    _
  $region87: #{_forward_core.1} parent=0 // pred_check_branch
    %73 = sbr.rel (0) target = $region89
  $region88: #{_forward_core.1} parent=0 // pred_region
    _
  $region89: #{_forward_core.1} parent=0 // pred_fallthru
    _
  // Predicated region
  $region90: #{_forward_core.1} parent=0 // pred_check
    _
  $region91: #{_forward_core.1} parent=0 // pred_check_branch
    %75 = sbr.rel (0) target = $region93
  $region92: #{_forward_core.1} parent=0 // pred_region
    _
  $region93: #{_forward_core.1} parent=0 // pred_fallthru
    _
  %v77 = vld [vmem:[%s0] sm:$0x3]
  %v78 = vld [vmem:[%s1] sm:$0xf]
  %v79 = vld [vmem:[%s2] sm:$0x3]
  %v80 = vpack.c.bf16 %v77, %v77
  %v81 = vld [vmem:[%s3] sm:$0xff]
  %v82 = vld [vmem:[%s3 + $0x8] sm:$0xff]
  %v83 = vld [vmem:[%s3 + $0x10] sm:$0xff]
  %v84 = vld [vmem:[%s3 + $0x18] sm:$0xff]
  %v85 = vld [vmem:[%s3 + $0x20] sm:$0xf]
  %v86 = vld [vmem:[%s3 + $0x24] sm:$0xff]
  %v87 = vld [vmem:[%s3 + $0x2c] sm:$0xff]
  %v88 = vld [vmem:[%s3 + $0x34] sm:$0xff]
  %v89 = vld [vmem:[%s3 + $0x3c] sm:$0xff]
  %v90 = vld [vmem:[%s3 + $0x44] sm:$0xf]
  %v91 = vld [vmem:[%s3 + $0x48] sm:$0xff]
  %v92 = vld [vmem:[%s3 + $0x50] sm:$0xff]
  %v93 = vld [vmem:[%s3 + $0x58] sm:$0xff]
  %v94 = vld [vmem:[%s3 + $0x60] sm:$0xff]
  %v95 = vld [vmem:[%s3 + $0x68] sm:$0xf]
  %v96 = vld [vmem:[%s3 + $0x6c] sm:$0xff]
  %v97 = vld [vmem:[%s3 + $0x74] sm:$0xff]
  %v98 = vld [vmem:[%s3 + $0x7c] sm:$0xff]
  %v99 = vld [vmem:[%s3 + $0x84] sm:$0xff]
  %v100 = vld [vmem:[%s3 + $0x8c] sm:$0xf]
  %v101 = vld [vmem:[%s3 + $0x90] sm:$0xff]
  %v102 = vld [vmem:[%s3 + $0x98] sm:$0xff]
  %v103 = vld [vmem:[%s3 + $0xa0] sm:$0xff]
  %v104 = vld [vmem:[%s3 + $0xa8] sm:$0xff]
  %v105 = vld [vmem:[%s3 + $0xb0] sm:$0xf]
  %v106 = vld [vmem:[%s3 + $0xb4] sm:$0xff]
  %v107 = vld [vmem:[%s3 + $0xbc] sm:$0xff]
  %v108 = vld [vmem:[%s3 + $0xc4] sm:$0xff]
  %v109 = vld [vmem:[%s3 + $0xcc] sm:$0xff]
  %v110 = vld [vmem:[%s3 + $0xd4] sm:$0xf]
  %v111 = vld [vmem:[%s3 + $0xd8] sm:$0xff]
  %v112 = vld [vmem:[%s3 + $0xe0] sm:$0xff]
  %v113 = vld [vmem:[%s3 + $0xe8] sm:$0xff]
  %v114 = vld [vmem:[%s3 + $0xf0] sm:$0xff]
  %v115 = vld [vmem:[%s3 + $0xf8] sm:$0xf]
  %v116 = vld [vmem:[%s3 + $0xfc] sm:$0xff]
  %v117 = vld [vmem:[%s3 + $0x104] sm:$0xff]
  %v118 = vld [vmem:[%s3 + $0x10c] sm:$0xff]
  %v119 = vld [vmem:[%s3 + $0x114] sm:$0xff]
  %v120 = vld [vmem:[%s3 + $0x11c] sm:$0xf]
  %v121 = vld [vmem:[%s4] sm:$0xff]
  %v122 = vld [vmem:[%s4 + $0x8] sm:$0x1]
  %v125 = vlaneseq
  %v126 = vshrl.u32 %v125, 7
  %v127 = vsub.s32 0, %v126
  %v128 = vrot.slane %v121, %v127
  %v129 = vlaneseq
  %v130 = vshrl.u32 %v129, 7
  %v131 = vsub.s32 1, %v130
  %v132 = vrot.slane %v121, %v131
  %v133 = vlaneseq
  %v134 = vshrl.u32 %v133, 7
  %v135 = vsub.s32 2, %v134
  %v136 = vrot.slane %v121, %v135
  %v137 = vlaneseq
  %v138 = vshrl.u32 %v137, 7
  %v139 = vsub.s32 3, %v138
  %v140 = vrot.slane %v121, %v139
  %v141 = vlaneseq
  %v142 = vshrl.u32 %v141, 7
  %v143 = vsub.s32 4, %v142
  %v144 = vrot.slane %v121, %v143
  %v145 = vlaneseq
  %v146 = vshrl.u32 %v145, 7
  %v147 = vsub.s32 5, %v146
  %v148 = vrot.slane %v121, %v147
  %v149 = vlaneseq
  %v150 = vshrl.u32 %v149, 7
  %v151 = vsub.s32 6, %v150
  %v152 = vrot.slane %v121, %v151
  %v153 = vlaneseq
  %v154 = vshrl.u32 %v153, 7
  %v155 = vsub.s32 7, %v154
  %v156 = vrot.slane %v121, %v155
  %v157 = vlaneseq
  %v158 = vshrl.u32 %v157, 7
  %v159 = vsub.s32 0, %v158
  %v160 = vrot.slane %v122, %v159
  %v210 = vunpack.c.l.b16 %v81
  %v211 = vunpack.c.h.b16 %v81
  %v212 = vunpack.c.l.b16 %v82
  %v213 = vunpack.c.h.b16 %v82
  %v214 = vunpack.c.l.b16 %v83
  %v215 = vunpack.c.h.b16 %v83
  %v216 = vunpack.c.l.b16 %v84
  %v217 = vunpack.c.h.b16 %v84
  %v218 = vunpack.c.l.b16 %v85
  %v219 = vunpack.c.l.b16 %v86
  %v220 = vunpack.c.h.b16 %v86
  %v221 = vunpack.c.l.b16 %v87
  %v222 = vunpack.c.h.b16 %v87
  %v223 = vunpack.c.l.b16 %v88
  %v224 = vunpack.c.h.b16 %v88
  %v225 = vunpack.c.l.b16 %v89
  %v226 = vunpack.c.h.b16 %v89
  %v227 = vunpack.c.l.b16 %v90
  %v228 = vunpack.c.l.b16 %v91
  %v229 = vunpack.c.h.b16 %v91
  %v230 = vunpack.c.l.b16 %v92
  %v231 = vunpack.c.h.b16 %v92
  %v232 = vunpack.c.l.b16 %v93
  %v233 = vunpack.c.h.b16 %v93
  %v234 = vunpack.c.l.b16 %v94
  %v235 = vunpack.c.h.b16 %v94
  %v236 = vunpack.c.l.b16 %v95
  %v237 = vunpack.c.l.b16 %v96
  %v238 = vunpack.c.h.b16 %v96
  %v239 = vunpack.c.l.b16 %v97
  %v240 = vunpack.c.h.b16 %v97
  %v241 = vunpack.c.l.b16 %v98
  %v242 = vunpack.c.h.b16 %v98
  %v243 = vunpack.c.l.b16 %v99
  %v244 = vunpack.c.h.b16 %v99
  %v245 = vunpack.c.l.b16 %v100
  %v246 = vunpack.c.l.b16 %v101
  %v247 = vunpack.c.h.b16 %v101
  %v248 = vunpack.c.l.b16 %v102
  %v249 = vunpack.c.h.b16 %v102
  %v250 = vunpack.c.l.b16 %v103
  %v251 = vunpack.c.h.b16 %v103
  %v252 = vunpack.c.l.b16 %v104
  %v253 = vunpack.c.h.b16 %v104
  %v254 = vunpack.c.l.b16 %v105
  %v255 = vunpack.c.l.b16 %v106
  %v256 = vunpack.c.h.b16 %v106
  %v257 = vunpack.c.l.b16 %v107
  %v258 = vunpack.c.h.b16 %v107
  %v259 = vunpack.c.l.b16 %v108
  %v260 = vunpack.c.h.b16 %v108
  %v261 = vunpack.c.l.b16 %v109
  %v262 = vunpack.c.h.b16 %v109
  %v263 = vunpack.c.l.b16 %v110
  %v264 = vunpack.c.l.b16 %v111
  %v265 = vunpack.c.h.b16 %v111
  %v266 = vunpack.c.l.b16 %v112
  %v267 = vunpack.c.h.b16 %v112
  %v268 = vunpack.c.l.b16 %v113
  %v269 = vunpack.c.h.b16 %v113
  %v270 = vunpack.c.l.b16 %v114
  %v271 = vunpack.c.h.b16 %v114
  %v272 = vunpack.c.l.b16 %v115
  %v273 = vunpack.c.l.b16 %v116
  %v274 = vunpack.c.h.b16 %v116
  %v275 = vunpack.c.l.b16 %v117
  %v276 = vunpack.c.h.b16 %v117
  %v277 = vunpack.c.l.b16 %v118
  %v278 = vunpack.c.h.b16 %v118
  %v279 = vunpack.c.l.b16 %v119
  %v280 = vunpack.c.h.b16 %v119
  %v281 = vunpack.c.l.b16 %v120
  %v282 = vpack.c.b16 %v219, %v210
  %v283 = vpack.c.b16 %v220, %v211
  %v284 = vpack.c.b16 %v221, %v212
  %v285 = vpack.c.b16 %v222, %v213
  %v286 = vpack.c.b16 %v223, %v214
  %v287 = vpack.c.b16 %v224, %v215
  %v288 = vpack.c.b16 %v225, %v216
  %v289 = vpack.c.b16 %v226, %v217
  %v290 = vpack.c.b16 %v227, %v218
  %v291 = vpack.c.b16 %v237, %v228
  %v292 = vpack.c.b16 %v238, %v229
  %v293 = vpack.c.b16 %v239, %v230
  %v294 = vpack.c.b16 %v240, %v231
  %v295 = vpack.c.b16 %v241, %v232
  %v296 = vpack.c.b16 %v242, %v233
  %v297 = vpack.c.b16 %v243, %v234
  %v298 = vpack.c.b16 %v244, %v235
  %v299 = vpack.c.b16 %v245, %v236
  %v300 = vpack.c.b16 %v255, %v246
  %v301 = vpack.c.b16 %v256, %v247
  %v302 = vpack.c.b16 %v257, %v248
  %v303 = vpack.c.b16 %v258, %v249
  %v304 = vpack.c.b16 %v259, %v250
  %v305 = vpack.c.b16 %v260, %v251
  %v306 = vpack.c.b16 %v261, %v252
  %v307 = vpack.c.b16 %v262, %v253
  %v308 = vpack.c.b16 %v263, %v254
  %v309 = vpack.c.b16 %v273, %v264
  %v310 = vpack.c.b16 %v274, %v265
  %v311 = vpack.c.b16 %v275, %v266
  %v312 = vpack.c.b16 %v276, %v267
  %v313 = vpack.c.b16 %v277, %v268
  %v314 = vpack.c.b16 %v278, %v269
  %v315 = vpack.c.b16 %v279, %v270
  %v316 = vpack.c.b16 %v280, %v271
  %v317 = vpack.c.b16 %v281, %v272
  %vm345 = vcmask 515072
  %v347 = vsel %vm345, %v80, 0
  %vm349 = vcmask 1046528
  %vm350 = vcmask 1047552
  %v351 = vsel %vm349, 4294967295, 65535
  %v352 = vsel %vm350, %v351, 0
  %v354 = vand.u32 %v309, %v352
  %v357 = vand.u32 %v310, %v352
  %v360 = vand.u32 %v311, %v352
  %v363 = vand.u32 %v312, %v352
  %v366 = vand.u32 %v313, %v352
  %v369 = vand.u32 %v314, %v352
  %v372 = vand.u32 %v315, %v352
  %v375 = vand.u32 %v316, %v352
  %v378 = vand.u32 %v317, %v352
  %380 = vmatprep.subr.bf16.mxu0 %v283
  %381 = vmatpush1.bf16.msra.mxu0 %v282
  %382 = vmatprep.subr.bf16.mxu0 %v292
  %383 = vmatpush1.bf16.msra.mxu0 %v291
  %384 = vmatprep.subr.bf16.mxu0 %v301
  %385 = vmatpush1.bf16.msra.mxu0 %v300
  %386 = vmatprep.subr.bf16.mxu0 %v357
  %387 = vmatpush1.bf16.msra.mxu0 %v354
  %388 = vmatprep.subr.bf16.mxu0 0
  %389 = vmatpush1.bf16.msra.mxu0 0
  %390 = vmatprep.subr.bf16.mxu0 0
  %391 = vmatpush1.bf16.msra.mxu0 0
  %392 = vmatprep.subr.bf16.mxu0 0
  %393 = vmatpush1.bf16.msra.mxu0 0
  %394 = vmatprep.subr.bf16.mxu0 0
  %395 = vmatpush1.bf16.msra.mxu0 0
  %396 = vmatprep.subr.bf16.mxu0 0
  %397 = vmatpush1.bf16.msra.mxu0 0
  %398 = vmatprep.subr.bf16.mxu0 0
  %399 = vmatpush1.bf16.msra.mxu0 0
  %400 = vmatprep.subr.bf16.mxu0 0
  %401 = vmatpush1.bf16.msra.mxu0 0
  %402 = vmatprep.subr.bf16.mxu0 0
  %403 = vmatpush1.bf16.msra.mxu0 0
  %404 = vmatprep.subr.bf16.mxu0 0
  %405 = vmatpush1.bf16.msra.mxu0 0
  %406 = vmatprep.subr.bf16.mxu0 0
  %407 = vmatpush1.bf16.msra.mxu0 0
  %408 = vmatprep.subr.bf16.mxu0 0
  %409 = vmatpush1.bf16.msra.mxu0 0
  %410 = vmatprep.subr.bf16.mxu0 0
  %411 = vmatpush1.bf16.msra.mxu0 0
  %412 = vmatprep.mubr.bf16.mxu0 0
  %413 = vmatmul.mubr.bf16.gmra.mrb[0].mxu0 %v347
  %v414 = vpop.f32.mrb[0].mxu0
  %v415 = vadd.f32 %v128, %v414
  %v416 = vpop.f32.mrb[0].mxu0
  %v417 = vadd.f32 %v132, %v416
  %v418 = vpop.f32.mrb[0].mxu0
  %v419 = vpop.f32.mrb[0].mxu0
  %420 = vdwg.mxu0
  %421 = vmatprep.subr.bf16.mxu0 %v285
  %422 = vmatpush1.bf16.msra.mxu0 %v284
  %423 = vmatprep.subr.bf16.mxu0 %v294
  %424 = vmatpush1.bf16.msra.mxu0 %v293
  %425 = vmatprep.subr.bf16.mxu0 %v303
  %426 = vmatpush1.bf16.msra.mxu0 %v302
  %427 = vmatprep.subr.bf16.mxu0 %v363
  %428 = vmatpush1.bf16.msra.mxu0 %v360
  %429 = vmatprep.subr.bf16.mxu0 0
  %430 = vmatpush1.bf16.msra.mxu0 0
  %431 = vmatprep.subr.bf16.mxu0 0
  %432 = vmatpush1.bf16.msra.mxu0 0
  %433 = vmatprep.subr.bf16.mxu0 0
  %434 = vmatpush1.bf16.msra.mxu0 0
  %435 = vmatprep.subr.bf16.mxu0 0
  %436 = vmatpush1.bf16.msra.mxu0 0
  %437 = vmatprep.subr.bf16.mxu0 0
  %438 = vmatpush1.bf16.msra.mxu0 0
  %439 = vmatprep.subr.bf16.mxu0 0
  %440 = vmatpush1.bf16.msra.mxu0 0
  %441 = vmatprep.subr.bf16.mxu0 0
  %442 = vmatpush1.bf16.msra.mxu0 0
  %443 = vmatprep.subr.bf16.mxu0 0
  %444 = vmatpush1.bf16.msra.mxu0 0
  %445 = vmatprep.subr.bf16.mxu0 0
  %446 = vmatpush1.bf16.msra.mxu0 0
  %447 = vmatprep.subr.bf16.mxu0 0
  %448 = vmatpush1.bf16.msra.mxu0 0
  %449 = vmatprep.subr.bf16.mxu0 0
  %450 = vmatpush1.bf16.msra.mxu0 0
  %451 = vmatprep.subr.bf16.mxu0 0
  %452 = vmatpush1.bf16.msra.mxu0 0
  %453 = vmatprep.mubr.bf16.mxu0 0
  %454 = vmatmul.mubr.bf16.gmra.mrb[0].mxu0 %v347
  %v455 = vpop.f32.mrb[0].mxu0
  %v456 = vadd.f32 %v136, %v455
  %v457 = vpop.f32.mrb[0].mxu0
  %v458 = vadd.f32 %v140, %v457
  %v459 = vpop.f32.mrb[0].mxu0
  %v460 = vpop.f32.mrb[0].mxu0
  %461 = vdwg.mxu0
  %462 = vmatprep.subr.bf16.mxu0 %v287
  %463 = vmatpush1.bf16.msra.mxu0 %v286
  %464 = vmatprep.subr.bf16.mxu0 %v296
  %465 = vmatpush1.bf16.msra.mxu0 %v295
  %466 = vmatprep.subr.bf16.mxu0 %v305
  %467 = vmatpush1.bf16.msra.mxu0 %v304
  %468 = vmatprep.subr.bf16.mxu0 %v369
  %469 = vmatpush1.bf16.msra.mxu0 %v366
  %470 = vmatprep.subr.bf16.mxu0 0
  %471 = vmatpush1.bf16.msra.mxu0 0
  %472 = vmatprep.subr.bf16.mxu0 0
  %473 = vmatpush1.bf16.msra.mxu0 0
  %474 = vmatprep.subr.bf16.mxu0 0
  %475 = vmatpush1.bf16.msra.mxu0 0
  %476 = vmatprep.subr.bf16.mxu0 0
  %477 = vmatpush1.bf16.msra.mxu0 0
  %478 = vmatprep.subr.bf16.mxu0 0
  %479 = vmatpush1.bf16.msra.mxu0 0
  %480 = vmatprep.subr.bf16.mxu0 0
  %481 = vmatpush1.bf16.msra.mxu0 0
  %482 = vmatprep.subr.bf16.mxu0 0
  %483 = vmatpush1.bf16.msra.mxu0 0
  %484 = vmatprep.subr.bf16.mxu0 0
  %485 = vmatpush1.bf16.msra.mxu0 0
  %486 = vmatprep.subr.bf16.mxu0 0
  %487 = vmatpush1.bf16.msra.mxu0 0
  %488 = vmatprep.subr.bf16.mxu0 0
  %489 = vmatpush1.bf16.msra.mxu0 0
  %490 = vmatprep.subr.bf16.mxu0 0
  %491 = vmatpush1.bf16.msra.mxu0 0
  %492 = vmatprep.subr.bf16.mxu0 0
  %493 = vmatpush1.bf16.msra.mxu0 0
  %494 = vmatprep.mubr.bf16.mxu0 0
  %495 = vmatmul.mubr.bf16.gmra.mrb[0].mxu0 %v347
  %v496 = vpop.f32.mrb[0].mxu0
  %v497 = vadd.f32 %v144, %v496
  %v498 = vpop.f32.mrb[0].mxu0
  %v499 = vadd.f32 %v148, %v498
  %v500 = vpop.f32.mrb[0].mxu0
  %v501 = vpop.f32.mrb[0].mxu0
  %502 = vdwg.mxu0
  %503 = vmatprep.subr.bf16.mxu0 %v289
  %504 = vmatpush1.bf16.msra.mxu0 %v288
  %505 = vmatprep.subr.bf16.mxu0 %v298
  %506 = vmatpush1.bf16.msra.mxu0 %v297
  %507 = vmatprep.subr.bf16.mxu0 %v307
  %508 = vmatpush1.bf16.msra.mxu0 %v306
  %509 = vmatprep.subr.bf16.mxu0 %v375
  %510 = vmatpush1.bf16.msra.mxu0 %v372
  %511 = vmatprep.subr.bf16.mxu0 0
  %512 = vmatpush1.bf16.msra.mxu0 0
  %513 = vmatprep.subr.bf16.mxu0 0
  %514 = vmatpush1.bf16.msra.mxu0 0
  %515 = vmatprep.subr.bf16.mxu0 0
  %516 = vmatpush1.bf16.msra.mxu0 0
  %517 = vmatprep.subr.bf16.mxu0 0
  %518 = vmatpush1.bf16.msra.mxu0 0
  %519 = vmatprep.subr.bf16.mxu0 0
  %520 = vmatpush1.bf16.msra.mxu0 0
  %521 = vmatprep.subr.bf16.mxu0 0
  %522 = vmatpush1.bf16.msra.mxu0 0
  %523 = vmatprep.subr.bf16.mxu0 0
  %524 = vmatpush1.bf16.msra.mxu0 0
  %525 = vmatprep.subr.bf16.mxu0 0
  %526 = vmatpush1.bf16.msra.mxu0 0
  %527 = vmatprep.subr.bf16.mxu0 0
  %528 = vmatpush1.bf16.msra.mxu0 0
  %529 = vmatprep.subr.bf16.mxu0 0
  %530 = vmatpush1.bf16.msra.mxu0 0
  %531 = vmatprep.subr.bf16.mxu0 0
  %532 = vmatpush1.bf16.msra.mxu0 0
  %533 = vmatprep.subr.bf16.mxu0 0
  %534 = vmatpush1.bf16.msra.mxu0 0
  %535 = vmatprep.mubr.bf16.mxu0 0
  %536 = vmatmul.mubr.bf16.gmra.mrb[0].mxu0 %v347
  %v537 = vpop.f32.mrb[0].mxu0
  %v538 = vadd.f32 %v152, %v537
  %v539 = vpop.f32.mrb[0].mxu0
  %v540 = vadd.f32 %v156, %v539
  %v541 = vpop.f32.mrb[0].mxu0
  %v542 = vpop.f32.mrb[0].mxu0
  %543 = vdwg.mxu0
  %544 = vmatprep.subr.bf16.mxu0 0
  %545 = vmatpush1.bf16.msra.mxu0 %v290
  %546 = vmatprep.subr.bf16.mxu0 0
  %547 = vmatpush1.bf16.msra.mxu0 %v299
  %548 = vmatprep.subr.bf16.mxu0 0
  %549 = vmatpush1.bf16.msra.mxu0 %v308
  %550 = vmatprep.subr.bf16.mxu0 0
  %551 = vmatpush1.bf16.msra.mxu0 %v378
  %552 = vmatprep.subr.bf16.mxu0 0
  %553 = vmatpush1.bf16.msra.mxu0 0
  %554 = vmatprep.subr.bf16.mxu0 0
  %555 = vmatpush1.bf16.msra.mxu0 0
  %556 = vmatprep.subr.bf16.mxu0 0
  %557 = vmatpush1.bf16.msra.mxu0 0
  %558 = vmatprep.subr.bf16.mxu0 0
  %559 = vmatpush1.bf16.msra.mxu0 0
  %560 = vmatprep.subr.bf16.mxu0 0
  %561 = vmatpush1.bf16.msra.mxu0 0
  %562 = vmatprep.subr.bf16.mxu0 0
  %563 = vmatpush1.bf16.msra.mxu0 0
  %564 = vmatprep.subr.bf16.mxu0 0
  %565 = vmatpush1.bf16.msra.mxu0 0
  %566 = vmatprep.subr.bf16.mxu0 0
  %567 = vmatpush1.bf16.msra.mxu0 0
  %568 = vmatprep.subr.bf16.mxu0 0
  %569 = vmatpush1.bf16.msra.mxu0 0
  %570 = vmatprep.subr.bf16.mxu0 0
  %571 = vmatpush1.bf16.msra.mxu0 0
  %572 = vmatprep.subr.bf16.mxu0 0
  %573 = vmatpush1.bf16.msra.mxu0 0
  %574 = vmatprep.subr.bf16.mxu0 0
  %575 = vmatpush1.bf16.msra.mxu0 0
  %576 = vmatprep.mubr.bf16.mxu0 0
  %577 = vmatmul.mubr.bf16.gmra.mrb[0].mxu0 %v347
  %v578 = vpop.f32.mrb[0].mxu0
  %v579 = vadd.f32 %v160, %v578
  %v580 = vpop.f32.mrb[0].mxu0
  %v581 = vpop.f32.mrb[0].mxu0
  %v582 = vpop.f32.mrb[0].mxu0
  %583 = vdwg.mxu0
  %v584 = vmax.f32 %v415, 0.0
  %v585 = vmax.f32 %v417, 0.0
  %v586 = vmax.f32 %v456, 0.0
  %v587 = vmax.f32 %v458, 0.0
  %v588 = vmax.f32 %v497, 0.0
  %v589 = vmax.f32 %v499, 0.0
  %v590 = vmax.f32 %v538, 0.0
  %v591 = vmax.f32 %v540, 0.0
  %v592 = vmax.f32 %v579, 0.0
  %v593 = vpack.c.bf16 %v584, %v584
  %v594 = vpack.c.bf16 %v585, %v585
  %v595 = vpack.c.bf16 %v586, %v586
  %v596 = vpack.c.bf16 %v587, %v587
  %v597 = vpack.c.bf16 %v588, %v588
  %v598 = vpack.c.bf16 %v589, %v589
  %v599 = vpack.c.bf16 %v590, %v590
  %v600 = vpack.c.bf16 %v591, %v591
  %v601 = vpack.c.bf16 %v592, %v592
  %v602 = vld [vmem:[%s5] sm:$0xff]
  %v603 = vld [vmem:[%s5 + $0x8] sm:$0xff]
  %v604 = vld [vmem:[%s5 + $0x10] sm:$0xf]
  %v605 = vld [vmem:[%s5 + $0x14] sm:$0xff]
  %v606 = vld [vmem:[%s5 + $0x1c] sm:$0xff]
  %v607 = vld [vmem:[%s5 + $0x24] sm:$0xf]
  %v608 = vld [vmem:[%s5 + $0x28] sm:$0xff]
  %v609 = vld [vmem:[%s5 + $0x30] sm:$0xff]
  %v610 = vld [vmem:[%s5 + $0x38] sm:$0xf]
  %v611 = vld [vmem:[%s5 + $0x3c] sm:$0xff]
  %v612 = vld [vmem:[%s5 + $0x44] sm:$0xff]
  %v613 = vld [vmem:[%s5 + $0x4c] sm:$0xf]
  %v614 = vld [vmem:[%s5 + $0x50] sm:$0xff]
  %v615 = vld [vmem:[%s5 + $0x58] sm:$0xff]
  %v616 = vld [vmem:[%s5 + $0x60] sm:$0xf]
  %v617 = vld [vmem:[%s5 + $0x64] sm:$0xff]
  %v618 = vld [vmem:[%s5 + $0x6c] sm:$0xff]
  %v619 = vld [vmem:[%s5 + $0x74] sm:$0xf]
  %v620 = vld [vmem:[%s5 + $0x78] sm:$0xff]
  %v621 = vld [vmem:[%s5 + $0x80] sm:$0xff]
  %v622 = vld [vmem:[%s5 + $0x88] sm:$0xf]
  %v623 = vld [vmem:[%s5 + $0x8c] sm:$0xff]
  %v624 = vld [vmem:[%s5 + $0x94] sm:$0xff]
  %v625 = vld [vmem:[%s5 + $0x9c] sm:$0xf]
  %v626 = vld [vmem:[%s5 + $0xa0] sm:$0xff]
  %v627 = vld [vmem:[%s5 + $0xa8] sm:$0xff]
  %v628 = vld [vmem:[%s5 + $0xb0] sm:$0xf]
  %v629 = vld [vmem:[%s5 + $0xb4] sm:$0xff]
  %v630 = vld [vmem:[%s5 + $0xbc] sm:$0xff]
  %v631 = vld [vmem:[%s5 + $0xc4] sm:$0xf]
  %v632 = vld [vmem:[%s5 + $0xc8] sm:$0xff]
  %v633 = vld [vmem:[%s5 + $0xd0] sm:$0xff]
  %v634 = vld [vmem:[%s5 + $0xd8] sm:$0xf]
  %v635 = vld [vmem:[%s5 + $0xdc] sm:$0xff]
  %v636 = vld [vmem:[%s5 + $0xe4] sm:$0xff]
  %v637 = vld [vmem:[%s5 + $0xec] sm:$0xf]
  %v638 = vld [vmem:[%s5 + $0xf0] sm:$0xff]
  %v639 = vld [vmem:[%s5 + $0xf8] sm:$0xff]
  %v640 = vld [vmem:[%s5 + $0x100] sm:$0xf]
  %v641 = vld [vmem:[%s5 + $0x104] sm:$0xff]
  %v642 = vld [vmem:[%s5 + $0x10c] sm:$0xff]
  %v643 = vld [vmem:[%s5 + $0x114] sm:$0xf]
  %v644 = vld [vmem:[%s5 + $0x118] sm:$0xff]
  %v645 = vld [vmem:[%s5 + $0x120] sm:$0xff]
  %v646 = vld [vmem:[%s5 + $0x128] sm:$0xf]
  %v647 = vld [vmem:[%s5 + $0x12c] sm:$0xff]
  %v648 = vld [vmem:[%s5 + $0x134] sm:$0xff]
  %v649 = vld [vmem:[%s5 + $0x13c] sm:$0xf]
  %v650 = vld [vmem:[%s5 + $0x140] sm:$0xff]
  %v651 = vld [vmem:[%s5 + $0x148] sm:$0xff]
  %v652 = vld [vmem:[%s5 + $0x150] sm:$0xf]
  %v653 = vld [vmem:[%s5 + $0x154] sm:$0xff]
  %v654 = vld [vmem:[%s5 + $0x15c] sm:$0xff]
  %v655 = vld [vmem:[%s5 + $0x164] sm:$0xf]
  %v656 = vld [vmem:[%s5 + $0x168] sm:$0xff]
  %v657 = vld [vmem:[%s5 + $0x170] sm:$0xff]
  %v658 = vld [vmem:[%s5 + $0x178] sm:$0xf]
  %v659 = vld [vmem:[%s5 + $0x17c] sm:$0xff]
  %v660 = vld [vmem:[%s5 + $0x184] sm:$0xff]
  %v661 = vld [vmem:[%s5 + $0x18c] sm:$0xf]
  %v662 = vld [vmem:[%s5 + $0x190] sm:$0xff]
  %v663 = vld [vmem:[%s5 + $0x198] sm:$0xff]
  %v664 = vld [vmem:[%s5 + $0x1a0] sm:$0xf]
  %v665 = vld [vmem:[%s5 + $0x1a4] sm:$0xff]
  %v666 = vld [vmem:[%s5 + $0x1ac] sm:$0xff]
  %v667 = vld [vmem:[%s5 + $0x1b4] sm:$0xf]
  %v668 = vld [vmem:[%s5 + $0x1b8] sm:$0xff]
  %v669 = vld [vmem:[%s5 + $0x1c0] sm:$0xff]
  %v670 = vld [vmem:[%s5 + $0x1c8] sm:$0xf]
  %v671 = vld [vmem:[%s5 + $0x1cc] sm:$0xff]
  %v672 = vld [vmem:[%s5 + $0x1d4] sm:$0xff]
  %v673 = vld [vmem:[%s5 + $0x1dc] sm:$0xf]
  %v674 = vld [vmem:[%s5 + $0x1e0] sm:$0xff]
  %v675 = vld [vmem:[%s5 + $0x1e8] sm:$0xff]
  %v676 = vld [vmem:[%s5 + $0x1f0] sm:$0xf]
  %v677 = vld [vmem:[%s5 + $0x1f4] sm:$0xff]
  %v678 = vld [vmem:[%s5 + $0x1fc] sm:$0xff]
  %v679 = vld [vmem:[%s5 + $0x204] sm:$0xf]
  %v680 = vld [vmem:[%s5 + $0x208] sm:$0xff]
  %v681 = vld [vmem:[%s5 + $0x210] sm:$0xff]
  %v682 = vld [vmem:[%s5 + $0x218] sm:$0xf]
  %v683 = vld [vmem:[%s5 + $0x21c] sm:$0xff]
  %v684 = vld [vmem:[%s5 + $0x224] sm:$0xff]
  %v685 = vld [vmem:[%s5 + $0x22c] sm:$0xf]
  %v686 = vld [vmem:[%s5 + $0x230] sm:$0xff]
  %v687 = vld [vmem:[%s5 + $0x238] sm:$0xff]
  %v688 = vld [vmem:[%s5 + $0x240] sm:$0xf]
  %v689 = vld [vmem:[%s5 + $0x244] sm:$0xff]
  %v690 = vld [vmem:[%s5 + $0x24c] sm:$0xff]
  %v691 = vld [vmem:[%s5 + $0x254] sm:$0xf]
  %v692 = vld [vmem:[%s5 + $0x258] sm:$0xff]
  %v693 = vld [vmem:[%s5 + $0x260] sm:$0xff]
  %v694 = vld [vmem:[%s5 + $0x268] sm:$0xf]
  %v695 = vld [vmem:[%s5 + $0x26c] sm:$0xff]
  %v696 = vld [vmem:[%s5 + $0x274] sm:$0xff]
  %v697 = vld [vmem:[%s5 + $0x27c] sm:$0xf]
  %v698 = vld [vmem:[%s5 + $0x280] sm:$0xff]
  %v699 = vld [vmem:[%s5 + $0x288] sm:$0xff]
  %v700 = vld [vmem:[%s5 + $0x290] sm:$0xf]
  %v701 = vld [vmem:[%s5 + $0x294] sm:$0xff]
  %v702 = vld [vmem:[%s5 + $0x29c] sm:$0xff]
  %v703 = vld [vmem:[%s5 + $0x2a4] sm:$0xf]
  %v704 = vld [vmem:[%s5 + $0x2a8] sm:$0xff]
  %v705 = vld [vmem:[%s5 + $0x2b0] sm:$0xff]
  %v706 = vld [vmem:[%s5 + $0x2b8] sm:$0xf]
  %v707 = vld [vmem:[%s5 + $0x2bc] sm:$0xff]
  %v708 = vld [vmem:[%s5 + $0x2c4] sm:$0xff]
  %v709 = vld [vmem:[%s5 + $0x2cc] sm:$0xf]
  %v710 = vld [vmem:[%s5 + $0x2d0] sm:$0xff]
  %v711 = vld [vmem:[%s5 + $0x2d8] sm:$0xff]
  %v712 = vld [vmem:[%s5 + $0x2e0] sm:$0xf]
  %v713 = vld [vmem:[%s5 + $0x2e4] sm:$0xff]
  %v714 = vld [vmem:[%s5 + $0x2ec] sm:$0xff]
  %v715 = vld [vmem:[%s5 + $0x2f4] sm:$0xf]
  %v716 = vld [vmem:[%s5 + $0x2f8] sm:$0xff]
  %v717 = vld [vmem:[%s5 + $0x300] sm:$0xff]
  %v718 = vld [vmem:[%s5 + $0x308] sm:$0xf]
  %v719 = vld [vmem:[%s5 + $0x30c] sm:$0xff]
  %v720 = vld [vmem:[%s5 + $0x314] sm:$0xff]
  %v721 = vld [vmem:[%s5 + $0x31c] sm:$0xf]
  %v722 = vld [vmem:[%s5 + $0x320] sm:$0xff]
  %v723 = vld [vmem:[%s5 + $0x328] sm:$0xff]
  %v724 = vld [vmem:[%s5 + $0x330] sm:$0xf]
  %v725 = vld [vmem:[%s5 + $0x334] sm:$0xff]
  %v726 = vld [vmem:[%s5 + $0x33c] sm:$0xff]
  %v727 = vld [vmem:[%s5 + $0x344] sm:$0xf]
  %v728 = vld [vmem:[%s5 + $0x348] sm:$0xff]
  %v729 = vld [vmem:[%s5 + $0x350] sm:$0xff]
  %v730 = vld [vmem:[%s5 + $0x358] sm:$0xf]
  %v731 = vld [vmem:[%s5 + $0x35c] sm:$0xff]
  %v732 = vld [vmem:[%s5 + $0x364] sm:$0xff]
  %v733 = vld [vmem:[%s5 + $0x36c] sm:$0xf]
  %v734 = vld [vmem:[%s5 + $0x370] sm:$0xff]
  %v735 = vld [vmem:[%s5 + $0x378] sm:$0xff]
  %v736 = vld [vmem:[%s5 + $0x380] sm:$0xf]
  %v737 = vld [vmem:[%s5 + $0x384] sm:$0xff]
  %v738 = vld [vmem:[%s5 + $0x38c] sm:$0xff]
  %v739 = vld [vmem:[%s5 + $0x394] sm:$0xf]
  %v740 = vld [vmem:[%s5 + $0x398] sm:$0xff]
  %v741 = vld [vmem:[%s5 + $0x3a0] sm:$0xff]
  %v742 = vld [vmem:[%s5 + $0x3a8] sm:$0xf]
  %v743 = vld [vmem:[%s5 + $0x3ac] sm:$0xff]
  %v744 = vld [vmem:[%s5 + $0x3b4] sm:$0xff]
  %v745 = vld [vmem:[%s5 + $0x3bc] sm:$0xf]
  %v746 = vld [vmem:[%s5 + $0x3c0] sm:$0xff]
  %v747 = vld [vmem:[%s5 + $0x3c8] sm:$0xff]
  %v748 = vld [vmem:[%s5 + $0x3d0] sm:$0xf]
  %v749 = vld [vmem:[%s5 + $0x3d4] sm:$0xff]
  %v750 = vld [vmem:[%s5 + $0x3dc] sm:$0xff]
  %v751 = vld [vmem:[%s5 + $0x3e4] sm:$0xf]
  %v752 = vld [vmem:[%s5 + $0x3e8] sm:$0xff]
  %v753 = vld [vmem:[%s5 + $0x3f0] sm:$0xff]
  %v754 = vld [vmem:[%s5 + $0x3f8] sm:$0xf]
  %v755 = vld [vmem:[%s5 + $0x3fc] sm:$0xff]
  %v756 = vld [vmem:[%s5 + $0x404] sm:$0xff]
  %v757 = vld [vmem:[%s5 + $0x40c] sm:$0xf]
  %v758 = vld [vmem:[%s5 + $0x410] sm:$0xff]
  %v759 = vld [vmem:[%s5 + $0x418] sm:$0xff]
  %v760 = vld [vmem:[%s5 + $0x420] sm:$0xf]
  %v761 = vld [vmem:[%s5 + $0x424] sm:$0xff]
  %v762 = vld [vmem:[%s5 + $0x42c] sm:$0xff]
  %v763 = vld [vmem:[%s5 + $0x434] sm:$0xf]
  %v764 = vld [vmem:[%s5 + $0x438] sm:$0xff]
  %v765 = vld [vmem:[%s5 + $0x440] sm:$0xff]
  %v766 = vld [vmem:[%s5 + $0x448] sm:$0xf]
  %v767 = vld [vmem:[%s5 + $0x44c] sm:$0xff]
  %v768 = vld [vmem:[%s5 + $0x454] sm:$0xff]
  %v769 = vld [vmem:[%s5 + $0x45c] sm:$0xf]
  %v770 = vld [vmem:[%s5 + $0x460] sm:$0xff]
  %v771 = vld [vmem:[%s5 + $0x468] sm:$0xff]
  %v772 = vld [vmem:[%s5 + $0x470] sm:$0xf]
  %v773 = vld [vmem:[%s5 + $0x474] sm:$0xff]
  %v774 = vld [vmem:[%s5 + $0x47c] sm:$0xff]
  %v775 = vld [vmem:[%s5 + $0x484] sm:$0xf]
  %v776 = vld [vmem:[%s5 + $0x488] sm:$0xff]
  %v777 = vld [vmem:[%s5 + $0x490] sm:$0xff]
  %v778 = vld [vmem:[%s5 + $0x498] sm:$0xf]
  %v779 = vld [vmem:[%s5 + $0x49c] sm:$0xff]
  %v780 = vld [vmem:[%s5 + $0x4a4] sm:$0xff]
  %v781 = vld [vmem:[%s5 + $0x4ac] sm:$0xf]
  %v782 = vld [vmem:[%s5 + $0x4b0] sm:$0xff]
  %v783 = vld [vmem:[%s5 + $0x4b8] sm:$0xff]
  %v784 = vld [vmem:[%s5 + $0x4c0] sm:$0xf]
  %v785 = vld [vmem:[%s5 + $0x4c4] sm:$0xff]
  %v786 = vld [vmem:[%s5 + $0x4cc] sm:$0xff]
  %v787 = vld [vmem:[%s5 + $0x4d4] sm:$0xf]
  %v788 = vld [vmem:[%s5 + $0x4d8] sm:$0xff]
  %v789 = vld [vmem:[%s5 + $0x4e0] sm:$0xff]
  %v790 = vld [vmem:[%s5 + $0x4e8] sm:$0xf]
  %v791 = vld [vmem:[%s5 + $0x4ec] sm:$0xff]
  %v792 = vld [vmem:[%s5 + $0x4f4] sm:$0xff]
  %v793 = vld [vmem:[%s5 + $0x4fc] sm:$0xf]
  %v794 = vld [vmem:[%s5 + $0x500] sm:$0xff]
  %v795 = vld [vmem:[%s5 + $0x508] sm:$0xff]
  %v796 = vld [vmem:[%s5 + $0x510] sm:$0xf]
  %v797 = vld [vmem:[%s5 + $0x514] sm:$0xff]
  %v798 = vld [vmem:[%s5 + $0x51c] sm:$0xff]
  %v799 = vld [vmem:[%s5 + $0x524] sm:$0xf]
  %v800 = vld [vmem:[%s5 + $0x528] sm:$0xff]
  %v801 = vld [vmem:[%s5 + $0x530] sm:$0xff]
  %v802 = vld [vmem:[%s5 + $0x538] sm:$0xf]
  %v803 = vld [vmem:[%s5 + $0x53c] sm:$0xff]
  %v804 = vld [vmem:[%s5 + $0x544] sm:$0xff]
  %v805 = vld [vmem:[%s5 + $0x54c] sm:$0xf]
  %v806 = vld [vmem:[%s5 + $0x550] sm:$0xff]
  %v807 = vld [vmem:[%s5 + $0x558] sm:$0xff]
  %v808 = vld [vmem:[%s5 + $0x560] sm:$0xf]
  %v809 = vld [vmem:[%s5 + $0x564] sm:$0xff]
  %v810 = vld [vmem:[%s5 + $0x56c] sm:$0xff]
  %v811 = vld [vmem:[%s5 + $0x574] sm:$0xf]
  %v812 = vld [vmem:[%s5 + $0x578] sm:$0xff]
  %v813 = vld [vmem:[%s5 + $0x580] sm:$0xff]
  %v814 = vld [vmem:[%s5 + $0x588] sm:$0xf]
  %v815 = vld [vmem:[%s5 + $0x58c] sm:$0xff]
  %v816 = vld [vmem:[%s5 + $0x594] sm:$0xff]
  %v817 = vld [vmem:[%s5 + $0x59c] sm:$0xf]
  %v818 = vld [vmem:[%s5 + $0x5a0] sm:$0xff]
  %v819 = vld [vmem:[%s5 + $0x5a8] sm:$0xff]
  %v820 = vld [vmem:[%s5 + $0x5b0] sm:$0xf]
  %v821 = vld [vmem:[%s5 + $0x5b4] sm:$0xff]
  %v822 = vld [vmem:[%s5 + $0x5bc] sm:$0xff]
  %v823 = vld [vmem:[%s5 + $0x5c4] sm:$0xf]
  %v824 = vld [vmem:[%s5 + $0x5c8] sm:$0xff]
  %v825 = vld [vmem:[%s5 + $0x5d0] sm:$0xff]
  %v826 = vld [vmem:[%s5 + $0x5d8] sm:$0xf]
  %v827 = vld [vmem:[%s5 + $0x5dc] sm:$0xff]
  %v828 = vld [vmem:[%s5 + $0x5e4] sm:$0xff]
  %v829 = vld [vmem:[%s5 + $0x5ec] sm:$0xf]
  %v830 = vld [vmem:[%s5 + $0x5f0] sm:$0xff]
  %v831 = vld [vmem:[%s5 + $0x5f8] sm:$0xff]
  %v832 = vld [vmem:[%s5 + $0x600] sm:$0xf]
  %v833 = vld [vmem:[%s5 + $0x604] sm:$0xff]
  %v834 = vld [vmem:[%s5 + $0x60c] sm:$0xff]
  %v835 = vld [vmem:[%s5 + $0x614] sm:$0xf]
  %v836 = vld [vmem:[%s5 + $0x618] sm:$0xff]
  %v837 = vld [vmem:[%s5 + $0x620] sm:$0xff]
  %v838 = vld [vmem:[%s5 + $0x628] sm:$0xf]
  %v839 = vld [vmem:[%s5 + $0x62c] sm:$0xff]
  %v840 = vld [vmem:[%s5 + $0x634] sm:$0xff]
  %v841 = vld [vmem:[%s5 + $0x63c] sm:$0xf]
  %v842 = vld [vmem:[%s5 + $0x640] sm:$0xff]
  %v843 = vld [vmem:[%s5 + $0x648] sm:$0xff]
  %v844 = vld [vmem:[%s5 + $0x650] sm:$0xf]
  %v845 = vld [vmem:[%s5 + $0x654] sm:$0xff]
  %v846 = vld [vmem:[%s5 + $0x65c] sm:$0xff]
  %v847 = vld [vmem:[%s5 + $0x664] sm:$0xf]
  %v848 = vld [vmem:[%s5 + $0x668] sm:$0xff]
  %v849 = vld [vmem:[%s5 + $0x670] sm:$0xff]
  %v850 = vld [vmem:[%s5 + $0x678] sm:$0xf]
  %v851 = vld [vmem:[%s5 + $0x67c] sm:$0xff]
  %v852 = vld [vmem:[%s5 + $0x684] sm:$0xff]
  %v853 = vld [vmem:[%s5 + $0x68c] sm:$0xf]
  %v854 = vld [vmem:[%s5 + $0x690] sm:$0xff]
  %v855 = vld [vmem:[%s5 + $0x698] sm:$0xff]
  %v856 = vld [vmem:[%s5 + $0x6a0] sm:$0xf]
  %v857 = vld [vmem:[%s5 + $0x6a4] sm:$0xff]
  %v858 = vld [vmem:[%s5 + $0x6ac] sm:$0xff]
  %v859 = vld [vmem:[%s5 + $0x6b4] sm:$0xf]
  %v860 = vld [vmem:[%s5 + $0x6b8] sm:$0xff]
  %v861 = vld [vmem:[%s5 + $0x6c0] sm:$0xff]
  %v862 = vld [vmem:[%s5 + $0x6c8] sm:$0xf]
  %v863 = vld [vmem:[%s5 + $0x6cc] sm:$0xff]
  %v864 = vld [vmem:[%s5 + $0x6d4] sm:$0xff]
  %v865 = vld [vmem:[%s5 + $0x6dc] sm:$0xf]
  %v866 = vld [vmem:[%s5 + $0x6e0] sm:$0xff]
  %v867 = vld [vmem:[%s5 + $0x6e8] sm:$0xff]
  %v868 = vld [vmem:[%s5 + $0x6f0] sm:$0xf]
  %v869 = vld [vmem:[%s5 + $0x6f4] sm:$0xff]
  %v870 = vld [vmem:[%s5 + $0x6fc] sm:$0xff]
  %v871 = vld [vmem:[%s5 + $0x704] sm:$0xf]
  %v872 = vld [vmem:[%s5 + $0x708] sm:$0xff]
  %v873 = vld [vmem:[%s5 + $0x710] sm:$0xff]
  %v874 = vld [vmem:[%s5 + $0x718] sm:$0xf]
  %v875 = vld [vmem:[%s5 + $0x71c] sm:$0xff]
  %v876 = vld [vmem:[%s5 + $0x724] sm:$0xff]
  %v877 = vld [vmem:[%s5 + $0x72c] sm:$0xf]
  %v878 = vld [vmem:[%s5 + $0x730] sm:$0xff]
  %v879 = vld [vmem:[%s5 + $0x738] sm:$0xff]
  %v880 = vld [vmem:[%s5 + $0x740] sm:$0xf]
  %v881 = vld [vmem:[%s5 + $0x744] sm:$0xff]
  %v882 = vld [vmem:[%s5 + $0x74c] sm:$0xff]
  %v883 = vld [vmem:[%s5 + $0x754] sm:$0xf]
  %v884 = vld [vmem:[%s5 + $0x758] sm:$0xff]
  %v885 = vld [vmem:[%s5 + $0x760] sm:$0xff]
  %v886 = vld [vmem:[%s5 + $0x768] sm:$0xf]
  %v887 = vld [vmem:[%s5 + $0x76c] sm:$0xff]
  %v888 = vld [vmem:[%s5 + $0x774] sm:$0xff]
  %v889 = vld [vmem:[%s5 + $0x77c] sm:$0xf]
  %v890 = vld [vmem:[%s5 + $0x780] sm:$0xff]
  %v891 = vld [vmem:[%s5 + $0x788] sm:$0xff]
  %v892 = vld [vmem:[%s5 + $0x790] sm:$0xf]
  %v893 = vld [vmem:[%s5 + $0x794] sm:$0xff]
  %v894 = vld [vmem:[%s5 + $0x79c] sm:$0xff]
  %v895 = vld [vmem:[%s5 + $0x7a4] sm:$0xf]
  %v896 = vld [vmem:[%s5 + $0x7a8] sm:$0xff]
  %v897 = vld [vmem:[%s5 + $0x7b0] sm:$0xff]
  %v898 = vld [vmem:[%s5 + $0x7b8] sm:$0xf]
  %v899 = vld [vmem:[%s5 + $0x7bc] sm:$0xff]
  %v900 = vld [vmem:[%s5 + $0x7c4] sm:$0xff]
  %v901 = vld [vmem:[%s5 + $0x7cc] sm:$0xf]
  %v902 = vld [vmem:[%s5 + $0x7d0] sm:$0xff]
  %v903 = vld [vmem:[%s5 + $0x7d8] sm:$0xff]
  %v904 = vld [vmem:[%s5 + $0x7e0] sm:$0xf]
  %v905 = vld [vmem:[%s5 + $0x7e4] sm:$0xff]
  %v906 = vld [vmem:[%s5 + $0x7ec] sm:$0xff]
  %v907 = vld [vmem:[%s5 + $0x7f4] sm:$0xf]
  %v908 = vld [vmem:[%s5 + $0x7f8] sm:$0xff]
  %v909 = vld [vmem:[%s5 + $0x800] sm:$0xff]
  %v910 = vld [vmem:[%s5 + $0x808] sm:$0xf]
  %v911 = vld [vmem:[%s5 + $0x80c] sm:$0xff]
  %v912 = vld [vmem:[%s5 + $0x814] sm:$0xff]
  %v913 = vld [vmem:[%s5 + $0x81c] sm:$0xf]
  %v914 = vld [vmem:[%s5 + $0x820] sm:$0xff]
  %v915 = vld [vmem:[%s5 + $0x828] sm:$0xff]
  %v916 = vld [vmem:[%s5 + $0x830] sm:$0xf]
  %v917 = vld [vmem:[%s5 + $0x834] sm:$0xff]
  %v918 = vld [vmem:[%s5 + $0x83c] sm:$0xff]
  %v919 = vld [vmem:[%s5 + $0x844] sm:$0xf]
  %v920 = vld [vmem:[%s5 + $0x848] sm:$0xff]
  %v921 = vld [vmem:[%s5 + $0x850] sm:$0xff]
  %v922 = vld [vmem:[%s5 + $0x858] sm:$0xf]
  %v923 = vld [vmem:[%s5 + $0x85c] sm:$0xff]
  %v924 = vld [vmem:[%s5 + $0x864] sm:$0xff]
  %v925 = vld [vmem:[%s5 + $0x86c] sm:$0xf]
  %v926 = vld [vmem:[%s5 + $0x870] sm:$0xff]
  %v927 = vld [vmem:[%s5 + $0x878] sm:$0xff]
  %v928 = vld [vmem:[%s5 + $0x880] sm:$0xf]
  %v929 = vld [vmem:[%s5 + $0x884] sm:$0xff]
  %v930 = vld [vmem:[%s5 + $0x88c] sm:$0xff]
  %v931 = vld [vmem:[%s5 + $0x894] sm:$0xf]
  %v932 = vld [vmem:[%s5 + $0x898] sm:$0xff]
  %v933 = vld [vmem:[%s5 + $0x8a0] sm:$0xff]
  %v934 = vld [vmem:[%s5 + $0x8a8] sm:$0xf]
  %v935 = vld [vmem:[%s5 + $0x8ac] sm:$0xff]
  %v936 = vld [vmem:[%s5 + $0x8b4] sm:$0xff]
  %v937 = vld [vmem:[%s5 + $0x8bc] sm:$0xf]
  %v938 = vld [vmem:[%s5 + $0x8c0] sm:$0xff]
  %v939 = vld [vmem:[%s5 + $0x8c8] sm:$0xff]
  %v940 = vld [vmem:[%s5 + $0x8d0] sm:$0xf]
  %v941 = vld [vmem:[%s5 + $0x8d4] sm:$0xff]
  %v942 = vld [vmem:[%s5 + $0x8dc] sm:$0xff]
  %v943 = vld [vmem:[%s5 + $0x8e4] sm:$0xf]
  %v944 = vld [vmem:[%s5 + $0x8e8] sm:$0xff]
  %v945 = vld [vmem:[%s5 + $0x8f0] sm:$0xff]
  %v946 = vld [vmem:[%s5 + $0x8f8] sm:$0xf]
  %v947 = vld [vmem:[%s5 + $0x8fc] sm:$0xff]
  %v948 = vld [vmem:[%s5 + $0x904] sm:$0xff]
  %v949 = vld [vmem:[%s5 + $0x90c] sm:$0xf]
  %v950 = vld [vmem:[%s5 + $0x910] sm:$0xff]
  %v951 = vld [vmem:[%s5 + $0x918] sm:$0xff]
  %v952 = vld [vmem:[%s5 + $0x920] sm:$0xf]
  %v953 = vld [vmem:[%s5 + $0x924] sm:$0xff]
  %v954 = vld [vmem:[%s5 + $0x92c] sm:$0xff]
  %v955 = vld [vmem:[%s5 + $0x934] sm:$0xf]
  %v956 = vld [vmem:[%s5 + $0x938] sm:$0xff]
  %v957 = vld [vmem:[%s5 + $0x940] sm:$0xff]
  %v958 = vld [vmem:[%s5 + $0x948] sm:$0xf]
  %v959 = vld [vmem:[%s5 + $0x94c] sm:$0xff]
  %v960 = vld [vmem:[%s5 + $0x954] sm:$0xff]
  %v961 = vld [vmem:[%s5 + $0x95c] sm:$0xf]
  %v962 = vld [vmem:[%s5 + $0x960] sm:$0xff]
  %v963 = vld [vmem:[%s5 + $0x968] sm:$0xff]
  %v964 = vld [vmem:[%s5 + $0x970] sm:$0xf]
  %v965 = vld [vmem:[%s5 + $0x974] sm:$0xff]
  %v966 = vld [vmem:[%s5 + $0x97c] sm:$0xff]
  %v967 = vld [vmem:[%s5 + $0x984] sm:$0xf]
  %v968 = vld [vmem:[%s5 + $0x988] sm:$0xff]
  %v969 = vld [vmem:[%s5 + $0x990] sm:$0xff]
  %v970 = vld [vmem:[%s5 + $0x998] sm:$0xf]
  %v971 = vld [vmem:[%s5 + $0x99c] sm:$0xff]
  %v972 = vld [vmem:[%s5 + $0x9a4] sm:$0xff]
  %v973 = vld [vmem:[%s5 + $0x9ac] sm:$0xf]
  %v974 = vld [vmem:[%s5 + $0x9b0] sm:$0xff]
  %v975 = vld [vmem:[%s5 + $0x9b8] sm:$0xff]
  %v976 = vld [vmem:[%s5 + $0x9c0] sm:$0xf]
  %v977 = vld [vmem:[%s5 + $0x9c4] sm:$0xff]
  %v978 = vld [vmem:[%s5 + $0x9cc] sm:$0xff]
  %v979 = vld [vmem:[%s5 + $0x9d4] sm:$0xf]
  %v980 = vld [vmem:[%s5 + $0x9d8] sm:$0xff]
  %v981 = vld [vmem:[%s5 + $0x9e0] sm:$0xff]
  %v982 = vld [vmem:[%s5 + $0x9e8] sm:$0xf]
  %v983 = vld [vmem:[%s5 + $0x9ec] sm:$0xff]
  %v984 = vld [vmem:[%s5 + $0x9f4] sm:$0xff]
  %v985 = vld [vmem:[%s5 + $0x9fc] sm:$0xf]
  %v986 = vld [vmem:[%s5 + $0xa00] sm:$0xff]
  %v987 = vld [vmem:[%s5 + $0xa08] sm:$0xff]
  %v988 = vld [vmem:[%s5 + $0xa10] sm:$0xf]
  %v989 = vld [vmem:[%s5 + $0xa14] sm:$0xff]
  %v990 = vld [vmem:[%s5 + $0xa1c] sm:$0xff]
  %v991 = vld [vmem:[%s5 + $0xa24] sm:$0xf]
  %v992 = vld [vmem:[%s5 + $0xa28] sm:$0xff]
  %v993 = vld [vmem:[%s5 + $0xa30] sm:$0xff]
  %v994 = vld [vmem:[%s5 + $0xa38] sm:$0xf]
  %v995 = vld [vmem:[%s5 + $0xa3c] sm:$0xff]
  %v996 = vld [vmem:[%s5 + $0xa44] sm:$0xff]
  %v997 = vld [vmem:[%s5 + $0xa4c] sm:$0xf]
  %v998 = vld [vmem:[%s5 + $0xa50] sm:$0xff]
  %v999 = vld [vmem:[%s5 + $0xa58] sm:$0xff]
  %v1000 = vld [vmem:[%s5 + $0xa60] sm:$0xf]
  %v1001 = vld [vmem:[%s5 + $0xa64] sm:$0xff]
  %v1002 = vld [vmem:[%s5 + $0xa6c] sm:$0xff]
  %v1003 = vld [vmem:[%s5 + $0xa74] sm:$0xf]
  %v1004 = vld [vmem:[%s5 + $0xa78] sm:$0xff]
  %v1005 = vld [vmem:[%s5 + $0xa80] sm:$0xff]
  %v1006 = vld [vmem:[%s5 + $0xa88] sm:$0xf]
  %v1007 = vld [vmem:[%s5 + $0xa8c] sm:$0xff]
  %v1008 = vld [vmem:[%s5 + $0xa94] sm:$0xff]
  %v1009 = vld [vmem:[%s5 + $0xa9c] sm:$0xf]
  %v1010 = vld [vmem:[%s5 + $0xaa0] sm:$0xff]
  %v1011 = vld [vmem:[%s5 + $0xaa8] sm:$0xff]
  %v1012 = vld [vmem:[%s5 + $0xab0] sm:$0xf]
  %v1013 = vld [vmem:[%s5 + $0xab4] sm:$0xff]
  %v1014 = vld [vmem:[%s5 + $0xabc] sm:$0xff]
  %v1015 = vld [vmem:[%s5 + $0xac4] sm:$0xf]
  %v1016 = vld [vmem:[%s5 + $0xac8] sm:$0xff]
  %v1017 = vld [vmem:[%s5 + $0xad0] sm:$0xff]
  %v1018 = vld [vmem:[%s5 + $0xad8] sm:$0xf]
  %v1019 = vld [vmem:[%s5 + $0xadc] sm:$0xff]
  %v1020 = vld [vmem:[%s5 + $0xae4] sm:$0xff]
  %v1021 = vld [vmem:[%s5 + $0xaec] sm:$0xf]
  %v1022 = vld [vmem:[%s5 + $0xaf0] sm:$0xff]
  %v1023 = vld [vmem:[%s5 + $0xaf8] sm:$0xff]
  %v1024 = vld [vmem:[%s5 + $0xb00] sm:$0xf]
  %v1025 = vld [vmem:[%s5 + $0xb04] sm:$0xff]
  %v1026 = vld [vmem:[%s5 + $0xb0c] sm:$0xff]
  %v1027 = vld [vmem:[%s5 + $0xb14] sm:$0xf]
  %v1028 = vld [vmem:[%s5 + $0xb18] sm:$0xff]
  %v1029 = vld [vmem:[%s5 + $0xb20] sm:$0xff]
  %v1030 = vld [vmem:[%s5 + $0xb28] sm:$0xf]
  %v1031 = vld [vmem:[%s5 + $0xb2c] sm:$0xff]
  %v1032 = vld [vmem:[%s5 + $0xb34] sm:$0xff]
  %v1033 = vld [vmem:[%s5 + $0xb3c] sm:$0xf]
  %v1034 = vld [vmem:[%s6] sm:$0x1f]
  %v1036 = vlaneseq
  %v1037 = vshrl.u32 %v1036, 7
  %v1038 = vsub.s32 0, %v1037
  %v1039 = vrot.slane %v1034, %v1038
  %v1040 = vlaneseq
  %v1041 = vshrl.u32 %v1040, 7
  %v1042 = vsub.s32 1, %v1041
  %v1043 = vrot.slane %v1034, %v1042
  %v1044 = vlaneseq
  %v1045 = vshrl.u32 %v1044, 7
  %v1046 = vsub.s32 2, %v1045
  %v1047 = vrot.slane %v1034, %v1046
  %v1048 = vlaneseq
  %v1049 = vshrl.u32 %v1048, 7
  %v1050 = vsub.s32 3, %v1049
  %v1051 = vrot.slane %v1034, %v1050
  %v1052 = vlaneseq
  %v1053 = vshrl.u32 %v1052, 7
  %v1054 = vsub.s32 4, %v1053
  %v1055 = vrot.slane %v1034, %v1054
  %v1493 = vunpack.c.l.b16 %v602
  %v1494 = vunpack.c.h.b16 %v602
  %v1495 = vunpack.c.l.b16 %v603
  %v1496 = vunpack.c.h.b16 %v603
  %v1497 = vunpack.c.l.b16 %v604
  %v1498 = vunpack.c.l.b16 %v605
  %v1499 = vunpack.c.h.b16 %v605
  %v1500 = vunpack.c.l.b16 %v606
  %v1501 = vunpack.c.h.b16 %v606
  %v1502 = vunpack.c.l.b16 %v607
  %v1503 = vunpack.c.l.b16 %v608
  %v1504 = vunpack.c.h.b16 %v608
  %v1505 = vunpack.c.l.b16 %v609
  %v1506 = vunpack.c.h.b16 %v609
  %v1507 = vunpack.c.l.b16 %v610
  %v1508 = vunpack.c.l.b16 %v611
  %v1509 = vunpack.c.h.b16 %v611
  %v1510 = vunpack.c.l.b16 %v612
  %v1511 = vunpack.c.h.b16 %v612
  %v1512 = vunpack.c.l.b16 %v613
  %v1513 = vunpack.c.l.b16 %v614
  %v1514 = vunpack.c.h.b16 %v614
  %v1515 = vunpack.c.l.b16 %v615
  %v1516 = vunpack.c.h.b16 %v615
  %v1517 = vunpack.c.l.b16 %v616
  %v1518 = vunpack.c.l.b16 %v617
  %v1519 = vunpack.c.h.b16 %v617
  %v1520 = vunpack.c.l.b16 %v618
  %v1521 = vunpack.c.h.b16 %v618
  %v1522 = vunpack.c.l.b16 %v619
  %v1523 = vunpack.c.l.b16 %v620
  %v1524 = vunpack.c.h.b16 %v620
  %v1525 = vunpack.c.l.b16 %v621
  %v1526 = vunpack.c.h.b16 %v621
  %v1527 = vunpack.c.l.b16 %v622
  %v1528 = vunpack.c.l.b16 %v623
  %v1529 = vunpack.c.h.b16 %v623
  %v1530 = vunpack.c.l.b16 %v624
  %v1531 = vunpack.c.h.b16 %v624
  %v1532 = vunpack.c.l.b16 %v625
  %v1533 = vunpack.c.l.b16 %v626
  %v1534 = vunpack.c.h.b16 %v626
  %v1535 = vunpack.c.l.b16 %v627
  %v1536 = vunpack.c.h.b16 %v627
  %v1537 = vunpack.c.l.b16 %v628
  %v1538 = vunpack.c.l.b16 %v629
  %v1539 = vunpack.c.h.b16 %v629
  %v1540 = vunpack.c.l.b16 %v630
  %v1541 = vunpack.c.h.b16 %v630
  %v1542 = vunpack.c.l.b16 %v631
  %v1543 = vunpack.c.l.b16 %v632
  %v1544 = vunpack.c.h.b16 %v632
  %v1545 = vunpack.c.l.b16 %v633
  %v1546 = vunpack.c.h.b16 %v633
  %v1547 = vunpack.c.l.b16 %v634
  %v1548 = vunpack.c.l.b16 %v635
  %v1549 = vunpack.c.h.b16 %v635
  %v1550 = vunpack.c.l.b16 %v636
  %v1551 = vunpack.c.h.b16 %v636
  %v1552 = vunpack.c.l.b16 %v637
  %v1553 = vunpack.c.l.b16 %v638
  %v1554 = vunpack.c.h.b16 %v638
  %v1555 = vunpack.c.l.b16 %v639
  %v1556 = vunpack.c.h.b16 %v639
  %v1557 = vunpack.c.l.b16 %v640
  %v1558 = vunpack.c.l.b16 %v641
  %v1559 = vunpack.c.h.b16 %v641
  %v1560 = vunpack.c.l.b16 %v642
  %v1561 = vunpack.c.h.b16 %v642
  %v1562 = vunpack.c.l.b16 %v643
  %v1563 = vunpack.c.l.b16 %v644
  %v1564 = vunpack.c.h.b16 %v644
  %v1565 = vunpack.c.l.b16 %v645
  %v1566 = vunpack.c.h.b16 %v645
  %v1567 = vunpack.c.l.b16 %v646
  %v1568 = vunpack.c.l.b16 %v647
  %v1569 = vunpack.c.h.b16 %v647
  %v1570 = vunpack.c.l.b16 %v648
  %v1571 = vunpack.c.h.b16 %v648
  %v1572 = vunpack.c.l.b16 %v649
  %v1573 = vunpack.c.l.b16 %v650
  %v1574 = vunpack.c.h.b16 %v650
  %v1575 = vunpack.c.l.b16 %v651
  %v1576 = vunpack.c.h.b16 %v651
  %v1577 = vunpack.c.l.b16 %v652
  %v1578 = vunpack.c.l.b16 %v653
  %v1579 = vunpack.c.h.b16 %v653
  %v1580 = vunpack.c.l.b16 %v654
  %v1581 = vunpack.c.h.b16 %v654
  %v1582 = vunpack.c.l.b16 %v655
  %v1583 = vunpack.c.l.b16 %v656
  %v1584 = vunpack.c.h.b16 %v656
  %v1585 = vunpack.c.l.b16 %v657
  %v1586 = vunpack.c.h.b16 %v657
  %v1587 = vunpack.c.l.b16 %v658
  %v1588 = vunpack.c.l.b16 %v659
  %v1589 = vunpack.c.h.b16 %v659
  %v1590 = vunpack.c.l.b16 %v660
  %v1591 = vunpack.c.h.b16 %v660
  %v1592 = vunpack.c.l.b16 %v661
  %v1593 = vunpack.c.l.b16 %v662
  %v1594 = vunpack.c.h.b16 %v662
  %v1595 = vunpack.c.l.b16 %v663
  %v1596 = vunpack.c.h.b16 %v663
  %v1597 = vunpack.c.l.b16 %v664
  %v1598 = vunpack.c.l.b16 %v665
  %v1599 = vunpack.c.h.b16 %v665
  %v1600 = vunpack.c.l.b16 %v666
  %v1601 = vunpack.c.h.b16 %v666
  %v1602 = vunpack.c.l.b16 %v667
  %v1603 = vunpack.c.l.b16 %v668
  %v1604 = vunpack.c.h.b16 %v668
  %v1605 = vunpack.c.l.b16 %v669
  %v1606 = vunpack.c.h.b16 %v669
  %v1607 = vunpack.c.l.b16 %v670
  %v1608 = vunpack.c.l.b16 %v671
  %v1609 = vunpack.c.h.b16 %v671
  %v1610 = vunpack.c.l.b16 %v672
  %v1611 = vunpack.c.h.b16 %v672
  %v1612 = vunpack.c.l.b16 %v673
  %v1613 = vunpack.c.l.b16 %v674
  %v1614 = vunpack.c.h.b16 %v674
  %v1615 = vunpack.c.l.b16 %v675
  %v1616 = vunpack.c.h.b16 %v675
  %v1617 = vunpack.c.l.b16 %v676
  %v1618 = vunpack.c.l.b16 %v677
  %v1619 = vunpack.c.h.b16 %v677
  %v1620 = vunpack.c.l.b16 %v678
  %v1621 = vunpack.c.h.b16 %v678
  %v1622 = vunpack.c.l.b16 %v679
  %v1623 = vunpack.c.l.b16 %v680
  %v1624 = vunpack.c.h.b16 %v680
  %v1625 = vunpack.c.l.b16 %v681
  %v1626 = vunpack.c.h.b16 %v681
  %v1627 = vunpack.c.l.b16 %v682
  %v1628 = vunpack.c.l.b16 %v683
  %v1629 = vunpack.c.h.b16 %v683
  %v1630 = vunpack.c.l.b16 %v684
  %v1631 = vunpack.c.h.b16 %v684
  %v1632 = vunpack.c.l.b16 %v685
  %v1633 = vunpack.c.l.b16 %v686
  %v1634 = vunpack.c.h.b16 %v686
  %v1635 = vunpack.c.l.b16 %v687
  %v1636 = vunpack.c.h.b16 %v687
  %v1637 = vunpack.c.l.b16 %v688
  %v1638 = vunpack.c.l.b16 %v689
  %v1639 = vunpack.c.h.b16 %v689
  %v1640 = vunpack.c.l.b16 %v690
  %v1641 = vunpack.c.h.b16 %v690
  %v1642 = vunpack.c.l.b16 %v691
  %v1643 = vunpack.c.l.b16 %v692
  %v1644 = vunpack.c.h.b16 %v692
  %v1645 = vunpack.c.l.b16 %v693
  %v1646 = vunpack.c.h.b16 %v693
  %v1647 = vunpack.c.l.b16 %v694
  %v1648 = vunpack.c.l.b16 %v695
  %v1649 = vunpack.c.h.b16 %v695
  %v1650 = vunpack.c.l.b16 %v696
  %v1651 = vunpack.c.h.b16 %v696
  %v1652 = vunpack.c.l.b16 %v697
  %v1653 = vunpack.c.l.b16 %v698
  %v1654 = vunpack.c.h.b16 %v698
  %v1655 = vunpack.c.l.b16 %v699
  %v1656 = vunpack.c.h.b16 %v699
  %v1657 = vunpack.c.l.b16 %v700
  %v1658 = vunpack.c.l.b16 %v701
  %v1659 = vunpack.c.h.b16 %v701
  %v1660 = vunpack.c.l.b16 %v702
  %v1661 = vunpack.c.h.b16 %v702
  %v1662 = vunpack.c.l.b16 %v703
  %v1663 = vunpack.c.l.b16 %v704
  %v1664 = vunpack.c.h.b16 %v704
  %v1665 = vunpack.c.l.b16 %v705
  %v1666 = vunpack.c.h.b16 %v705
  %v1667 = vunpack.c.l.b16 %v706
  %v1668 = vunpack.c.l.b16 %v707
  %v1669 = vunpack.c.h.b16 %v707
  %v1670 = vunpack.c.l.b16 %v708
  %v1671 = vunpack.c.h.b16 %v708
  %v1672 = vunpack.c.l.b16 %v709
  %v1673 = vunpack.c.l.b16 %v710
  %v1674 = vunpack.c.h.b16 %v710
  %v1675 = vunpack.c.l.b16 %v711
  %v1676 = vunpack.c.h.b16 %v711
  %v1677 = vunpack.c.l.b16 %v712
  %v1678 = vunpack.c.l.b16 %v713
  %v1679 = vunpack.c.h.b16 %v713
  %v1680 = vunpack.c.l.b16 %v714
  %v1681 = vunpack.c.h.b16 %v714
  %v1682 = vunpack.c.l.b16 %v715
  %v1683 = vunpack.c.l.b16 %v716
  %v1684 = vunpack.c.h.b16 %v716
  %v1685 = vunpack.c.l.b16 %v717
  %v1686 = vunpack.c.h.b16 %v717
  %v1687 = vunpack.c.l.b16 %v718
  %v1688 = vunpack.c.l.b16 %v719
  %v1689 = vunpack.c.h.b16 %v719
  %v1690 = vunpack.c.l.b16 %v720
  %v1691 = vunpack.c.h.b16 %v720
  %v1692 = vunpack.c.l.b16 %v721
  %v1693 = vunpack.c.l.b16 %v722
  %v1694 = vunpack.c.h.b16 %v722
  %v1695 = vunpack.c.l.b16 %v723
  %v1696 = vunpack.c.h.b16 %v723
  %v1697 = vunpack.c.l.b16 %v724
  %v1698 = vunpack.c.l.b16 %v725
  %v1699 = vunpack.c.h.b16 %v725
  %v1700 = vunpack.c.l.b16 %v726
  %v1701 = vunpack.c.h.b16 %v726
  %v1702 = vunpack.c.l.b16 %v727
  %v1703 = vunpack.c.l.b16 %v728
  %v1704 = vunpack.c.h.b16 %v728
  %v1705 = vunpack.c.l.b16 %v729
  %v1706 = vunpack.c.h.b16 %v729
  %v1707 = vunpack.c.l.b16 %v730
  %v1708 = vunpack.c.l.b16 %v731
  %v1709 = vunpack.c.h.b16 %v731
  %v1710 = vunpack.c.l.b16 %v732
  %v1711 = vunpack.c.h.b16 %v732
  %v1712 = vunpack.c.l.b16 %v733
  %v1713 = vunpack.c.l.b16 %v734
  %v1714 = vunpack.c.h.b16 %v734
  %v1715 = vunpack.c.l.b16 %v735
  %v1716 = vunpack.c.h.b16 %v735
  %v1717 = vunpack.c.l.b16 %v736
  %v1718 = vunpack.c.l.b16 %v737
  %v1719 = vunpack.c.h.b16 %v737
  %v1720 = vunpack.c.l.b16 %v738
  %v1721 = vunpack.c.h.b16 %v738
  %v1722 = vunpack.c.l.b16 %v739
  %v1723 = vunpack.c.l.b16 %v740
  %v1724 = vunpack.c.h.b16 %v740
  %v1725 = vunpack.c.l.b16 %v741
  %v1726 = vunpack.c.h.b16 %v741
  %v1727 = vunpack.c.l.b16 %v742
  %v1728 = vunpack.c.l.b16 %v743
  %v1729 = vunpack.c.h.b16 %v743
  %v1730 = vunpack.c.l.b16 %v744
  %v1731 = vunpack.c.h.b16 %v744
  %v1732 = vunpack.c.l.b16 %v745
  %v1733 = vunpack.c.l.b16 %v746
  %v1734 = vunpack.c.h.b16 %v746
  %v1735 = vunpack.c.l.b16 %v747
  %v1736 = vunpack.c.h.b16 %v747
  %v1737 = vunpack.c.l.b16 %v748
  %v1738 = vunpack.c.l.b16 %v749
  %v1739 = vunpack.c.h.b16 %v749
  %v1740 = vunpack.c.l.b16 %v750
  %v1741 = vunpack.c.h.b16 %v750
  %v1742 = vunpack.c.l.b16 %v751
  %v1743 = vunpack.c.l.b16 %v752
  %v1744 = vunpack.c.h.b16 %v752
  %v1745 = vunpack.c.l.b16 %v753
  %v1746 = vunpack.c.h.b16 %v753
  %v1747 = vunpack.c.l.b16 %v754
  %v1748 = vunpack.c.l.b16 %v755
  %v1749 = vunpack.c.h.b16 %v755
  %v1750 = vunpack.c.l.b16 %v756
  %v1751 = vunpack.c.h.b16 %v756
  %v1752 = vunpack.c.l.b16 %v757
  %v1753 = vunpack.c.l.b16 %v758
  %v1754 = vunpack.c.h.b16 %v758
  %v1755 = vunpack.c.l.b16 %v759
  %v1756 = vunpack.c.h.b16 %v759
  %v1757 = vunpack.c.l.b16 %v760
  %v1758 = vunpack.c.l.b16 %v761
  %v1759 = vunpack.c.h.b16 %v761
  %v1760 = vunpack.c.l.b16 %v762
  %v1761 = vunpack.c.h.b16 %v762
  %v1762 = vunpack.c.l.b16 %v763
  %v1763 = vunpack.c.l.b16 %v764
  %v1764 = vunpack.c.h.b16 %v764
  %v1765 = vunpack.c.l.b16 %v765
  %v1766 = vunpack.c.h.b16 %v765
  %v1767 = vunpack.c.l.b16 %v766
  %v1768 = vunpack.c.l.b16 %v767
  %v1769 = vunpack.c.h.b16 %v767
  %v1770 = vunpack.c.l.b16 %v768
  %v1771 = vunpack.c.h.b16 %v768
  %v1772 = vunpack.c.l.b16 %v769
  %v1773 = vunpack.c.l.b16 %v770
  %v1774 = vunpack.c.h.b16 %v770
  %v1775 = vunpack.c.l.b16 %v771
  %v1776 = vunpack.c.h.b16 %v771
  %v1777 = vunpack.c.l.b16 %v772
  %v1778 = vunpack.c.l.b16 %v773
  %v1779 = vunpack.c.h.b16 %v773
  %v1780 = vunpack.c.l.b16 %v774
  %v1781 = vunpack.c.h.b16 %v774
  %v1782 = vunpack.c.l.b16 %v775
  %v1783 = vunpack.c.l.b16 %v776
  %v1784 = vunpack.c.h.b16 %v776
  %v1785 = vunpack.c.l.b16 %v777
  %v1786 = vunpack.c.h.b16 %v777
  %v1787 = vunpack.c.l.b16 %v778
  %v1788 = vunpack.c.l.b16 %v779
  %v1789 = vunpack.c.h.b16 %v779
  %v1790 = vunpack.c.l.b16 %v780
  %v1791 = vunpack.c.h.b16 %v780
  %v1792 = vunpack.c.l.b16 %v781
  %v1793 = vunpack.c.l.b16 %v782
  %v1794 = vunpack.c.h.b16 %v782
  %v1795 = vunpack.c.l.b16 %v783
  %v1796 = vunpack.c.h.b16 %v783
  %v1797 = vunpack.c.l.b16 %v784
  %v1798 = vunpack.c.l.b16 %v785
  %v1799 = vunpack.c.h.b16 %v785
  %v1800 = vunpack.c.l.b16 %v786
  %v1801 = vunpack.c.h.b16 %v786
  %v1802 = vunpack.c.l.b16 %v787
  %v1803 = vunpack.c.l.b16 %v788
  %v1804 = vunpack.c.h.b16 %v788
  %v1805 = vunpack.c.l.b16 %v789
  %v1806 = vunpack.c.h.b16 %v789
  %v1807 = vunpack.c.l.b16 %v790
  %v1808 = vunpack.c.l.b16 %v791
  %v1809 = vunpack.c.h.b16 %v791
  %v1810 = vunpack.c.l.b16 %v792
  %v1811 = vunpack.c.h.b16 %v792
  %v1812 = vunpack.c.l.b16 %v793
  %v1813 = vunpack.c.l.b16 %v794
  %v1814 = vunpack.c.h.b16 %v794
  %v1815 = vunpack.c.l.b16 %v795
  %v1816 = vunpack.c.h.b16 %v795
  %v1817 = vunpack.c.l.b16 %v796
  %v1818 = vunpack.c.l.b16 %v797
  %v1819 = vunpack.c.h.b16 %v797
  %v1820 = vunpack.c.l.b16 %v798
  %v1821 = vunpack.c.h.b16 %v798
  %v1822 = vunpack.c.l.b16 %v799
  %v1823 = vunpack.c.l.b16 %v800
  %v1824 = vunpack.c.h.b16 %v800
  %v1825 = vunpack.c.l.b16 %v801
  %v1826 = vunpack.c.h.b16 %v801
  %v1827 = vunpack.c.l.b16 %v802
  %v1828 = vunpack.c.l.b16 %v803
  %v1829 = vunpack.c.h.b16 %v803
  %v1830 = vunpack.c.l.b16 %v804
  %v1831 = vunpack.c.h.b16 %v804
  %v1832 = vunpack.c.l.b16 %v805
  %v1833 = vunpack.c.l.b16 %v806
  %v1834 = vunpack.c.h.b16 %v806
  %v1835 = vunpack.c.l.b16 %v807
  %v1836 = vunpack.c.h.b16 %v807
  %v1837 = vunpack.c.l.b16 %v808
  %v1838 = vunpack.c.l.b16 %v809
  %v1839 = vunpack.c.h.b16 %v809
  %v1840 = vunpack.c.l.b16 %v810
  %v1841 = vunpack.c.h.b16 %v810
  %v1842 = vunpack.c.l.b16 %v811
  %v1843 = vunpack.c.l.b16 %v812
  %v1844 = vunpack.c.h.b16 %v812
  %v1845 = vunpack.c.l.b16 %v813
  %v1846 = vunpack.c.h.b16 %v813
  %v1847 = vunpack.c.l.b16 %v814
  %v1848 = vunpack.c.l.b16 %v815
  %v1849 = vunpack.c.h.b16 %v815
  %v1850 = vunpack.c.l.b16 %v816
  %v1851 = vunpack.c.h.b16 %v816
  %v1852 = vunpack.c.l.b16 %v817
  %v1853 = vunpack.c.l.b16 %v818
  %v1854 = vunpack.c.h.b16 %v818
  %v1855 = vunpack.c.l.b16 %v819
  %v1856 = vunpack.c.h.b16 %v819
  %v1857 = vunpack.c.l.b16 %v820
  %v1858 = vunpack.c.l.b16 %v821
  %v1859 = vunpack.c.h.b16 %v821
  %v1860 = vunpack.c.l.b16 %v822
  %v1861 = vunpack.c.h.b16 %v822
  %v1862 = vunpack.c.l.b16 %v823
  %v1863 = vunpack.c.l.b16 %v824
  %v1864 = vunpack.c.h.b16 %v824
  %v1865 = vunpack.c.l.b16 %v825
  %v1866 = vunpack.c.h.b16 %v825
  %v1867 = vunpack.c.l.b16 %v826
  %v1868 = vunpack.c.l.b16 %v827
  %v1869 = vunpack.c.h.b16 %v827
  %v1870 = vunpack.c.l.b16 %v828
  %v1871 = vunpack.c.h.b16 %v828
  %v1872 = vunpack.c.l.b16 %v829
  %v1873 = vunpack.c.l.b16 %v830
  %v1874 = vunpack.c.h.b16 %v830
  %v1875 = vunpack.c.l.b16 %v831
  %v1876 = vunpack.c.h.b16 %v831
  %v1877 = vunpack.c.l.b16 %v832
  %v1878 = vunpack.c.l.b16 %v833
  %v1879 = vunpack.c.h.b16 %v833
  %v1880 = vunpack.c.l.b16 %v834
  %v1881 = vunpack.c.h.b16 %v834
  %v1882 = vunpack.c.l.b16 %v835
  %v1883 = vunpack.c.l.b16 %v836
  %v1884 = vunpack.c.h.b16 %v836
  %v1885 = vunpack.c.l.b16 %v837
  %v1886 = vunpack.c.h.b16 %v837
  %v1887 = vunpack.c.l.b16 %v838
  %v1888 = vunpack.c.l.b16 %v839
  %v1889 = vunpack.c.h.b16 %v839
  %v1890 = vunpack.c.l.b16 %v840
  %v1891 = vunpack.c.h.b16 %v840
  %v1892 = vunpack.c.l.b16 %v841
  %v1893 = vunpack.c.l.b16 %v842
  %v1894 = vunpack.c.h.b16 %v842
  %v1895 = vunpack.c.l.b16 %v843
  %v1896 = vunpack.c.h.b16 %v843
  %v1897 = vunpack.c.l.b16 %v844
  %v1898 = vunpack.c.l.b16 %v845
  %v1899 = vunpack.c.h.b16 %v845
  %v1900 = vunpack.c.l.b16 %v846
  %v1901 = vunpack.c.h.b16 %v846
  %v1902 = vunpack.c.l.b16 %v847
  %v1903 = vunpack.c.l.b16 %v848
  %v1904 = vunpack.c.h.b16 %v848
  %v1905 = vunpack.c.l.b16 %v849
  %v1906 = vunpack.c.h.b16 %v849
  %v1907 = vunpack.c.l.b16 %v850
  %v1908 = vunpack.c.l.b16 %v851
  %v1909 = vunpack.c.h.b16 %v851
  %v1910 = vunpack.c.l.b16 %v852
  %v1911 = vunpack.c.h.b16 %v852
  %v1912 = vunpack.c.l.b16 %v853
  %v1913 = vunpack.c.l.b16 %v854
  %v1914 = vunpack.c.h.b16 %v854
  %v1915 = vunpack.c.l.b16 %v855
  %v1916 = vunpack.c.h.b16 %v855
  %v1917 = vunpack.c.l.b16 %v856
  %v1918 = vunpack.c.l.b16 %v857
  %v1919 = vunpack.c.h.b16 %v857
  %v1920 = vunpack.c.l.b16 %v858
  %v1921 = vunpack.c.h.b16 %v858
  %v1922 = vunpack.c.l.b16 %v859
  %v1923 = vunpack.c.l.b16 %v860
  %v1924 = vunpack.c.h.b16 %v860
  %v1925 = vunpack.c.l.b16 %v861
  %v1926 = vunpack.c.h.b16 %v861
  %v1927 = vunpack.c.l.b16 %v862
  %v1928 = vunpack.c.l.b16 %v863
  %v1929 = vunpack.c.h.b16 %v863
  %v1930 = vunpack.c.l.b16 %v864
  %v1931 = vunpack.c.h.b16 %v864
  %v1932 = vunpack.c.l.b16 %v865
  %v1933 = vunpack.c.l.b16 %v866
  %v1934 = vunpack.c.h.b16 %v866
  %v1935 = vunpack.c.l.b16 %v867
  %v1936 = vunpack.c.h.b16 %v867
  %v1937 = vunpack.c.l.b16 %v868
  %v1938 = vunpack.c.l.b16 %v869
  %v1939 = vunpack.c.h.b16 %v869
  %v1940 = vunpack.c.l.b16 %v870
  %v1941 = vunpack.c.h.b16 %v870
  %v1942 = vunpack.c.l.b16 %v871
  %v1943 = vunpack.c.l.b16 %v872
  %v1944 = vunpack.c.h.b16 %v872
  %v1945 = vunpack.c.l.b16 %v873
  %v1946 = vunpack.c.h.b16 %v873
  %v1947 = vunpack.c.l.b16 %v874
  %v1948 = vunpack.c.l.b16 %v875
  %v1949 = vunpack.c.h.b16 %v875
  %v1950 = vunpack.c.l.b16 %v876
  %v1951 = vunpack.c.h.b16 %v876
  %v1952 = vunpack.c.l.b16 %v877
  %v1953 = vunpack.c.l.b16 %v878
  %v1954 = vunpack.c.h.b16 %v878
  %v1955 = vunpack.c.l.b16 %v879
  %v1956 = vunpack.c.h.b16 %v879
  %v1957 = vunpack.c.l.b16 %v880
  %v1958 = vunpack.c.l.b16 %v881
  %v1959 = vunpack.c.h.b16 %v881
  %v1960 = vunpack.c.l.b16 %v882
  %v1961 = vunpack.c.h.b16 %v882
  %v1962 = vunpack.c.l.b16 %v883
  %v1963 = vunpack.c.l.b16 %v884
  %v1964 = vunpack.c.h.b16 %v884
  %v1965 = vunpack.c.l.b16 %v885
  %v1966 = vunpack.c.h.b16 %v885
  %v1967 = vunpack.c.l.b16 %v886
  %v1968 = vunpack.c.l.b16 %v887
  %v1969 = vunpack.c.h.b16 %v887
  %v1970 = vunpack.c.l.b16 %v888
  %v1971 = vunpack.c.h.b16 %v888
  %v1972 = vunpack.c.l.b16 %v889
  %v1973 = vunpack.c.l.b16 %v890
  %v1974 = vunpack.c.h.b16 %v890
  %v1975 = vunpack.c.l.b16 %v891
  %v1976 = vunpack.c.h.b16 %v891
  %v1977 = vunpack.c.l.b16 %v892
  %v1978 = vunpack.c.l.b16 %v893
  %v1979 = vunpack.c.h.b16 %v893
  %v1980 = vunpack.c.l.b16 %v894
  %v1981 = vunpack.c.h.b16 %v894
  %v1982 = vunpack.c.l.b16 %v895
  %v1983 = vunpack.c.l.b16 %v896
  %v1984 = vunpack.c.h.b16 %v896
  %v1985 = vunpack.c.l.b16 %v897
  %v1986 = vunpack.c.h.b16 %v897
  %v1987 = vunpack.c.l.b16 %v898
  %v1988 = vunpack.c.l.b16 %v899
  %v1989 = vunpack.c.h.b16 %v899
  %v1990 = vunpack.c.l.b16 %v900
  %v1991 = vunpack.c.h.b16 %v900
  %v1992 = vunpack.c.l.b16 %v901
  %v1993 = vunpack.c.l.b16 %v902
  %v1994 = vunpack.c.h.b16 %v902
  %v1995 = vunpack.c.l.b16 %v903
  %v1996 = vunpack.c.h.b16 %v903
  %v1997 = vunpack.c.l.b16 %v904
  %v1998 = vunpack.c.l.b16 %v905
  %v1999 = vunpack.c.h.b16 %v905
  %v2000 = vunpack.c.l.b16 %v906
  %v2001 = vunpack.c.h.b16 %v906
  %v2002 = vunpack.c.l.b16 %v907
  %v2003 = vunpack.c.l.b16 %v908
  %v2004 = vunpack.c.h.b16 %v908
  %v2005 = vunpack.c.l.b16 %v909
  %v2006 = vunpack.c.h.b16 %v909
  %v2007 = vunpack.c.l.b16 %v910
  %v2008 = vunpack.c.l.b16 %v911
  %v2009 = vunpack.c.h.b16 %v911
  %v2010 = vunpack.c.l.b16 %v912
  %v2011 = vunpack.c.h.b16 %v912
  %v2012 = vunpack.c.l.b16 %v913
  %v2013 = vunpack.c.l.b16 %v914
  %v2014 = vunpack.c.h.b16 %v914
  %v2015 = vunpack.c.l.b16 %v915
  %v2016 = vunpack.c.h.b16 %v915
  %v2017 = vunpack.c.l.b16 %v916
  %v2018 = vunpack.c.l.b16 %v917
  %v2019 = vunpack.c.h.b16 %v917
  %v2020 = vunpack.c.l.b16 %v918
  %v2021 = vunpack.c.h.b16 %v918
  %v2022 = vunpack.c.l.b16 %v919
  %v2023 = vunpack.c.l.b16 %v920
  %v2024 = vunpack.c.h.b16 %v920
  %v2025 = vunpack.c.l.b16 %v921
  %v2026 = vunpack.c.h.b16 %v921
  %v2027 = vunpack.c.l.b16 %v922
  %v2028 = vunpack.c.l.b16 %v923
  %v2029 = vunpack.c.h.b16 %v923
  %v2030 = vunpack.c.l.b16 %v924
  %v2031 = vunpack.c.h.b16 %v924
  %v2032 = vunpack.c.l.b16 %v925
  %v2033 = vunpack.c.l.b16 %v926
  %v2034 = vunpack.c.h.b16 %v926
  %v2035 = vunpack.c.l.b16 %v927
  %v2036 = vunpack.c.h.b16 %v927
  %v2037 = vunpack.c.l.b16 %v928
  %v2038 = vunpack.c.l.b16 %v929
  %v2039 = vunpack.c.h.b16 %v929
  %v2040 = vunpack.c.l.b16 %v930
  %v2041 = vunpack.c.h.b16 %v930
  %v2042 = vunpack.c.l.b16 %v931
  %v2043 = vunpack.c.l.b16 %v932
  %v2044 = vunpack.c.h.b16 %v932
  %v2045 = vunpack.c.l.b16 %v933
  %v2046 = vunpack.c.h.b16 %v933
  %v2047 = vunpack.c.l.b16 %v934
  %v2048 = vunpack.c.l.b16 %v935
  %v2049 = vunpack.c.h.b16 %v935
  %v2050 = vunpack.c.l.b16 %v936
  %v2051 = vunpack.c.h.b16 %v936
  %v2052 = vunpack.c.l.b16 %v937
  %v2053 = vunpack.c.l.b16 %v938
  %v2054 = vunpack.c.h.b16 %v938
  %v2055 = vunpack.c.l.b16 %v939
  %v2056 = vunpack.c.h.b16 %v939
  %v2057 = vunpack.c.l.b16 %v940
  %v2058 = vunpack.c.l.b16 %v941
  %v2059 = vunpack.c.h.b16 %v941
  %v2060 = vunpack.c.l.b16 %v942
  %v2061 = vunpack.c.h.b16 %v942
  %v2062 = vunpack.c.l.b16 %v943
  %v2063 = vunpack.c.l.b16 %v944
  %v2064 = vunpack.c.h.b16 %v944
  %v2065 = vunpack.c.l.b16 %v945
  %v2066 = vunpack.c.h.b16 %v945
  %v2067 = vunpack.c.l.b16 %v946
  %v2068 = vunpack.c.l.b16 %v947
  %v2069 = vunpack.c.h.b16 %v947
  %v2070 = vunpack.c.l.b16 %v948
  %v2071 = vunpack.c.h.b16 %v948
  %v2072 = vunpack.c.l.b16 %v949
  %v2073 = vunpack.c.l.b16 %v950
  %v2074 = vunpack.c.h.b16 %v950
  %v2075 = vunpack.c.l.b16 %v951
  %v2076 = vunpack.c.h.b16 %v951
  %v2077 = vunpack.c.l.b16 %v952
  %v2078 = vunpack.c.l.b16 %v953
  %v2079 = vunpack.c.h.b16 %v953
  %v2080 = vunpack.c.l.b16 %v954
  %v2081 = vunpack.c.h.b16 %v954
  %v2082 = vunpack.c.l.b16 %v955
  %v2083 = vunpack.c.l.b16 %v956
  %v2084 = vunpack.c.h.b16 %v956
  %v2085 = vunpack.c.l.b16 %v957
  %v2086 = vunpack.c.h.b16 %v957
  %v2087 = vunpack.c.l.b16 %v958
  %v2088 = vunpack.c.l.b16 %v959
  %v2089 = vunpack.c.h.b16 %v959
  %v2090 = vunpack.c.l.b16 %v960
  %v2091 = vunpack.c.h.b16 %v960
  %v2092 = vunpack.c.l.b16 %v961
  %v2093 = vunpack.c.l.b16 %v962
  %v2094 = vunpack.c.h.b16 %v962
  %v2095 = vunpack.c.l.b16 %v963
  %v2096 = vunpack.c.h.b16 %v963
  %v2097 = vunpack.c.l.b16 %v964
  %v2098 = vunpack.c.l.b16 %v965
  %v2099 = vunpack.c.h.b16 %v965
  %v2100 = vunpack.c.l.b16 %v966
  %v2101 = vunpack.c.h.b16 %v966
  %v2102 = vunpack.c.l.b16 %v967
  %v2103 = vunpack.c.l.b16 %v968
  %v2104 = vunpack.c.h.b16 %v968
  %v2105 = vunpack.c.l.b16 %v969
  %v2106 = vunpack.c.h.b16 %v969
  %v2107 = vunpack.c.l.b16 %v970
  %v2108 = vunpack.c.l.b16 %v971
  %v2109 = vunpack.c.h.b16 %v971
  %v2110 = vunpack.c.l.b16 %v972
  %v2111 = vunpack.c.h.b16 %v972
  %v2112 = vunpack.c.l.b16 %v973
  %v2113 = vunpack.c.l.b16 %v974
  %v2114 = vunpack.c.h.b16 %v974
  %v2115 = vunpack.c.l.b16 %v975
  %v2116 = vunpack.c.h.b16 %v975
  %v2117 = vunpack.c.l.b16 %v976
  %v2118 = vunpack.c.l.b16 %v977
  %v2119 = vunpack.c.h.b16 %v977
  %v2120 = vunpack.c.l.b16 %v978
  %v2121 = vunpack.c.h.b16 %v978
  %v2122 = vunpack.c.l.b16 %v979
  %v2123 = vunpack.c.l.b16 %v980
  %v2124 = vunpack.c.h.b16 %v980
  %v2125 = vunpack.c.l.b16 %v981
  %v2126 = vunpack.c.h.b16 %v981
  %v2127 = vunpack.c.l.b16 %v982
  %v2128 = vunpack.c.l.b16 %v983
  %v2129 = vunpack.c.h.b16 %v983
  %v2130 = vunpack.c.l.b16 %v984
  %v2131 = vunpack.c.h.b16 %v984
  %v2132 = vunpack.c.l.b16 %v985
  %v2133 = vunpack.c.l.b16 %v986
  %v2134 = vunpack.c.h.b16 %v986
  %v2135 = vunpack.c.l.b16 %v987
  %v2136 = vunpack.c.h.b16 %v987
  %v2137 = vunpack.c.l.b16 %v988
  %v2138 = vunpack.c.l.b16 %v989
  %v2139 = vunpack.c.h.b16 %v989
  %v2140 = vunpack.c.l.b16 %v990
  %v2141 = vunpack.c.h.b16 %v990
  %v2142 = vunpack.c.l.b16 %v991
  %v2143 = vunpack.c.l.b16 %v992
  %v2144 = vunpack.c.h.b16 %v992
  %v2145 = vunpack.c.l.b16 %v993
  %v2146 = vunpack.c.h.b16 %v993
  %v2147 = vunpack.c.l.b16 %v994
  %v2148 = vunpack.c.l.b16 %v995
  %v2149 = vunpack.c.h.b16 %v995
  %v2150 = vunpack.c.l.b16 %v996
  %v2151 = vunpack.c.h.b16 %v996
  %v2152 = vunpack.c.l.b16 %v997
  %v2153 = vunpack.c.l.b16 %v998
  %v2154 = vunpack.c.h.b16 %v998
  %v2155 = vunpack.c.l.b16 %v999
  %v2156 = vunpack.c.h.b16 %v999
  %v2157 = vunpack.c.l.b16 %v1000
  %v2158 = vunpack.c.l.b16 %v1001
  %v2159 = vunpack.c.h.b16 %v1001
  %v2160 = vunpack.c.l.b16 %v1002
  %v2161 = vunpack.c.h.b16 %v1002
  %v2162 = vunpack.c.l.b16 %v1003
  %v2163 = vunpack.c.l.b16 %v1004
  %v2164 = vunpack.c.h.b16 %v1004
  %v2165 = vunpack.c.l.b16 %v1005
  %v2166 = vunpack.c.h.b16 %v1005
  %v2167 = vunpack.c.l.b16 %v1006
  %v2168 = vunpack.c.l.b16 %v1007
  %v2169 = vunpack.c.h.b16 %v1007
  %v2170 = vunpack.c.l.b16 %v1008
  %v2171 = vunpack.c.h.b16 %v1008
  %v2172 = vunpack.c.l.b16 %v1009
  %v2173 = vunpack.c.l.b16 %v1010
  %v2174 = vunpack.c.h.b16 %v1010
  %v2175 = vunpack.c.l.b16 %v1011
  %v2176 = vunpack.c.h.b16 %v1011
  %v2177 = vunpack.c.l.b16 %v1012
  %v2178 = vunpack.c.l.b16 %v1013
  %v2179 = vunpack.c.h.b16 %v1013
  %v2180 = vunpack.c.l.b16 %v1014
  %v2181 = vunpack.c.h.b16 %v1014
  %v2182 = vunpack.c.l.b16 %v1015
  %v2183 = vunpack.c.l.b16 %v1016
  %v2184 = vunpack.c.h.b16 %v1016
  %v2185 = vunpack.c.l.b16 %v1017
  %v2186 = vunpack.c.h.b16 %v1017
  %v2187 = vunpack.c.l.b16 %v1018
  %v2188 = vunpack.c.l.b16 %v1019
  %v2189 = vunpack.c.h.b16 %v1019
  %v2190 = vunpack.c.l.b16 %v1020
  %v2191 = vunpack.c.h.b16 %v1020
  %v2192 = vunpack.c.l.b16 %v1021
  %v2193 = vunpack.c.l.b16 %v1022
  %v2194 = vunpack.c.h.b16 %v1022
  %v2195 = vunpack.c.l.b16 %v1023
  %v2196 = vunpack.c.h.b16 %v1023
  %v2197 = vunpack.c.l.b16 %v1024
  %v2198 = vunpack.c.l.b16 %v1025
  %v2199 = vunpack.c.h.b16 %v1025
  %v2200 = vunpack.c.l.b16 %v1026
  %v2201 = vunpack.c.h.b16 %v1026
  %v2202 = vunpack.c.l.b16 %v1027
  %v2203 = vunpack.c.l.b16 %v1028
  %v2204 = vunpack.c.h.b16 %v1028
  %v2205 = vunpack.c.l.b16 %v1029
  %v2206 = vunpack.c.h.b16 %v1029
  %v2207 = vunpack.c.l.b16 %v1030
  %v2208 = vunpack.c.l.b16 %v1031
  %v2209 = vunpack.c.h.b16 %v1031
  %v2210 = vunpack.c.l.b16 %v1032
  %v2211 = vunpack.c.h.b16 %v1032
  %v2212 = vunpack.c.l.b16 %v1033
  %v2213 = vpack.c.b16 %v1498, %v1493
  %v2214 = vpack.c.b16 %v1499, %v1494
  %v2215 = vpack.c.b16 %v1500, %v1495
  %v2216 = vpack.c.b16 %v1501, %v1496
  %v2217 = vpack.c.b16 %v1502, %v1497
  %v2218 = vpack.c.b16 %v1508, %v1503
  %v2219 = vpack.c.b16 %v1509, %v1504
  %v2220 = vpack.c.b16 %v1510, %v1505
  %v2221 = vpack.c.b16 %v1511, %v1506
  %v2222 = vpack.c.b16 %v1512, %v1507
  %v2223 = vpack.c.b16 %v1518, %v1513
  %v2224 = vpack.c.b16 %v1519, %v1514
  %v2225 = vpack.c.b16 %v1520, %v1515
  %v2226 = vpack.c.b16 %v1521, %v1516
  %v2227 = vpack.c.b16 %v1522, %v1517
  %v2228 = vpack.c.b16 %v1528, %v1523
  %v2229 = vpack.c.b16 %v1529, %v1524
  %v2230 = vpack.c.b16 %v1530, %v1525
  %v2231 = vpack.c.b16 %v1531, %v1526
  %v2232 = vpack.c.b16 %v1532, %v1527
  %v2233 = vpack.c.b16 %v1538, %v1533
  %v2234 = vpack.c.b16 %v1539, %v1534
  %v2235 = vpack.c.b16 %v1540, %v1535
  %v2236 = vpack.c.b16 %v1541, %v1536
  %v2237 = vpack.c.b16 %v1542, %v1537
  %v2238 = vpack.c.b16 %v1548, %v1543
  %v2239 = vpack.c.b16 %v1549, %v1544
  %v2240 = vpack.c.b16 %v1550, %v1545
  %v2241 = vpack.c.b16 %v1551, %v1546
  %v2242 = vpack.c.b16 %v1552, %v1547
  %v2243 = vpack.c.b16 %v1558, %v1553
  %v2244 = vpack.c.b16 %v1559, %v1554
  %v2245 = vpack.c.b16 %v1560, %v1555
  %v2246 = vpack.c.b16 %v1561, %v1556
  %v2247 = vpack.c.b16 %v1562, %v1557
  %v2248 = vpack.c.b16 %v1568, %v1563
  %v2249 = vpack.c.b16 %v1569, %v1564
  %v2250 = vpack.c.b16 %v1570, %v1565
  %v2251 = vpack.c.b16 %v1571, %v1566
  %v2252 = vpack.c.b16 %v1572, %v1567
  %v2253 = vpack.c.b16 %v1578, %v1573
  %v2254 = vpack.c.b16 %v1579, %v1574
  %v2255 = vpack.c.b16 %v1580, %v1575
  %v2256 = vpack.c.b16 %v1581, %v1576
  %v2257 = vpack.c.b16 %v1582, %v1577
  %v2258 = vpack.c.b16 %v1588, %v1583
  %v2259 = vpack.c.b16 %v1589, %v1584
  %v2260 = vpack.c.b16 %v1590, %v1585
  %v2261 = vpack.c.b16 %v1591, %v1586
  %v2262 = vpack.c.b16 %v1592, %v1587
  %v2263 = vpack.c.b16 %v1598, %v1593
  %v2264 = vpack.c.b16 %v1599, %v1594
  %v2265 = vpack.c.b16 %v1600, %v1595
  %v2266 = vpack.c.b16 %v1601, %v1596
  %v2267 = vpack.c.b16 %v1602, %v1597
  %v2268 = vpack.c.b16 %v1608, %v1603
  %v2269 = vpack.c.b16 %v1609, %v1604
  %v2270 = vpack.c.b16 %v1610, %v1605
  %v2271 = vpack.c.b16 %v1611, %v1606
  %v2272 = vpack.c.b16 %v1612, %v1607
  %v2273 = vpack.c.b16 %v1618, %v1613
  %v2274 = vpack.c.b16 %v1619, %v1614
  %v2275 = vpack.c.b16 %v1620, %v1615
  %v2276 = vpack.c.b16 %v1621, %v1616
  %v2277 = vpack.c.b16 %v1622, %v1617
  %v2278 = vpack.c.b16 %v1628, %v1623
  %v2279 = vpack.c.b16 %v1629, %v1624
  %v2280 = vpack.c.b16 %v1630, %v1625
  %v2281 = vpack.c.b16 %v1631, %v1626
  %v2282 = vpack.c.b16 %v1632, %v1627
  %v2283 = vpack.c.b16 %v1638, %v1633
  %v2284 = vpack.c.b16 %v1639, %v1634
  %v2285 = vpack.c.b16 %v1640, %v1635
  %v2286 = vpack.c.b16 %v1641, %v1636
  %v2287 = vpack.c.b16 %v1642, %v1637
  %v2288 = vpack.c.b16 %v1648, %v1643
  %v2289 = vpack.c.b16 %v1649, %v1644
  %v2290 = vpack.c.b16 %v1650, %v1645
  %v2291 = vpack.c.b16 %v1651, %v1646
  %v2292 = vpack.c.b16 %v1652, %v1647
  %v2293 = vpack.c.b16 %v1658, %v1653
  %v2294 = vpack.c.b16 %v1659, %v1654
  %v2295 = vpack.c.b16 %v1660, %v1655
  %v2296 = vpack.c.b16 %v1661, %v1656
  %v2297 = vpack.c.b16 %v1662, %v1657
  %v2298 = vpack.c.b16 %v1668, %v1663
  %v2299 = vpack.c.b16 %v1669, %v1664
  %v2300 = vpack.c.b16 %v1670, %v1665
  %v2301 = vpack.c.b16 %v1671, %v1666
  %v2302 = vpack.c.b16 %v1672, %v1667
  %v2303 = vpack.c.b16 %v1678, %v1673
  %v2304 = vpack.c.b16 %v1679, %v1674
  %v2305 = vpack.c.b16 %v1680, %v1675
  %v2306 = vpack.c.b16 %v1681, %v1676
  %v2307 = vpack.c.b16 %v1682, %v1677
  %v2308 = vpack.c.b16 %v1688, %v1683
  %v2309 = vpack.c.b16 %v1689, %v1684
  %v2310 = vpack.c.b16 %v1690, %v1685
  %v2311 = vpack.c.b16 %v1691, %v1686
  %v2312 = vpack.c.b16 %v1692, %v1687
  %v2313 = vpack.c.b16 %v1698, %v1693
  %v2314 = vpack.c.b16 %v1699, %v1694
  %v2315 = vpack.c.b16 %v1700, %v1695
  %v2316 = vpack.c.b16 %v1701, %v1696
  %v2317 = vpack.c.b16 %v1702, %v1697
  %v2318 = vpack.c.b16 %v1708, %v1703
  %v2319 = vpack.c.b16 %v1709, %v1704
  %v2320 = vpack.c.b16 %v1710, %v1705
  %v2321 = vpack.c.b16 %v1711, %v1706
  %v2322 = vpack.c.b16 %v1712, %v1707
  %v2323 = vpack.c.b16 %v1718, %v1713
  %v2324 = vpack.c.b16 %v1719, %v1714
  %v2325 = vpack.c.b16 %v1720, %v1715
  %v2326 = vpack.c.b16 %v1721, %v1716
  %v2327 = vpack.c.b16 %v1722, %v1717
  %v2328 = vpack.c.b16 %v1728, %v1723
  %v2329 = vpack.c.b16 %v1729, %v1724
  %v2330 = vpack.c.b16 %v1730, %v1725
  %v2331 = vpack.c.b16 %v1731, %v1726
  %v2332 = vpack.c.b16 %v1732, %v1727
  %v2333 = vpack.c.b16 %v1738, %v1733
  %v2334 = vpack.c.b16 %v1739, %v1734
  %v2335 = vpack.c.b16 %v1740, %v1735
  %v2336 = vpack.c.b16 %v1741, %v1736
  %v2337 = vpack.c.b16 %v1742, %v1737
  %v2338 = vpack.c.b16 %v1748, %v1743
  %v2339 = vpack.c.b16 %v1749, %v1744
  %v2340 = vpack.c.b16 %v1750, %v1745
  %v2341 = vpack.c.b16 %v1751, %v1746
  %v2342 = vpack.c.b16 %v1752, %v1747
  %v2343 = vpack.c.b16 %v1758, %v1753
  %v2344 = vpack.c.b16 %v1759, %v1754
  %v2345 = vpack.c.b16 %v1760, %v1755
  %v2346 = vpack.c.b16 %v1761, %v1756
  %v2347 = vpack.c.b16 %v1762, %v1757
  %v2348 = vpack.c.b16 %v1768, %v1763
  %v2349 = vpack.c.b16 %v1769, %v1764
  %v2350 = vpack.c.b16 %v1770, %v1765
  %v2351 = vpack.c.b16 %v1771, %v1766
  %v2352 = vpack.c.b16 %v1772, %v1767
  %v2353 = vpack.c.b16 %v1778, %v1773
  %v2354 = vpack.c.b16 %v1779, %v1774
  %v2355 = vpack.c.b16 %v1780, %v1775
  %v2356 = vpack.c.b16 %v1781, %v1776
  %v2357 = vpack.c.b16 %v1782, %v1777
  %v2358 = vpack.c.b16 %v1788, %v1783
  %v2359 = vpack.c.b16 %v1789, %v1784
  %v2360 = vpack.c.b16 %v1790, %v1785
  %v2361 = vpack.c.b16 %v1791, %v1786
  %v2362 = vpack.c.b16 %v1792, %v1787
  %v2363 = vpack.c.b16 %v1798, %v1793
  %v2364 = vpack.c.b16 %v1799, %v1794
  %v2365 = vpack.c.b16 %v1800, %v1795
  %v2366 = vpack.c.b16 %v1801, %v1796
  %v2367 = vpack.c.b16 %v1802, %v1797
  %v2368 = vpack.c.b16 %v1808, %v1803
  %v2369 = vpack.c.b16 %v1809, %v1804
  %v2370 = vpack.c.b16 %v1810, %v1805
  %v2371 = vpack.c.b16 %v1811, %v1806
  %v2372 = vpack.c.b16 %v1812, %v1807
  %v2373 = vpack.c.b16 %v1818, %v1813
  %v2374 = vpack.c.b16 %v1819, %v1814
  %v2375 = vpack.c.b16 %v1820, %v1815
  %v2376 = vpack.c.b16 %v1821, %v1816
  %v2377 = vpack.c.b16 %v1822, %v1817
  %v2378 = vpack.c.b16 %v1828, %v1823
  %v2379 = vpack.c.b16 %v1829, %v1824
  %v2380 = vpack.c.b16 %v1830, %v1825
  %v2381 = vpack.c.b16 %v1831, %v1826
  %v2382 = vpack.c.b16 %v1832, %v1827
  %v2383 = vpack.c.b16 %v1838, %v1833
  %v2384 = vpack.c.b16 %v1839, %v1834
  %v2385 = vpack.c.b16 %v1840, %v1835
  %v2386 = vpack.c.b16 %v1841, %v1836
  %v2387 = vpack.c.b16 %v1842, %v1837
  %v2388 = vpack.c.b16 %v1848, %v1843
  %v2389 = vpack.c.b16 %v1849, %v1844
  %v2390 = vpack.c.b16 %v1850, %v1845
  %v2391 = vpack.c.b16 %v1851, %v1846
  %v2392 = vpack.c.b16 %v1852, %v1847
  %v2393 = vpack.c.b16 %v1858, %v1853
  %v2394 = vpack.c.b16 %v1859, %v1854
  %v2395 = vpack.c.b16 %v1860, %v1855
  %v2396 = vpack.c.b16 %v1861, %v1856
  %v2397 = vpack.c.b16 %v1862, %v1857
  %v2398 = vpack.c.b16 %v1868, %v1863
  %v2399 = vpack.c.b16 %v1869, %v1864
  %v2400 = vpack.c.b16 %v1870, %v1865
  %v2401 = vpack.c.b16 %v1871, %v1866
  %v2402 = vpack.c.b16 %v1872, %v1867
  %v2403 = vpack.c.b16 %v1878, %v1873
  %v2404 = vpack.c.b16 %v1879, %v1874
  %v2405 = vpack.c.b16 %v1880, %v1875
  %v2406 = vpack.c.b16 %v1881, %v1876
  %v2407 = vpack.c.b16 %v1882, %v1877
  %v2408 = vpack.c.b16 %v1888, %v1883
  %v2409 = vpack.c.b16 %v1889, %v1884
  %v2410 = vpack.c.b16 %v1890, %v1885
  %v2411 = vpack.c.b16 %v1891, %v1886
  %v2412 = vpack.c.b16 %v1892, %v1887
  %v2413 = vpack.c.b16 %v1898, %v1893
  %v2414 = vpack.c.b16 %v1899, %v1894
  %v2415 = vpack.c.b16 %v1900, %v1895
  %v2416 = vpack.c.b16 %v1901, %v1896
  %v2417 = vpack.c.b16 %v1902, %v1897
  %v2418 = vpack.c.b16 %v1908, %v1903
  %v2419 = vpack.c.b16 %v1909, %v1904
  %v2420 = vpack.c.b16 %v1910, %v1905
  %v2421 = vpack.c.b16 %v1911, %v1906
  %v2422 = vpack.c.b16 %v1912, %v1907
  %v2423 = vpack.c.b16 %v1918, %v1913
  %v2424 = vpack.c.b16 %v1919, %v1914
  %v2425 = vpack.c.b16 %v1920, %v1915
  %v2426 = vpack.c.b16 %v1921, %v1916
  %v2427 = vpack.c.b16 %v1922, %v1917
  %v2428 = vpack.c.b16 %v1928, %v1923
  %v2429 = vpack.c.b16 %v1929, %v1924
  %v2430 = vpack.c.b16 %v1930, %v1925
  %v2431 = vpack.c.b16 %v1931, %v1926
  %v2432 = vpack.c.b16 %v1932, %v1927
  %v2433 = vpack.c.b16 %v1938, %v1933
  %v2434 = vpack.c.b16 %v1939, %v1934
  %v2435 = vpack.c.b16 %v1940, %v1935
  %v2436 = vpack.c.b16 %v1941, %v1936
  %v2437 = vpack.c.b16 %v1942, %v1937
  %v2438 = vpack.c.b16 %v1948, %v1943
  %v2439 = vpack.c.b16 %v1949, %v1944
  %v2440 = vpack.c.b16 %v1950, %v1945
  %v2441 = vpack.c.b16 %v1951, %v1946
  %v2442 = vpack.c.b16 %v1952, %v1947
  %v2443 = vpack.c.b16 %v1958, %v1953
  %v2444 = vpack.c.b16 %v1959, %v1954
  %v2445 = vpack.c.b16 %v1960, %v1955
  %v2446 = vpack.c.b16 %v1961, %v1956
  %v2447 = vpack.c.b16 %v1962, %v1957
  %v2448 = vpack.c.b16 %v1968, %v1963
  %v2449 = vpack.c.b16 %v1969, %v1964
  %v2450 = vpack.c.b16 %v1970, %v1965
  %v2451 = vpack.c.b16 %v1971, %v1966
  %v2452 = vpack.c.b16 %v1972, %v1967
  %v2453 = vpack.c.b16 %v1978, %v1973
  %v2454 = vpack.c.b16 %v1979, %v1974
  %v2455 = vpack.c.b16 %v1980, %v1975
  %v2456 = vpack.c.b16 %v1981, %v1976
  %v2457 = vpack.c.b16 %v1982, %v1977
  %v2458 = vpack.c.b16 %v1988, %v1983
  %v2459 = vpack.c.b16 %v1989, %v1984
  %v2460 = vpack.c.b16 %v1990, %v1985
  %v2461 = vpack.c.b16 %v1991, %v1986
  %v2462 = vpack.c.b16 %v1992, %v1987
  %v2463 = vpack.c.b16 %v1998, %v1993
  %v2464 = vpack.c.b16 %v1999, %v1994
  %v2465 = vpack.c.b16 %v2000, %v1995
  %v2466 = vpack.c.b16 %v2001, %v1996
  %v2467 = vpack.c.b16 %v2002, %v1997
  %v2468 = vpack.c.b16 %v2008, %v2003
  %v2469 = vpack.c.b16 %v2009, %v2004
  %v2470 = vpack.c.b16 %v2010, %v2005
  %v2471 = vpack.c.b16 %v2011, %v2006
  %v2472 = vpack.c.b16 %v2012, %v2007
  %v2473 = vpack.c.b16 %v2018, %v2013
  %v2474 = vpack.c.b16 %v2019, %v2014
  %v2475 = vpack.c.b16 %v2020, %v2015
  %v2476 = vpack.c.b16 %v2021, %v2016
  %v2477 = vpack.c.b16 %v2022, %v2017
  %v2478 = vpack.c.b16 %v2028, %v2023
  %v2479 = vpack.c.b16 %v2029, %v2024
  %v2480 = vpack.c.b16 %v2030, %v2025
  %v2481 = vpack.c.b16 %v2031, %v2026
  %v2482 = vpack.c.b16 %v2032, %v2027
  %v2483 = vpack.c.b16 %v2038, %v2033
  %v2484 = vpack.c.b16 %v2039, %v2034
  %v2485 = vpack.c.b16 %v2040, %v2035
  %v2486 = vpack.c.b16 %v2041, %v2036
  %v2487 = vpack.c.b16 %v2042, %v2037
  %v2488 = vpack.c.b16 %v2048, %v2043
  %v2489 = vpack.c.b16 %v2049, %v2044
  %v2490 = vpack.c.b16 %v2050, %v2045
  %v2491 = vpack.c.b16 %v2051, %v2046
  %v2492 = vpack.c.b16 %v2052, %v2047
  %v2493 = vpack.c.b16 %v2058, %v2053
  %v2494 = vpack.c.b16 %v2059, %v2054
  %v2495 = vpack.c.b16 %v2060, %v2055
  %v2496 = vpack.c.b16 %v2061, %v2056
  %v2497 = vpack.c.b16 %v2062, %v2057
  %v2498 = vpack.c.b16 %v2068, %v2063
  %v2499 = vpack.c.b16 %v2069, %v2064
  %v2500 = vpack.c.b16 %v2070, %v2065
  %v2501 = vpack.c.b16 %v2071, %v2066
  %v2502 = vpack.c.b16 %v2072, %v2067
  %v2503 = vpack.c.b16 %v2078, %v2073
  %v2504 = vpack.c.b16 %v2079, %v2074
  %v2505 = vpack.c.b16 %v2080, %v2075
  %v2506 = vpack.c.b16 %v2081, %v2076
  %v2507 = vpack.c.b16 %v2082, %v2077
  %v2508 = vpack.c.b16 %v2088, %v2083
  %v2509 = vpack.c.b16 %v2089, %v2084
  %v2510 = vpack.c.b16 %v2090, %v2085
  %v2511 = vpack.c.b16 %v2091, %v2086
  %v2512 = vpack.c.b16 %v2092, %v2087
  %v2513 = vpack.c.b16 %v2098, %v2093
  %v2514 = vpack.c.b16 %v2099, %v2094
  %v2515 = vpack.c.b16 %v2100, %v2095
  %v2516 = vpack.c.b16 %v2101, %v2096
  %v2517 = vpack.c.b16 %v2102, %v2097
  %v2518 = vpack.c.b16 %v2108, %v2103
  %v2519 = vpack.c.b16 %v2109, %v2104
  %v2520 = vpack.c.b16 %v2110, %v2105
  %v2521 = vpack.c.b16 %v2111, %v2106
  %v2522 = vpack.c.b16 %v2112, %v2107
  %v2523 = vpack.c.b16 %v2118, %v2113
  %v2524 = vpack.c.b16 %v2119, %v2114
  %v2525 = vpack.c.b16 %v2120, %v2115
  %v2526 = vpack.c.b16 %v2121, %v2116
  %v2527 = vpack.c.b16 %v2122, %v2117
  %v2528 = vpack.c.b16 %v2128, %v2123
  %v2529 = vpack.c.b16 %v2129, %v2124
  %v2530 = vpack.c.b16 %v2130, %v2125
  %v2531 = vpack.c.b16 %v2131, %v2126
  %v2532 = vpack.c.b16 %v2132, %v2127
  %v2533 = vpack.c.b16 %v2138, %v2133
  %v2534 = vpack.c.b16 %v2139, %v2134
  %v2535 = vpack.c.b16 %v2140, %v2135
  %v2536 = vpack.c.b16 %v2141, %v2136
  %v2537 = vpack.c.b16 %v2142, %v2137
  %v2538 = vpack.c.b16 %v2148, %v2143
  %v2539 = vpack.c.b16 %v2149, %v2144
  %v2540 = vpack.c.b16 %v2150, %v2145
  %v2541 = vpack.c.b16 %v2151, %v2146
  %v2542 = vpack.c.b16 %v2152, %v2147
  %v2543 = vpack.c.b16 %v2158, %v2153
  %v2544 = vpack.c.b16 %v2159, %v2154
  %v2545 = vpack.c.b16 %v2160, %v2155
  %v2546 = vpack.c.b16 %v2161, %v2156
  %v2547 = vpack.c.b16 %v2162, %v2157
  %v2548 = vpack.c.b16 %v2168, %v2163
  %v2549 = vpack.c.b16 %v2169, %v2164
  %v2550 = vpack.c.b16 %v2170, %v2165
  %v2551 = vpack.c.b16 %v2171, %v2166
  %v2552 = vpack.c.b16 %v2172, %v2167
  %v2553 = vpack.c.b16 %v2178, %v2173
  %v2554 = vpack.c.b16 %v2179, %v2174
  %v2555 = vpack.c.b16 %v2180, %v2175
  %v2556 = vpack.c.b16 %v2181, %v2176
  %v2557 = vpack.c.b16 %v2182, %v2177
  %v2558 = vpack.c.b16 %v2188, %v2183
  %v2559 = vpack.c.b16 %v2189, %v2184
  %v2560 = vpack.c.b16 %v2190, %v2185
  %v2561 = vpack.c.b16 %v2191, %v2186
  %v2562 = vpack.c.b16 %v2192, %v2187
  %v2563 = vpack.c.b16 %v2198, %v2193
  %v2564 = vpack.c.b16 %v2199, %v2194
  %v2565 = vpack.c.b16 %v2200, %v2195
  %v2566 = vpack.c.b16 %v2201, %v2196
  %v2567 = vpack.c.b16 %v2202, %v2197
  %v2568 = vpack.c.b16 %v2208, %v2203
  %v2569 = vpack.c.b16 %v2209, %v2204
  %v2570 = vpack.c.b16 %v2210, %v2205
  %v2571 = vpack.c.b16 %v2211, %v2206
  %v2572 = vpack.c.b16 %v2212, %v2207
  %2933 = vmatprep.subr.bf16.mxu0 %v2214
  %2934 = vmatpush1.bf16.msra.mxu0 %v2213
  %2935 = vmatprep.subr.bf16.mxu0 %v2219
  %2936 = vmatpush1.bf16.msra.mxu0 %v2218
  %2937 = vmatprep.subr.bf16.mxu0 %v2224
  %2938 = vmatpush1.bf16.msra.mxu0 %v2223
  %2939 = vmatprep.subr.bf16.mxu0 %v2229
  %2940 = vmatpush1.bf16.msra.mxu0 %v2228
  %2941 = vmatprep.subr.bf16.mxu0 %v2234
  %2942 = vmatpush1.bf16.msra.mxu0 %v2233
  %2943 = vmatprep.subr.bf16.mxu0 %v2239
  %2944 = vmatpush1.bf16.msra.mxu0 %v2238
  %2945 = vmatprep.subr.bf16.mxu0 %v2244
  %2946 = vmatpush1.bf16.msra.mxu0 %v2243
  %2947 = vmatprep.subr.bf16.mxu0 %v2249
  %2948 = vmatpush1.bf16.msra.mxu0 %v2248
  %2949 = vmatprep.subr.bf16.mxu0 %v2254
  %2950 = vmatpush1.bf16.msra.mxu0 %v2253
  %2951 = vmatprep.subr.bf16.mxu0 %v2259
  %2952 = vmatpush1.bf16.msra.mxu0 %v2258
  %2953 = vmatprep.subr.bf16.mxu0 %v2264
  %2954 = vmatpush1.bf16.msra.mxu0 %v2263
  %2955 = vmatprep.subr.bf16.mxu0 %v2269
  %2956 = vmatpush1.bf16.msra.mxu0 %v2268
  %2957 = vmatprep.subr.bf16.mxu0 %v2274
  %2958 = vmatpush1.bf16.msra.mxu0 %v2273
  %2959 = vmatprep.subr.bf16.mxu0 %v2279
  %2960 = vmatpush1.bf16.msra.mxu0 %v2278
  %2961 = vmatprep.subr.bf16.mxu0 %v2284
  %2962 = vmatpush1.bf16.msra.mxu0 %v2283
  %2963 = vmatprep.subr.bf16.mxu0 %v2289
  %2964 = vmatpush1.bf16.msra.mxu0 %v2288
  %2965 = vmatprep.mubr.bf16.mxu0 %v594
  %2966 = vmatmul.mubr.bf16.gmra.mrb[0].mxu0 %v593
  %v2967 = vpop.f32.mrb[0].mxu0
  %v2968 = vadd.f32 %v1039, %v2967
  %v2969 = vpop.f32.mrb[0].mxu0
  %v2970 = vadd.f32 %v1043, %v2969
  %v2971 = vpop.f32.mrb[0].mxu0
  %v2972 = vpop.f32.mrb[0].mxu0
  %2973 = vdwg.mxu0
  %2974 = vmatprep.subr.bf16.mxu0 %v2294
  %2975 = vmatpush1.bf16.msra.mxu0 %v2293
  %2976 = vmatprep.subr.bf16.mxu0 %v2299
  %2977 = vmatpush1.bf16.msra.mxu0 %v2298
  %2978 = vmatprep.subr.bf16.mxu0 %v2304
  %2979 = vmatpush1.bf16.msra.mxu0 %v2303
  %2980 = vmatprep.subr.bf16.mxu0 %v2309
  %2981 = vmatpush1.bf16.msra.mxu0 %v2308
  %2982 = vmatprep.subr.bf16.mxu0 %v2314
  %2983 = vmatpush1.bf16.msra.mxu0 %v2313
  %2984 = vmatprep.subr.bf16.mxu0 %v2319
  %2985 = vmatpush1.bf16.msra.mxu0 %v2318
  %2986 = vmatprep.subr.bf16.mxu0 %v2324
  %2987 = vmatpush1.bf16.msra.mxu0 %v2323
  %2988 = vmatprep.subr.bf16.mxu0 %v2329
  %2989 = vmatpush1.bf16.msra.mxu0 %v2328
  %2990 = vmatprep.subr.bf16.mxu0 %v2334
  %2991 = vmatpush1.bf16.msra.mxu0 %v2333
  %2992 = vmatprep.subr.bf16.mxu0 %v2339
  %2993 = vmatpush1.bf16.msra.mxu0 %v2338
  %2994 = vmatprep.subr.bf16.mxu0 %v2344
  %2995 = vmatpush1.bf16.msra.mxu0 %v2343
  %2996 = vmatprep.subr.bf16.mxu0 %v2349
  %2997 = vmatpush1.bf16.msra.mxu0 %v2348
  %2998 = vmatprep.subr.bf16.mxu0 %v2354
  %2999 = vmatpush1.bf16.msra.mxu0 %v2353
  %3000 = vmatprep.subr.bf16.mxu0 %v2359
  %3001 = vmatpush1.bf16.msra.mxu0 %v2358
  %3002 = vmatprep.subr.bf16.mxu0 %v2364
  %3003 = vmatpush1.bf16.msra.mxu0 %v2363
  %3004 = vmatprep.subr.bf16.mxu0 %v2369
  %3005 = vmatpush1.bf16.msra.mxu0 %v2368
  %3006 = vmatprep.mubr.bf16.mxu0 %v596
  %3007 = vmatmul.mubr.bf16.gmra.mrb[0].mxu0 %v595
  %v3008 = vpop.f32.mrb[0].mxu0
  %v3009 = vadd.f32 %v2968, %v3008
  %v3010 = vpop.f32.mrb[0].mxu0
  %v3011 = vadd.f32 %v2970, %v3010
  %v3012 = vpop.f32.mrb[0].mxu0
  %v3013 = vpop.f32.mrb[0].mxu0
  %3014 = vdwg.mxu0
  %3015 = vmatprep.subr.bf16.mxu0 %v2374
  %3016 = vmatpush1.bf16.msra.mxu0 %v2373
  %3017 = vmatprep.subr.bf16.mxu0 %v2379
  %3018 = vmatpush1.bf16.msra.mxu0 %v2378
  %3019 = vmatprep.subr.bf16.mxu0 %v2384
  %3020 = vmatpush1.bf16.msra.mxu0 %v2383
  %3021 = vmatprep.subr.bf16.mxu0 %v2389
  %3022 = vmatpush1.bf16.msra.mxu0 %v2388
  %3023 = vmatprep.subr.bf16.mxu0 %v2394
  %3024 = vmatpush1.bf16.msra.mxu0 %v2393
  %3025 = vmatprep.subr.bf16.mxu0 %v2399
  %3026 = vmatpush1.bf16.msra.mxu0 %v2398
  %3027 = vmatprep.subr.bf16.mxu0 %v2404
  %3028 = vmatpush1.bf16.msra.mxu0 %v2403
  %3029 = vmatprep.subr.bf16.mxu0 %v2409
  %3030 = vmatpush1.bf16.msra.mxu0 %v2408
  %3031 = vmatprep.subr.bf16.mxu0 %v2414
  %3032 = vmatpush1.bf16.msra.mxu0 %v2413
  %3033 = vmatprep.subr.bf16.mxu0 %v2419
  %3034 = vmatpush1.bf16.msra.mxu0 %v2418
  %3035 = vmatprep.subr.bf16.mxu0 %v2424
  %3036 = vmatpush1.bf16.msra.mxu0 %v2423
  %3037 = vmatprep.subr.bf16.mxu0 %v2429
  %3038 = vmatpush1.bf16.msra.mxu0 %v2428
  %3039 = vmatprep.subr.bf16.mxu0 %v2434
  %3040 = vmatpush1.bf16.msra.mxu0 %v2433
  %3041 = vmatprep.subr.bf16.mxu0 %v2439
  %3042 = vmatpush1.bf16.msra.mxu0 %v2438
  %3043 = vmatprep.subr.bf16.mxu0 %v2444
  %3044 = vmatpush1.bf16.msra.mxu0 %v2443
  %3045 = vmatprep.subr.bf16.mxu0 %v2449
  %3046 = vmatpush1.bf16.msra.mxu0 %v2448
  %3047 = vmatprep.mubr.bf16.mxu0 %v598
  %3048 = vmatmul.mubr.bf16.gmra.mrb[0].mxu0 %v597
  %v3049 = vpop.f32.mrb[0].mxu0
  %v3050 = vadd.f32 %v3009, %v3049
  %v3051 = vpop.f32.mrb[0].mxu0
  %v3052 = vadd.f32 %v3011, %v3051
  %v3053 = vpop.f32.mrb[0].mxu0
  %v3054 = vpop.f32.mrb[0].mxu0
  %3055 = vdwg.mxu0
  %3056 = vmatprep.subr.bf16.mxu0 %v2454
  %3057 = vmatpush1.bf16.msra.mxu0 %v2453
  %3058 = vmatprep.subr.bf16.mxu0 %v2459
  %3059 = vmatpush1.bf16.msra.mxu0 %v2458
  %3060 = vmatprep.subr.bf16.mxu0 %v2464
  %3061 = vmatpush1.bf16.msra.mxu0 %v2463
  %3062 = vmatprep.subr.bf16.mxu0 %v2469
  %3063 = vmatpush1.bf16.msra.mxu0 %v2468
  %3064 = vmatprep.subr.bf16.mxu0 %v2474
  %3065 = vmatpush1.bf16.msra.mxu0 %v2473
  %3066 = vmatprep.subr.bf16.mxu0 %v2479
  %3067 = vmatpush1.bf16.msra.mxu0 %v2478
  %3068 = vmatprep.subr.bf16.mxu0 %v2484
  %3069 = vmatpush1.bf16.msra.mxu0 %v2483
  %3070 = vmatprep.subr.bf16.mxu0 %v2489
  %3071 = vmatpush1.bf16.msra.mxu0 %v2488
  %3072 = vmatprep.subr.bf16.mxu0 %v2494
  %3073 = vmatpush1.bf16.msra.mxu0 %v2493
  %3074 = vmatprep.subr.bf16.mxu0 %v2499
  %3075 = vmatpush1.bf16.msra.mxu0 %v2498
  %3076 = vmatprep.subr.bf16.mxu0 %v2504
  %3077 = vmatpush1.bf16.msra.mxu0 %v2503
  %3078 = vmatprep.subr.bf16.mxu0 %v2509
  %3079 = vmatpush1.bf16.msra.mxu0 %v2508
  %3080 = vmatprep.subr.bf16.mxu0 %v2514
  %3081 = vmatpush1.bf16.msra.mxu0 %v2513
  %3082 = vmatprep.subr.bf16.mxu0 %v2519
  %3083 = vmatpush1.bf16.msra.mxu0 %v2518
  %3084 = vmatprep.subr.bf16.mxu0 %v2524
  %3085 = vmatpush1.bf16.msra.mxu0 %v2523
  %3086 = vmatprep.subr.bf16.mxu0 %v2529
  %3087 = vmatpush1.bf16.msra.mxu0 %v2528
  %3088 = vmatprep.mubr.bf16.mxu0 %v600
  %3089 = vmatmul.mubr.bf16.gmra.mrb[0].mxu0 %v599
  %v3090 = vpop.f32.mrb[0].mxu0
  %v3091 = vadd.f32 %v3050, %v3090
  %v3092 = vpop.f32.mrb[0].mxu0
  %v3093 = vadd.f32 %v3052, %v3092
  %v3094 = vpop.f32.mrb[0].mxu0
  %v3095 = vpop.f32.mrb[0].mxu0
  %3096 = vdwg.mxu0
  %3097 = vmatprep.subr.bf16.mxu0 %v2534
  %3098 = vmatpush1.bf16.msra.mxu0 %v2533
  %3099 = vmatprep.subr.bf16.mxu0 %v2539
  %3100 = vmatpush1.bf16.msra.mxu0 %v2538
  %3101 = vmatprep.subr.bf16.mxu0 %v2544
  %3102 = vmatpush1.bf16.msra.mxu0 %v2543
  %3103 = vmatprep.subr.bf16.mxu0 %v2549
  %3104 = vmatpush1.bf16.msra.mxu0 %v2548
  %3105 = vmatprep.subr.bf16.mxu0 %v2554
  %3106 = vmatpush1.bf16.msra.mxu0 %v2553
  %3107 = vmatprep.subr.bf16.mxu0 %v2559
  %3108 = vmatpush1.bf16.msra.mxu0 %v2558
  %3109 = vmatprep.subr.bf16.mxu0 %v2564
  %3110 = vmatpush1.bf16.msra.mxu0 %v2563
  %3111 = vmatprep.subr.bf16.mxu0 %v2569
  %3112 = vmatpush1.bf16.msra.mxu0 %v2568
  %3113 = vmatprep.subr.bf16.mxu0 0
  %3114 = vmatpush1.bf16.msra.mxu0 0
  %3115 = vmatprep.subr.bf16.mxu0 0
  %3116 = vmatpush1.bf16.msra.mxu0 0
  %3117 = vmatprep.subr.bf16.mxu0 0
  %3118 = vmatpush1.bf16.msra.mxu0 0
  %3119 = vmatprep.subr.bf16.mxu0 0
  %3120 = vmatpush1.bf16.msra.mxu0 0
  %3121 = vmatprep.subr.bf16.mxu0 0
  %3122 = vmatpush1.bf16.msra.mxu0 0
  %3123 = vmatprep.subr.bf16.mxu0 0
  %3124 = vmatpush1.bf16.msra.mxu0 0
  %3125 = vmatprep.subr.bf16.mxu0 0
  %3126 = vmatpush1.bf16.msra.mxu0 0
  %3127 = vmatprep.subr.bf16.mxu0 0
  %3128 = vmatpush1.bf16.msra.mxu0 0
  %3129 = vmatprep.mubr.bf16.mxu0 0
  %3130 = vmatmul.mubr.bf16.gmra.mrb[0].mxu0 %v601
  %v3131 = vpop.f32.mrb[0].mxu0
  %v3132 = vadd.f32 %v3091, %v3131
  %v3133 = vpop.f32.mrb[0].mxu0
  %v3134 = vadd.f32 %v3093, %v3133
  %v3135 = vpop.f32.mrb[0].mxu0
  %v3136 = vpop.f32.mrb[0].mxu0
  %3137 = vdwg.mxu0
  %3138 = vmatprep.subr.bf16.mxu0 %v2216
  %3139 = vmatpush1.bf16.msra.mxu0 %v2215
  %3140 = vmatprep.subr.bf16.mxu0 %v2221
  %3141 = vmatpush1.bf16.msra.mxu0 %v2220
  %3142 = vmatprep.subr.bf16.mxu0 %v2226
  %3143 = vmatpush1.bf16.msra.mxu0 %v2225
  %3144 = vmatprep.subr.bf16.mxu0 %v2231
  %3145 = vmatpush1.bf16.msra.mxu0 %v2230
  %3146 = vmatprep.subr.bf16.mxu0 %v2236
  %3147 = vmatpush1.bf16.msra.mxu0 %v2235
  %3148 = vmatprep.subr.bf16.mxu0 %v2241
  %3149 = vmatpush1.bf16.msra.mxu0 %v2240
  %3150 = vmatprep.subr.bf16.mxu0 %v2246
  %3151 = vmatpush1.bf16.msra.mxu0 %v2245
  %3152 = vmatprep.subr.bf16.mxu0 %v2251
  %3153 = vmatpush1.bf16.msra.mxu0 %v2250
  %3154 = vmatprep.subr.bf16.mxu0 %v2256
  %3155 = vmatpush1.bf16.msra.mxu0 %v2255
  %3156 = vmatprep.subr.bf16.mxu0 %v2261
  %3157 = vmatpush1.bf16.msra.mxu0 %v2260
  %3158 = vmatprep.subr.bf16.mxu0 %v2266
  %3159 = vmatpush1.bf16.msra.mxu0 %v2265
  %3160 = vmatprep.subr.bf16.mxu0 %v2271
  %3161 = vmatpush1.bf16.msra.mxu0 %v2270
  %3162 = vmatprep.subr.bf16.mxu0 %v2276
  %3163 = vmatpush1.bf16.msra.mxu0 %v2275
  %3164 = vmatprep.subr.bf16.mxu0 %v2281
  %3165 = vmatpush1.bf16.msra.mxu0 %v2280
  %3166 = vmatprep.subr.bf16.mxu0 %v2286
  %3167 = vmatpush1.bf16.msra.mxu0 %v2285
  %3168 = vmatprep.subr.bf16.mxu0 %v2291
  %3169 = vmatpush1.bf16.msra.mxu0 %v2290
  %3170 = vmatprep.mubr.bf16.mxu0 %v594
  %3171 = vmatmul.mubr.bf16.gmra.mrb[0].mxu0 %v593
  %v3172 = vpop.f32.mrb[0].mxu0
  %v3173 = vadd.f32 %v1047, %v3172
  %v3174 = vpop.f32.mrb[0].mxu0
  %v3175 = vadd.f32 %v1051, %v3174
  %v3176 = vpop.f32.mrb[0].mxu0
  %v3177 = vpop.f32.mrb[0].mxu0
  %3178 = vdwg.mxu0
  %3179 = vmatprep.subr.bf16.mxu0 %v2296
  %3180 = vmatpush1.bf16.msra.mxu0 %v2295
  %3181 = vmatprep.subr.bf16.mxu0 %v2301
  %3182 = vmatpush1.bf16.msra.mxu0 %v2300
  %3183 = vmatprep.subr.bf16.mxu0 %v2306
  %3184 = vmatpush1.bf16.msra.mxu0 %v2305
  %3185 = vmatprep.subr.bf16.mxu0 %v2311
  %3186 = vmatpush1.bf16.msra.mxu0 %v2310
  %3187 = vmatprep.subr.bf16.mxu0 %v2316
  %3188 = vmatpush1.bf16.msra.mxu0 %v2315
  %3189 = vmatprep.subr.bf16.mxu0 %v2321
  %3190 = vmatpush1.bf16.msra.mxu0 %v2320
  %3191 = vmatprep.subr.bf16.mxu0 %v2326
  %3192 = vmatpush1.bf16.msra.mxu0 %v2325
  %3193 = vmatprep.subr.bf16.mxu0 %v2331
  %3194 = vmatpush1.bf16.msra.mxu0 %v2330
  %3195 = vmatprep.subr.bf16.mxu0 %v2336
  %3196 = vmatpush1.bf16.msra.mxu0 %v2335
  %3197 = vmatprep.subr.bf16.mxu0 %v2341
  %3198 = vmatpush1.bf16.msra.mxu0 %v2340
  %3199 = vmatprep.subr.bf16.mxu0 %v2346
  %3200 = vmatpush1.bf16.msra.mxu0 %v2345
  %3201 = vmatprep.subr.bf16.mxu0 %v2351
  %3202 = vmatpush1.bf16.msra.mxu0 %v2350
  %3203 = vmatprep.subr.bf16.mxu0 %v2356
  %3204 = vmatpush1.bf16.msra.mxu0 %v2355
  %3205 = vmatprep.subr.bf16.mxu0 %v2361
  %3206 = vmatpush1.bf16.msra.mxu0 %v2360
  %3207 = vmatprep.subr.bf16.mxu0 %v2366
  %3208 = vmatpush1.bf16.msra.mxu0 %v2365
  %3209 = vmatprep.subr.bf16.mxu0 %v2371
  %3210 = vmatpush1.bf16.msra.mxu0 %v2370
  %3211 = vmatprep.mubr.bf16.mxu0 %v596
  %3212 = vmatmul.mubr.bf16.gmra.mrb[0].mxu0 %v595
  %v3213 = vpop.f32.mrb[0].mxu0
  %v3214 = vadd.f32 %v3173, %v3213
  %v3215 = vpop.f32.mrb[0].mxu0
  %v3216 = vadd.f32 %v3175, %v3215
  %v3217 = vpop.f32.mrb[0].mxu0
  %v3218 = vpop.f32.mrb[0].mxu0
  %3219 = vdwg.mxu0
  %3220 = vmatprep.subr.bf16.mxu0 %v2376
  %3221 = vmatpush1.bf16.msra.mxu0 %v2375
  %3222 = vmatprep.subr.bf16.mxu0 %v2381
  %3223 = vmatpush1.bf16.msra.mxu0 %v2380
  %3224 = vmatprep.subr.bf16.mxu0 %v2386
  %3225 = vmatpush1.bf16.msra.mxu0 %v2385
  %3226 = vmatprep.subr.bf16.mxu0 %v2391
  %3227 = vmatpush1.bf16.msra.mxu0 %v2390
  %3228 = vmatprep.subr.bf16.mxu0 %v2396
  %3229 = vmatpush1.bf16.msra.mxu0 %v2395
  %3230 = vmatprep.subr.bf16.mxu0 %v2401
  %3231 = vmatpush1.bf16.msra.mxu0 %v2400
  %3232 = vmatprep.subr.bf16.mxu0 %v2406
  %3233 = vmatpush1.bf16.msra.mxu0 %v2405
  %3234 = vmatprep.subr.bf16.mxu0 %v2411
  %3235 = vmatpush1.bf16.msra.mxu0 %v2410
  %3236 = vmatprep.subr.bf16.mxu0 %v2416
  %3237 = vmatpush1.bf16.msra.mxu0 %v2415
  %3238 = vmatprep.subr.bf16.mxu0 %v2421
  %3239 = vmatpush1.bf16.msra.mxu0 %v2420
  %3240 = vmatprep.subr.bf16.mxu0 %v2426
  %3241 = vmatpush1.bf16.msra.mxu0 %v2425
  %3242 = vmatprep.subr.bf16.mxu0 %v2431
  %3243 = vmatpush1.bf16.msra.mxu0 %v2430
  %3244 = vmatprep.subr.bf16.mxu0 %v2436
  %3245 = vmatpush1.bf16.msra.mxu0 %v2435
  %3246 = vmatprep.subr.bf16.mxu0 %v2441
  %3247 = vmatpush1.bf16.msra.mxu0 %v2440
  %3248 = vmatprep.subr.bf16.mxu0 %v2446
  %3249 = vmatpush1.bf16.msra.mxu0 %v2445
  %3250 = vmatprep.subr.bf16.mxu0 %v2451
  %3251 = vmatpush1.bf16.msra.mxu0 %v2450
  %3252 = vmatprep.mubr.bf16.mxu0 %v598
  %3253 = vmatmul.mubr.bf16.gmra.mrb[0].mxu0 %v597
  %v3254 = vpop.f32.mrb[0].mxu0
  %v3255 = vadd.f32 %v3214, %v3254
  %v3256 = vpop.f32.mrb[0].mxu0
  %v3257 = vadd.f32 %v3216, %v3256
  %v3258 = vpop.f32.mrb[0].mxu0
  %v3259 = vpop.f32.mrb[0].mxu0
  %3260 = vdwg.mxu0
  %3261 = vmatprep.subr.bf16.mxu0 %v2456
  %3262 = vmatpush1.bf16.msra.mxu0 %v2455
  %3263 = vmatprep.subr.bf16.mxu0 %v2461
  %3264 = vmatpush1.bf16.msra.mxu0 %v2460
  %3265 = vmatprep.subr.bf16.mxu0 %v2466
  %3266 = vmatpush1.bf16.msra.mxu0 %v2465
  %3267 = vmatprep.subr.bf16.mxu0 %v2471
  %3268 = vmatpush1.bf16.msra.mxu0 %v2470
  %3269 = vmatprep.subr.bf16.mxu0 %v2476
  %3270 = vmatpush1.bf16.msra.mxu0 %v2475
  %3271 = vmatprep.subr.bf16.mxu0 %v2481
  %3272 = vmatpush1.bf16.msra.mxu0 %v2480
  %3273 = vmatprep.subr.bf16.mxu0 %v2486
  %3274 = vmatpush1.bf16.msra.mxu0 %v2485
  %3275 = vmatprep.subr.bf16.mxu0 %v2491
  %3276 = vmatpush1.bf16.msra.mxu0 %v2490
  %3277 = vmatprep.subr.bf16.mxu0 %v2496
  %3278 = vmatpush1.bf16.msra.mxu0 %v2495
  %3279 = vmatprep.subr.bf16.mxu0 %v2501
  %3280 = vmatpush1.bf16.msra.mxu0 %v2500
  %3281 = vmatprep.subr.bf16.mxu0 %v2506
  %3282 = vmatpush1.bf16.msra.mxu0 %v2505
  %3283 = vmatprep.subr.bf16.mxu0 %v2511
  %3284 = vmatpush1.bf16.msra.mxu0 %v2510
  %3285 = vmatprep.subr.bf16.mxu0 %v2516
  %3286 = vmatpush1.bf16.msra.mxu0 %v2515
  %3287 = vmatprep.subr.bf16.mxu0 %v2521
  %3288 = vmatpush1.bf16.msra.mxu0 %v2520
  %3289 = vmatprep.subr.bf16.mxu0 %v2526
  %3290 = vmatpush1.bf16.msra.mxu0 %v2525
  %3291 = vmatprep.subr.bf16.mxu0 %v2531
  %3292 = vmatpush1.bf16.msra.mxu0 %v2530
  %3293 = vmatprep.mubr.bf16.mxu0 %v600
  %3294 = vmatmul.mubr.bf16.gmra.mrb[0].mxu0 %v599
  %v3295 = vpop.f32.mrb[0].mxu0
  %v3296 = vadd.f32 %v3255, %v3295
  %v3297 = vpop.f32.mrb[0].mxu0
  %v3298 = vadd.f32 %v3257, %v3297
  %v3299 = vpop.f32.mrb[0].mxu0
  %v3300 = vpop.f32.mrb[0].mxu0
  %3301 = vdwg.mxu0
  %3302 = vmatprep.subr.bf16.mxu0 %v2536
  %3303 = vmatpush1.bf16.msra.mxu0 %v2535
  %3304 = vmatprep.subr.bf16.mxu0 %v2541
  %3305 = vmatpush1.bf16.msra.mxu0 %v2540
  %3306 = vmatprep.subr.bf16.mxu0 %v2546
  %3307 = vmatpush1.bf16.msra.mxu0 %v2545
  %3308 = vmatprep.subr.bf16.mxu0 %v2551
  %3309 = vmatpush1.bf16.msra.mxu0 %v2550
  %3310 = vmatprep.subr.bf16.mxu0 %v2556
  %3311 = vmatpush1.bf16.msra.mxu0 %v2555
  %3312 = vmatprep.subr.bf16.mxu0 %v2561
  %3313 = vmatpush1.bf16.msra.mxu0 %v2560
  %3314 = vmatprep.subr.bf16.mxu0 %v2566
  %3315 = vmatpush1.bf16.msra.mxu0 %v2565
  %3316 = vmatprep.subr.bf16.mxu0 %v2571
  %3317 = vmatpush1.bf16.msra.mxu0 %v2570
  %3318 = vmatprep.subr.bf16.mxu0 0
  %3319 = vmatpush1.bf16.msra.mxu0 0
  %3320 = vmatprep.subr.bf16.mxu0 0
  %3321 = vmatpush1.bf16.msra.mxu0 0
  %3322 = vmatprep.subr.bf16.mxu0 0
  %3323 = vmatpush1.bf16.msra.mxu0 0
  %3324 = vmatprep.subr.bf16.mxu0 0
  %3325 = vmatpush1.bf16.msra.mxu0 0
  %3326 = vmatprep.subr.bf16.mxu0 0
  %3327 = vmatpush1.bf16.msra.mxu0 0
  %3328 = vmatprep.subr.bf16.mxu0 0
  %3329 = vmatpush1.bf16.msra.mxu0 0
  %3330 = vmatprep.subr.bf16.mxu0 0
  %3331 = vmatpush1.bf16.msra.mxu0 0
  %3332 = vmatprep.subr.bf16.mxu0 0
  %3333 = vmatpush1.bf16.msra.mxu0 0
  %3334 = vmatprep.mubr.bf16.mxu0 0
  %3335 = vmatmul.mubr.bf16.gmra.mrb[0].mxu0 %v601
  %v3336 = vpop.f32.mrb[0].mxu0
  %v3337 = vadd.f32 %v3296, %v3336
  %v3338 = vpop.f32.mrb[0].mxu0
  %v3339 = vadd.f32 %v3298, %v3338
  %v3340 = vpop.f32.mrb[0].mxu0
  %v3341 = vpop.f32.mrb[0].mxu0
  %3342 = vdwg.mxu0
  %3343 = vmatprep.subr.bf16.mxu0 0
  %3344 = vmatpush1.bf16.msra.mxu0 %v2217
  %3345 = vmatprep.subr.bf16.mxu0 0
  %3346 = vmatpush1.bf16.msra.mxu0 %v2222
  %3347 = vmatprep.subr.bf16.mxu0 0
  %3348 = vmatpush1.bf16.msra.mxu0 %v2227
  %3349 = vmatprep.subr.bf16.mxu0 0
  %3350 = vmatpush1.bf16.msra.mxu0 %v2232
  %3351 = vmatprep.subr.bf16.mxu0 0
  %3352 = vmatpush1.bf16.msra.mxu0 %v2237
  %3353 = vmatprep.subr.bf16.mxu0 0
  %3354 = vmatpush1.bf16.msra.mxu0 %v2242
  %3355 = vmatprep.subr.bf16.mxu0 0
  %3356 = vmatpush1.bf16.msra.mxu0 %v2247
  %3357 = vmatprep.subr.bf16.mxu0 0
  %3358 = vmatpush1.bf16.msra.mxu0 %v2252
  %3359 = vmatprep.subr.bf16.mxu0 0
  %3360 = vmatpush1.bf16.msra.mxu0 %v2257
  %3361 = vmatprep.subr.bf16.mxu0 0
  %3362 = vmatpush1.bf16.msra.mxu0 %v2262
  %3363 = vmatprep.subr.bf16.mxu0 0
  %3364 = vmatpush1.bf16.msra.mxu0 %v2267
  %3365 = vmatprep.subr.bf16.mxu0 0
  %3366 = vmatpush1.bf16.msra.mxu0 %v2272
  %3367 = vmatprep.subr.bf16.mxu0 0
  %3368 = vmatpush1.bf16.msra.mxu0 %v2277
  %3369 = vmatprep.subr.bf16.mxu0 0
  %3370 = vmatpush1.bf16.msra.mxu0 %v2282
  %3371 = vmatprep.subr.bf16.mxu0 0
  %3372 = vmatpush1.bf16.msra.mxu0 %v2287
  %3373 = vmatprep.subr.bf16.mxu0 0
  %3374 = vmatpush1.bf16.msra.mxu0 %v2292
  %3375 = vmatprep.mubr.bf16.mxu0 %v594
  %3376 = vmatmul.mubr.bf16.gmra.mrb[0].mxu0 %v593
  %v3377 = vpop.f32.mrb[0].mxu0
  %v3378 = vadd.f32 %v1055, %v3377
  %v3379 = vpop.f32.mrb[0].mxu0
  %v3380 = vpop.f32.mrb[0].mxu0
  %v3381 = vpop.f32.mrb[0].mxu0
  %3382 = vdwg.mxu0
  %3383 = vmatprep.subr.bf16.mxu0 0
  %3384 = vmatpush1.bf16.msra.mxu0 %v2297
  %3385 = vmatprep.subr.bf16.mxu0 0
  %3386 = vmatpush1.bf16.msra.mxu0 %v2302
  %3387 = vmatprep.subr.bf16.mxu0 0
  %3388 = vmatpush1.bf16.msra.mxu0 %v2307
  %3389 = vmatprep.subr.bf16.mxu0 0
  %3390 = vmatpush1.bf16.msra.mxu0 %v2312
  %3391 = vmatprep.subr.bf16.mxu0 0
  %3392 = vmatpush1.bf16.msra.mxu0 %v2317
  %3393 = vmatprep.subr.bf16.mxu0 0
  %3394 = vmatpush1.bf16.msra.mxu0 %v2322
  %3395 = vmatprep.subr.bf16.mxu0 0
  %3396 = vmatpush1.bf16.msra.mxu0 %v2327
  %3397 = vmatprep.subr.bf16.mxu0 0
  %3398 = vmatpush1.bf16.msra.mxu0 %v2332
  %3399 = vmatprep.subr.bf16.mxu0 0
  %3400 = vmatpush1.bf16.msra.mxu0 %v2337
  %3401 = vmatprep.subr.bf16.mxu0 0
  %3402 = vmatpush1.bf16.msra.mxu0 %v2342
  %3403 = vmatprep.subr.bf16.mxu0 0
  %3404 = vmatpush1.bf16.msra.mxu0 %v2347
  %3405 = vmatprep.subr.bf16.mxu0 0
  %3406 = vmatpush1.bf16.msra.mxu0 %v2352
  %3407 = vmatprep.subr.bf16.mxu0 0
  %3408 = vmatpush1.bf16.msra.mxu0 %v2357
  %3409 = vmatprep.subr.bf16.mxu0 0
  %3410 = vmatpush1.bf16.msra.mxu0 %v2362
  %3411 = vmatprep.subr.bf16.mxu0 0
  %3412 = vmatpush1.bf16.msra.mxu0 %v2367
  %3413 = vmatprep.subr.bf16.mxu0 0
  %3414 = vmatpush1.bf16.msra.mxu0 %v2372
  %3415 = vmatprep.mubr.bf16.mxu0 %v596
  %3416 = vmatmul.mubr.bf16.gmra.mrb[0].mxu0 %v595
  %v3417 = vpop.f32.mrb[0].mxu0
  %v3418 = vadd.f32 %v3378, %v3417
  %v3419 = vpop.f32.mrb[0].mxu0
  %v3420 = vpop.f32.mrb[0].mxu0
  %v3421 = vpop.f32.mrb[0].mxu0
  %3422 = vdwg.mxu0
  %3423 = vmatprep.subr.bf16.mxu0 0
  %3424 = vmatpush1.bf16.msra.mxu0 %v2377
  %3425 = vmatprep.subr.bf16.mxu0 0
  %3426 = vmatpush1.bf16.msra.mxu0 %v2382
  %3427 = vmatprep.subr.bf16.mxu0 0
  %3428 = vmatpush1.bf16.msra.mxu0 %v2387
  %3429 = vmatprep.subr.bf16.mxu0 0
  %3430 = vmatpush1.bf16.msra.mxu0 %v2392
  %3431 = vmatprep.subr.bf16.mxu0 0
  %3432 = vmatpush1.bf16.msra.mxu0 %v2397
  %3433 = vmatprep.subr.bf16.mxu0 0
  %3434 = vmatpush1.bf16.msra.mxu0 %v2402
  %3435 = vmatprep.subr.bf16.mxu0 0
  %3436 = vmatpush1.bf16.msra.mxu0 %v2407
  %3437 = vmatprep.subr.bf16.mxu0 0
  %3438 = vmatpush1.bf16.msra.mxu0 %v2412
  %3439 = vmatprep.subr.bf16.mxu0 0
  %3440 = vmatpush1.bf16.msra.mxu0 %v2417
  %3441 = vmatprep.subr.bf16.mxu0 0
  %3442 = vmatpush1.bf16.msra.mxu0 %v2422
  %3443 = vmatprep.subr.bf16.mxu0 0
  %3444 = vmatpush1.bf16.msra.mxu0 %v2427
  %3445 = vmatprep.subr.bf16.mxu0 0
  %3446 = vmatpush1.bf16.msra.mxu0 %v2432
  %3447 = vmatprep.subr.bf16.mxu0 0
  %3448 = vmatpush1.bf16.msra.mxu0 %v2437
  %3449 = vmatprep.subr.bf16.mxu0 0
  %3450 = vmatpush1.bf16.msra.mxu0 %v2442
  %3451 = vmatprep.subr.bf16.mxu0 0
  %3452 = vmatpush1.bf16.msra.mxu0 %v2447
  %3453 = vmatprep.subr.bf16.mxu0 0
  %3454 = vmatpush1.bf16.msra.mxu0 %v2452
  %3455 = vmatprep.mubr.bf16.mxu0 %v598
  %3456 = vmatmul.mubr.bf16.gmra.mrb[0].mxu0 %v597
  %v3457 = vpop.f32.mrb[0].mxu0
  %v3458 = vadd.f32 %v3418, %v3457
  %v3459 = vpop.f32.mrb[0].mxu0
  %v3460 = vpop.f32.mrb[0].mxu0
  %v3461 = vpop.f32.mrb[0].mxu0
  %3462 = vdwg.mxu0
  %3463 = vmatprep.subr.bf16.mxu0 0
  %3464 = vmatpush1.bf16.msra.mxu0 %v2457
  %3465 = vmatprep.subr.bf16.mxu0 0
  %3466 = vmatpush1.bf16.msra.mxu0 %v2462
  %3467 = vmatprep.subr.bf16.mxu0 0
  %3468 = vmatpush1.bf16.msra.mxu0 %v2467
  %3469 = vmatprep.subr.bf16.mxu0 0
  %3470 = vmatpush1.bf16.msra.mxu0 %v2472
  %3471 = vmatprep.subr.bf16.mxu0 0
  %3472 = vmatpush1.bf16.msra.mxu0 %v2477
  %3473 = vmatprep.subr.bf16.mxu0 0
  %3474 = vmatpush1.bf16.msra.mxu0 %v2482
  %3475 = vmatprep.subr.bf16.mxu0 0
  %3476 = vmatpush1.bf16.msra.mxu0 %v2487
  %3477 = vmatprep.subr.bf16.mxu0 0
  %3478 = vmatpush1.bf16.msra.mxu0 %v2492
  %3479 = vmatprep.subr.bf16.mxu0 0
  %3480 = vmatpush1.bf16.msra.mxu0 %v2497
  %3481 = vmatprep.subr.bf16.mxu0 0
  %3482 = vmatpush1.bf16.msra.mxu0 %v2502
  %3483 = vmatprep.subr.bf16.mxu0 0
  %3484 = vmatpush1.bf16.msra.mxu0 %v2507
  %3485 = vmatprep.subr.bf16.mxu0 0
  %3486 = vmatpush1.bf16.msra.mxu0 %v2512
  %3487 = vmatprep.subr.bf16.mxu0 0
  %3488 = vmatpush1.bf16.msra.mxu0 %v2517
  %3489 = vmatprep.subr.bf16.mxu0 0
  %3490 = vmatpush1.bf16.msra.mxu0 %v2522
  %3491 = vmatprep.subr.bf16.mxu0 0
  %3492 = vmatpush1.bf16.msra.mxu0 %v2527
  %3493 = vmatprep.subr.bf16.mxu0 0
  %3494 = vmatpush1.bf16.msra.mxu0 %v2532
  %3495 = vmatprep.mubr.bf16.mxu0 %v600
  %3496 = vmatmul.mubr.bf16.gmra.mrb[0].mxu0 %v599
  %v3497 = vpop.f32.mrb[0].mxu0
  %v3498 = vadd.f32 %v3458, %v3497
  %v3499 = vpop.f32.mrb[0].mxu0
  %v3500 = vpop.f32.mrb[0].mxu0
  %v3501 = vpop.f32.mrb[0].mxu0
  %3502 = vdwg.mxu0
  %3503 = vmatprep.subr.bf16.mxu0 0
  %3504 = vmatpush1.bf16.msra.mxu0 %v2537
  %3505 = vmatprep.subr.bf16.mxu0 0
  %3506 = vmatpush1.bf16.msra.mxu0 %v2542
  %3507 = vmatprep.subr.bf16.mxu0 0
  %3508 = vmatpush1.bf16.msra.mxu0 %v2547
  %3509 = vmatprep.subr.bf16.mxu0 0
  %3510 = vmatpush1.bf16.msra.mxu0 %v2552
  %3511 = vmatprep.subr.bf16.mxu0 0
  %3512 = vmatpush1.bf16.msra.mxu0 %v2557
  %3513 = vmatprep.subr.bf16.mxu0 0
  %3514 = vmatpush1.bf16.msra.mxu0 %v2562
  %3515 = vmatprep.subr.bf16.mxu0 0
  %3516 = vmatpush1.bf16.msra.mxu0 %v2567
  %3517 = vmatprep.subr.bf16.mxu0 0
  %3518 = vmatpush1.bf16.msra.mxu0 %v2572
  %3519 = vmatprep.subr.bf16.mxu0 0
  %3520 = vmatpush1.bf16.msra.mxu0 0
  %3521 = vmatprep.subr.bf16.mxu0 0
  %3522 = vmatpush1.bf16.msra.mxu0 0
  %3523 = vmatprep.subr.bf16.mxu0 0
  %3524 = vmatpush1.bf16.msra.mxu0 0
  %3525 = vmatprep.subr.bf16.mxu0 0
  %3526 = vmatpush1.bf16.msra.mxu0 0
  %3527 = vmatprep.subr.bf16.mxu0 0
  %3528 = vmatpush1.bf16.msra.mxu0 0
  %3529 = vmatprep.subr.bf16.mxu0 0
  %3530 = vmatpush1.bf16.msra.mxu0 0
  %3531 = vmatprep.subr.bf16.mxu0 0
  %3532 = vmatpush1.bf16.msra.mxu0 0
  %3533 = vmatprep.subr.bf16.mxu0 0
  %3534 = vmatpush1.bf16.msra.mxu0 0
  %3535 = vmatprep.mubr.bf16.mxu0 0
  %3536 = vmatmul.mubr.bf16.gmra.mrb[0].mxu0 %v601
  %v3537 = vpop.f32.mrb[0].mxu0
  %v3538 = vadd.f32 %v3498, %v3537
  %v3539 = vpop.f32.mrb[0].mxu0
  %v3540 = vpop.f32.mrb[0].mxu0
  %v3541 = vpop.f32.mrb[0].mxu0
  %3542 = vdwg.mxu0
  %v3545 = vunpack.c.l.s4 1983009808
  %v3546 = vunpack.c.0.s8 %v3545
  %v3547 = vlaneseq
  %v3548 = vshrl.u32 %v3547, 7
  %v3549 = vsub.s32 %v3546, %v3548
  %v3550 = vrot.slane %v78, %v3549
  %v3551 = vcombine.high %v3550, %v3550
  %v3554 = vpack.c.bf16 %v3550, %v3550
  %v3555 = vpack.c.bf16 %v3551, %v3551
  %v3556 = vld [vmem:[%s11] sm:$0xff]
  %v3557 = vld [vmem:[%s11 + $0x8] sm:$0xff]
  %v3558 = vld [vmem:[%s11 + $0x10] sm:$0xff]
  %v3559 = vld [vmem:[%s11 + $0x18] sm:$0xff]
  %v3560 = vld [vmem:[%s11 + $0x20] sm:$0xff]
  %v3561 = vld [vmem:[%s11 + $0x28] sm:$0xff]
  %v3562 = vld [vmem:[%s11 + $0x30] sm:$0xff]
  %v3563 = vld [vmem:[%s11 + $0x38] sm:$0xff]
  %v3564 = vld [vmem:[%s11 + $0x40] sm:$0xff]
  %v3565 = vld [vmem:[%s11 + $0x48] sm:$0xff]
  %v3566 = vld [vmem:[%s11 + $0x50] sm:$0xff]
  %v3567 = vld [vmem:[%s11 + $0x58] sm:$0xff]
  %v3568 = vld [vmem:[%s11 + $0x60] sm:$0xff]
  %v3569 = vld [vmem:[%s11 + $0x68] sm:$0xff]
  %v3570 = vld [vmem:[%s11 + $0x70] sm:$0xff]
  %v3571 = vld [vmem:[%s11 + $0x78] sm:$0xff]
  %v3572 = vld [vmem:[%s11 + $0x80] sm:$0xff]
  %v3573 = vld [vmem:[%s11 + $0x88] sm:$0xff]
  %v3574 = vld [vmem:[%s11 + $0x90] sm:$0xff]
  %v3575 = vld [vmem:[%s11 + $0x98] sm:$0xff]
  %v3576 = vld [vmem:[%s12] sm:$0x3]
  %v3578 = vlaneseq
  %v3579 = vshrl.u32 %v3578, 7
  %v3580 = vsub.s32 0, %v3579
  %v3581 = vrot.slane %v3576, %v3580
  %v3582 = vlaneseq
  %v3583 = vshrl.u32 %v3582, 7
  %v3584 = vsub.s32 1, %v3583
  %v3585 = vrot.slane %v3576, %v3584
  %v3608 = vunpack.c.l.b16 %v3556
  %v3609 = vunpack.c.h.b16 %v3556
  %v3610 = vunpack.c.l.b16 %v3557
  %v3611 = vunpack.c.h.b16 %v3557
  %v3612 = vunpack.c.l.b16 %v3558
  %v3613 = vunpack.c.h.b16 %v3558
  %v3614 = vunpack.c.l.b16 %v3559
  %v3615 = vunpack.c.h.b16 %v3559
  %v3616 = vunpack.c.l.b16 %v3560
  %v3617 = vunpack.c.h.b16 %v3560
  %v3618 = vunpack.c.l.b16 %v3561
  %v3619 = vunpack.c.h.b16 %v3561
  %v3620 = vunpack.c.l.b16 %v3562
  %v3621 = vunpack.c.h.b16 %v3562
  %v3622 = vunpack.c.l.b16 %v3563
  %v3623 = vunpack.c.h.b16 %v3563
  %v3624 = vunpack.c.l.b16 %v3564
  %v3625 = vunpack.c.h.b16 %v3564
  %v3626 = vunpack.c.l.b16 %v3565
  %v3627 = vunpack.c.h.b16 %v3565
  %v3628 = vunpack.c.l.b16 %v3566
  %v3629 = vunpack.c.h.b16 %v3566
  %v3630 = vunpack.c.l.b16 %v3567
  %v3631 = vunpack.c.h.b16 %v3567
  %v3632 = vunpack.c.l.b16 %v3568
  %v3633 = vunpack.c.h.b16 %v3568
  %v3634 = vunpack.c.l.b16 %v3569
  %v3635 = vunpack.c.h.b16 %v3569
  %v3636 = vunpack.c.l.b16 %v3570
  %v3637 = vunpack.c.h.b16 %v3570
  %v3638 = vunpack.c.l.b16 %v3571
  %v3639 = vunpack.c.h.b16 %v3571
  %v3640 = vunpack.c.l.b16 %v3572
  %v3641 = vunpack.c.h.b16 %v3572
  %v3642 = vunpack.c.l.b16 %v3573
  %v3643 = vunpack.c.h.b16 %v3573
  %v3644 = vunpack.c.l.b16 %v3574
  %v3645 = vunpack.c.h.b16 %v3574
  %v3646 = vunpack.c.l.b16 %v3575
  %v3647 = vunpack.c.h.b16 %v3575
  %v3648 = vpack.c.b16 %v3610, %v3608
  %v3649 = vpack.c.b16 %v3611, %v3609
  %v3650 = vpack.c.b16 %v3614, %v3612
  %v3651 = vpack.c.b16 %v3615, %v3613
  %v3652 = vpack.c.b16 %v3618, %v3616
  %v3653 = vpack.c.b16 %v3619, %v3617
  %v3654 = vpack.c.b16 %v3622, %v3620
  %v3655 = vpack.c.b16 %v3623, %v3621
  %v3656 = vpack.c.b16 %v3626, %v3624
  %v3657 = vpack.c.b16 %v3627, %v3625
  %v3658 = vpack.c.b16 %v3630, %v3628
  %v3659 = vpack.c.b16 %v3631, %v3629
  %v3660 = vpack.c.b16 %v3634, %v3632
  %v3661 = vpack.c.b16 %v3635, %v3633
  %v3662 = vpack.c.b16 %v3638, %v3636
  %v3663 = vpack.c.b16 %v3639, %v3637
  %v3664 = vpack.c.b16 %v3642, %v3640
  %v3665 = vpack.c.b16 %v3643, %v3641
  %v3666 = vpack.c.b16 %v3646, %v3644
  %v3667 = vpack.c.b16 %v3647, %v3645
  %vm3688 = vcmask 261120
  %v3690 = vsel %vm3688, %v3555, 0
  %3692 = vmatprep.subr.bf16.mxu0 %v3649
  %3693 = vmatpush1.bf16.msra.mxu0 %v3648
  %3694 = vmatprep.subr.bf16.mxu0 %v3651
  %3695 = vmatpush1.bf16.msra.mxu0 %v3650
  %3696 = vmatprep.subr.bf16.mxu0 %v3653
  %3697 = vmatpush1.bf16.msra.mxu0 %v3652
  %3698 = vmatprep.subr.bf16.mxu0 %v3655
  %3699 = vmatpush1.bf16.msra.mxu0 %v3654
  %3700 = vmatprep.subr.bf16.mxu0 %v3657
  %3701 = vmatpush1.bf16.msra.mxu0 %v3656
  %3702 = vmatprep.subr.bf16.mxu0 %v3659
  %3703 = vmatpush1.bf16.msra.mxu0 %v3658
  %3704 = vmatprep.subr.bf16.mxu0 %v3661
  %3705 = vmatpush1.bf16.msra.mxu0 %v3660
  %3706 = vmatprep.subr.bf16.mxu0 %v3663
  %3707 = vmatpush1.bf16.msra.mxu0 %v3662
  %3708 = vmatprep.subr.bf16.mxu0 %v3665
  %3709 = vmatpush1.bf16.msra.mxu0 %v3664
  %3710 = vmatprep.subr.bf16.mxu0 %v3667
  %3711 = vmatpush1.bf16.msra.mxu0 %v3666
  %3712 = vmatprep.subr.bf16.mxu0 0
  %3713 = vmatpush1.bf16.msra.mxu0 0
  %3714 = vmatprep.subr.bf16.mxu0 0
  %3715 = vmatpush1.bf16.msra.mxu0 0
  %3716 = vmatprep.subr.bf16.mxu0 0
  %3717 = vmatpush1.bf16.msra.mxu0 0
  %3718 = vmatprep.subr.bf16.mxu0 0
  %3719 = vmatpush1.bf16.msra.mxu0 0
  %3720 = vmatprep.subr.bf16.mxu0 0
  %3721 = vmatpush1.bf16.msra.mxu0 0
  %3722 = vmatprep.subr.bf16.mxu0 0
  %3723 = vmatpush1.bf16.msra.mxu0 0
  %3724 = vmatprep.mubr.bf16.mxu0 %v3690
  %3725 = vmatmul.mubr.bf16.gmra.mrb[0].mxu0 %v3554
  %v3726 = vpop.f32.mrb[0].mxu0
  %v3727 = vadd.f32 %v3581, %v3726
  %v3728 = vpop.f32.mrb[0].mxu0
  %v3729 = vadd.f32 %v3585, %v3728
  %v3730 = vpop.f32.mrb[0].mxu0
  %v3731 = vpop.f32.mrb[0].mxu0
  %3732 = vdwg.mxu0
  %v3733 = vpack.c.bf16 %v3132, %v3132
  %v3734 = vpack.c.bf16 %v3134, %v3134
  %v3735 = vpack.c.bf16 %v3337, %v3337
  %v3736 = vpack.c.bf16 %v3339, %v3339
  %v3737 = vpack.c.bf16 %v3538, %v3538
  %v3738 = vld [vmem:[%s13] sm:$0xff]
  %v3739 = vld [vmem:[%s13 + $0x8] sm:$0xff]
  %v3740 = vld [vmem:[%s13 + $0x10] sm:$0xff]
  %v3741 = vld [vmem:[%s13 + $0x18] sm:$0xff]
  %v3742 = vld [vmem:[%s13 + $0x20] sm:$0xff]
  %v3743 = vld [vmem:[%s13 + $0x28] sm:$0xff]
  %v3744 = vld [vmem:[%s13 + $0x30] sm:$0xff]
  %v3745 = vld [vmem:[%s13 + $0x38] sm:$0xff]
  %v3746 = vld [vmem:[%s13 + $0x40] sm:$0xff]
  %v3747 = vld [vmem:[%s13 + $0x48] sm:$0xff]
  %v3748 = vld [vmem:[%s13 + $0x50] sm:$0xff]
  %v3749 = vld [vmem:[%s13 + $0x58] sm:$0xff]
  %v3750 = vld [vmem:[%s13 + $0x60] sm:$0xff]
  %v3751 = vld [vmem:[%s13 + $0x68] sm:$0xff]
  %v3752 = vld [vmem:[%s13 + $0x70] sm:$0xff]
  %v3753 = vld [vmem:[%s13 + $0x78] sm:$0xff]
  %v3754 = vld [vmem:[%s13 + $0x80] sm:$0xff]
  %v3755 = vld [vmem:[%s13 + $0x88] sm:$0xff]
  %v3756 = vld [vmem:[%s13 + $0x90] sm:$0xff]
  %v3757 = vld [vmem:[%s13 + $0x98] sm:$0xff]
  %v3758 = vld [vmem:[%s13 + $0xa0] sm:$0xff]
  %v3759 = vld [vmem:[%s13 + $0xa8] sm:$0xff]
  %v3760 = vld [vmem:[%s13 + $0xb0] sm:$0xff]
  %v3761 = vld [vmem:[%s13 + $0xb8] sm:$0xff]
  %v3762 = vld [vmem:[%s13 + $0xc0] sm:$0xff]
  %v3763 = vld [vmem:[%s13 + $0xc8] sm:$0xff]
  %v3764 = vld [vmem:[%s13 + $0xd0] sm:$0xff]
  %v3765 = vld [vmem:[%s13 + $0xd8] sm:$0xff]
  %v3766 = vld [vmem:[%s13 + $0xe0] sm:$0xff]
  %v3767 = vld [vmem:[%s13 + $0xe8] sm:$0xff]
  %v3768 = vld [vmem:[%s13 + $0xf0] sm:$0xff]
  %v3769 = vld [vmem:[%s13 + $0xf8] sm:$0xff]
  %v3770 = vld [vmem:[%s13 + $0x100] sm:$0xff]
  %v3771 = vld [vmem:[%s13 + $0x108] sm:$0xff]
  %v3772 = vld [vmem:[%s13 + $0x110] sm:$0xff]
  %v3773 = vld [vmem:[%s13 + $0x118] sm:$0xff]
  %v3774 = vld [vmem:[%s13 + $0x120] sm:$0xff]
  %v3775 = vld [vmem:[%s13 + $0x128] sm:$0xff]
  %v3776 = vld [vmem:[%s13 + $0x130] sm:$0xff]
  %v3777 = vld [vmem:[%s13 + $0x138] sm:$0xff]
  %v3778 = vld [vmem:[%s13 + $0x140] sm:$0xff]
  %v3779 = vld [vmem:[%s13 + $0x148] sm:$0xff]
  %v3780 = vld [vmem:[%s13 + $0x150] sm:$0xff]
  %v3781 = vld [vmem:[%s13 + $0x158] sm:$0xff]
  %v3782 = vld [vmem:[%s13 + $0x160] sm:$0xff]
  %v3783 = vld [vmem:[%s13 + $0x168] sm:$0xff]
  %v3784 = vld [vmem:[%s13 + $0x170] sm:$0xff]
  %v3785 = vld [vmem:[%s13 + $0x178] sm:$0xff]
  %v3786 = vld [vmem:[%s13 + $0x180] sm:$0xff]
  %v3787 = vld [vmem:[%s13 + $0x188] sm:$0xff]
  %v3788 = vld [vmem:[%s13 + $0x190] sm:$0xff]
  %v3789 = vld [vmem:[%s13 + $0x198] sm:$0xff]
  %v3790 = vld [vmem:[%s13 + $0x1a0] sm:$0xff]
  %v3791 = vld [vmem:[%s13 + $0x1a8] sm:$0xff]
  %v3792 = vld [vmem:[%s13 + $0x1b0] sm:$0xff]
  %v3793 = vld [vmem:[%s13 + $0x1b8] sm:$0xff]
  %v3794 = vld [vmem:[%s13 + $0x1c0] sm:$0xff]
  %v3795 = vld [vmem:[%s13 + $0x1c8] sm:$0xff]
  %v3796 = vld [vmem:[%s13 + $0x1d0] sm:$0xff]
  %v3797 = vld [vmem:[%s13 + $0x1d8] sm:$0xff]
  %v3798 = vld [vmem:[%s13 + $0x1e0] sm:$0xff]
  %v3799 = vld [vmem:[%s13 + $0x1e8] sm:$0xff]
  %v3800 = vld [vmem:[%s13 + $0x1f0] sm:$0xff]
  %v3801 = vld [vmem:[%s13 + $0x1f8] sm:$0xff]
  %v3802 = vld [vmem:[%s13 + $0x200] sm:$0xff]
  %v3803 = vld [vmem:[%s13 + $0x208] sm:$0xff]
  %v3804 = vld [vmem:[%s13 + $0x210] sm:$0xff]
  %v3805 = vld [vmem:[%s13 + $0x218] sm:$0xff]
  %v3806 = vld [vmem:[%s13 + $0x220] sm:$0xff]
  %v3807 = vld [vmem:[%s13 + $0x228] sm:$0xff]
  %v3808 = vld [vmem:[%s13 + $0x230] sm:$0xff]
  %v3809 = vld [vmem:[%s13 + $0x238] sm:$0xff]
  %v3810 = vld [vmem:[%s13 + $0x240] sm:$0xff]
  %v3811 = vld [vmem:[%s13 + $0x248] sm:$0xff]
  %v3812 = vld [vmem:[%s13 + $0x250] sm:$0xff]
  %v3813 = vld [vmem:[%s13 + $0x258] sm:$0xff]
  %v3814 = vld [vmem:[%s13 + $0x260] sm:$0xff]
  %v3815 = vld [vmem:[%s13 + $0x268] sm:$0xff]
  %v3816 = vld [vmem:[%s13 + $0x270] sm:$0xff]
  %v3817 = vld [vmem:[%s13 + $0x278] sm:$0xff]
  %v3818 = vld [vmem:[%s13 + $0x280] sm:$0xff]
  %v3819 = vld [vmem:[%s13 + $0x288] sm:$0xff]
  %v3820 = vld [vmem:[%s13 + $0x290] sm:$0xff]
  %v3821 = vld [vmem:[%s13 + $0x298] sm:$0xff]
  %v3822 = vld [vmem:[%s13 + $0x2a0] sm:$0xff]
  %v3823 = vld [vmem:[%s13 + $0x2a8] sm:$0xff]
  %v3824 = vld [vmem:[%s13 + $0x2b0] sm:$0xff]
  %v3825 = vld [vmem:[%s13 + $0x2b8] sm:$0xff]
  %v3826 = vld [vmem:[%s13 + $0x2c0] sm:$0xff]
  %v3827 = vld [vmem:[%s13 + $0x2c8] sm:$0xff]
  %v3828 = vld [vmem:[%s13 + $0x2d0] sm:$0xff]
  %v3829 = vld [vmem:[%s13 + $0x2d8] sm:$0xff]
  %v3830 = vld [vmem:[%s13 + $0x2e0] sm:$0xff]
  %v3831 = vld [vmem:[%s13 + $0x2e8] sm:$0xff]
  %v3832 = vld [vmem:[%s13 + $0x2f0] sm:$0xff]
  %v3833 = vld [vmem:[%s13 + $0x2f8] sm:$0xff]
  %v3834 = vld [vmem:[%s13 + $0x300] sm:$0xff]
  %v3835 = vld [vmem:[%s13 + $0x308] sm:$0xff]
  %v3836 = vld [vmem:[%s13 + $0x310] sm:$0xff]
  %v3837 = vld [vmem:[%s13 + $0x318] sm:$0xff]
  %v3838 = vld [vmem:[%s13 + $0x320] sm:$0xff]
  %v3839 = vld [vmem:[%s13 + $0x328] sm:$0xff]
  %v3840 = vld [vmem:[%s13 + $0x330] sm:$0xff]
  %v3841 = vld [vmem:[%s13 + $0x338] sm:$0xff]
  %v3842 = vld [vmem:[%s13 + $0x340] sm:$0xff]
  %v3843 = vld [vmem:[%s13 + $0x348] sm:$0xff]
  %v3844 = vld [vmem:[%s13 + $0x350] sm:$0xff]
  %v3845 = vld [vmem:[%s13 + $0x358] sm:$0xff]
  %v3846 = vld [vmem:[%s13 + $0x360] sm:$0xff]
  %v3847 = vld [vmem:[%s13 + $0x368] sm:$0xff]
  %v3848 = vld [vmem:[%s13 + $0x370] sm:$0xff]
  %v3849 = vld [vmem:[%s13 + $0x378] sm:$0xff]
  %v3850 = vld [vmem:[%s13 + $0x380] sm:$0xff]
  %v3851 = vld [vmem:[%s13 + $0x388] sm:$0xff]
  %v3852 = vld [vmem:[%s13 + $0x390] sm:$0xff]
  %v3853 = vld [vmem:[%s13 + $0x398] sm:$0xff]
  %v3854 = vld [vmem:[%s13 + $0x3a0] sm:$0xff]
  %v3855 = vld [vmem:[%s13 + $0x3a8] sm:$0xff]
  %v3856 = vld [vmem:[%s13 + $0x3b0] sm:$0xff]
  %v3857 = vld [vmem:[%s13 + $0x3b8] sm:$0xff]
  %v3858 = vld [vmem:[%s13 + $0x3c0] sm:$0xff]
  %v3859 = vld [vmem:[%s13 + $0x3c8] sm:$0xff]
  %v3860 = vld [vmem:[%s13 + $0x3d0] sm:$0xff]
  %v3861 = vld [vmem:[%s13 + $0x3d8] sm:$0xff]
  %v3862 = vld [vmem:[%s13 + $0x3e0] sm:$0xff]
  %v3863 = vld [vmem:[%s13 + $0x3e8] sm:$0xff]
  %v3864 = vld [vmem:[%s13 + $0x3f0] sm:$0xff]
  %v3865 = vld [vmem:[%s13 + $0x3f8] sm:$0xff]
  %v3866 = vld [vmem:[%s13 + $0x400] sm:$0xff]
  %v3867 = vld [vmem:[%s13 + $0x408] sm:$0xff]
  %v3868 = vld [vmem:[%s13 + $0x410] sm:$0xff]
  %v3869 = vld [vmem:[%s13 + $0x418] sm:$0xff]
  %v3870 = vld [vmem:[%s13 + $0x420] sm:$0xff]
  %v3871 = vld [vmem:[%s13 + $0x428] sm:$0xff]
  %v3872 = vld [vmem:[%s13 + $0x430] sm:$0xff]
  %v3873 = vld [vmem:[%s13 + $0x438] sm:$0xff]
  %v3874 = vld [vmem:[%s13 + $0x440] sm:$0xff]
  %v3875 = vld [vmem:[%s13 + $0x448] sm:$0xff]
  %v3876 = vld [vmem:[%s13 + $0x450] sm:$0xff]
  %v3877 = vld [vmem:[%s13 + $0x458] sm:$0xff]
  %v3878 = vld [vmem:[%s13 + $0x460] sm:$0xff]
  %v3879 = vld [vmem:[%s13 + $0x468] sm:$0xff]
  %v3880 = vld [vmem:[%s13 + $0x470] sm:$0xff]
  %v3881 = vld [vmem:[%s13 + $0x478] sm:$0xff]
  %v3882 = vpack.c.bf16 %v3727, %v3727
  %v3883 = vpack.c.bf16 %v3729, %v3729
  %v3884 = vld [vmem:[%s14] sm:$0xff]
  %v3885 = vld [vmem:[%s14 + $0x8] sm:$0xff]
  %v3886 = vld [vmem:[%s14 + $0x10] sm:$0xff]
  %v3887 = vld [vmem:[%s14 + $0x18] sm:$0xff]
  %v3888 = vld [vmem:[%s14 + $0x20] sm:$0xff]
  %v3889 = vld [vmem:[%s14 + $0x28] sm:$0xff]
  %v3890 = vld [vmem:[%s14 + $0x30] sm:$0xff]
  %v3891 = vld [vmem:[%s14 + $0x38] sm:$0xff]
  %v3892 = vld [vmem:[%s14 + $0x40] sm:$0xff]
  %v3893 = vld [vmem:[%s14 + $0x48] sm:$0xff]
  %v3894 = vld [vmem:[%s14 + $0x50] sm:$0xff]
  %v3895 = vld [vmem:[%s14 + $0x58] sm:$0xff]
  %v3896 = vld [vmem:[%s14 + $0x60] sm:$0xff]
  %v3897 = vld [vmem:[%s14 + $0x68] sm:$0xff]
  %v3898 = vld [vmem:[%s14 + $0x70] sm:$0xff]
  %v3899 = vld [vmem:[%s14 + $0x78] sm:$0xff]
  %v3900 = vld [vmem:[%s14 + $0x80] sm:$0xff]
  %v3901 = vld [vmem:[%s14 + $0x88] sm:$0xff]
  %v3902 = vld [vmem:[%s14 + $0x90] sm:$0xff]
  %v3903 = vld [vmem:[%s14 + $0x98] sm:$0xff]
  %v3904 = vld [vmem:[%s14 + $0xa0] sm:$0xff]
  %v3905 = vld [vmem:[%s14 + $0xa8] sm:$0xff]
  %v3906 = vld [vmem:[%s14 + $0xb0] sm:$0xff]
  %v3907 = vld [vmem:[%s14 + $0xb8] sm:$0xff]
  %v3908 = vld [vmem:[%s14 + $0xc0] sm:$0xff]
  %v3909 = vld [vmem:[%s14 + $0xc8] sm:$0xff]
  %v3910 = vld [vmem:[%s14 + $0xd0] sm:$0xff]
  %v3911 = vld [vmem:[%s14 + $0xd8] sm:$0xff]
  %v3912 = vld [vmem:[%s14 + $0xe0] sm:$0xff]
  %v3913 = vld [vmem:[%s14 + $0xe8] sm:$0xff]
  %v3914 = vld [vmem:[%s14 + $0xf0] sm:$0xff]
  %v3915 = vld [vmem:[%s14 + $0xf8] sm:$0xff]
  %v3916 = vld [vmem:[%s14 + $0x100] sm:$0xff]
  %v3917 = vld [vmem:[%s14 + $0x108] sm:$0xff]
  %v3918 = vld [vmem:[%s14 + $0x110] sm:$0xff]
  %v3919 = vld [vmem:[%s14 + $0x118] sm:$0xff]
  %v3920 = vld [vmem:[%s14 + $0x120] sm:$0xff]
  %v3921 = vld [vmem:[%s14 + $0x128] sm:$0xff]
  %v3922 = vld [vmem:[%s14 + $0x130] sm:$0xff]
  %v3923 = vld [vmem:[%s14 + $0x138] sm:$0xff]
  %v3964 = vunpack.c.l.b16 %v3884
  %v3965 = vunpack.c.h.b16 %v3884
  %v3966 = vunpack.c.l.b16 %v3885
  %v3967 = vunpack.c.h.b16 %v3885
  %v3968 = vunpack.c.l.b16 %v3886
  %v3969 = vunpack.c.h.b16 %v3886
  %v3970 = vunpack.c.l.b16 %v3887
  %v3971 = vunpack.c.h.b16 %v3887
  %v3972 = vunpack.c.l.b16 %v3888
  %v3973 = vunpack.c.h.b16 %v3888
  %v3974 = vunpack.c.l.b16 %v3889
  %v3975 = vunpack.c.h.b16 %v3889
  %v3976 = vunpack.c.l.b16 %v3890
  %v3977 = vunpack.c.h.b16 %v3890
  %v3978 = vunpack.c.l.b16 %v3891
  %v3979 = vunpack.c.h.b16 %v3891
  %v3980 = vunpack.c.l.b16 %v3892
  %v3981 = vunpack.c.h.b16 %v3892
  %v3982 = vunpack.c.l.b16 %v3893
  %v3983 = vunpack.c.h.b16 %v3893
  %v3984 = vunpack.c.l.b16 %v3894
  %v3985 = vunpack.c.h.b16 %v3894
  %v3986 = vunpack.c.l.b16 %v3895
  %v3987 = vunpack.c.h.b16 %v3895
  %v3988 = vunpack.c.l.b16 %v3896
  %v3989 = vunpack.c.h.b16 %v3896
  %v3990 = vunpack.c.l.b16 %v3897
  %v3991 = vunpack.c.h.b16 %v3897
  %v3992 = vunpack.c.l.b16 %v3898
  %v3993 = vunpack.c.h.b16 %v3898
  %v3994 = vunpack.c.l.b16 %v3899
  %v3995 = vunpack.c.h.b16 %v3899
  %v3996 = vunpack.c.l.b16 %v3900
  %v3997 = vunpack.c.h.b16 %v3900
  %v3998 = vunpack.c.l.b16 %v3901
  %v3999 = vunpack.c.h.b16 %v3901
  %v4000 = vunpack.c.l.b16 %v3902
  %v4001 = vunpack.c.h.b16 %v3902
  %v4002 = vunpack.c.l.b16 %v3903
  %v4003 = vunpack.c.h.b16 %v3903
  %v4004 = vunpack.c.l.b16 %v3904
  %v4005 = vunpack.c.h.b16 %v3904
  %v4006 = vunpack.c.l.b16 %v3905
  %v4007 = vunpack.c.h.b16 %v3905
  %v4008 = vunpack.c.l.b16 %v3906
  %v4009 = vunpack.c.h.b16 %v3906
  %v4010 = vunpack.c.l.b16 %v3907
  %v4011 = vunpack.c.h.b16 %v3907
  %v4012 = vunpack.c.l.b16 %v3908
  %v4013 = vunpack.c.h.b16 %v3908
  %v4014 = vunpack.c.l.b16 %v3909
  %v4015 = vunpack.c.h.b16 %v3909
  %v4016 = vunpack.c.l.b16 %v3910
  %v4017 = vunpack.c.h.b16 %v3910
  %v4018 = vunpack.c.l.b16 %v3911
  %v4019 = vunpack.c.h.b16 %v3911
  %v4020 = vunpack.c.l.b16 %v3912
  %v4021 = vunpack.c.h.b16 %v3912
  %v4022 = vunpack.c.l.b16 %v3913
  %v4023 = vunpack.c.h.b16 %v3913
  %v4024 = vunpack.c.l.b16 %v3914
  %v4025 = vunpack.c.h.b16 %v3914
  %v4026 = vunpack.c.l.b16 %v3915
  %v4027 = vunpack.c.h.b16 %v3915
  %v4028 = vunpack.c.l.b16 %v3916
  %v4029 = vunpack.c.h.b16 %v3916
  %v4030 = vunpack.c.l.b16 %v3917
  %v4031 = vunpack.c.h.b16 %v3917
  %v4032 = vunpack.c.l.b16 %v3918
  %v4033 = vunpack.c.h.b16 %v3918
  %v4034 = vunpack.c.l.b16 %v3919
  %v4035 = vunpack.c.h.b16 %v3919
  %v4036 = vunpack.c.l.b16 %v3920
  %v4037 = vunpack.c.h.b16 %v3920
  %v4038 = vunpack.c.l.b16 %v3921
  %v4039 = vunpack.c.h.b16 %v3921
  %v4040 = vunpack.c.l.b16 %v3922
  %v4041 = vunpack.c.h.b16 %v3922
  %v4042 = vunpack.c.l.b16 %v3923
  %v4043 = vunpack.c.h.b16 %v3923
  %v4044 = vpack.c.b16 %v3968, %v3964
  %v4045 = vpack.c.b16 %v3969, %v3965
  %v4046 = vpack.c.b16 %v3970, %v3966
  %v4047 = vpack.c.b16 %v3971, %v3967
  %v4048 = vpack.c.b16 %v3976, %v3972
  %v4049 = vpack.c.b16 %v3977, %v3973
  %v4050 = vpack.c.b16 %v3978, %v3974
  %v4051 = vpack.c.b16 %v3979, %v3975
  %v4052 = vpack.c.b16 %v3984, %v3980
  %v4053 = vpack.c.b16 %v3985, %v3981
  %v4054 = vpack.c.b16 %v3986, %v3982
  %v4055 = vpack.c.b16 %v3987, %v3983
  %v4056 = vpack.c.b16 %v3992, %v3988
  %v4057 = vpack.c.b16 %v3993, %v3989
  %v4058 = vpack.c.b16 %v3994, %v3990
  %v4059 = vpack.c.b16 %v3995, %v3991
  %v4060 = vpack.c.b16 %v4000, %v3996
  %v4061 = vpack.c.b16 %v4001, %v3997
  %v4062 = vpack.c.b16 %v4002, %v3998
  %v4063 = vpack.c.b16 %v4003, %v3999
  %v4064 = vpack.c.b16 %v4008, %v4004
  %v4065 = vpack.c.b16 %v4009, %v4005
  %v4066 = vpack.c.b16 %v4010, %v4006
  %v4067 = vpack.c.b16 %v4011, %v4007
  %v4068 = vpack.c.b16 %v4016, %v4012
  %v4069 = vpack.c.b16 %v4017, %v4013
  %v4070 = vpack.c.b16 %v4018, %v4014
  %v4071 = vpack.c.b16 %v4019, %v4015
  %v4072 = vpack.c.b16 %v4024, %v4020
  %v4073 = vpack.c.b16 %v4025, %v4021
  %v4074 = vpack.c.b16 %v4026, %v4022
  %v4075 = vpack.c.b16 %v4027, %v4023
  %v4076 = vpack.c.b16 %v4032, %v4028
  %v4077 = vpack.c.b16 %v4033, %v4029
  %v4078 = vpack.c.b16 %v4034, %v4030
  %v4079 = vpack.c.b16 %v4035, %v4031
  %v4080 = vpack.c.b16 %v4040, %v4036
  %v4081 = vpack.c.b16 %v4041, %v4037
  %v4082 = vpack.c.b16 %v4042, %v4038
  %v4083 = vpack.c.b16 %v4043, %v4039
  %v4125 = vsel %vm3688, %v3883, 0
  %4127 = vmatprep.subr.bf16.mxu0 %v4045
  %4128 = vmatpush1.bf16.msra.mxu0 %v4044
  %4129 = vmatprep.subr.bf16.mxu0 %v4049
  %4130 = vmatpush1.bf16.msra.mxu0 %v4048
  %4131 = vmatprep.subr.bf16.mxu0 %v4053
  %4132 = vmatpush1.bf16.msra.mxu0 %v4052
  %4133 = vmatprep.subr.bf16.mxu0 %v4057
  %4134 = vmatpush1.bf16.msra.mxu0 %v4056
  %4135 = vmatprep.subr.bf16.mxu0 %v4061
  %4136 = vmatpush1.bf16.msra.mxu0 %v4060
  %4137 = vmatprep.subr.bf16.mxu0 %v4065
  %4138 = vmatpush1.bf16.msra.mxu0 %v4064
  %4139 = vmatprep.subr.bf16.mxu0 %v4069
  %4140 = vmatpush1.bf16.msra.mxu0 %v4068
  %4141 = vmatprep.subr.bf16.mxu0 %v4073
  %4142 = vmatpush1.bf16.msra.mxu0 %v4072
  %4143 = vmatprep.subr.bf16.mxu0 %v4077
  %4144 = vmatpush1.bf16.msra.mxu0 %v4076
  %4145 = vmatprep.subr.bf16.mxu0 %v4081
  %4146 = vmatpush1.bf16.msra.mxu0 %v4080
  %4147 = vmatprep.subr.bf16.mxu0 0
  %4148 = vmatpush1.bf16.msra.mxu0 0
  %4149 = vmatprep.subr.bf16.mxu0 0
  %4150 = vmatpush1.bf16.msra.mxu0 0
  %4151 = vmatprep.subr.bf16.mxu0 0
  %4152 = vmatpush1.bf16.msra.mxu0 0
  %4153 = vmatprep.subr.bf16.mxu0 0
  %4154 = vmatpush1.bf16.msra.mxu0 0
  %4155 = vmatprep.subr.bf16.mxu0 0
  %4156 = vmatpush1.bf16.msra.mxu0 0
  %4157 = vmatprep.subr.bf16.mxu0 0
  %4158 = vmatpush1.bf16.msra.mxu0 0
  %4159 = vmatprep.mubr.bf16.mxu0 %v4125
  %4160 = vmatmul.mubr.bf16.gmra.mrb[0].mxu0 %v3882
  %v4161 = vpop.f32.mrb[0].mxu0
  %v4162 = vadd.f32 0.0, %v4161
  %v4163 = vpop.f32.mrb[0].mxu0
  %v4164 = vadd.f32 0.0, %v4163
  %v4165 = vpop.f32.mrb[0].mxu0
  %v4166 = vpop.f32.mrb[0].mxu0
  %4167 = vdwg.mxu0
  %4168 = vmatprep.subr.bf16.mxu0 %v4047
  %4169 = vmatpush1.bf16.msra.mxu0 %v4046
  %4170 = vmatprep.subr.bf16.mxu0 %v4051
  %4171 = vmatpush1.bf16.msra.mxu0 %v4050
  %4172 = vmatprep.subr.bf16.mxu0 %v4055
  %4173 = vmatpush1.bf16.msra.mxu0 %v4054
  %4174 = vmatprep.subr.bf16.mxu0 %v4059
  %4175 = vmatpush1.bf16.msra.mxu0 %v4058
  %4176 = vmatprep.subr.bf16.mxu0 %v4063
  %4177 = vmatpush1.bf16.msra.mxu0 %v4062
  %4178 = vmatprep.subr.bf16.mxu0 %v4067
  %4179 = vmatpush1.bf16.msra.mxu0 %v4066
  %4180 = vmatprep.subr.bf16.mxu0 %v4071
  %4181 = vmatpush1.bf16.msra.mxu0 %v4070
  %4182 = vmatprep.subr.bf16.mxu0 %v4075
  %4183 = vmatpush1.bf16.msra.mxu0 %v4074
  %4184 = vmatprep.subr.bf16.mxu0 %v4079
  %4185 = vmatpush1.bf16.msra.mxu0 %v4078
  %4186 = vmatprep.subr.bf16.mxu0 %v4083
  %4187 = vmatpush1.bf16.msra.mxu0 %v4082
  %4188 = vmatprep.subr.bf16.mxu0 0
  %4189 = vmatpush1.bf16.msra.mxu0 0
  %4190 = vmatprep.subr.bf16.mxu0 0
  %4191 = vmatpush1.bf16.msra.mxu0 0
  %4192 = vmatprep.subr.bf16.mxu0 0
  %4193 = vmatpush1.bf16.msra.mxu0 0
  %4194 = vmatprep.subr.bf16.mxu0 0
  %4195 = vmatpush1.bf16.msra.mxu0 0
  %4196 = vmatprep.subr.bf16.mxu0 0
  %4197 = vmatpush1.bf16.msra.mxu0 0
  %4198 = vmatprep.subr.bf16.mxu0 0
  %4199 = vmatpush1.bf16.msra.mxu0 0
  %4200 = vmatprep.mubr.bf16.mxu0 %v4125
  %4201 = vmatmul.mubr.bf16.gmra.mrb[0].mxu0 %v3882
  %v4202 = vpop.f32.mrb[0].mxu0
  %v4203 = vadd.f32 0.0, %v4202
  %v4204 = vpop.f32.mrb[0].mxu0
  %v4205 = vadd.f32 0.0, %v4204
  %v4206 = vpop.f32.mrb[0].mxu0
  %v4207 = vpop.f32.mrb[0].mxu0
  %4208 = vdwg.mxu0
  %v4353 = vunpack.c.l.b16 %v3738
  %v4354 = vunpack.c.h.b16 %v3738
  %v4355 = vunpack.c.l.b16 %v3739
  %v4356 = vunpack.c.h.b16 %v3739
  %v4357 = vunpack.c.l.b16 %v3740
  %v4358 = vunpack.c.h.b16 %v3740
  %v4359 = vunpack.c.l.b16 %v3741
  %v4360 = vunpack.c.h.b16 %v3741
  %v4361 = vunpack.c.l.b16 %v3742
  %v4362 = vunpack.c.h.b16 %v3742
  %v4363 = vunpack.c.l.b16 %v3743
  %v4364 = vunpack.c.h.b16 %v3743
  %v4365 = vunpack.c.l.b16 %v3744
  %v4366 = vunpack.c.h.b16 %v3744
  %v4367 = vunpack.c.l.b16 %v3745
  %v4368 = vunpack.c.h.b16 %v3745
  %v4369 = vunpack.c.l.b16 %v3746
  %v4370 = vunpack.c.h.b16 %v3746
  %v4371 = vunpack.c.l.b16 %v3747
  %v4372 = vunpack.c.h.b16 %v3747
  %v4373 = vunpack.c.l.b16 %v3748
  %v4374 = vunpack.c.h.b16 %v3748
  %v4375 = vunpack.c.l.b16 %v3749
  %v4376 = vunpack.c.h.b16 %v3749
  %v4377 = vunpack.c.l.b16 %v3750
  %v4378 = vunpack.c.h.b16 %v3750
  %v4379 = vunpack.c.l.b16 %v3751
  %v4380 = vunpack.c.h.b16 %v3751
  %v4381 = vunpack.c.l.b16 %v3752
  %v4382 = vunpack.c.h.b16 %v3752
  %v4383 = vunpack.c.l.b16 %v3753
  %v4384 = vunpack.c.h.b16 %v3753
  %v4385 = vunpack.c.l.b16 %v3754
  %v4386 = vunpack.c.h.b16 %v3754
  %v4387 = vunpack.c.l.b16 %v3755
  %v4388 = vunpack.c.h.b16 %v3755
  %v4389 = vunpack.c.l.b16 %v3756
  %v4390 = vunpack.c.h.b16 %v3756
  %v4391 = vunpack.c.l.b16 %v3757
  %v4392 = vunpack.c.h.b16 %v3757
  %v4393 = vunpack.c.l.b16 %v3758
  %v4394 = vunpack.c.h.b16 %v3758
  %v4395 = vunpack.c.l.b16 %v3759
  %v4396 = vunpack.c.h.b16 %v3759
  %v4397 = vunpack.c.l.b16 %v3760
  %v4398 = vunpack.c.h.b16 %v3760
  %v4399 = vunpack.c.l.b16 %v3761
  %v4400 = vunpack.c.h.b16 %v3761
  %v4401 = vunpack.c.l.b16 %v3762
  %v4402 = vunpack.c.h.b16 %v3762
  %v4403 = vunpack.c.l.b16 %v3763
  %v4404 = vunpack.c.h.b16 %v3763
  %v4405 = vunpack.c.l.b16 %v3764
  %v4406 = vunpack.c.h.b16 %v3764
  %v4407 = vunpack.c.l.b16 %v3765
  %v4408 = vunpack.c.h.b16 %v3765
  %v4409 = vunpack.c.l.b16 %v3766
  %v4410 = vunpack.c.h.b16 %v3766
  %v4411 = vunpack.c.l.b16 %v3767
  %v4412 = vunpack.c.h.b16 %v3767
  %v4413 = vunpack.c.l.b16 %v3768
  %v4414 = vunpack.c.h.b16 %v3768
  %v4415 = vunpack.c.l.b16 %v3769
  %v4416 = vunpack.c.h.b16 %v3769
  %v4417 = vunpack.c.l.b16 %v3770
  %v4418 = vunpack.c.h.b16 %v3770
  %v4419 = vunpack.c.l.b16 %v3771
  %v4420 = vunpack.c.h.b16 %v3771
  %v4421 = vunpack.c.l.b16 %v3772
  %v4422 = vunpack.c.h.b16 %v3772
  %v4423 = vunpack.c.l.b16 %v3773
  %v4424 = vunpack.c.h.b16 %v3773
  %v4425 = vunpack.c.l.b16 %v3774
  %v4426 = vunpack.c.h.b16 %v3774
  %v4427 = vunpack.c.l.b16 %v3775
  %v4428 = vunpack.c.h.b16 %v3775
  %v4429 = vunpack.c.l.b16 %v3776
  %v4430 = vunpack.c.h.b16 %v3776
  %v4431 = vunpack.c.l.b16 %v3777
  %v4432 = vunpack.c.h.b16 %v3777
  %v4433 = vunpack.c.l.b16 %v3778
  %v4434 = vunpack.c.h.b16 %v3778
  %v4435 = vunpack.c.l.b16 %v3779
  %v4436 = vunpack.c.h.b16 %v3779
  %v4437 = vunpack.c.l.b16 %v3780
  %v4438 = vunpack.c.h.b16 %v3780
  %v4439 = vunpack.c.l.b16 %v3781
  %v4440 = vunpack.c.h.b16 %v3781
  %v4441 = vunpack.c.l.b16 %v3782
  %v4442 = vunpack.c.h.b16 %v3782
  %v4443 = vunpack.c.l.b16 %v3783
  %v4444 = vunpack.c.h.b16 %v3783
  %v4445 = vunpack.c.l.b16 %v3784
  %v4446 = vunpack.c.h.b16 %v3784
  %v4447 = vunpack.c.l.b16 %v3785
  %v4448 = vunpack.c.h.b16 %v3785
  %v4449 = vunpack.c.l.b16 %v3786
  %v4450 = vunpack.c.h.b16 %v3786
  %v4451 = vunpack.c.l.b16 %v3787
  %v4452 = vunpack.c.h.b16 %v3787
  %v4453 = vunpack.c.l.b16 %v3788
  %v4454 = vunpack.c.h.b16 %v3788
  %v4455 = vunpack.c.l.b16 %v3789
  %v4456 = vunpack.c.h.b16 %v3789
  %v4457 = vunpack.c.l.b16 %v3790
  %v4458 = vunpack.c.h.b16 %v3790
  %v4459 = vunpack.c.l.b16 %v3791
  %v4460 = vunpack.c.h.b16 %v3791
  %v4461 = vunpack.c.l.b16 %v3792
  %v4462 = vunpack.c.h.b16 %v3792
  %v4463 = vunpack.c.l.b16 %v3793
  %v4464 = vunpack.c.h.b16 %v3793
  %v4465 = vunpack.c.l.b16 %v3794
  %v4466 = vunpack.c.h.b16 %v3794
  %v4467 = vunpack.c.l.b16 %v3795
  %v4468 = vunpack.c.h.b16 %v3795
  %v4469 = vunpack.c.l.b16 %v3796
  %v4470 = vunpack.c.h.b16 %v3796
  %v4471 = vunpack.c.l.b16 %v3797
  %v4472 = vunpack.c.h.b16 %v3797
  %v4473 = vunpack.c.l.b16 %v3798
  %v4474 = vunpack.c.h.b16 %v3798
  %v4475 = vunpack.c.l.b16 %v3799
  %v4476 = vunpack.c.h.b16 %v3799
  %v4477 = vunpack.c.l.b16 %v3800
  %v4478 = vunpack.c.h.b16 %v3800
  %v4479 = vunpack.c.l.b16 %v3801
  %v4480 = vunpack.c.h.b16 %v3801
  %v4481 = vunpack.c.l.b16 %v3802
  %v4482 = vunpack.c.h.b16 %v3802
  %v4483 = vunpack.c.l.b16 %v3803
  %v4484 = vunpack.c.h.b16 %v3803
  %v4485 = vunpack.c.l.b16 %v3804
  %v4486 = vunpack.c.h.b16 %v3804
  %v4487 = vunpack.c.l.b16 %v3805
  %v4488 = vunpack.c.h.b16 %v3805
  %v4489 = vunpack.c.l.b16 %v3806
  %v4490 = vunpack.c.h.b16 %v3806
  %v4491 = vunpack.c.l.b16 %v3807
  %v4492 = vunpack.c.h.b16 %v3807
  %v4493 = vunpack.c.l.b16 %v3808
  %v4494 = vunpack.c.h.b16 %v3808
  %v4495 = vunpack.c.l.b16 %v3809
  %v4496 = vunpack.c.h.b16 %v3809
  %v4497 = vunpack.c.l.b16 %v3810
  %v4498 = vunpack.c.h.b16 %v3810
  %v4499 = vunpack.c.l.b16 %v3811
  %v4500 = vunpack.c.h.b16 %v3811
  %v4501 = vunpack.c.l.b16 %v3812
  %v4502 = vunpack.c.h.b16 %v3812
  %v4503 = vunpack.c.l.b16 %v3813
  %v4504 = vunpack.c.h.b16 %v3813
  %v4505 = vunpack.c.l.b16 %v3814
  %v4506 = vunpack.c.h.b16 %v3814
  %v4507 = vunpack.c.l.b16 %v3815
  %v4508 = vunpack.c.h.b16 %v3815
  %v4509 = vunpack.c.l.b16 %v3816
  %v4510 = vunpack.c.h.b16 %v3816
  %v4511 = vunpack.c.l.b16 %v3817
  %v4512 = vunpack.c.h.b16 %v3817
  %v4513 = vunpack.c.l.b16 %v3818
  %v4514 = vunpack.c.h.b16 %v3818
  %v4515 = vunpack.c.l.b16 %v3819
  %v4516 = vunpack.c.h.b16 %v3819
  %v4517 = vunpack.c.l.b16 %v3820
  %v4518 = vunpack.c.h.b16 %v3820
  %v4519 = vunpack.c.l.b16 %v3821
  %v4520 = vunpack.c.h.b16 %v3821
  %v4521 = vunpack.c.l.b16 %v3822
  %v4522 = vunpack.c.h.b16 %v3822
  %v4523 = vunpack.c.l.b16 %v3823
  %v4524 = vunpack.c.h.b16 %v3823
  %v4525 = vunpack.c.l.b16 %v3824
  %v4526 = vunpack.c.h.b16 %v3824
  %v4527 = vunpack.c.l.b16 %v3825
  %v4528 = vunpack.c.h.b16 %v3825
  %v4529 = vunpack.c.l.b16 %v3826
  %v4530 = vunpack.c.h.b16 %v3826
  %v4531 = vunpack.c.l.b16 %v3827
  %v4532 = vunpack.c.h.b16 %v3827
  %v4533 = vunpack.c.l.b16 %v3828
  %v4534 = vunpack.c.h.b16 %v3828
  %v4535 = vunpack.c.l.b16 %v3829
  %v4536 = vunpack.c.h.b16 %v3829
  %v4537 = vunpack.c.l.b16 %v3830
  %v4538 = vunpack.c.h.b16 %v3830
  %v4539 = vunpack.c.l.b16 %v3831
  %v4540 = vunpack.c.h.b16 %v3831
  %v4541 = vunpack.c.l.b16 %v3832
  %v4542 = vunpack.c.h.b16 %v3832
  %v4543 = vunpack.c.l.b16 %v3833
  %v4544 = vunpack.c.h.b16 %v3833
  %v4545 = vunpack.c.l.b16 %v3834
  %v4546 = vunpack.c.h.b16 %v3834
  %v4547 = vunpack.c.l.b16 %v3835
  %v4548 = vunpack.c.h.b16 %v3835
  %v4549 = vunpack.c.l.b16 %v3836
  %v4550 = vunpack.c.h.b16 %v3836
  %v4551 = vunpack.c.l.b16 %v3837
  %v4552 = vunpack.c.h.b16 %v3837
  %v4553 = vunpack.c.l.b16 %v3838
  %v4554 = vunpack.c.h.b16 %v3838
  %v4555 = vunpack.c.l.b16 %v3839
  %v4556 = vunpack.c.h.b16 %v3839
  %v4557 = vunpack.c.l.b16 %v3840
  %v4558 = vunpack.c.h.b16 %v3840
  %v4559 = vunpack.c.l.b16 %v3841
  %v4560 = vunpack.c.h.b16 %v3841
  %v4561 = vunpack.c.l.b16 %v3842
  %v4562 = vunpack.c.h.b16 %v3842
  %v4563 = vunpack.c.l.b16 %v3843
  %v4564 = vunpack.c.h.b16 %v3843
  %v4565 = vunpack.c.l.b16 %v3844
  %v4566 = vunpack.c.h.b16 %v3844
  %v4567 = vunpack.c.l.b16 %v3845
  %v4568 = vunpack.c.h.b16 %v3845
  %v4569 = vunpack.c.l.b16 %v3846
  %v4570 = vunpack.c.h.b16 %v3846
  %v4571 = vunpack.c.l.b16 %v3847
  %v4572 = vunpack.c.h.b16 %v3847
  %v4573 = vunpack.c.l.b16 %v3848
  %v4574 = vunpack.c.h.b16 %v3848
  %v4575 = vunpack.c.l.b16 %v3849
  %v4576 = vunpack.c.h.b16 %v3849
  %v4577 = vunpack.c.l.b16 %v3850
  %v4578 = vunpack.c.h.b16 %v3850
  %v4579 = vunpack.c.l.b16 %v3851
  %v4580 = vunpack.c.h.b16 %v3851
  %v4581 = vunpack.c.l.b16 %v3852
  %v4582 = vunpack.c.h.b16 %v3852
  %v4583 = vunpack.c.l.b16 %v3853
  %v4584 = vunpack.c.h.b16 %v3853
  %v4585 = vunpack.c.l.b16 %v3854
  %v4586 = vunpack.c.h.b16 %v3854
  %v4587 = vunpack.c.l.b16 %v3855
  %v4588 = vunpack.c.h.b16 %v3855
  %v4589 = vunpack.c.l.b16 %v3856
  %v4590 = vunpack.c.h.b16 %v3856
  %v4591 = vunpack.c.l.b16 %v3857
  %v4592 = vunpack.c.h.b16 %v3857
  %v4593 = vunpack.c.l.b16 %v3858
  %v4594 = vunpack.c.h.b16 %v3858
  %v4595 = vunpack.c.l.b16 %v3859
  %v4596 = vunpack.c.h.b16 %v3859
  %v4597 = vunpack.c.l.b16 %v3860
  %v4598 = vunpack.c.h.b16 %v3860
  %v4599 = vunpack.c.l.b16 %v3861
  %v4600 = vunpack.c.h.b16 %v3861
  %v4601 = vunpack.c.l.b16 %v3862
  %v4602 = vunpack.c.h.b16 %v3862
  %v4603 = vunpack.c.l.b16 %v3863
  %v4604 = vunpack.c.h.b16 %v3863
  %v4605 = vunpack.c.l.b16 %v3864
  %v4606 = vunpack.c.h.b16 %v3864
  %v4607 = vunpack.c.l.b16 %v3865
  %v4608 = vunpack.c.h.b16 %v3865
  %v4609 = vunpack.c.l.b16 %v3866
  %v4610 = vunpack.c.h.b16 %v3866
  %v4611 = vunpack.c.l.b16 %v3867
  %v4612 = vunpack.c.h.b16 %v3867
  %v4613 = vunpack.c.l.b16 %v3868
  %v4614 = vunpack.c.h.b16 %v3868
  %v4615 = vunpack.c.l.b16 %v3869
  %v4616 = vunpack.c.h.b16 %v3869
  %v4617 = vunpack.c.l.b16 %v3870
  %v4618 = vunpack.c.h.b16 %v3870
  %v4619 = vunpack.c.l.b16 %v3871
  %v4620 = vunpack.c.h.b16 %v3871
  %v4621 = vunpack.c.l.b16 %v3872
  %v4622 = vunpack.c.h.b16 %v3872
  %v4623 = vunpack.c.l.b16 %v3873
  %v4624 = vunpack.c.h.b16 %v3873
  %v4625 = vunpack.c.l.b16 %v3874
  %v4626 = vunpack.c.h.b16 %v3874
  %v4627 = vunpack.c.l.b16 %v3875
  %v4628 = vunpack.c.h.b16 %v3875
  %v4629 = vunpack.c.l.b16 %v3876
  %v4630 = vunpack.c.h.b16 %v3876
  %v4631 = vunpack.c.l.b16 %v3877
  %v4632 = vunpack.c.h.b16 %v3877
  %v4633 = vunpack.c.l.b16 %v3878
  %v4634 = vunpack.c.h.b16 %v3878
  %v4635 = vunpack.c.l.b16 %v3879
  %v4636 = vunpack.c.h.b16 %v3879
  %v4637 = vunpack.c.l.b16 %v3880
  %v4638 = vunpack.c.h.b16 %v3880
  %v4639 = vunpack.c.l.b16 %v3881
  %v4640 = vunpack.c.h.b16 %v3881
  %v4641 = vpack.c.b16 %v4357, %v4353
  %v4642 = vpack.c.b16 %v4358, %v4354
  %v4643 = vpack.c.b16 %v4359, %v4355
  %v4644 = vpack.c.b16 %v4360, %v4356
  %v4645 = vpack.c.b16 %v4365, %v4361
  %v4646 = vpack.c.b16 %v4366, %v4362
  %v4647 = vpack.c.b16 %v4367, %v4363
  %v4648 = vpack.c.b16 %v4368, %v4364
  %v4649 = vpack.c.b16 %v4373, %v4369
  %v4650 = vpack.c.b16 %v4374, %v4370
  %v4651 = vpack.c.b16 %v4375, %v4371
  %v4652 = vpack.c.b16 %v4376, %v4372
  %v4653 = vpack.c.b16 %v4381, %v4377
  %v4654 = vpack.c.b16 %v4382, %v4378
  %v4655 = vpack.c.b16 %v4383, %v4379
  %v4656 = vpack.c.b16 %v4384, %v4380
  %v4657 = vpack.c.b16 %v4389, %v4385
  %v4658 = vpack.c.b16 %v4390, %v4386
  %v4659 = vpack.c.b16 %v4391, %v4387
  %v4660 = vpack.c.b16 %v4392, %v4388
  %v4661 = vpack.c.b16 %v4397, %v4393
  %v4662 = vpack.c.b16 %v4398, %v4394
  %v4663 = vpack.c.b16 %v4399, %v4395
  %v4664 = vpack.c.b16 %v4400, %v4396
  %v4665 = vpack.c.b16 %v4405, %v4401
  %v4666 = vpack.c.b16 %v4406, %v4402
  %v4667 = vpack.c.b16 %v4407, %v4403
  %v4668 = vpack.c.b16 %v4408, %v4404
  %v4669 = vpack.c.b16 %v4413, %v4409
  %v4670 = vpack.c.b16 %v4414, %v4410
  %v4671 = vpack.c.b16 %v4415, %v4411
  %v4672 = vpack.c.b16 %v4416, %v4412
  %v4673 = vpack.c.b16 %v4421, %v4417
  %v4674 = vpack.c.b16 %v4422, %v4418
  %v4675 = vpack.c.b16 %v4423, %v4419
  %v4676 = vpack.c.b16 %v4424, %v4420
  %v4677 = vpack.c.b16 %v4429, %v4425
  %v4678 = vpack.c.b16 %v4430, %v4426
  %v4679 = vpack.c.b16 %v4431, %v4427
  %v4680 = vpack.c.b16 %v4432, %v4428
  %v4681 = vpack.c.b16 %v4437, %v4433
  %v4682 = vpack.c.b16 %v4438, %v4434
  %v4683 = vpack.c.b16 %v4439, %v4435
  %v4684 = vpack.c.b16 %v4440, %v4436
  %v4685 = vpack.c.b16 %v4445, %v4441
  %v4686 = vpack.c.b16 %v4446, %v4442
  %v4687 = vpack.c.b16 %v4447, %v4443
  %v4688 = vpack.c.b16 %v4448, %v4444
  %v4689 = vpack.c.b16 %v4453, %v4449
  %v4690 = vpack.c.b16 %v4454, %v4450
  %v4691 = vpack.c.b16 %v4455, %v4451
  %v4692 = vpack.c.b16 %v4456, %v4452
  %v4693 = vpack.c.b16 %v4461, %v4457
  %v4694 = vpack.c.b16 %v4462, %v4458
  %v4695 = vpack.c.b16 %v4463, %v4459
  %v4696 = vpack.c.b16 %v4464, %v4460
  %v4697 = vpack.c.b16 %v4469, %v4465
  %v4698 = vpack.c.b16 %v4470, %v4466
  %v4699 = vpack.c.b16 %v4471, %v4467
  %v4700 = vpack.c.b16 %v4472, %v4468
  %v4701 = vpack.c.b16 %v4477, %v4473
  %v4702 = vpack.c.b16 %v4478, %v4474
  %v4703 = vpack.c.b16 %v4479, %v4475
  %v4704 = vpack.c.b16 %v4480, %v4476
  %v4705 = vpack.c.b16 %v4485, %v4481
  %v4706 = vpack.c.b16 %v4486, %v4482
  %v4707 = vpack.c.b16 %v4487, %v4483
  %v4708 = vpack.c.b16 %v4488, %v4484
  %v4709 = vpack.c.b16 %v4493, %v4489
  %v4710 = vpack.c.b16 %v4494, %v4490
  %v4711 = vpack.c.b16 %v4495, %v4491
  %v4712 = vpack.c.b16 %v4496, %v4492
  %v4713 = vpack.c.b16 %v4501, %v4497
  %v4714 = vpack.c.b16 %v4502, %v4498
  %v4715 = vpack.c.b16 %v4503, %v4499
  %v4716 = vpack.c.b16 %v4504, %v4500
  %v4717 = vpack.c.b16 %v4509, %v4505
  %v4718 = vpack.c.b16 %v4510, %v4506
  %v4719 = vpack.c.b16 %v4511, %v4507
  %v4720 = vpack.c.b16 %v4512, %v4508
  %v4721 = vpack.c.b16 %v4517, %v4513
  %v4722 = vpack.c.b16 %v4518, %v4514
  %v4723 = vpack.c.b16 %v4519, %v4515
  %v4724 = vpack.c.b16 %v4520, %v4516
  %v4725 = vpack.c.b16 %v4525, %v4521
  %v4726 = vpack.c.b16 %v4526, %v4522
  %v4727 = vpack.c.b16 %v4527, %v4523
  %v4728 = vpack.c.b16 %v4528, %v4524
  %v4729 = vpack.c.b16 %v4533, %v4529
  %v4730 = vpack.c.b16 %v4534, %v4530
  %v4731 = vpack.c.b16 %v4535, %v4531
  %v4732 = vpack.c.b16 %v4536, %v4532
  %v4733 = vpack.c.b16 %v4541, %v4537
  %v4734 = vpack.c.b16 %v4542, %v4538
  %v4735 = vpack.c.b16 %v4543, %v4539
  %v4736 = vpack.c.b16 %v4544, %v4540
  %v4737 = vpack.c.b16 %v4549, %v4545
  %v4738 = vpack.c.b16 %v4550, %v4546
  %v4739 = vpack.c.b16 %v4551, %v4547
  %v4740 = vpack.c.b16 %v4552, %v4548
  %v4741 = vpack.c.b16 %v4557, %v4553
  %v4742 = vpack.c.b16 %v4558, %v4554
  %v4743 = vpack.c.b16 %v4559, %v4555
  %v4744 = vpack.c.b16 %v4560, %v4556
  %v4745 = vpack.c.b16 %v4565, %v4561
  %v4746 = vpack.c.b16 %v4566, %v4562
  %v4747 = vpack.c.b16 %v4567, %v4563
  %v4748 = vpack.c.b16 %v4568, %v4564
  %v4749 = vpack.c.b16 %v4573, %v4569
  %v4750 = vpack.c.b16 %v4574, %v4570
  %v4751 = vpack.c.b16 %v4575, %v4571
  %v4752 = vpack.c.b16 %v4576, %v4572
  %v4753 = vpack.c.b16 %v4581, %v4577
  %v4754 = vpack.c.b16 %v4582, %v4578
  %v4755 = vpack.c.b16 %v4583, %v4579
  %v4756 = vpack.c.b16 %v4584, %v4580
  %v4757 = vpack.c.b16 %v4589, %v4585
  %v4758 = vpack.c.b16 %v4590, %v4586
  %v4759 = vpack.c.b16 %v4591, %v4587
  %v4760 = vpack.c.b16 %v4592, %v4588
  %v4761 = vpack.c.b16 %v4597, %v4593
  %v4762 = vpack.c.b16 %v4598, %v4594
  %v4763 = vpack.c.b16 %v4599, %v4595
  %v4764 = vpack.c.b16 %v4600, %v4596
  %v4765 = vpack.c.b16 %v4605, %v4601
  %v4766 = vpack.c.b16 %v4606, %v4602
  %v4767 = vpack.c.b16 %v4607, %v4603
  %v4768 = vpack.c.b16 %v4608, %v4604
  %v4769 = vpack.c.b16 %v4613, %v4609
  %v4770 = vpack.c.b16 %v4614, %v4610
  %v4771 = vpack.c.b16 %v4615, %v4611
  %v4772 = vpack.c.b16 %v4616, %v4612
  %v4773 = vpack.c.b16 %v4621, %v4617
  %v4774 = vpack.c.b16 %v4622, %v4618
  %v4775 = vpack.c.b16 %v4623, %v4619
  %v4776 = vpack.c.b16 %v4624, %v4620
  %v4777 = vpack.c.b16 %v4629, %v4625
  %v4778 = vpack.c.b16 %v4630, %v4626
  %v4779 = vpack.c.b16 %v4631, %v4627
  %v4780 = vpack.c.b16 %v4632, %v4628
  %v4781 = vpack.c.b16 %v4637, %v4633
  %v4782 = vpack.c.b16 %v4638, %v4634
  %v4783 = vpack.c.b16 %v4639, %v4635
  %v4784 = vpack.c.b16 %v4640, %v4636
  %vm4929 = vcmask 523264
  %v4931 = vsel %vm4929, %v3737, 0
  %4933 = vmatprep.subr.bf16.mxu0 %v4642
  %4934 = vmatpush1.bf16.msra.mxu0 %v4641
  %4935 = vmatprep.subr.bf16.mxu0 %v4646
  %4936 = vmatpush1.bf16.msra.mxu0 %v4645
  %4937 = vmatprep.subr.bf16.mxu0 %v4650
  %4938 = vmatpush1.bf16.msra.mxu0 %v4649
  %4939 = vmatprep.subr.bf16.mxu0 %v4654
  %4940 = vmatpush1.bf16.msra.mxu0 %v4653
  %4941 = vmatprep.subr.bf16.mxu0 %v4658
  %4942 = vmatpush1.bf16.msra.mxu0 %v4657
  %4943 = vmatprep.subr.bf16.mxu0 %v4662
  %4944 = vmatpush1.bf16.msra.mxu0 %v4661
  %4945 = vmatprep.subr.bf16.mxu0 %v4666
  %4946 = vmatpush1.bf16.msra.mxu0 %v4665
  %4947 = vmatprep.subr.bf16.mxu0 %v4670
  %4948 = vmatpush1.bf16.msra.mxu0 %v4669
  %4949 = vmatprep.subr.bf16.mxu0 %v4674
  %4950 = vmatpush1.bf16.msra.mxu0 %v4673
  %4951 = vmatprep.subr.bf16.mxu0 %v4678
  %4952 = vmatpush1.bf16.msra.mxu0 %v4677
  %4953 = vmatprep.subr.bf16.mxu0 %v4682
  %4954 = vmatpush1.bf16.msra.mxu0 %v4681
  %4955 = vmatprep.subr.bf16.mxu0 %v4686
  %4956 = vmatpush1.bf16.msra.mxu0 %v4685
  %4957 = vmatprep.subr.bf16.mxu0 %v4690
  %4958 = vmatpush1.bf16.msra.mxu0 %v4689
  %4959 = vmatprep.subr.bf16.mxu0 %v4694
  %4960 = vmatpush1.bf16.msra.mxu0 %v4693
  %4961 = vmatprep.subr.bf16.mxu0 %v4698
  %4962 = vmatpush1.bf16.msra.mxu0 %v4697
  %4963 = vmatprep.subr.bf16.mxu0 %v4702
  %4964 = vmatpush1.bf16.msra.mxu0 %v4701
  %4965 = vmatprep.mubr.bf16.mxu0 %v3734
  %4966 = vmatmul.mubr.bf16.gmra.mrb[0].mxu0 %v3733
  %v4967 = vpop.f32.mrb[0].mxu0
  %v4968 = vadd.f32 %v4162, %v4967
  %v4969 = vpop.f32.mrb[0].mxu0
  %v4970 = vadd.f32 %v4164, %v4969
  %v4971 = vpop.f32.mrb[0].mxu0
  %v4972 = vpop.f32.mrb[0].mxu0
  %4973 = vdwg.mxu0
  %4974 = vmatprep.subr.bf16.mxu0 %v4706
  %4975 = vmatpush1.bf16.msra.mxu0 %v4705
  %4976 = vmatprep.subr.bf16.mxu0 %v4710
  %4977 = vmatpush1.bf16.msra.mxu0 %v4709
  %4978 = vmatprep.subr.bf16.mxu0 %v4714
  %4979 = vmatpush1.bf16.msra.mxu0 %v4713
  %4980 = vmatprep.subr.bf16.mxu0 %v4718
  %4981 = vmatpush1.bf16.msra.mxu0 %v4717
  %4982 = vmatprep.subr.bf16.mxu0 %v4722
  %4983 = vmatpush1.bf16.msra.mxu0 %v4721
  %4984 = vmatprep.subr.bf16.mxu0 %v4726
  %4985 = vmatpush1.bf16.msra.mxu0 %v4725
  %4986 = vmatprep.subr.bf16.mxu0 %v4730
  %4987 = vmatpush1.bf16.msra.mxu0 %v4729
  %4988 = vmatprep.subr.bf16.mxu0 %v4734
  %4989 = vmatpush1.bf16.msra.mxu0 %v4733
  %4990 = vmatprep.subr.bf16.mxu0 %v4738
  %4991 = vmatpush1.bf16.msra.mxu0 %v4737
  %4992 = vmatprep.subr.bf16.mxu0 %v4742
  %4993 = vmatpush1.bf16.msra.mxu0 %v4741
  %4994 = vmatprep.subr.bf16.mxu0 %v4746
  %4995 = vmatpush1.bf16.msra.mxu0 %v4745
  %4996 = vmatprep.subr.bf16.mxu0 %v4750
  %4997 = vmatpush1.bf16.msra.mxu0 %v4749
  %4998 = vmatprep.subr.bf16.mxu0 %v4754
  %4999 = vmatpush1.bf16.msra.mxu0 %v4753
  %5000 = vmatprep.subr.bf16.mxu0 %v4758
  %5001 = vmatpush1.bf16.msra.mxu0 %v4757
  %5002 = vmatprep.subr.bf16.mxu0 %v4762
  %5003 = vmatpush1.bf16.msra.mxu0 %v4761
  %5004 = vmatprep.subr.bf16.mxu0 %v4766
  %5005 = vmatpush1.bf16.msra.mxu0 %v4765
  %5006 = vmatprep.mubr.bf16.mxu0 %v3736
  %5007 = vmatmul.mubr.bf16.gmra.mrb[0].mxu0 %v3735
  %v5008 = vpop.f32.mrb[0].mxu0
  %v5009 = vadd.f32 %v4968, %v5008
  %v5010 = vpop.f32.mrb[0].mxu0
  %v5011 = vadd.f32 %v4970, %v5010
  %v5012 = vpop.f32.mrb[0].mxu0
  %v5013 = vpop.f32.mrb[0].mxu0
  %5014 = vdwg.mxu0
  %5015 = vmatprep.subr.bf16.mxu0 %v4770
  %5016 = vmatpush1.bf16.msra.mxu0 %v4769
  %5017 = vmatprep.subr.bf16.mxu0 %v4774
  %5018 = vmatpush1.bf16.msra.mxu0 %v4773
  %5019 = vmatprep.subr.bf16.mxu0 %v4778
  %5020 = vmatpush1.bf16.msra.mxu0 %v4777
  %5021 = vmatprep.subr.bf16.mxu0 %v4782
  %5022 = vmatpush1.bf16.msra.mxu0 %v4781
  %5023 = vmatprep.subr.bf16.mxu0 0
  %5024 = vmatpush1.bf16.msra.mxu0 0
  %5025 = vmatprep.subr.bf16.mxu0 0
  %5026 = vmatpush1.bf16.msra.mxu0 0
  %5027 = vmatprep.subr.bf16.mxu0 0
  %5028 = vmatpush1.bf16.msra.mxu0 0
  %5029 = vmatprep.subr.bf16.mxu0 0
  %5030 = vmatpush1.bf16.msra.mxu0 0
  %5031 = vmatprep.subr.bf16.mxu0 0
  %5032 = vmatpush1.bf16.msra.mxu0 0
  %5033 = vmatprep.subr.bf16.mxu0 0
  %5034 = vmatpush1.bf16.msra.mxu0 0
  %5035 = vmatprep.subr.bf16.mxu0 0
  %5036 = vmatpush1.bf16.msra.mxu0 0
  %5037 = vmatprep.subr.bf16.mxu0 0
  %5038 = vmatpush1.bf16.msra.mxu0 0
  %5039 = vmatprep.subr.bf16.mxu0 0
  %5040 = vmatpush1.bf16.msra.mxu0 0
  %5041 = vmatprep.subr.bf16.mxu0 0
  %5042 = vmatpush1.bf16.msra.mxu0 0
  %5043 = vmatprep.subr.bf16.mxu0 0
  %5044 = vmatpush1.bf16.msra.mxu0 0
  %5045 = vmatprep.subr.bf16.mxu0 0
  %5046 = vmatpush1.bf16.msra.mxu0 0
  %5047 = vmatprep.mubr.bf16.mxu0 0
  %5048 = vmatmul.mubr.bf16.gmra.mrb[0].mxu0 %v4931
  %v5049 = vpop.f32.mrb[0].mxu0
  %v5050 = vadd.f32 %v5009, %v5049
  %v5051 = vpop.f32.mrb[0].mxu0
  %v5052 = vadd.f32 %v5011, %v5051
  %v5053 = vpop.f32.mrb[0].mxu0
  %v5054 = vpop.f32.mrb[0].mxu0
  %5055 = vdwg.mxu0
  %5056 = vmatprep.subr.bf16.mxu0 %v4644
  %5057 = vmatpush1.bf16.msra.mxu0 %v4643
  %5058 = vmatprep.subr.bf16.mxu0 %v4648
  %5059 = vmatpush1.bf16.msra.mxu0 %v4647
  %5060 = vmatprep.subr.bf16.mxu0 %v4652
  %5061 = vmatpush1.bf16.msra.mxu0 %v4651
  %5062 = vmatprep.subr.bf16.mxu0 %v4656
  %5063 = vmatpush1.bf16.msra.mxu0 %v4655
  %5064 = vmatprep.subr.bf16.mxu0 %v4660
  %5065 = vmatpush1.bf16.msra.mxu0 %v4659
  %5066 = vmatprep.subr.bf16.mxu0 %v4664
  %5067 = vmatpush1.bf16.msra.mxu0 %v4663
  %5068 = vmatprep.subr.bf16.mxu0 %v4668
  %5069 = vmatpush1.bf16.msra.mxu0 %v4667
  %5070 = vmatprep.subr.bf16.mxu0 %v4672
  %5071 = vmatpush1.bf16.msra.mxu0 %v4671
  %5072 = vmatprep.subr.bf16.mxu0 %v4676
  %5073 = vmatpush1.bf16.msra.mxu0 %v4675
  %5074 = vmatprep.subr.bf16.mxu0 %v4680
  %5075 = vmatpush1.bf16.msra.mxu0 %v4679
  %5076 = vmatprep.subr.bf16.mxu0 %v4684
  %5077 = vmatpush1.bf16.msra.mxu0 %v4683
  %5078 = vmatprep.subr.bf16.mxu0 %v4688
  %5079 = vmatpush1.bf16.msra.mxu0 %v4687
  %5080 = vmatprep.subr.bf16.mxu0 %v4692
  %5081 = vmatpush1.bf16.msra.mxu0 %v4691
  %5082 = vmatprep.subr.bf16.mxu0 %v4696
  %5083 = vmatpush1.bf16.msra.mxu0 %v4695
  %5084 = vmatprep.subr.bf16.mxu0 %v4700
  %5085 = vmatpush1.bf16.msra.mxu0 %v4699
  %5086 = vmatprep.subr.bf16.mxu0 %v4704
  %5087 = vmatpush1.bf16.msra.mxu0 %v4703
  %5088 = vmatprep.mubr.bf16.mxu0 %v3734
  %5089 = vmatmul.mubr.bf16.gmra.mrb[0].mxu0 %v3733
  %v5090 = vpop.f32.mrb[0].mxu0
  %v5091 = vadd.f32 %v4203, %v5090
  %v5092 = vpop.f32.mrb[0].mxu0
  %v5093 = vadd.f32 %v4205, %v5092
  %v5094 = vpop.f32.mrb[0].mxu0
  %v5095 = vpop.f32.mrb[0].mxu0
  %5096 = vdwg.mxu0
  %5097 = vmatprep.subr.bf16.mxu0 %v4708
  %5098 = vmatpush1.bf16.msra.mxu0 %v4707
  %5099 = vmatprep.subr.bf16.mxu0 %v4712
  %5100 = vmatpush1.bf16.msra.mxu0 %v4711
  %5101 = vmatprep.subr.bf16.mxu0 %v4716
  %5102 = vmatpush1.bf16.msra.mxu0 %v4715
  %5103 = vmatprep.subr.bf16.mxu0 %v4720
  %5104 = vmatpush1.bf16.msra.mxu0 %v4719
  %5105 = vmatprep.subr.bf16.mxu0 %v4724
  %5106 = vmatpush1.bf16.msra.mxu0 %v4723
  %5107 = vmatprep.subr.bf16.mxu0 %v4728
  %5108 = vmatpush1.bf16.msra.mxu0 %v4727
  %5109 = vmatprep.subr.bf16.mxu0 %v4732
  %5110 = vmatpush1.bf16.msra.mxu0 %v4731
  %5111 = vmatprep.subr.bf16.mxu0 %v4736
  %5112 = vmatpush1.bf16.msra.mxu0 %v4735
  %5113 = vmatprep.subr.bf16.mxu0 %v4740
  %5114 = vmatpush1.bf16.msra.mxu0 %v4739
  %5115 = vmatprep.subr.bf16.mxu0 %v4744
  %5116 = vmatpush1.bf16.msra.mxu0 %v4743
  %5117 = vmatprep.subr.bf16.mxu0 %v4748
  %5118 = vmatpush1.bf16.msra.mxu0 %v4747
  %5119 = vmatprep.subr.bf16.mxu0 %v4752
  %5120 = vmatpush1.bf16.msra.mxu0 %v4751
  %5121 = vmatprep.subr.bf16.mxu0 %v4756
  %5122 = vmatpush1.bf16.msra.mxu0 %v4755
  %5123 = vmatprep.subr.bf16.mxu0 %v4760
  %5124 = vmatpush1.bf16.msra.mxu0 %v4759
  %5125 = vmatprep.subr.bf16.mxu0 %v4764
  %5126 = vmatpush1.bf16.msra.mxu0 %v4763
  %5127 = vmatprep.subr.bf16.mxu0 %v4768
  %5128 = vmatpush1.bf16.msra.mxu0 %v4767
  %5129 = vmatprep.mubr.bf16.mxu0 %v3736
  %5130 = vmatmul.mubr.bf16.gmra.mrb[0].mxu0 %v3735
  %v5131 = vpop.f32.mrb[0].mxu0
  %v5132 = vadd.f32 %v5091, %v5131
  %v5133 = vpop.f32.mrb[0].mxu0
  %v5134 = vadd.f32 %v5093, %v5133
  %v5135 = vpop.f32.mrb[0].mxu0
  %v5136 = vpop.f32.mrb[0].mxu0
  %5137 = vdwg.mxu0
  %5138 = vmatprep.subr.bf16.mxu0 %v4772
  %5139 = vmatpush1.bf16.msra.mxu0 %v4771
  %5140 = vmatprep.subr.bf16.mxu0 %v4776
  %5141 = vmatpush1.bf16.msra.mxu0 %v4775
  %5142 = vmatprep.subr.bf16.mxu0 %v4780
  %5143 = vmatpush1.bf16.msra.mxu0 %v4779
  %5144 = vmatprep.subr.bf16.mxu0 %v4784
  %5145 = vmatpush1.bf16.msra.mxu0 %v4783
  %5146 = vmatprep.subr.bf16.mxu0 0
  %5147 = vmatpush1.bf16.msra.mxu0 0
  %5148 = vmatprep.subr.bf16.mxu0 0
  %5149 = vmatpush1.bf16.msra.mxu0 0
  %5150 = vmatprep.subr.bf16.mxu0 0
  %5151 = vmatpush1.bf16.msra.mxu0 0
  %5152 = vmatprep.subr.bf16.mxu0 0
  %5153 = vmatpush1.bf16.msra.mxu0 0
  %5154 = vmatprep.subr.bf16.mxu0 0
  %5155 = vmatpush1.bf16.msra.mxu0 0
  %5156 = vmatprep.subr.bf16.mxu0 0
  %5157 = vmatpush1.bf16.msra.mxu0 0
  %5158 = vmatprep.subr.bf16.mxu0 0
  %5159 = vmatpush1.bf16.msra.mxu0 0
  %5160 = vmatprep.subr.bf16.mxu0 0
  %5161 = vmatpush1.bf16.msra.mxu0 0
  %5162 = vmatprep.subr.bf16.mxu0 0
  %5163 = vmatpush1.bf16.msra.mxu0 0
  %5164 = vmatprep.subr.bf16.mxu0 0
  %5165 = vmatpush1.bf16.msra.mxu0 0
  %5166 = vmatprep.subr.bf16.mxu0 0
  %5167 = vmatpush1.bf16.msra.mxu0 0
  %5168 = vmatprep.subr.bf16.mxu0 0
  %5169 = vmatpush1.bf16.msra.mxu0 0
  %5170 = vmatprep.mubr.bf16.mxu0 0
  %5171 = vmatmul.mubr.bf16.gmra.mrb[0].mxu0 %v4931
  %v5172 = vpop.f32.mrb[0].mxu0
  %v5173 = vadd.f32 %v5132, %v5172
  %v5174 = vpop.f32.mrb[0].mxu0
  %v5175 = vadd.f32 %v5134, %v5174
  %v5176 = vpop.f32.mrb[0].mxu0
  %v5177 = vpop.f32.mrb[0].mxu0
  %5178 = vdwg.mxu0
  %v5179 = vld [vmem:[%s15] sm:$0xf]
  %v5181 = vlaneseq
  %v5182 = vshrl.u32 %v5181, 7
  %v5183 = vsub.s32 0, %v5182
  %v5184 = vrot.slane %v5179, %v5183
  %v5185 = vlaneseq
  %v5186 = vshrl.u32 %v5185, 7
  %v5187 = vsub.s32 1, %v5186
  %v5188 = vrot.slane %v5179, %v5187
  %v5189 = vlaneseq
  %v5190 = vshrl.u32 %v5189, 7
  %v5191 = vsub.s32 2, %v5190
  %v5192 = vrot.slane %v5179, %v5191
  %v5193 = vlaneseq
  %v5194 = vshrl.u32 %v5193, 7
  %v5195 = vsub.s32 3, %v5194
  %v5196 = vrot.slane %v5179, %v5195
  %v5201 = vadd.f32 %v5050, %v5184
  %v5202 = vadd.f32 %v5052, %v5188
  %v5203 = vadd.f32 %v5173, %v5192
  %v5204 = vadd.f32 %v5175, %v5196
  %v5205 = vmax.f32 %v5201, 0.0
  %v5206 = vmax.f32 %v5202, 0.0
  %v5207 = vmax.f32 %v5203, 0.0
  %v5208 = vmax.f32 %v5204, 0.0
  %v5209 = vpack.c.bf16 %v5205, %v5205
  %v5210 = vpack.c.bf16 %v5206, %v5206
  %v5211 = vpack.c.bf16 %v5207, %v5207
  %v5212 = vpack.c.bf16 %v5208, %v5208
  %v5213 = vld [vmem:[%s16] sm:$0xff]
  %v5214 = vld [vmem:[%s16 + $0x8] sm:$0xff]
  %v5215 = vld [vmem:[%s16 + $0x10] sm:$0xff]
  %v5216 = vld [vmem:[%s16 + $0x18] sm:$0xff]
  %v5217 = vld [vmem:[%s16 + $0x20] sm:$0xff]
  %v5218 = vld [vmem:[%s16 + $0x28] sm:$0xff]
  %v5219 = vld [vmem:[%s16 + $0x30] sm:$0xff]
  %v5220 = vld [vmem:[%s16 + $0x38] sm:$0xff]
  %v5221 = vld [vmem:[%s16 + $0x40] sm:$0xff]
  %v5222 = vld [vmem:[%s16 + $0x48] sm:$0xff]
  %v5223 = vld [vmem:[%s16 + $0x50] sm:$0xff]
  %v5224 = vld [vmem:[%s16 + $0x58] sm:$0xff]
  %v5225 = vld [vmem:[%s16 + $0x60] sm:$0xff]
  %v5226 = vld [vmem:[%s16 + $0x68] sm:$0xff]
  %v5227 = vld [vmem:[%s16 + $0x70] sm:$0xff]
  %v5228 = vld [vmem:[%s16 + $0x78] sm:$0xff]
  %v5229 = vld [vmem:[%s16 + $0x80] sm:$0xff]
  %v5230 = vld [vmem:[%s16 + $0x88] sm:$0xff]
  %v5231 = vld [vmem:[%s16 + $0x90] sm:$0xff]
  %v5232 = vld [vmem:[%s16 + $0x98] sm:$0xff]
  %v5233 = vld [vmem:[%s16 + $0xa0] sm:$0xff]
  %v5234 = vld [vmem:[%s16 + $0xa8] sm:$0xff]
  %v5235 = vld [vmem:[%s16 + $0xb0] sm:$0xff]
  %v5236 = vld [vmem:[%s16 + $0xb8] sm:$0xff]
  %v5237 = vld [vmem:[%s16 + $0xc0] sm:$0xff]
  %v5238 = vld [vmem:[%s16 + $0xc8] sm:$0xff]
  %v5239 = vld [vmem:[%s16 + $0xd0] sm:$0xff]
  %v5240 = vld [vmem:[%s16 + $0xd8] sm:$0xff]
  %v5241 = vld [vmem:[%s16 + $0xe0] sm:$0xff]
  %v5242 = vld [vmem:[%s16 + $0xe8] sm:$0xff]
  %v5243 = vld [vmem:[%s16 + $0xf0] sm:$0xff]
  %v5244 = vld [vmem:[%s16 + $0xf8] sm:$0xff]
  %v5245 = vld [vmem:[%s16 + $0x100] sm:$0xff]
  %v5246 = vld [vmem:[%s16 + $0x108] sm:$0xff]
  %v5247 = vld [vmem:[%s16 + $0x110] sm:$0xff]
  %v5248 = vld [vmem:[%s16 + $0x118] sm:$0xff]
  %v5249 = vld [vmem:[%s16 + $0x120] sm:$0xff]
  %v5250 = vld [vmem:[%s16 + $0x128] sm:$0xff]
  %v5251 = vld [vmem:[%s16 + $0x130] sm:$0xff]
  %v5252 = vld [vmem:[%s16 + $0x138] sm:$0xff]
  %v5253 = vld [vmem:[%s16 + $0x140] sm:$0xff]
  %v5254 = vld [vmem:[%s16 + $0x148] sm:$0xff]
  %v5255 = vld [vmem:[%s16 + $0x150] sm:$0xff]
  %v5256 = vld [vmem:[%s16 + $0x158] sm:$0xff]
  %v5257 = vld [vmem:[%s16 + $0x160] sm:$0xff]
  %v5258 = vld [vmem:[%s16 + $0x168] sm:$0xff]
  %v5259 = vld [vmem:[%s16 + $0x170] sm:$0xff]
  %v5260 = vld [vmem:[%s16 + $0x178] sm:$0xff]
  %v5261 = vld [vmem:[%s16 + $0x180] sm:$0xff]
  %v5262 = vld [vmem:[%s16 + $0x188] sm:$0xff]
  %v5263 = vld [vmem:[%s16 + $0x190] sm:$0xff]
  %v5264 = vld [vmem:[%s16 + $0x198] sm:$0xff]
  %v5265 = vld [vmem:[%s16 + $0x1a0] sm:$0xff]
  %v5266 = vld [vmem:[%s16 + $0x1a8] sm:$0xff]
  %v5267 = vld [vmem:[%s16 + $0x1b0] sm:$0xff]
  %v5268 = vld [vmem:[%s16 + $0x1b8] sm:$0xff]
  %v5269 = vld [vmem:[%s16 + $0x1c0] sm:$0xff]
  %v5270 = vld [vmem:[%s16 + $0x1c8] sm:$0xff]
  %v5271 = vld [vmem:[%s16 + $0x1d0] sm:$0xff]
  %v5272 = vld [vmem:[%s16 + $0x1d8] sm:$0xff]
  %v5273 = vld [vmem:[%s16 + $0x1e0] sm:$0xff]
  %v5274 = vld [vmem:[%s16 + $0x1e8] sm:$0xff]
  %v5275 = vld [vmem:[%s16 + $0x1f0] sm:$0xff]
  %v5276 = vld [vmem:[%s16 + $0x1f8] sm:$0xff]
  %v5277 = vld [vmem:[%s16 + $0x200] sm:$0xff]
  %v5278 = vld [vmem:[%s16 + $0x208] sm:$0xff]
  %v5279 = vld [vmem:[%s16 + $0x210] sm:$0xff]
  %v5280 = vld [vmem:[%s16 + $0x218] sm:$0xff]
  %v5281 = vld [vmem:[%s16 + $0x220] sm:$0xff]
  %v5282 = vld [vmem:[%s16 + $0x228] sm:$0xff]
  %v5283 = vld [vmem:[%s16 + $0x230] sm:$0xff]
  %v5284 = vld [vmem:[%s16 + $0x238] sm:$0xff]
  %v5285 = vld [vmem:[%s16 + $0x240] sm:$0xff]
  %v5286 = vld [vmem:[%s16 + $0x248] sm:$0xff]
  %v5287 = vld [vmem:[%s16 + $0x250] sm:$0xff]
  %v5288 = vld [vmem:[%s16 + $0x258] sm:$0xff]
  %v5289 = vld [vmem:[%s16 + $0x260] sm:$0xff]
  %v5290 = vld [vmem:[%s16 + $0x268] sm:$0xff]
  %v5291 = vld [vmem:[%s16 + $0x270] sm:$0xff]
  %v5292 = vld [vmem:[%s16 + $0x278] sm:$0xff]
  %v5293 = vld [vmem:[%s16 + $0x280] sm:$0xff]
  %v5294 = vld [vmem:[%s16 + $0x288] sm:$0xff]
  %v5295 = vld [vmem:[%s16 + $0x290] sm:$0xff]
  %v5296 = vld [vmem:[%s16 + $0x298] sm:$0xff]
  %v5297 = vld [vmem:[%s16 + $0x2a0] sm:$0xff]
  %v5298 = vld [vmem:[%s16 + $0x2a8] sm:$0xff]
  %v5299 = vld [vmem:[%s16 + $0x2b0] sm:$0xff]
  %v5300 = vld [vmem:[%s16 + $0x2b8] sm:$0xff]
  %v5301 = vld [vmem:[%s16 + $0x2c0] sm:$0xff]
  %v5302 = vld [vmem:[%s16 + $0x2c8] sm:$0xff]
  %v5303 = vld [vmem:[%s16 + $0x2d0] sm:$0xff]
  %v5304 = vld [vmem:[%s16 + $0x2d8] sm:$0xff]
  %v5305 = vld [vmem:[%s16 + $0x2e0] sm:$0xff]
  %v5306 = vld [vmem:[%s16 + $0x2e8] sm:$0xff]
  %v5307 = vld [vmem:[%s16 + $0x2f0] sm:$0xff]
  %v5308 = vld [vmem:[%s16 + $0x2f8] sm:$0xff]
  %v5309 = vld [vmem:[%s16 + $0x300] sm:$0xff]
  %v5310 = vld [vmem:[%s16 + $0x308] sm:$0xff]
  %v5311 = vld [vmem:[%s16 + $0x310] sm:$0xff]
  %v5312 = vld [vmem:[%s16 + $0x318] sm:$0xff]
  %v5313 = vld [vmem:[%s16 + $0x320] sm:$0xff]
  %v5314 = vld [vmem:[%s16 + $0x328] sm:$0xff]
  %v5315 = vld [vmem:[%s16 + $0x330] sm:$0xff]
  %v5316 = vld [vmem:[%s16 + $0x338] sm:$0xff]
  %v5317 = vld [vmem:[%s16 + $0x340] sm:$0xff]
  %v5318 = vld [vmem:[%s16 + $0x348] sm:$0xff]
  %v5319 = vld [vmem:[%s16 + $0x350] sm:$0xff]
  %v5320 = vld [vmem:[%s16 + $0x358] sm:$0xff]
  %v5321 = vld [vmem:[%s16 + $0x360] sm:$0xff]
  %v5322 = vld [vmem:[%s16 + $0x368] sm:$0xff]
  %v5323 = vld [vmem:[%s16 + $0x370] sm:$0xff]
  %v5324 = vld [vmem:[%s16 + $0x378] sm:$0xff]
  %v5325 = vld [vmem:[%s16 + $0x380] sm:$0xff]
  %v5326 = vld [vmem:[%s16 + $0x388] sm:$0xff]
  %v5327 = vld [vmem:[%s16 + $0x390] sm:$0xff]
  %v5328 = vld [vmem:[%s16 + $0x398] sm:$0xff]
  %v5329 = vld [vmem:[%s16 + $0x3a0] sm:$0xff]
  %v5330 = vld [vmem:[%s16 + $0x3a8] sm:$0xff]
  %v5331 = vld [vmem:[%s16 + $0x3b0] sm:$0xff]
  %v5332 = vld [vmem:[%s16 + $0x3b8] sm:$0xff]
  %v5333 = vld [vmem:[%s16 + $0x3c0] sm:$0xff]
  %v5334 = vld [vmem:[%s16 + $0x3c8] sm:$0xff]
  %v5335 = vld [vmem:[%s16 + $0x3d0] sm:$0xff]
  %v5336 = vld [vmem:[%s16 + $0x3d8] sm:$0xff]
  %v5337 = vld [vmem:[%s16 + $0x3e0] sm:$0xff]
  %v5338 = vld [vmem:[%s16 + $0x3e8] sm:$0xff]
  %v5339 = vld [vmem:[%s16 + $0x3f0] sm:$0xff]
  %v5340 = vld [vmem:[%s16 + $0x3f8] sm:$0xff]
  %v5341 = vld [vmem:[%s17] sm:$0xf]
  %v5343 = vlaneseq
  %v5344 = vshrl.u32 %v5343, 7
  %v5345 = vsub.s32 0, %v5344
  %v5346 = vrot.slane %v5341, %v5345
  %v5347 = vlaneseq
  %v5348 = vshrl.u32 %v5347, 7
  %v5349 = vsub.s32 1, %v5348
  %v5350 = vrot.slane %v5341, %v5349
  %v5351 = vlaneseq
  %v5352 = vshrl.u32 %v5351, 7
  %v5353 = vsub.s32 2, %v5352
  %v5354 = vrot.slane %v5341, %v5353
  %v5355 = vlaneseq
  %v5356 = vshrl.u32 %v5355, 7
  %v5357 = vsub.s32 3, %v5356
  %v5358 = vrot.slane %v5341, %v5357
  %v5491 = vunpack.c.l.b16 %v5213
  %v5492 = vunpack.c.h.b16 %v5213
  %v5493 = vunpack.c.l.b16 %v5214
  %v5494 = vunpack.c.h.b16 %v5214
  %v5495 = vunpack.c.l.b16 %v5215
  %v5496 = vunpack.c.h.b16 %v5215
  %v5497 = vunpack.c.l.b16 %v5216
  %v5498 = vunpack.c.h.b16 %v5216
  %v5499 = vunpack.c.l.b16 %v5217
  %v5500 = vunpack.c.h.b16 %v5217
  %v5501 = vunpack.c.l.b16 %v5218
  %v5502 = vunpack.c.h.b16 %v5218
  %v5503 = vunpack.c.l.b16 %v5219
  %v5504 = vunpack.c.h.b16 %v5219
  %v5505 = vunpack.c.l.b16 %v5220
  %v5506 = vunpack.c.h.b16 %v5220
  %v5507 = vunpack.c.l.b16 %v5221
  %v5508 = vunpack.c.h.b16 %v5221
  %v5509 = vunpack.c.l.b16 %v5222
  %v5510 = vunpack.c.h.b16 %v5222
  %v5511 = vunpack.c.l.b16 %v5223
  %v5512 = vunpack.c.h.b16 %v5223
  %v5513 = vunpack.c.l.b16 %v5224
  %v5514 = vunpack.c.h.b16 %v5224
  %v5515 = vunpack.c.l.b16 %v5225
  %v5516 = vunpack.c.h.b16 %v5225
  %v5517 = vunpack.c.l.b16 %v5226
  %v5518 = vunpack.c.h.b16 %v5226
  %v5519 = vunpack.c.l.b16 %v5227
  %v5520 = vunpack.c.h.b16 %v5227
  %v5521 = vunpack.c.l.b16 %v5228
  %v5522 = vunpack.c.h.b16 %v5228
  %v5523 = vunpack.c.l.b16 %v5229
  %v5524 = vunpack.c.h.b16 %v5229
  %v5525 = vunpack.c.l.b16 %v5230
  %v5526 = vunpack.c.h.b16 %v5230
  %v5527 = vunpack.c.l.b16 %v5231
  %v5528 = vunpack.c.h.b16 %v5231
  %v5529 = vunpack.c.l.b16 %v5232
  %v5530 = vunpack.c.h.b16 %v5232
  %v5531 = vunpack.c.l.b16 %v5233
  %v5532 = vunpack.c.h.b16 %v5233
  %v5533 = vunpack.c.l.b16 %v5234
  %v5534 = vunpack.c.h.b16 %v5234
  %v5535 = vunpack.c.l.b16 %v5235
  %v5536 = vunpack.c.h.b16 %v5235
  %v5537 = vunpack.c.l.b16 %v5236
  %v5538 = vunpack.c.h.b16 %v5236
  %v5539 = vunpack.c.l.b16 %v5237
  %v5540 = vunpack.c.h.b16 %v5237
  %v5541 = vunpack.c.l.b16 %v5238
  %v5542 = vunpack.c.h.b16 %v5238
  %v5543 = vunpack.c.l.b16 %v5239
  %v5544 = vunpack.c.h.b16 %v5239
  %v5545 = vunpack.c.l.b16 %v5240
  %v5546 = vunpack.c.h.b16 %v5240
  %v5547 = vunpack.c.l.b16 %v5241
  %v5548 = vunpack.c.h.b16 %v5241
  %v5549 = vunpack.c.l.b16 %v5242
  %v5550 = vunpack.c.h.b16 %v5242
  %v5551 = vunpack.c.l.b16 %v5243
  %v5552 = vunpack.c.h.b16 %v5243
  %v5553 = vunpack.c.l.b16 %v5244
  %v5554 = vunpack.c.h.b16 %v5244
  %v5555 = vunpack.c.l.b16 %v5245
  %v5556 = vunpack.c.h.b16 %v5245
  %v5557 = vunpack.c.l.b16 %v5246
  %v5558 = vunpack.c.h.b16 %v5246
  %v5559 = vunpack.c.l.b16 %v5247
  %v5560 = vunpack.c.h.b16 %v5247
  %v5561 = vunpack.c.l.b16 %v5248
  %v5562 = vunpack.c.h.b16 %v5248
  %v5563 = vunpack.c.l.b16 %v5249
  %v5564 = vunpack.c.h.b16 %v5249
  %v5565 = vunpack.c.l.b16 %v5250
  %v5566 = vunpack.c.h.b16 %v5250
  %v5567 = vunpack.c.l.b16 %v5251
  %v5568 = vunpack.c.h.b16 %v5251
  %v5569 = vunpack.c.l.b16 %v5252
  %v5570 = vunpack.c.h.b16 %v5252
  %v5571 = vunpack.c.l.b16 %v5253
  %v5572 = vunpack.c.h.b16 %v5253
  %v5573 = vunpack.c.l.b16 %v5254
  %v5574 = vunpack.c.h.b16 %v5254
  %v5575 = vunpack.c.l.b16 %v5255
  %v5576 = vunpack.c.h.b16 %v5255
  %v5577 = vunpack.c.l.b16 %v5256
  %v5578 = vunpack.c.h.b16 %v5256
  %v5579 = vunpack.c.l.b16 %v5257
  %v5580 = vunpack.c.h.b16 %v5257
  %v5581 = vunpack.c.l.b16 %v5258
  %v5582 = vunpack.c.h.b16 %v5258
  %v5583 = vunpack.c.l.b16 %v5259
  %v5584 = vunpack.c.h.b16 %v5259
  %v5585 = vunpack.c.l.b16 %v5260
  %v5586 = vunpack.c.h.b16 %v5260
  %v5587 = vunpack.c.l.b16 %v5261
  %v5588 = vunpack.c.h.b16 %v5261
  %v5589 = vunpack.c.l.b16 %v5262
  %v5590 = vunpack.c.h.b16 %v5262
  %v5591 = vunpack.c.l.b16 %v5263
  %v5592 = vunpack.c.h.b16 %v5263
  %v5593 = vunpack.c.l.b16 %v5264
  %v5594 = vunpack.c.h.b16 %v5264
  %v5595 = vunpack.c.l.b16 %v5265
  %v5596 = vunpack.c.h.b16 %v5265
  %v5597 = vunpack.c.l.b16 %v5266
  %v5598 = vunpack.c.h.b16 %v5266
  %v5599 = vunpack.c.l.b16 %v5267
  %v5600 = vunpack.c.h.b16 %v5267
  %v5601 = vunpack.c.l.b16 %v5268
  %v5602 = vunpack.c.h.b16 %v5268
  %v5603 = vunpack.c.l.b16 %v5269
  %v5604 = vunpack.c.h.b16 %v5269
  %v5605 = vunpack.c.l.b16 %v5270
  %v5606 = vunpack.c.h.b16 %v5270
  %v5607 = vunpack.c.l.b16 %v5271
  %v5608 = vunpack.c.h.b16 %v5271
  %v5609 = vunpack.c.l.b16 %v5272
  %v5610 = vunpack.c.h.b16 %v5272
  %v5611 = vunpack.c.l.b16 %v5273
  %v5612 = vunpack.c.h.b16 %v5273
  %v5613 = vunpack.c.l.b16 %v5274
  %v5614 = vunpack.c.h.b16 %v5274
  %v5615 = vunpack.c.l.b16 %v5275
  %v5616 = vunpack.c.h.b16 %v5275
  %v5617 = vunpack.c.l.b16 %v5276
  %v5618 = vunpack.c.h.b16 %v5276
  %v5619 = vunpack.c.l.b16 %v5277
  %v5620 = vunpack.c.h.b16 %v5277
  %v5621 = vunpack.c.l.b16 %v5278
  %v5622 = vunpack.c.h.b16 %v5278
  %v5623 = vunpack.c.l.b16 %v5279
  %v5624 = vunpack.c.h.b16 %v5279
  %v5625 = vunpack.c.l.b16 %v5280
  %v5626 = vunpack.c.h.b16 %v5280
  %v5627 = vunpack.c.l.b16 %v5281
  %v5628 = vunpack.c.h.b16 %v5281
  %v5629 = vunpack.c.l.b16 %v5282
  %v5630 = vunpack.c.h.b16 %v5282
  %v5631 = vunpack.c.l.b16 %v5283
  %v5632 = vunpack.c.h.b16 %v5283
  %v5633 = vunpack.c.l.b16 %v5284
  %v5634 = vunpack.c.h.b16 %v5284
  %v5635 = vunpack.c.l.b16 %v5285
  %v5636 = vunpack.c.h.b16 %v5285
  %v5637 = vunpack.c.l.b16 %v5286
  %v5638 = vunpack.c.h.b16 %v5286
  %v5639 = vunpack.c.l.b16 %v5287
  %v5640 = vunpack.c.h.b16 %v5287
  %v5641 = vunpack.c.l.b16 %v5288
  %v5642 = vunpack.c.h.b16 %v5288
  %v5643 = vunpack.c.l.b16 %v5289
  %v5644 = vunpack.c.h.b16 %v5289
  %v5645 = vunpack.c.l.b16 %v5290
  %v5646 = vunpack.c.h.b16 %v5290
  %v5647 = vunpack.c.l.b16 %v5291
  %v5648 = vunpack.c.h.b16 %v5291
  %v5649 = vunpack.c.l.b16 %v5292
  %v5650 = vunpack.c.h.b16 %v5292
  %v5651 = vunpack.c.l.b16 %v5293
  %v5652 = vunpack.c.h.b16 %v5293
  %v5653 = vunpack.c.l.b16 %v5294
  %v5654 = vunpack.c.h.b16 %v5294
  %v5655 = vunpack.c.l.b16 %v5295
  %v5656 = vunpack.c.h.b16 %v5295
  %v5657 = vunpack.c.l.b16 %v5296
  %v5658 = vunpack.c.h.b16 %v5296
  %v5659 = vunpack.c.l.b16 %v5297
  %v5660 = vunpack.c.h.b16 %v5297
  %v5661 = vunpack.c.l.b16 %v5298
  %v5662 = vunpack.c.h.b16 %v5298
  %v5663 = vunpack.c.l.b16 %v5299
  %v5664 = vunpack.c.h.b16 %v5299
  %v5665 = vunpack.c.l.b16 %v5300
  %v5666 = vunpack.c.h.b16 %v5300
  %v5667 = vunpack.c.l.b16 %v5301
  %v5668 = vunpack.c.h.b16 %v5301
  %v5669 = vunpack.c.l.b16 %v5302
  %v5670 = vunpack.c.h.b16 %v5302
  %v5671 = vunpack.c.l.b16 %v5303
  %v5672 = vunpack.c.h.b16 %v5303
  %v5673 = vunpack.c.l.b16 %v5304
  %v5674 = vunpack.c.h.b16 %v5304
  %v5675 = vunpack.c.l.b16 %v5305
  %v5676 = vunpack.c.h.b16 %v5305
  %v5677 = vunpack.c.l.b16 %v5306
  %v5678 = vunpack.c.h.b16 %v5306
  %v5679 = vunpack.c.l.b16 %v5307
  %v5680 = vunpack.c.h.b16 %v5307
  %v5681 = vunpack.c.l.b16 %v5308
  %v5682 = vunpack.c.h.b16 %v5308
  %v5683 = vunpack.c.l.b16 %v5309
  %v5684 = vunpack.c.h.b16 %v5309
  %v5685 = vunpack.c.l.b16 %v5310
  %v5686 = vunpack.c.h.b16 %v5310
  %v5687 = vunpack.c.l.b16 %v5311
  %v5688 = vunpack.c.h.b16 %v5311
  %v5689 = vunpack.c.l.b16 %v5312
  %v5690 = vunpack.c.h.b16 %v5312
  %v5691 = vunpack.c.l.b16 %v5313
  %v5692 = vunpack.c.h.b16 %v5313
  %v5693 = vunpack.c.l.b16 %v5314
  %v5694 = vunpack.c.h.b16 %v5314
  %v5695 = vunpack.c.l.b16 %v5315
  %v5696 = vunpack.c.h.b16 %v5315
  %v5697 = vunpack.c.l.b16 %v5316
  %v5698 = vunpack.c.h.b16 %v5316
  %v5699 = vunpack.c.l.b16 %v5317
  %v5700 = vunpack.c.h.b16 %v5317
  %v5701 = vunpack.c.l.b16 %v5318
  %v5702 = vunpack.c.h.b16 %v5318
  %v5703 = vunpack.c.l.b16 %v5319
  %v5704 = vunpack.c.h.b16 %v5319
  %v5705 = vunpack.c.l.b16 %v5320
  %v5706 = vunpack.c.h.b16 %v5320
  %v5707 = vunpack.c.l.b16 %v5321
  %v5708 = vunpack.c.h.b16 %v5321
  %v5709 = vunpack.c.l.b16 %v5322
  %v5710 = vunpack.c.h.b16 %v5322
  %v5711 = vunpack.c.l.b16 %v5323
  %v5712 = vunpack.c.h.b16 %v5323
  %v5713 = vunpack.c.l.b16 %v5324
  %v5714 = vunpack.c.h.b16 %v5324
  %v5715 = vunpack.c.l.b16 %v5325
  %v5716 = vunpack.c.h.b16 %v5325
  %v5717 = vunpack.c.l.b16 %v5326
  %v5718 = vunpack.c.h.b16 %v5326
  %v5719 = vunpack.c.l.b16 %v5327
  %v5720 = vunpack.c.h.b16 %v5327
  %v5721 = vunpack.c.l.b16 %v5328
  %v5722 = vunpack.c.h.b16 %v5328
  %v5723 = vunpack.c.l.b16 %v5329
  %v5724 = vunpack.c.h.b16 %v5329
  %v5725 = vunpack.c.l.b16 %v5330
  %v5726 = vunpack.c.h.b16 %v5330
  %v5727 = vunpack.c.l.b16 %v5331
  %v5728 = vunpack.c.h.b16 %v5331
  %v5729 = vunpack.c.l.b16 %v5332
  %v5730 = vunpack.c.h.b16 %v5332
  %v5731 = vunpack.c.l.b16 %v5333
  %v5732 = vunpack.c.h.b16 %v5333
  %v5733 = vunpack.c.l.b16 %v5334
  %v5734 = vunpack.c.h.b16 %v5334
  %v5735 = vunpack.c.l.b16 %v5335
  %v5736 = vunpack.c.h.b16 %v5335
  %v5737 = vunpack.c.l.b16 %v5336
  %v5738 = vunpack.c.h.b16 %v5336
  %v5739 = vunpack.c.l.b16 %v5337
  %v5740 = vunpack.c.h.b16 %v5337
  %v5741 = vunpack.c.l.b16 %v5338
  %v5742 = vunpack.c.h.b16 %v5338
  %v5743 = vunpack.c.l.b16 %v5339
  %v5744 = vunpack.c.h.b16 %v5339
  %v5745 = vunpack.c.l.b16 %v5340
  %v5746 = vunpack.c.h.b16 %v5340
  %v5747 = vpack.c.b16 %v5495, %v5491
  %v5748 = vpack.c.b16 %v5496, %v5492
  %v5749 = vpack.c.b16 %v5497, %v5493
  %v5750 = vpack.c.b16 %v5498, %v5494
  %v5751 = vpack.c.b16 %v5503, %v5499
  %v5752 = vpack.c.b16 %v5504, %v5500
  %v5753 = vpack.c.b16 %v5505, %v5501
  %v5754 = vpack.c.b16 %v5506, %v5502
  %v5755 = vpack.c.b16 %v5511, %v5507
  %v5756 = vpack.c.b16 %v5512, %v5508
  %v5757 = vpack.c.b16 %v5513, %v5509
  %v5758 = vpack.c.b16 %v5514, %v5510
  %v5759 = vpack.c.b16 %v5519, %v5515
  %v5760 = vpack.c.b16 %v5520, %v5516
  %v5761 = vpack.c.b16 %v5521, %v5517
  %v5762 = vpack.c.b16 %v5522, %v5518
  %v5763 = vpack.c.b16 %v5527, %v5523
  %v5764 = vpack.c.b16 %v5528, %v5524
  %v5765 = vpack.c.b16 %v5529, %v5525
  %v5766 = vpack.c.b16 %v5530, %v5526
  %v5767 = vpack.c.b16 %v5535, %v5531
  %v5768 = vpack.c.b16 %v5536, %v5532
  %v5769 = vpack.c.b16 %v5537, %v5533
  %v5770 = vpack.c.b16 %v5538, %v5534
  %v5771 = vpack.c.b16 %v5543, %v5539
  %v5772 = vpack.c.b16 %v5544, %v5540
  %v5773 = vpack.c.b16 %v5545, %v5541
  %v5774 = vpack.c.b16 %v5546, %v5542
  %v5775 = vpack.c.b16 %v5551, %v5547
  %v5776 = vpack.c.b16 %v5552, %v5548
  %v5777 = vpack.c.b16 %v5553, %v5549
  %v5778 = vpack.c.b16 %v5554, %v5550
  %v5779 = vpack.c.b16 %v5559, %v5555
  %v5780 = vpack.c.b16 %v5560, %v5556
  %v5781 = vpack.c.b16 %v5561, %v5557
  %v5782 = vpack.c.b16 %v5562, %v5558
  %v5783 = vpack.c.b16 %v5567, %v5563
  %v5784 = vpack.c.b16 %v5568, %v5564
  %v5785 = vpack.c.b16 %v5569, %v5565
  %v5786 = vpack.c.b16 %v5570, %v5566
  %v5787 = vpack.c.b16 %v5575, %v5571
  %v5788 = vpack.c.b16 %v5576, %v5572
  %v5789 = vpack.c.b16 %v5577, %v5573
  %v5790 = vpack.c.b16 %v5578, %v5574
  %v5791 = vpack.c.b16 %v5583, %v5579
  %v5792 = vpack.c.b16 %v5584, %v5580
  %v5793 = vpack.c.b16 %v5585, %v5581
  %v5794 = vpack.c.b16 %v5586, %v5582
  %v5795 = vpack.c.b16 %v5591, %v5587
  %v5796 = vpack.c.b16 %v5592, %v5588
  %v5797 = vpack.c.b16 %v5593, %v5589
  %v5798 = vpack.c.b16 %v5594, %v5590
  %v5799 = vpack.c.b16 %v5599, %v5595
  %v5800 = vpack.c.b16 %v5600, %v5596
  %v5801 = vpack.c.b16 %v5601, %v5597
  %v5802 = vpack.c.b16 %v5602, %v5598
  %v5803 = vpack.c.b16 %v5607, %v5603
  %v5804 = vpack.c.b16 %v5608, %v5604
  %v5805 = vpack.c.b16 %v5609, %v5605
  %v5806 = vpack.c.b16 %v5610, %v5606
  %v5807 = vpack.c.b16 %v5615, %v5611
  %v5808 = vpack.c.b16 %v5616, %v5612
  %v5809 = vpack.c.b16 %v5617, %v5613
  %v5810 = vpack.c.b16 %v5618, %v5614
  %v5811 = vpack.c.b16 %v5623, %v5619
  %v5812 = vpack.c.b16 %v5624, %v5620
  %v5813 = vpack.c.b16 %v5625, %v5621
  %v5814 = vpack.c.b16 %v5626, %v5622
  %v5815 = vpack.c.b16 %v5631, %v5627
  %v5816 = vpack.c.b16 %v5632, %v5628
  %v5817 = vpack.c.b16 %v5633, %v5629
  %v5818 = vpack.c.b16 %v5634, %v5630
  %v5819 = vpack.c.b16 %v5639, %v5635
  %v5820 = vpack.c.b16 %v5640, %v5636
  %v5821 = vpack.c.b16 %v5641, %v5637
  %v5822 = vpack.c.b16 %v5642, %v5638
  %v5823 = vpack.c.b16 %v5647, %v5643
  %v5824 = vpack.c.b16 %v5648, %v5644
  %v5825 = vpack.c.b16 %v5649, %v5645
  %v5826 = vpack.c.b16 %v5650, %v5646
  %v5827 = vpack.c.b16 %v5655, %v5651
  %v5828 = vpack.c.b16 %v5656, %v5652
  %v5829 = vpack.c.b16 %v5657, %v5653
  %v5830 = vpack.c.b16 %v5658, %v5654
  %v5831 = vpack.c.b16 %v5663, %v5659
  %v5832 = vpack.c.b16 %v5664, %v5660
  %v5833 = vpack.c.b16 %v5665, %v5661
  %v5834 = vpack.c.b16 %v5666, %v5662
  %v5835 = vpack.c.b16 %v5671, %v5667
  %v5836 = vpack.c.b16 %v5672, %v5668
  %v5837 = vpack.c.b16 %v5673, %v5669
  %v5838 = vpack.c.b16 %v5674, %v5670
  %v5839 = vpack.c.b16 %v5679, %v5675
  %v5840 = vpack.c.b16 %v5680, %v5676
  %v5841 = vpack.c.b16 %v5681, %v5677
  %v5842 = vpack.c.b16 %v5682, %v5678
  %v5843 = vpack.c.b16 %v5687, %v5683
  %v5844 = vpack.c.b16 %v5688, %v5684
  %v5845 = vpack.c.b16 %v5689, %v5685
  %v5846 = vpack.c.b16 %v5690, %v5686
  %v5847 = vpack.c.b16 %v5695, %v5691
  %v5848 = vpack.c.b16 %v5696, %v5692
  %v5849 = vpack.c.b16 %v5697, %v5693
  %v5850 = vpack.c.b16 %v5698, %v5694
  %v5851 = vpack.c.b16 %v5703, %v5699
  %v5852 = vpack.c.b16 %v5704, %v5700
  %v5853 = vpack.c.b16 %v5705, %v5701
  %v5854 = vpack.c.b16 %v5706, %v5702
  %v5855 = vpack.c.b16 %v5711, %v5707
  %v5856 = vpack.c.b16 %v5712, %v5708
  %v5857 = vpack.c.b16 %v5713, %v5709
  %v5858 = vpack.c.b16 %v5714, %v5710
  %v5859 = vpack.c.b16 %v5719, %v5715
  %v5860 = vpack.c.b16 %v5720, %v5716
  %v5861 = vpack.c.b16 %v5721, %v5717
  %v5862 = vpack.c.b16 %v5722, %v5718
  %v5863 = vpack.c.b16 %v5727, %v5723
  %v5864 = vpack.c.b16 %v5728, %v5724
  %v5865 = vpack.c.b16 %v5729, %v5725
  %v5866 = vpack.c.b16 %v5730, %v5726
  %v5867 = vpack.c.b16 %v5735, %v5731
  %v5868 = vpack.c.b16 %v5736, %v5732
  %v5869 = vpack.c.b16 %v5737, %v5733
  %v5870 = vpack.c.b16 %v5738, %v5734
  %v5871 = vpack.c.b16 %v5743, %v5739
  %v5872 = vpack.c.b16 %v5744, %v5740
  %v5873 = vpack.c.b16 %v5745, %v5741
  %v5874 = vpack.c.b16 %v5746, %v5742
  %6003 = vmatprep.subr.bf16.mxu0 %v5748
  %6004 = vmatpush1.bf16.msra.mxu0 %v5747
  %6005 = vmatprep.subr.bf16.mxu0 %v5752
  %6006 = vmatpush1.bf16.msra.mxu0 %v5751
  %6007 = vmatprep.subr.bf16.mxu0 %v5756
  %6008 = vmatpush1.bf16.msra.mxu0 %v5755
  %6009 = vmatprep.subr.bf16.mxu0 %v5760
  %6010 = vmatpush1.bf16.msra.mxu0 %v5759
  %6011 = vmatprep.subr.bf16.mxu0 %v5764
  %6012 = vmatpush1.bf16.msra.mxu0 %v5763
  %6013 = vmatprep.subr.bf16.mxu0 %v5768
  %6014 = vmatpush1.bf16.msra.mxu0 %v5767
  %6015 = vmatprep.subr.bf16.mxu0 %v5772
  %6016 = vmatpush1.bf16.msra.mxu0 %v5771
  %6017 = vmatprep.subr.bf16.mxu0 %v5776
  %6018 = vmatpush1.bf16.msra.mxu0 %v5775
  %6019 = vmatprep.subr.bf16.mxu0 %v5780
  %6020 = vmatpush1.bf16.msra.mxu0 %v5779
  %6021 = vmatprep.subr.bf16.mxu0 %v5784
  %6022 = vmatpush1.bf16.msra.mxu0 %v5783
  %6023 = vmatprep.subr.bf16.mxu0 %v5788
  %6024 = vmatpush1.bf16.msra.mxu0 %v5787
  %6025 = vmatprep.subr.bf16.mxu0 %v5792
  %6026 = vmatpush1.bf16.msra.mxu0 %v5791
  %6027 = vmatprep.subr.bf16.mxu0 %v5796
  %6028 = vmatpush1.bf16.msra.mxu0 %v5795
  %6029 = vmatprep.subr.bf16.mxu0 %v5800
  %6030 = vmatpush1.bf16.msra.mxu0 %v5799
  %6031 = vmatprep.subr.bf16.mxu0 %v5804
  %6032 = vmatpush1.bf16.msra.mxu0 %v5803
  %6033 = vmatprep.subr.bf16.mxu0 %v5808
  %6034 = vmatpush1.bf16.msra.mxu0 %v5807
  %6035 = vmatprep.mubr.bf16.mxu0 %v5210
  %6036 = vmatmul.mubr.bf16.gmra.mrb[0].mxu0 %v5209
  %v6037 = vpop.f32.mrb[0].mxu0
  %v6038 = vadd.f32 %v5346, %v6037
  %v6039 = vpop.f32.mrb[0].mxu0
  %v6040 = vadd.f32 %v5350, %v6039
  %v6041 = vpop.f32.mrb[0].mxu0
  %v6042 = vpop.f32.mrb[0].mxu0
  %6043 = vdwg.mxu0
  %6044 = vmatprep.subr.bf16.mxu0 %v5812
  %6045 = vmatpush1.bf16.msra.mxu0 %v5811
  %6046 = vmatprep.subr.bf16.mxu0 %v5816
  %6047 = vmatpush1.bf16.msra.mxu0 %v5815
  %6048 = vmatprep.subr.bf16.mxu0 %v5820
  %6049 = vmatpush1.bf16.msra.mxu0 %v5819
  %6050 = vmatprep.subr.bf16.mxu0 %v5824
  %6051 = vmatpush1.bf16.msra.mxu0 %v5823
  %6052 = vmatprep.subr.bf16.mxu0 %v5828
  %6053 = vmatpush1.bf16.msra.mxu0 %v5827
  %6054 = vmatprep.subr.bf16.mxu0 %v5832
  %6055 = vmatpush1.bf16.msra.mxu0 %v5831
  %6056 = vmatprep.subr.bf16.mxu0 %v5836
  %6057 = vmatpush1.bf16.msra.mxu0 %v5835
  %6058 = vmatprep.subr.bf16.mxu0 %v5840
  %6059 = vmatpush1.bf16.msra.mxu0 %v5839
  %6060 = vmatprep.subr.bf16.mxu0 %v5844
  %6061 = vmatpush1.bf16.msra.mxu0 %v5843
  %6062 = vmatprep.subr.bf16.mxu0 %v5848
  %6063 = vmatpush1.bf16.msra.mxu0 %v5847
  %6064 = vmatprep.subr.bf16.mxu0 %v5852
  %6065 = vmatpush1.bf16.msra.mxu0 %v5851
  %6066 = vmatprep.subr.bf16.mxu0 %v5856
  %6067 = vmatpush1.bf16.msra.mxu0 %v5855
  %6068 = vmatprep.subr.bf16.mxu0 %v5860
  %6069 = vmatpush1.bf16.msra.mxu0 %v5859
  %6070 = vmatprep.subr.bf16.mxu0 %v5864
  %6071 = vmatpush1.bf16.msra.mxu0 %v5863
  %6072 = vmatprep.subr.bf16.mxu0 %v5868
  %6073 = vmatpush1.bf16.msra.mxu0 %v5867
  %6074 = vmatprep.subr.bf16.mxu0 %v5872
  %6075 = vmatpush1.bf16.msra.mxu0 %v5871
  %6076 = vmatprep.mubr.bf16.mxu0 %v5212
  %6077 = vmatmul.mubr.bf16.gmra.mrb[0].mxu0 %v5211
  %v6078 = vpop.f32.mrb[0].mxu0
  %v6079 = vadd.f32 %v6038, %v6078
  %v6080 = vpop.f32.mrb[0].mxu0
  %v6081 = vadd.f32 %v6040, %v6080
  %v6082 = vpop.f32.mrb[0].mxu0
  %v6083 = vpop.f32.mrb[0].mxu0
  %6084 = vdwg.mxu0
  %6085 = vmatprep.subr.bf16.mxu0 %v5750
  %6086 = vmatpush1.bf16.msra.mxu0 %v5749
  %6087 = vmatprep.subr.bf16.mxu0 %v5754
  %6088 = vmatpush1.bf16.msra.mxu0 %v5753
  %6089 = vmatprep.subr.bf16.mxu0 %v5758
  %6090 = vmatpush1.bf16.msra.mxu0 %v5757
  %6091 = vmatprep.subr.bf16.mxu0 %v5762
  %6092 = vmatpush1.bf16.msra.mxu0 %v5761
  %6093 = vmatprep.subr.bf16.mxu0 %v5766
  %6094 = vmatpush1.bf16.msra.mxu0 %v5765
  %6095 = vmatprep.subr.bf16.mxu0 %v5770
  %6096 = vmatpush1.bf16.msra.mxu0 %v5769
  %6097 = vmatprep.subr.bf16.mxu0 %v5774
  %6098 = vmatpush1.bf16.msra.mxu0 %v5773
  %6099 = vmatprep.subr.bf16.mxu0 %v5778
  %6100 = vmatpush1.bf16.msra.mxu0 %v5777
  %6101 = vmatprep.subr.bf16.mxu0 %v5782
  %6102 = vmatpush1.bf16.msra.mxu0 %v5781
  %6103 = vmatprep.subr.bf16.mxu0 %v5786
  %6104 = vmatpush1.bf16.msra.mxu0 %v5785
  %6105 = vmatprep.subr.bf16.mxu0 %v5790
  %6106 = vmatpush1.bf16.msra.mxu0 %v5789
  %6107 = vmatprep.subr.bf16.mxu0 %v5794
  %6108 = vmatpush1.bf16.msra.mxu0 %v5793
  %6109 = vmatprep.subr.bf16.mxu0 %v5798
  %6110 = vmatpush1.bf16.msra.mxu0 %v5797
  %6111 = vmatprep.subr.bf16.mxu0 %v5802
  %6112 = vmatpush1.bf16.msra.mxu0 %v5801
  %6113 = vmatprep.subr.bf16.mxu0 %v5806
  %6114 = vmatpush1.bf16.msra.mxu0 %v5805
  %6115 = vmatprep.subr.bf16.mxu0 %v5810
  %6116 = vmatpush1.bf16.msra.mxu0 %v5809
  %6117 = vmatprep.mubr.bf16.mxu0 %v5210
  %6118 = vmatmul.mubr.bf16.gmra.mrb[0].mxu0 %v5209
  %v6119 = vpop.f32.mrb[0].mxu0
  %v6120 = vadd.f32 %v5354, %v6119
  %v6121 = vpop.f32.mrb[0].mxu0
  %v6122 = vadd.f32 %v5358, %v6121
  %v6123 = vpop.f32.mrb[0].mxu0
  %v6124 = vpop.f32.mrb[0].mxu0
  %6125 = vdwg.mxu0
  %6126 = vmatprep.subr.bf16.mxu0 %v5814
  %6127 = vmatpush1.bf16.msra.mxu0 %v5813
  %6128 = vmatprep.subr.bf16.mxu0 %v5818
  %6129 = vmatpush1.bf16.msra.mxu0 %v5817
  %6130 = vmatprep.subr.bf16.mxu0 %v5822
  %6131 = vmatpush1.bf16.msra.mxu0 %v5821
  %6132 = vmatprep.subr.bf16.mxu0 %v5826
  %6133 = vmatpush1.bf16.msra.mxu0 %v5825
  %6134 = vmatprep.subr.bf16.mxu0 %v5830
  %6135 = vmatpush1.bf16.msra.mxu0 %v5829
  %6136 = vmatprep.subr.bf16.mxu0 %v5834
  %6137 = vmatpush1.bf16.msra.mxu0 %v5833
  %6138 = vmatprep.subr.bf16.mxu0 %v5838
  %6139 = vmatpush1.bf16.msra.mxu0 %v5837
  %6140 = vmatprep.subr.bf16.mxu0 %v5842
  %6141 = vmatpush1.bf16.msra.mxu0 %v5841
  %6142 = vmatprep.subr.bf16.mxu0 %v5846
  %6143 = vmatpush1.bf16.msra.mxu0 %v5845
  %6144 = vmatprep.subr.bf16.mxu0 %v5850
  %6145 = vmatpush1.bf16.msra.mxu0 %v5849
  %6146 = vmatprep.subr.bf16.mxu0 %v5854
  %6147 = vmatpush1.bf16.msra.mxu0 %v5853
  %6148 = vmatprep.subr.bf16.mxu0 %v5858
  %6149 = vmatpush1.bf16.msra.mxu0 %v5857
  %6150 = vmatprep.subr.bf16.mxu0 %v5862
  %6151 = vmatpush1.bf16.msra.mxu0 %v5861
  %6152 = vmatprep.subr.bf16.mxu0 %v5866
  %6153 = vmatpush1.bf16.msra.mxu0 %v5865
  %6154 = vmatprep.subr.bf16.mxu0 %v5870
  %6155 = vmatpush1.bf16.msra.mxu0 %v5869
  %6156 = vmatprep.subr.bf16.mxu0 %v5874
  %6157 = vmatpush1.bf16.msra.mxu0 %v5873
  %6158 = vmatprep.mubr.bf16.mxu0 %v5212
  %6159 = vmatmul.mubr.bf16.gmra.mrb[0].mxu0 %v5211
  %v6160 = vpop.f32.mrb[0].mxu0
  %v6161 = vadd.f32 %v6120, %v6160
  %v6162 = vpop.f32.mrb[0].mxu0
  %v6163 = vadd.f32 %v6122, %v6162
  %v6164 = vpop.f32.mrb[0].mxu0
  %v6165 = vpop.f32.mrb[0].mxu0
  %6166 = vdwg.mxu0
  %v6171 = vcombine.low %v6079, %v6081
  %v6172 = vcombine.low %v6161, %v6163
  %v6174 = vunpack.c.l.s4 1983009808
  %v6175 = vunpack.c.0.s8 %v6174
  %v6176 = vlaneseq
  %v6177 = vshrl.u32 %v6176, 7
  %v6178 = vsub.s32 %v6175, %v6177
  %v6179 = vrot.slane %v6171, %v6178
  %v6181 = vunpack.c.l.s4 1983009808
  %v6182 = vunpack.c.0.s8 %v6181
  %v6183 = vlaneseq
  %v6184 = vshrl.u32 %v6183, 7
  %v6185 = vsub.s32 %v6182, %v6184
  %v6186 = vrot.slane %v6172, %v6185
  %v6187 = vcombine.low %v6179, %v6186
  %6189 = vst [vmem:[%s23] sm:$0xff] %v6187
  %v6190 = vld [vmem:[%s18] sm:$0xf]
  %v6191 = vld [vmem:[%s18 + $0x4] sm:$0xf]
  %v6192 = vld [vmem:[%s18 + $0x8] sm:$0xf]
  %v6193 = vld [vmem:[%s18 + $0xc] sm:$0xf]
  %v6194 = vld [vmem:[%s18 + $0x10] sm:$0xf]
  %v6195 = vld [vmem:[%s18 + $0x14] sm:$0xf]
  %v6196 = vld [vmem:[%s18 + $0x18] sm:$0xf]
  %v6197 = vld [vmem:[%s18 + $0x1c] sm:$0xf]
  %v6198 = vld [vmem:[%s18 + $0x20] sm:$0xf]
  %v6199 = vld [vmem:[%s18 + $0x24] sm:$0xf]
  %v6200 = vld [vmem:[%s18 + $0x28] sm:$0xf]
  %v6201 = vld [vmem:[%s18 + $0x2c] sm:$0xf]
  %v6202 = vld [vmem:[%s18 + $0x30] sm:$0xf]
  %v6203 = vld [vmem:[%s18 + $0x34] sm:$0xf]
  %v6204 = vld [vmem:[%s18 + $0x38] sm:$0xf]
  %v6205 = vld [vmem:[%s18 + $0x3c] sm:$0xf]
  %v6206 = vld [vmem:[%s18 + $0x40] sm:$0xf]
  %v6207 = vld [vmem:[%s18 + $0x44] sm:$0xf]
  %v6208 = vld [vmem:[%s18 + $0x48] sm:$0xf]
  %v6209 = vld [vmem:[%s18 + $0x4c] sm:$0xf]
  %v6210 = vld [vmem:[%s18 + $0x50] sm:$0xf]
  %v6211 = vld [vmem:[%s18 + $0x54] sm:$0xf]
  %v6212 = vld [vmem:[%s18 + $0x58] sm:$0xf]
  %v6213 = vld [vmem:[%s18 + $0x5c] sm:$0xf]
  %v6214 = vld [vmem:[%s18 + $0x60] sm:$0xf]
  %v6215 = vld [vmem:[%s18 + $0x64] sm:$0xf]
  %v6216 = vld [vmem:[%s18 + $0x68] sm:$0xf]
  %v6217 = vld [vmem:[%s18 + $0x6c] sm:$0xf]
  %v6218 = vld [vmem:[%s18 + $0x70] sm:$0xf]
  %v6219 = vld [vmem:[%s18 + $0x74] sm:$0xf]
  %v6220 = vld [vmem:[%s18 + $0x78] sm:$0xf]
  %v6221 = vld [vmem:[%s18 + $0x7c] sm:$0xf]
  %v6222 = vld [vmem:[%s18 + $0x80] sm:$0xf]
  %v6223 = vld [vmem:[%s18 + $0x84] sm:$0xf]
  %v6224 = vld [vmem:[%s18 + $0x88] sm:$0xf]
  %v6225 = vld [vmem:[%s18 + $0x8c] sm:$0xf]
  %v6226 = vld [vmem:[%s18 + $0x90] sm:$0xf]
  %v6227 = vld [vmem:[%s18 + $0x94] sm:$0xf]
  %v6228 = vld [vmem:[%s18 + $0x98] sm:$0xf]
  %v6229 = vld [vmem:[%s18 + $0x9c] sm:$0xf]
  %v6230 = vld [vmem:[%s18 + $0xa0] sm:$0xf]
  %v6231 = vld [vmem:[%s18 + $0xa4] sm:$0xf]
  %v6232 = vld [vmem:[%s18 + $0xa8] sm:$0xf]
  %v6233 = vld [vmem:[%s18 + $0xac] sm:$0xf]
  %v6234 = vld [vmem:[%s18 + $0xb0] sm:$0xf]
  %v6235 = vld [vmem:[%s18 + $0xb4] sm:$0xf]
  %v6236 = vld [vmem:[%s18 + $0xb8] sm:$0xf]
  %v6237 = vld [vmem:[%s18 + $0xbc] sm:$0xf]
  %v6238 = vld [vmem:[%s18 + $0xc0] sm:$0xf]
  %v6239 = vld [vmem:[%s18 + $0xc4] sm:$0xf]
  %v6240 = vld [vmem:[%s18 + $0xc8] sm:$0xf]
  %v6241 = vld [vmem:[%s18 + $0xcc] sm:$0xf]
  %v6242 = vld [vmem:[%s18 + $0xd0] sm:$0xf]
  %v6243 = vld [vmem:[%s18 + $0xd4] sm:$0xf]
  %v6244 = vld [vmem:[%s18 + $0xd8] sm:$0xf]
  %v6245 = vld [vmem:[%s18 + $0xdc] sm:$0xf]
  %v6246 = vld [vmem:[%s18 + $0xe0] sm:$0xf]
  %v6247 = vld [vmem:[%s18 + $0xe4] sm:$0xf]
  %v6248 = vld [vmem:[%s18 + $0xe8] sm:$0xf]
  %v6249 = vld [vmem:[%s18 + $0xec] sm:$0xf]
  %v6250 = vld [vmem:[%s18 + $0xf0] sm:$0xf]
  %v6251 = vld [vmem:[%s18 + $0xf4] sm:$0xf]
  %v6252 = vld [vmem:[%s18 + $0xf8] sm:$0xf]
  %v6253 = vld [vmem:[%s18 + $0xfc] sm:$0xf]
  %v6254 = vld [vmem:[%s18 + $0x100] sm:$0xf]
  %v6255 = vld [vmem:[%s18 + $0x104] sm:$0xf]
  %v6256 = vld [vmem:[%s18 + $0x108] sm:$0xf]
  %v6257 = vld [vmem:[%s18 + $0x10c] sm:$0xf]
  %v6258 = vld [vmem:[%s18 + $0x110] sm:$0xf]
  %v6259 = vld [vmem:[%s18 + $0x114] sm:$0xf]
  %v6260 = vld [vmem:[%s18 + $0x118] sm:$0xf]
  %v6261 = vld [vmem:[%s18 + $0x11c] sm:$0xf]
  %v6262 = vld [vmem:[%s19] sm:$0xf]
  %v6263 = vld [vmem:[%s19 + $0x4] sm:$0xf]
  %v6264 = vld [vmem:[%s19 + $0x8] sm:$0xf]
  %v6265 = vld [vmem:[%s19 + $0xc] sm:$0xf]
  %v6266 = vld [vmem:[%s19 + $0x10] sm:$0xf]
  %v6267 = vld [vmem:[%s19 + $0x14] sm:$0xf]
  %v6268 = vld [vmem:[%s19 + $0x18] sm:$0xf]
  %v6269 = vld [vmem:[%s19 + $0x1c] sm:$0xf]
  %v6270 = vld [vmem:[%s19 + $0x20] sm:$0xf]
  %v6271 = vld [vmem:[%s19 + $0x24] sm:$0xf]
  %v6272 = vld [vmem:[%s19 + $0x28] sm:$0xf]
  %v6273 = vld [vmem:[%s19 + $0x2c] sm:$0xf]
  %v6274 = vld [vmem:[%s19 + $0x30] sm:$0xf]
  %v6275 = vld [vmem:[%s19 + $0x34] sm:$0xf]
  %v6276 = vld [vmem:[%s19 + $0x38] sm:$0xf]
  %v6277 = vld [vmem:[%s19 + $0x3c] sm:$0xf]
  %v6278 = vld [vmem:[%s19 + $0x40] sm:$0xf]
  %v6279 = vld [vmem:[%s19 + $0x44] sm:$0xf]
  %v6280 = vld [vmem:[%s19 + $0x48] sm:$0xf]
  %v6281 = vld [vmem:[%s19 + $0x4c] sm:$0xf]
  %v6302 = vunpack.c.l.b16 %v6262
  %v6303 = vunpack.c.l.b16 %v6263
  %v6304 = vunpack.c.l.b16 %v6264
  %v6305 = vunpack.c.l.b16 %v6265
  %v6306 = vunpack.c.l.b16 %v6266
  %v6307 = vunpack.c.l.b16 %v6267
  %v6308 = vunpack.c.l.b16 %v6268
  %v6309 = vunpack.c.l.b16 %v6269
  %v6310 = vunpack.c.l.b16 %v6270
  %v6311 = vunpack.c.l.b16 %v6271
  %v6312 = vunpack.c.l.b16 %v6272
  %v6313 = vunpack.c.l.b16 %v6273
  %v6314 = vunpack.c.l.b16 %v6274
  %v6315 = vunpack.c.l.b16 %v6275
  %v6316 = vunpack.c.l.b16 %v6276
  %v6317 = vunpack.c.l.b16 %v6277
  %v6318 = vunpack.c.l.b16 %v6278
  %v6319 = vunpack.c.l.b16 %v6279
  %v6320 = vunpack.c.l.b16 %v6280
  %v6321 = vunpack.c.l.b16 %v6281
  %v6322 = vpack.c.b16 %v6303, %v6302
  %v6323 = vpack.c.b16 %v6305, %v6304
  %v6324 = vpack.c.b16 %v6307, %v6306
  %v6325 = vpack.c.b16 %v6309, %v6308
  %v6326 = vpack.c.b16 %v6311, %v6310
  %v6327 = vpack.c.b16 %v6313, %v6312
  %v6328 = vpack.c.b16 %v6315, %v6314
  %v6329 = vpack.c.b16 %v6317, %v6316
  %v6330 = vpack.c.b16 %v6319, %v6318
  %v6331 = vpack.c.b16 %v6321, %v6320
  %6342 = vmatprep.subr.bf16.mxu0 0
  %6343 = vmatpush1.bf16.msra.mxu0 %v6322
  %6344 = vmatprep.subr.bf16.mxu0 0
  %6345 = vmatpush1.bf16.msra.mxu0 %v6323
  %6346 = vmatprep.subr.bf16.mxu0 0
  %6347 = vmatpush1.bf16.msra.mxu0 %v6324
  %6348 = vmatprep.subr.bf16.mxu0 0
  %6349 = vmatpush1.bf16.msra.mxu0 %v6325
  %6350 = vmatprep.subr.bf16.mxu0 0
  %6351 = vmatpush1.bf16.msra.mxu0 %v6326
  %6352 = vmatprep.subr.bf16.mxu0 0
  %6353 = vmatpush1.bf16.msra.mxu0 %v6327
  %6354 = vmatprep.subr.bf16.mxu0 0
  %6355 = vmatpush1.bf16.msra.mxu0 %v6328
  %6356 = vmatprep.subr.bf16.mxu0 0
  %6357 = vmatpush1.bf16.msra.mxu0 %v6329
  %6358 = vmatprep.subr.bf16.mxu0 0
  %6359 = vmatpush1.bf16.msra.mxu0 %v6330
  %6360 = vmatprep.subr.bf16.mxu0 0
  %6361 = vmatpush1.bf16.msra.mxu0 %v6331
  %6362 = vmatprep.subr.bf16.mxu0 0
  %6363 = vmatpush1.bf16.msra.mxu0 0
  %6364 = vmatprep.subr.bf16.mxu0 0
  %6365 = vmatpush1.bf16.msra.mxu0 0
  %6366 = vmatprep.subr.bf16.mxu0 0
  %6367 = vmatpush1.bf16.msra.mxu0 0
  %6368 = vmatprep.subr.bf16.mxu0 0
  %6369 = vmatpush1.bf16.msra.mxu0 0
  %6370 = vmatprep.subr.bf16.mxu0 0
  %6371 = vmatpush1.bf16.msra.mxu0 0
  %6372 = vmatprep.subr.bf16.mxu0 0
  %6373 = vmatpush1.bf16.msra.mxu0 0
  %6374 = vmatprep.mubr.bf16.mxu0 %v4125
  %6375 = vmatmul.mubr.bf16.gmra.mrb[0].mxu0 %v3882
  %v6376 = vpop.f32.mrb[0].mxu0
  %v6377 = vadd.f32 0.0, %v6376
  %v6378 = vpop.f32.mrb[0].mxu0
  %v6379 = vpop.f32.mrb[0].mxu0
  %v6380 = vpop.f32.mrb[0].mxu0
  %6381 = vdwg.mxu0
  %v6454 = vunpack.c.l.b16 %v6190
  %v6455 = vunpack.c.l.b16 %v6191
  %v6456 = vunpack.c.l.b16 %v6192
  %v6457 = vunpack.c.l.b16 %v6193
  %v6458 = vunpack.c.l.b16 %v6194
  %v6459 = vunpack.c.l.b16 %v6195
  %v6460 = vunpack.c.l.b16 %v6196
  %v6461 = vunpack.c.l.b16 %v6197
  %v6462 = vunpack.c.l.b16 %v6198
  %v6463 = vunpack.c.l.b16 %v6199
  %v6464 = vunpack.c.l.b16 %v6200
  %v6465 = vunpack.c.l.b16 %v6201
  %v6466 = vunpack.c.l.b16 %v6202
  %v6467 = vunpack.c.l.b16 %v6203
  %v6468 = vunpack.c.l.b16 %v6204
  %v6469 = vunpack.c.l.b16 %v6205
  %v6470 = vunpack.c.l.b16 %v6206
  %v6471 = vunpack.c.l.b16 %v6207
  %v6472 = vunpack.c.l.b16 %v6208
  %v6473 = vunpack.c.l.b16 %v6209
  %v6474 = vunpack.c.l.b16 %v6210
  %v6475 = vunpack.c.l.b16 %v6211
  %v6476 = vunpack.c.l.b16 %v6212
  %v6477 = vunpack.c.l.b16 %v6213
  %v6478 = vunpack.c.l.b16 %v6214
  %v6479 = vunpack.c.l.b16 %v6215
  %v6480 = vunpack.c.l.b16 %v6216
  %v6481 = vunpack.c.l.b16 %v6217
  %v6482 = vunpack.c.l.b16 %v6218
  %v6483 = vunpack.c.l.b16 %v6219
  %v6484 = vunpack.c.l.b16 %v6220
  %v6485 = vunpack.c.l.b16 %v6221
  %v6486 = vunpack.c.l.b16 %v6222
  %v6487 = vunpack.c.l.b16 %v6223
  %v6488 = vunpack.c.l.b16 %v6224
  %v6489 = vunpack.c.l.b16 %v6225
  %v6490 = vunpack.c.l.b16 %v6226
  %v6491 = vunpack.c.l.b16 %v6227
  %v6492 = vunpack.c.l.b16 %v6228
  %v6493 = vunpack.c.l.b16 %v6229
  %v6494 = vunpack.c.l.b16 %v6230
  %v6495 = vunpack.c.l.b16 %v6231
  %v6496 = vunpack.c.l.b16 %v6232
  %v6497 = vunpack.c.l.b16 %v6233
  %v6498 = vunpack.c.l.b16 %v6234
  %v6499 = vunpack.c.l.b16 %v6235
  %v6500 = vunpack.c.l.b16 %v6236
  %v6501 = vunpack.c.l.b16 %v6237
  %v6502 = vunpack.c.l.b16 %v6238
  %v6503 = vunpack.c.l.b16 %v6239
  %v6504 = vunpack.c.l.b16 %v6240
  %v6505 = vunpack.c.l.b16 %v6241
  %v6506 = vunpack.c.l.b16 %v6242
  %v6507 = vunpack.c.l.b16 %v6243
  %v6508 = vunpack.c.l.b16 %v6244
  %v6509 = vunpack.c.l.b16 %v6245
  %v6510 = vunpack.c.l.b16 %v6246
  %v6511 = vunpack.c.l.b16 %v6247
  %v6512 = vunpack.c.l.b16 %v6248
  %v6513 = vunpack.c.l.b16 %v6249
  %v6514 = vunpack.c.l.b16 %v6250
  %v6515 = vunpack.c.l.b16 %v6251
  %v6516 = vunpack.c.l.b16 %v6252
  %v6517 = vunpack.c.l.b16 %v6253
  %v6518 = vunpack.c.l.b16 %v6254
  %v6519 = vunpack.c.l.b16 %v6255
  %v6520 = vunpack.c.l.b16 %v6256
  %v6521 = vunpack.c.l.b16 %v6257
  %v6522 = vunpack.c.l.b16 %v6258
  %v6523 = vunpack.c.l.b16 %v6259
  %v6524 = vunpack.c.l.b16 %v6260
  %v6525 = vunpack.c.l.b16 %v6261
  %v6526 = vpack.c.b16 %v6455, %v6454
  %v6527 = vpack.c.b16 %v6457, %v6456
  %v6528 = vpack.c.b16 %v6459, %v6458
  %v6529 = vpack.c.b16 %v6461, %v6460
  %v6530 = vpack.c.b16 %v6463, %v6462
  %v6531 = vpack.c.b16 %v6465, %v6464
  %v6532 = vpack.c.b16 %v6467, %v6466
  %v6533 = vpack.c.b16 %v6469, %v6468
  %v6534 = vpack.c.b16 %v6471, %v6470
  %v6535 = vpack.c.b16 %v6473, %v6472
  %v6536 = vpack.c.b16 %v6475, %v6474
  %v6537 = vpack.c.b16 %v6477, %v6476
  %v6538 = vpack.c.b16 %v6479, %v6478
  %v6539 = vpack.c.b16 %v6481, %v6480
  %v6540 = vpack.c.b16 %v6483, %v6482
  %v6541 = vpack.c.b16 %v6485, %v6484
  %v6542 = vpack.c.b16 %v6487, %v6486
  %v6543 = vpack.c.b16 %v6489, %v6488
  %v6544 = vpack.c.b16 %v6491, %v6490
  %v6545 = vpack.c.b16 %v6493, %v6492
  %v6546 = vpack.c.b16 %v6495, %v6494
  %v6547 = vpack.c.b16 %v6497, %v6496
  %v6548 = vpack.c.b16 %v6499, %v6498
  %v6549 = vpack.c.b16 %v6501, %v6500
  %v6550 = vpack.c.b16 %v6503, %v6502
  %v6551 = vpack.c.b16 %v6505, %v6504
  %v6552 = vpack.c.b16 %v6507, %v6506
  %v6553 = vpack.c.b16 %v6509, %v6508
  %v6554 = vpack.c.b16 %v6511, %v6510
  %v6555 = vpack.c.b16 %v6513, %v6512
  %v6556 = vpack.c.b16 %v6515, %v6514
  %v6557 = vpack.c.b16 %v6517, %v6516
  %v6558 = vpack.c.b16 %v6519, %v6518
  %v6559 = vpack.c.b16 %v6521, %v6520
  %v6560 = vpack.c.b16 %v6523, %v6522
  %v6561 = vpack.c.b16 %v6525, %v6524
  %6598 = vmatprep.subr.bf16.mxu0 0
  %6599 = vmatpush1.bf16.msra.mxu0 %v6526
  %6600 = vmatprep.subr.bf16.mxu0 0
  %6601 = vmatpush1.bf16.msra.mxu0 %v6527
  %6602 = vmatprep.subr.bf16.mxu0 0
  %6603 = vmatpush1.bf16.msra.mxu0 %v6528
  %6604 = vmatprep.subr.bf16.mxu0 0
  %6605 = vmatpush1.bf16.msra.mxu0 %v6529
  %6606 = vmatprep.subr.bf16.mxu0 0
  %6607 = vmatpush1.bf16.msra.mxu0 %v6530
  %6608 = vmatprep.subr.bf16.mxu0 0
  %6609 = vmatpush1.bf16.msra.mxu0 %v6531
  %6610 = vmatprep.subr.bf16.mxu0 0
  %6611 = vmatpush1.bf16.msra.mxu0 %v6532
  %6612 = vmatprep.subr.bf16.mxu0 0
  %6613 = vmatpush1.bf16.msra.mxu0 %v6533
  %6614 = vmatprep.subr.bf16.mxu0 0
  %6615 = vmatpush1.bf16.msra.mxu0 %v6534
  %6616 = vmatprep.subr.bf16.mxu0 0
  %6617 = vmatpush1.bf16.msra.mxu0 %v6535
  %6618 = vmatprep.subr.bf16.mxu0 0
  %6619 = vmatpush1.bf16.msra.mxu0 %v6536
  %6620 = vmatprep.subr.bf16.mxu0 0
  %6621 = vmatpush1.bf16.msra.mxu0 %v6537
  %6622 = vmatprep.subr.bf16.mxu0 0
  %6623 = vmatpush1.bf16.msra.mxu0 %v6538
  %6624 = vmatprep.subr.bf16.mxu0 0
  %6625 = vmatpush1.bf16.msra.mxu0 %v6539
  %6626 = vmatprep.subr.bf16.mxu0 0
  %6627 = vmatpush1.bf16.msra.mxu0 %v6540
  %6628 = vmatprep.subr.bf16.mxu0 0
  %6629 = vmatpush1.bf16.msra.mxu0 %v6541
  %6630 = vmatprep.mubr.bf16.mxu0 %v3734
  %6631 = vmatmul.mubr.bf16.gmra.mrb[0].mxu0 %v3733
  %v6632 = vpop.f32.mrb[0].mxu0
  %v6633 = vadd.f32 %v6377, %v6632
  %v6634 = vpop.f32.mrb[0].mxu0
  %v6635 = vpop.f32.mrb[0].mxu0
  %v6636 = vpop.f32.mrb[0].mxu0
  %6637 = vdwg.mxu0
  %6638 = vmatprep.subr.bf16.mxu0 0
  %6639 = vmatpush1.bf16.msra.mxu0 %v6542
  %6640 = vmatprep.subr.bf16.mxu0 0
  %6641 = vmatpush1.bf16.msra.mxu0 %v6543
  %6642 = vmatprep.subr.bf16.mxu0 0
  %6643 = vmatpush1.bf16.msra.mxu0 %v6544
  %6644 = vmatprep.subr.bf16.mxu0 0
  %6645 = vmatpush1.bf16.msra.mxu0 %v6545
  %6646 = vmatprep.subr.bf16.mxu0 0
  %6647 = vmatpush1.bf16.msra.mxu0 %v6546
  %6648 = vmatprep.subr.bf16.mxu0 0
  %6649 = vmatpush1.bf16.msra.mxu0 %v6547
  %6650 = vmatprep.subr.bf16.mxu0 0
  %6651 = vmatpush1.bf16.msra.mxu0 %v6548
  %6652 = vmatprep.subr.bf16.mxu0 0
  %6653 = vmatpush1.bf16.msra.mxu0 %v6549
  %6654 = vmatprep.subr.bf16.mxu0 0
  %6655 = vmatpush1.bf16.msra.mxu0 %v6550
  %6656 = vmatprep.subr.bf16.mxu0 0
  %6657 = vmatpush1.bf16.msra.mxu0 %v6551
  %6658 = vmatprep.subr.bf16.mxu0 0
  %6659 = vmatpush1.bf16.msra.mxu0 %v6552
  %6660 = vmatprep.subr.bf16.mxu0 0
  %6661 = vmatpush1.bf16.msra.mxu0 %v6553
  %6662 = vmatprep.subr.bf16.mxu0 0
  %6663 = vmatpush1.bf16.msra.mxu0 %v6554
  %6664 = vmatprep.subr.bf16.mxu0 0
  %6665 = vmatpush1.bf16.msra.mxu0 %v6555
  %6666 = vmatprep.subr.bf16.mxu0 0
  %6667 = vmatpush1.bf16.msra.mxu0 %v6556
  %6668 = vmatprep.subr.bf16.mxu0 0
  %6669 = vmatpush1.bf16.msra.mxu0 %v6557
  %6670 = vmatprep.mubr.bf16.mxu0 %v3736
  %6671 = vmatmul.mubr.bf16.gmra.mrb[0].mxu0 %v3735
  %v6672 = vpop.f32.mrb[0].mxu0
  %v6673 = vadd.f32 %v6633, %v6672
  %v6674 = vpop.f32.mrb[0].mxu0
  %v6675 = vpop.f32.mrb[0].mxu0
  %v6676 = vpop.f32.mrb[0].mxu0
  %6677 = vdwg.mxu0
  %6678 = vmatprep.subr.bf16.mxu0 0
  %6679 = vmatpush1.bf16.msra.mxu0 %v6558
  %6680 = vmatprep.subr.bf16.mxu0 0
  %6681 = vmatpush1.bf16.msra.mxu0 %v6559
  %6682 = vmatprep.subr.bf16.mxu0 0
  %6683 = vmatpush1.bf16.msra.mxu0 %v6560
  %6684 = vmatprep.subr.bf16.mxu0 0
  %6685 = vmatpush1.bf16.msra.mxu0 %v6561
  %6686 = vmatprep.subr.bf16.mxu0 0
  %6687 = vmatpush1.bf16.msra.mxu0 0
  %6688 = vmatprep.subr.bf16.mxu0 0
  %6689 = vmatpush1.bf16.msra.mxu0 0
  %6690 = vmatprep.subr.bf16.mxu0 0
  %6691 = vmatpush1.bf16.msra.mxu0 0
  %6692 = vmatprep.subr.bf16.mxu0 0
  %6693 = vmatpush1.bf16.msra.mxu0 0
  %6694 = vmatprep.subr.bf16.mxu0 0
  %6695 = vmatpush1.bf16.msra.mxu0 0
  %6696 = vmatprep.subr.bf16.mxu0 0
  %6697 = vmatpush1.bf16.msra.mxu0 0
  %6698 = vmatprep.subr.bf16.mxu0 0
  %6699 = vmatpush1.bf16.msra.mxu0 0
  %6700 = vmatprep.subr.bf16.mxu0 0
  %6701 = vmatpush1.bf16.msra.mxu0 0
  %6702 = vmatprep.subr.bf16.mxu0 0
  %6703 = vmatpush1.bf16.msra.mxu0 0
  %6704 = vmatprep.subr.bf16.mxu0 0
  %6705 = vmatpush1.bf16.msra.mxu0 0
  %6706 = vmatprep.subr.bf16.mxu0 0
  %6707 = vmatpush1.bf16.msra.mxu0 0
  %6708 = vmatprep.subr.bf16.mxu0 0
  %6709 = vmatpush1.bf16.msra.mxu0 0
  %6710 = vmatprep.mubr.bf16.mxu0 0
  %6711 = vmatmul.mubr.bf16.gmra.mrb[0].mxu0 %v4931
  %v6712 = vpop.f32.mrb[0].mxu0
  %v6713 = vadd.f32 %v6673, %v6712
  %v6714 = vpop.f32.mrb[0].mxu0
  %v6715 = vpop.f32.mrb[0].mxu0
  %v6716 = vpop.f32.mrb[0].mxu0
  %6717 = vdwg.mxu0
  %v6718 = vld [vmem:[%s20] sm:$0x1]
  %v6720 = vlaneseq
  %v6721 = vshrl.u32 %v6720, 7
  %v6722 = vsub.s32 0, %v6721
  %v6723 = vrot.slane %v6718, %v6722
  %v6725 = vadd.f32 %v6713, %v6723
  %v6726 = vld [vmem:[%s21] sm:$0xff]
  %v6727 = vld [vmem:[%s21 + $0x8] sm:$0xff]
  %v6728 = vld [vmem:[%s21 + $0x10] sm:$0xff]
  %v6729 = vld [vmem:[%s21 + $0x18] sm:$0xff]
  %v6730 = vld [vmem:[%s21 + $0x20] sm:$0xff]
  %v6731 = vld [vmem:[%s21 + $0x28] sm:$0xff]
  %v6732 = vld [vmem:[%s21 + $0x30] sm:$0xff]
  %v6733 = vld [vmem:[%s21 + $0x38] sm:$0xff]
  %v6734 = vld [vmem:[%s21 + $0x40] sm:$0xff]
  %v6735 = vld [vmem:[%s21 + $0x48] sm:$0xff]
  %v6736 = vld [vmem:[%s21 + $0x50] sm:$0xff]
  %v6737 = vld [vmem:[%s21 + $0x58] sm:$0xff]
  %v6738 = vld [vmem:[%s21 + $0x60] sm:$0xff]
  %v6739 = vld [vmem:[%s21 + $0x68] sm:$0xff]
  %v6740 = vld [vmem:[%s21 + $0x70] sm:$0xff]
  %v6741 = vld [vmem:[%s21 + $0x78] sm:$0xff]
  %v6742 = vld [vmem:[%s21 + $0x80] sm:$0xff]
  %v6743 = vld [vmem:[%s21 + $0x88] sm:$0xff]
  %v6744 = vld [vmem:[%s21 + $0x90] sm:$0xff]
  %v6745 = vld [vmem:[%s21 + $0x98] sm:$0xff]
  %v6746 = vld [vmem:[%s21 + $0xa0] sm:$0xff]
  %v6747 = vld [vmem:[%s21 + $0xa8] sm:$0xff]
  %v6748 = vld [vmem:[%s21 + $0xb0] sm:$0xff]
  %v6749 = vld [vmem:[%s21 + $0xb8] sm:$0xff]
  %v6751 = vsel %vm4929, %v6725, 0
  %6753 = vmatprep.subr.mxu0 %v6727
  %6754 = vmatpush1.msra.mxu0 %v6726
  %6755 = vmatprep.subr.mxu0 %v6730
  %6756 = vmatpush1.msra.mxu0 %v6729
  %6757 = vmatprep.subr.mxu0 %v6733
  %6758 = vmatpush1.msra.mxu0 %v6732
  %6759 = vmatprep.subr.mxu0 %v6736
  %6760 = vmatpush1.msra.mxu0 %v6735
  %6761 = vmatprep.subr.mxu0 %v6739
  %6762 = vmatpush1.msra.mxu0 %v6738
  %6763 = vmatprep.subr.mxu0 %v6742
  %6764 = vmatpush1.msra.mxu0 %v6741
  %6765 = vmatprep.subr.mxu0 %v6745
  %6766 = vmatpush1.msra.mxu0 %v6744
  %6767 = vmatprep.subr.mxu0 %v6748
  %6768 = vmatpush1.msra.mxu0 %v6747
  %6769 = vmatprep.subr.mxu0 0.0
  %6770 = vmatpush1.msra.mxu0 0.0
  %6771 = vmatprep.subr.mxu0 0.0
  %6772 = vmatpush1.msra.mxu0 0.0
  %6773 = vmatprep.subr.mxu0 0.0
  %6774 = vmatpush1.msra.mxu0 0.0
  %6775 = vmatprep.subr.mxu0 0.0
  %6776 = vmatpush1.msra.mxu0 0.0
  %6777 = vmatprep.subr.mxu0 0.0
  %6778 = vmatpush1.msra.mxu0 0.0
  %6779 = vmatprep.subr.mxu0 0.0
  %6780 = vmatpush1.msra.mxu0 0.0
  %6781 = vmatprep.subr.mxu0 0.0
  %6782 = vmatpush1.msra.mxu0 0.0
  %6783 = vmatprep.subr.mxu0 0.0
  %6784 = vmatpush1.msra.mxu0 0.0
  %6785 = vmatprep.subr.mxu0 0.0
  %6786 = vmatpush1.msra.mxu0 0.0
  %6787 = vmatprep.subr.mxu0 0.0
  %6788 = vmatpush1.msra.mxu0 0.0
  %6789 = vmatprep.subr.mxu0 0.0
  %6790 = vmatpush1.msra.mxu0 0.0
  %6791 = vmatprep.subr.mxu0 0.0
  %6792 = vmatpush1.msra.mxu0 0.0
  %6793 = vmatprep.subr.mxu0 0.0
  %6794 = vmatpush1.msra.mxu0 0.0
  %6795 = vmatprep.subr.mxu0 0.0
  %6796 = vmatpush1.msra.mxu0 0.0
  %6797 = vmatprep.subr.mxu0 0.0
  %6798 = vmatpush1.msra.mxu0 0.0
  %6799 = vmatprep.subr.mxu0 0.0
  %6800 = vmatpush1.msra.mxu0 0.0
  %6801 = vmatprep.subr.mxu0 0.0
  %6802 = vmatpush1.msra.mxu0 0.0
  %6803 = vmatprep.subr.mxu0 0.0
  %6804 = vmatpush1.msra.mxu0 0.0
  %6805 = vmatprep.subr.mxu0 0.0
  %6806 = vmatpush1.msra.mxu0 0.0
  %6807 = vmatprep.subr.mxu0 0.0
  %6808 = vmatpush1.msra.mxu0 0.0
  %6809 = vmatprep.subr.mxu0 0.0
  %6810 = vmatpush1.msra.mxu0 0.0
  %6811 = vmatprep.subr.mxu0 0.0
  %6812 = vmatpush1.msra.mxu0 0.0
  %6813 = vmatprep.subr.mxu0 0.0
  %6814 = vmatpush1.msra.mxu0 0.0
  %6815 = vmatprep.subr.mxu0 0.0
  %6816 = vmatpush1.msra.mxu0 0.0
  %6817 = vmatprep.mubr.f32.mxu0 0.0
  %6818 = vmatmul.mubr.f32.gmra.mrb[0].mxu0 %v6751
  %v6819 = vpop.f32.mrb[0].mxu0
  %v6820 = vadd.f32 0.0, %v6819
  %v6821 = vpop.f32.mrb[0].mxu0
  %v6822 = vadd.f32 0.0, %v6821
  %6823 = vdwg.mxu0
  %6824 = vmatprep.subr.mxu0 0.0
  %6825 = vmatpush1.msra.mxu0 %v6728
  %6826 = vmatprep.subr.mxu0 0.0
  %6827 = vmatpush1.msra.mxu0 %v6731
  %6828 = vmatprep.subr.mxu0 0.0
  %6829 = vmatpush1.msra.mxu0 %v6734
  %6830 = vmatprep.subr.mxu0 0.0
  %6831 = vmatpush1.msra.mxu0 %v6737
  %6832 = vmatprep.subr.mxu0 0.0
  %6833 = vmatpush1.msra.mxu0 %v6740
  %6834 = vmatprep.subr.mxu0 0.0
  %6835 = vmatpush1.msra.mxu0 %v6743
  %6836 = vmatprep.subr.mxu0 0.0
  %6837 = vmatpush1.msra.mxu0 %v6746
  %6838 = vmatprep.subr.mxu0 0.0
  %6839 = vmatpush1.msra.mxu0 %v6749
  %6840 = vmatprep.subr.mxu0 0.0
  %6841 = vmatpush1.msra.mxu0 0.0
  %6842 = vmatprep.subr.mxu0 0.0
  %6843 = vmatpush1.msra.mxu0 0.0
  %6844 = vmatprep.subr.mxu0 0.0
  %6845 = vmatpush1.msra.mxu0 0.0
  %6846 = vmatprep.subr.mxu0 0.0
  %6847 = vmatpush1.msra.mxu0 0.0
  %6848 = vmatprep.subr.mxu0 0.0
  %6849 = vmatpush1.msra.mxu0 0.0
  %6850 = vmatprep.subr.mxu0 0.0
  %6851 = vmatpush1.msra.mxu0 0.0
  %6852 = vmatprep.subr.mxu0 0.0
  %6853 = vmatpush1.msra.mxu0 0.0
  %6854 = vmatprep.subr.mxu0 0.0
  %6855 = vmatpush1.msra.mxu0 0.0
  %6856 = vmatprep.subr.mxu0 0.0
  %6857 = vmatpush1.msra.mxu0 0.0
  %6858 = vmatprep.subr.mxu0 0.0
  %6859 = vmatpush1.msra.mxu0 0.0
  %6860 = vmatprep.subr.mxu0 0.0
  %6861 = vmatpush1.msra.mxu0 0.0
  %6862 = vmatprep.subr.mxu0 0.0
  %6863 = vmatpush1.msra.mxu0 0.0
  %6864 = vmatprep.subr.mxu0 0.0
  %6865 = vmatpush1.msra.mxu0 0.0
  %6866 = vmatprep.subr.mxu0 0.0
  %6867 = vmatpush1.msra.mxu0 0.0
  %6868 = vmatprep.subr.mxu0 0.0
  %6869 = vmatpush1.msra.mxu0 0.0
  %6870 = vmatprep.subr.mxu0 0.0
  %6871 = vmatpush1.msra.mxu0 0.0
  %6872 = vmatprep.subr.mxu0 0.0
  %6873 = vmatpush1.msra.mxu0 0.0
  %6874 = vmatprep.subr.mxu0 0.0
  %6875 = vmatpush1.msra.mxu0 0.0
  %6876 = vmatprep.subr.mxu0 0.0
  %6877 = vmatpush1.msra.mxu0 0.0
  %6878 = vmatprep.subr.mxu0 0.0
  %6879 = vmatpush1.msra.mxu0 0.0
  %6880 = vmatprep.subr.mxu0 0.0
  %6881 = vmatpush1.msra.mxu0 0.0
  %6882 = vmatprep.subr.mxu0 0.0
  %6883 = vmatpush1.msra.mxu0 0.0
  %6884 = vmatprep.subr.mxu0 0.0
  %6885 = vmatpush1.msra.mxu0 0.0
  %6886 = vmatprep.subr.mxu0 0.0
  %6887 = vmatpush1.msra.mxu0 0.0
  %6888 = vmatprep.mubr.f32.mxu0 0.0
  %6889 = vmatmul.mubr.f32.gmra.mrb[0].mxu0 %v6751
  %v6890 = vpop.f32.mrb[0].mxu0
  %v6891 = vadd.f32 0.0, %v6890
  %v6892 = vpop.f32.mrb[0].mxu0
  %6893 = vdwg.mxu0
  %v6894 = vpack.c.bf16 %v79, %v79
  %v6895 = vld [vmem:[%s7] sm:$0xff]
  %v6896 = vld [vmem:[%s7 + $0x8] sm:$0xff]
  %v6897 = vld [vmem:[%s7 + $0x10] sm:$0xff]
  %v6898 = vld [vmem:[%s7 + $0x18] sm:$0xff]
  %v6899 = vld [vmem:[%s7 + $0x20] sm:$0xff]
  %v6900 = vld [vmem:[%s7 + $0x28] sm:$0xff]
  %v6901 = vld [vmem:[%s7 + $0x30] sm:$0xff]
  %v6902 = vld [vmem:[%s7 + $0x38] sm:$0xff]
  %v6903 = vld [vmem:[%s7 + $0x40] sm:$0xff]
  %v6904 = vld [vmem:[%s7 + $0x48] sm:$0xff]
  %v6905 = vld [vmem:[%s7 + $0x50] sm:$0xff]
  %v6906 = vld [vmem:[%s7 + $0x58] sm:$0xff]
  %v6907 = vld [vmem:[%s7 + $0x60] sm:$0x33]
  %v6908 = vld [vmem:[%s7 + $0x68] sm:$0x33]
  %v6909 = vld [vmem:[%s7 + $0x70] sm:$0x33]
  %v6910 = vld [vmem:[%s8] sm:$0x3f]
  %v6912 = vlaneseq
  %v6913 = vshrl.u32 %v6912, 7
  %v6914 = vsub.s32 0, %v6913
  %v6915 = vrot.slane %v6910, %v6914
  %v6916 = vlaneseq
  %v6917 = vshrl.u32 %v6916, 7
  %v6918 = vsub.s32 1, %v6917
  %v6919 = vrot.slane %v6910, %v6918
  %v6920 = vlaneseq
  %v6921 = vshrl.u32 %v6920, 7
  %v6922 = vsub.s32 2, %v6921
  %v6923 = vrot.slane %v6910, %v6922
  %v6924 = vlaneseq
  %v6925 = vshrl.u32 %v6924, 7
  %v6926 = vsub.s32 3, %v6925
  %v6927 = vrot.slane %v6910, %v6926
  %v6928 = vlaneseq
  %v6929 = vshrl.u32 %v6928, 7
  %v6930 = vsub.s32 4, %v6929
  %v6931 = vrot.slane %v6910, %v6930
  %v6932 = vlaneseq
  %v6933 = vshrl.u32 %v6932, 7
  %v6934 = vsub.s32 5, %v6933
  %v6935 = vrot.slane %v6910, %v6934
  %v6957 = vunpack.c.l.b16 %v6895
  %v6958 = vunpack.c.h.b16 %v6895
  %v6959 = vunpack.c.l.b16 %v6896
  %v6960 = vunpack.c.h.b16 %v6896
  %v6961 = vunpack.c.l.b16 %v6897
  %v6962 = vunpack.c.h.b16 %v6897
  %v6963 = vunpack.c.l.b16 %v6898
  %v6964 = vunpack.c.h.b16 %v6898
  %v6965 = vunpack.c.l.b16 %v6899
  %v6966 = vunpack.c.h.b16 %v6899
  %v6967 = vunpack.c.l.b16 %v6900
  %v6968 = vunpack.c.h.b16 %v6900
  %v6969 = vunpack.c.l.b16 %v6901
  %v6970 = vunpack.c.h.b16 %v6901
  %v6971 = vunpack.c.l.b16 %v6902
  %v6972 = vunpack.c.h.b16 %v6902
  %v6973 = vunpack.c.l.b16 %v6903
  %v6974 = vunpack.c.h.b16 %v6903
  %v6975 = vunpack.c.l.b16 %v6904
  %v6976 = vunpack.c.h.b16 %v6904
  %v6977 = vunpack.c.l.b16 %v6905
  %v6978 = vunpack.c.h.b16 %v6905
  %v6979 = vunpack.c.l.b16 %v6906
  %v6980 = vunpack.c.h.b16 %v6906
  %v6981 = vunpack.c.l.b16 %v6907
  %v6982 = vunpack.c.h.b16 %v6907
  %v6983 = vunpack.c.l.b16 %v6908
  %v6984 = vunpack.c.h.b16 %v6908
  %v6985 = vunpack.c.l.b16 %v6909
  %v6986 = vunpack.c.h.b16 %v6909
  %v6987 = vpack.c.b16 %v6963, %v6957
  %v6988 = vpack.c.b16 %v6964, %v6958
  %v6989 = vpack.c.b16 %v6965, %v6959
  %v6990 = vpack.c.b16 %v6966, %v6960
  %v6991 = vpack.c.b16 %v6967, %v6961
  %v6992 = vpack.c.b16 %v6968, %v6962
  %v6993 = vpack.c.b16 %v6975, %v6969
  %v6994 = vpack.c.b16 %v6976, %v6970
  %v6995 = vpack.c.b16 %v6977, %v6971
  %v6996 = vpack.c.b16 %v6978, %v6972
  %v6997 = vpack.c.b16 %v6979, %v6973
  %v6998 = vpack.c.b16 %v6980, %v6974
  %v6999 = vpack.c.b16 %v6981, %v6981
  %v7000 = vpack.c.b16 %v6982, %v6982
  %v7001 = vpack.c.b16 %v6983, %v6983
  %v7002 = vpack.c.b16 %v6984, %v6984
  %v7003 = vpack.c.b16 %v6985, %v6985
  %v7004 = vpack.c.b16 %v6986, %v6986
  %vm7017 = vcmask 293888
  %v7019 = vsel %vm7017, %v6894, 0
  %vm7021 = vcmask 1041408
  %v7023 = vsel %vm7021, %v6999, 0
  %v7026 = vsel %vm7021, %v7000, 0
  %v7029 = vsel %vm7021, %v7001, 0
  %v7032 = vsel %vm7021, %v7002, 0
  %v7035 = vsel %vm7021, %v7003, 0
  %v7038 = vsel %vm7021, %v7004, 0
  %7040 = vmatprep.subr.bf16.mxu0 %v6988
  %7041 = vmatpush1.bf16.msra.mxu0 %v6987
  %7042 = vmatprep.subr.bf16.mxu0 %v6994
  %7043 = vmatpush1.bf16.msra.mxu0 %v6993
  %7044 = vmatprep.subr.bf16.mxu0 %v7026
  %7045 = vmatpush1.bf16.msra.mxu0 %v7023
  %7046 = vmatprep.subr.bf16.mxu0 0
  %7047 = vmatpush1.bf16.msra.mxu0 0
  %7048 = vmatprep.subr.bf16.mxu0 0
  %7049 = vmatpush1.bf16.msra.mxu0 0
  %7050 = vmatprep.subr.bf16.mxu0 0
  %7051 = vmatpush1.bf16.msra.mxu0 0
  %7052 = vmatprep.subr.bf16.mxu0 0
  %7053 = vmatpush1.bf16.msra.mxu0 0
  %7054 = vmatprep.subr.bf16.mxu0 0
  %7055 = vmatpush1.bf16.msra.mxu0 0
  %7056 = vmatprep.subr.bf16.mxu0 0
  %7057 = vmatpush1.bf16.msra.mxu0 0
  %7058 = vmatprep.subr.bf16.mxu0 0
  %7059 = vmatpush1.bf16.msra.mxu0 0
  %7060 = vmatprep.subr.bf16.mxu0 0
  %7061 = vmatpush1.bf16.msra.mxu0 0
  %7062 = vmatprep.subr.bf16.mxu0 0
  %7063 = vmatpush1.bf16.msra.mxu0 0
  %7064 = vmatprep.subr.bf16.mxu0 0
  %7065 = vmatpush1.bf16.msra.mxu0 0
  %7066 = vmatprep.subr.bf16.mxu0 0
  %7067 = vmatpush1.bf16.msra.mxu0 0
  %7068 = vmatprep.subr.bf16.mxu0 0
  %7069 = vmatpush1.bf16.msra.mxu0 0
  %7070 = vmatprep.subr.bf16.mxu0 0
  %7071 = vmatpush1.bf16.msra.mxu0 0
  %7072 = vmatprep.mubr.bf16.mxu0 0
  %7073 = vmatmul.mubr.bf16.gmra.mrb[0].mxu0 %v7019
  %v7074 = vpop.f32.mrb[0].mxu0
  %v7075 = vadd.f32 %v6915, %v7074
  %v7076 = vpop.f32.mrb[0].mxu0
  %v7077 = vadd.f32 %v6919, %v7076
  %v7078 = vpop.f32.mrb[0].mxu0
  %v7079 = vpop.f32.mrb[0].mxu0
  %7080 = vdwg.mxu0
  %7081 = vmatprep.subr.bf16.mxu0 %v6990
  %7082 = vmatpush1.bf16.msra.mxu0 %v6989
  %7083 = vmatprep.subr.bf16.mxu0 %v6996
  %7084 = vmatpush1.bf16.msra.mxu0 %v6995
  %7085 = vmatprep.subr.bf16.mxu0 %v7032
  %7086 = vmatpush1.bf16.msra.mxu0 %v7029
  %7087 = vmatprep.subr.bf16.mxu0 0
  %7088 = vmatpush1.bf16.msra.mxu0 0
  %7089 = vmatprep.subr.bf16.mxu0 0
  %7090 = vmatpush1.bf16.msra.mxu0 0
  %7091 = vmatprep.subr.bf16.mxu0 0
  %7092 = vmatpush1.bf16.msra.mxu0 0
  %7093 = vmatprep.subr.bf16.mxu0 0
  %7094 = vmatpush1.bf16.msra.mxu0 0
  %7095 = vmatprep.subr.bf16.mxu0 0
  %7096 = vmatpush1.bf16.msra.mxu0 0
  %7097 = vmatprep.subr.bf16.mxu0 0
  %7098 = vmatpush1.bf16.msra.mxu0 0
  %7099 = vmatprep.subr.bf16.mxu0 0
  %7100 = vmatpush1.bf16.msra.mxu0 0
  %7101 = vmatprep.subr.bf16.mxu0 0
  %7102 = vmatpush1.bf16.msra.mxu0 0
  %7103 = vmatprep.subr.bf16.mxu0 0
  %7104 = vmatpush1.bf16.msra.mxu0 0
  %7105 = vmatprep.subr.bf16.mxu0 0
  %7106 = vmatpush1.bf16.msra.mxu0 0
  %7107 = vmatprep.subr.bf16.mxu0 0
  %7108 = vmatpush1.bf16.msra.mxu0 0
  %7109 = vmatprep.subr.bf16.mxu0 0
  %7110 = vmatpush1.bf16.msra.mxu0 0
  %7111 = vmatprep.subr.bf16.mxu0 0
  %7112 = vmatpush1.bf16.msra.mxu0 0
  %7113 = vmatprep.mubr.bf16.mxu0 0
  %7114 = vmatmul.mubr.bf16.gmra.mrb[0].mxu0 %v7019
  %v7115 = vpop.f32.mrb[0].mxu0
  %v7116 = vadd.f32 %v6923, %v7115
  %v7117 = vpop.f32.mrb[0].mxu0
  %v7118 = vadd.f32 %v6927, %v7117
  %v7119 = vpop.f32.mrb[0].mxu0
  %v7120 = vpop.f32.mrb[0].mxu0
  %7121 = vdwg.mxu0
  %7122 = vmatprep.subr.bf16.mxu0 %v6992
  %7123 = vmatpush1.bf16.msra.mxu0 %v6991
  %7124 = vmatprep.subr.bf16.mxu0 %v6998
  %7125 = vmatpush1.bf16.msra.mxu0 %v6997
  %7126 = vmatprep.subr.bf16.mxu0 %v7038
  %7127 = vmatpush1.bf16.msra.mxu0 %v7035
  %7128 = vmatprep.subr.bf16.mxu0 0
  %7129 = vmatpush1.bf16.msra.mxu0 0
  %7130 = vmatprep.subr.bf16.mxu0 0
  %7131 = vmatpush1.bf16.msra.mxu0 0
  %7132 = vmatprep.subr.bf16.mxu0 0
  %7133 = vmatpush1.bf16.msra.mxu0 0
  %7134 = vmatprep.subr.bf16.mxu0 0
  %7135 = vmatpush1.bf16.msra.mxu0 0
  %7136 = vmatprep.subr.bf16.mxu0 0
  %7137 = vmatpush1.bf16.msra.mxu0 0
  %7138 = vmatprep.subr.bf16.mxu0 0
  %7139 = vmatpush1.bf16.msra.mxu0 0
  %7140 = vmatprep.subr.bf16.mxu0 0
  %7141 = vmatpush1.bf16.msra.mxu0 0
  %7142 = vmatprep.subr.bf16.mxu0 0
  %7143 = vmatpush1.bf16.msra.mxu0 0
  %7144 = vmatprep.subr.bf16.mxu0 0
  %7145 = vmatpush1.bf16.msra.mxu0 0
  %7146 = vmatprep.subr.bf16.mxu0 0
  %7147 = vmatpush1.bf16.msra.mxu0 0
  %7148 = vmatprep.subr.bf16.mxu0 0
  %7149 = vmatpush1.bf16.msra.mxu0 0
  %7150 = vmatprep.subr.bf16.mxu0 0
  %7151 = vmatpush1.bf16.msra.mxu0 0
  %7152 = vmatprep.subr.bf16.mxu0 0
  %7153 = vmatpush1.bf16.msra.mxu0 0
  %7154 = vmatprep.mubr.bf16.mxu0 0
  %7155 = vmatmul.mubr.bf16.gmra.mrb[0].mxu0 %v7019
  %v7156 = vpop.f32.mrb[0].mxu0
  %v7157 = vadd.f32 %v6931, %v7156
  %v7158 = vpop.f32.mrb[0].mxu0
  %v7159 = vadd.f32 %v6935, %v7158
  %v7160 = vpop.f32.mrb[0].mxu0
  %v7161 = vpop.f32.mrb[0].mxu0
  %7162 = vdwg.mxu0
  %v7163 = vmax.f32 %v7075, 0.0
  %v7164 = vmax.f32 %v7077, 0.0
  %v7165 = vmax.f32 %v7116, 0.0
  %v7166 = vmax.f32 %v7118, 0.0
  %v7167 = vmax.f32 %v7157, 0.0
  %v7168 = vmax.f32 %v7159, 0.0
  %v7169 = vpack.c.bf16 %v7163, %v7163
  %v7170 = vpack.c.bf16 %v7164, %v7164
  %v7171 = vpack.c.bf16 %v7165, %v7165
  %v7172 = vpack.c.bf16 %v7166, %v7166
  %v7173 = vpack.c.bf16 %v7167, %v7167
  %v7174 = vpack.c.bf16 %v7168, %v7168
  %v7175 = vld [vmem:[%s9] sm:$0xff]
  %v7176 = vld [vmem:[%s9 + $0x8] sm:$0xf]
  %v7177 = vld [vmem:[%s9 + $0xc] sm:$0xff]
  %v7178 = vld [vmem:[%s9 + $0x14] sm:$0xf]
  %v7179 = vld [vmem:[%s9 + $0x18] sm:$0xff]
  %v7180 = vld [vmem:[%s9 + $0x20] sm:$0xf]
  %v7181 = vld [vmem:[%s9 + $0x24] sm:$0xff]
  %v7182 = vld [vmem:[%s9 + $0x2c] sm:$0xf]
  %v7183 = vld [vmem:[%s9 + $0x30] sm:$0xff]
  %v7184 = vld [vmem:[%s9 + $0x38] sm:$0xf]
  %v7185 = vld [vmem:[%s9 + $0x3c] sm:$0xff]
  %v7186 = vld [vmem:[%s9 + $0x44] sm:$0xf]
  %v7187 = vld [vmem:[%s9 + $0x48] sm:$0xff]
  %v7188 = vld [vmem:[%s9 + $0x50] sm:$0xf]
  %v7189 = vld [vmem:[%s9 + $0x54] sm:$0xff]
  %v7190 = vld [vmem:[%s9 + $0x5c] sm:$0xf]
  %v7191 = vld [vmem:[%s9 + $0x60] sm:$0xff]
  %v7192 = vld [vmem:[%s9 + $0x68] sm:$0xf]
  %v7193 = vld [vmem:[%s9 + $0x6c] sm:$0xff]
  %v7194 = vld [vmem:[%s9 + $0x74] sm:$0xf]
  %v7195 = vld [vmem:[%s9 + $0x78] sm:$0xff]
  %v7196 = vld [vmem:[%s9 + $0x80] sm:$0xf]
  %v7197 = vld [vmem:[%s9 + $0x84] sm:$0xff]
  %v7198 = vld [vmem:[%s9 + $0x8c] sm:$0xf]
  %v7199 = vld [vmem:[%s9 + $0x90] sm:$0xff]
  %v7200 = vld [vmem:[%s9 + $0x98] sm:$0xf]
  %v7201 = vld [vmem:[%s9 + $0x9c] sm:$0xff]
  %v7202 = vld [vmem:[%s9 + $0xa4] sm:$0xf]
  %v7203 = vld [vmem:[%s9 + $0xa8] sm:$0xff]
  %v7204 = vld [vmem:[%s9 + $0xb0] sm:$0xf]
  %v7205 = vld [vmem:[%s9 + $0xb4] sm:$0xff]
  %v7206 = vld [vmem:[%s9 + $0xbc] sm:$0xf]
  %v7207 = vld [vmem:[%s9 + $0xc0] sm:$0xff]
  %v7208 = vld [vmem:[%s9 + $0xc8] sm:$0xf]
  %v7209 = vld [vmem:[%s9 + $0xcc] sm:$0xff]
  %v7210 = vld [vmem:[%s9 + $0xd4] sm:$0xf]
  %v7211 = vld [vmem:[%s9 + $0xd8] sm:$0xff]
  %v7212 = vld [vmem:[%s9 + $0xe0] sm:$0xf]
  %v7213 = vld [vmem:[%s9 + $0xe4] sm:$0xff]
  %v7214 = vld [vmem:[%s9 + $0xec] sm:$0xf]
  %v7215 = vld [vmem:[%s9 + $0xf0] sm:$0xff]
  %v7216 = vld [vmem:[%s9 + $0xf8] sm:$0xf]
  %v7217 = vld [vmem:[%s9 + $0xfc] sm:$0xff]
  %v7218 = vld [vmem:[%s9 + $0x104] sm:$0xf]
  %v7219 = vld [vmem:[%s9 + $0x108] sm:$0xff]
  %v7220 = vld [vmem:[%s9 + $0x110] sm:$0xf]
  %v7221 = vld [vmem:[%s9 + $0x114] sm:$0xff]
  %v7222 = vld [vmem:[%s9 + $0x11c] sm:$0xf]
  %v7223 = vld [vmem:[%s9 + $0x120] sm:$0xff]
  %v7224 = vld [vmem:[%s9 + $0x128] sm:$0xf]
  %v7225 = vld [vmem:[%s9 + $0x12c] sm:$0xff]
  %v7226 = vld [vmem:[%s9 + $0x134] sm:$0xf]
  %v7227 = vld [vmem:[%s9 + $0x138] sm:$0xff]
  %v7228 = vld [vmem:[%s9 + $0x140] sm:$0xf]
  %v7229 = vld [vmem:[%s9 + $0x144] sm:$0xff]
  %v7230 = vld [vmem:[%s9 + $0x14c] sm:$0xf]
  %v7231 = vld [vmem:[%s9 + $0x150] sm:$0xff]
  %v7232 = vld [vmem:[%s9 + $0x158] sm:$0xf]
  %v7233 = vld [vmem:[%s9 + $0x15c] sm:$0xff]
  %v7234 = vld [vmem:[%s9 + $0x164] sm:$0xf]
  %v7235 = vld [vmem:[%s9 + $0x168] sm:$0xff]
  %v7236 = vld [vmem:[%s9 + $0x170] sm:$0xf]
  %v7237 = vld [vmem:[%s9 + $0x174] sm:$0xff]
  %v7238 = vld [vmem:[%s9 + $0x17c] sm:$0xf]
  %v7239 = vld [vmem:[%s9 + $0x180] sm:$0xff]
  %v7240 = vld [vmem:[%s9 + $0x188] sm:$0xf]
  %v7241 = vld [vmem:[%s9 + $0x18c] sm:$0xff]
  %v7242 = vld [vmem:[%s9 + $0x194] sm:$0xf]
  %v7243 = vld [vmem:[%s9 + $0x198] sm:$0xff]
  %v7244 = vld [vmem:[%s9 + $0x1a0] sm:$0xf]
  %v7245 = vld [vmem:[%s9 + $0x1a4] sm:$0xff]
  %v7246 = vld [vmem:[%s9 + $0x1ac] sm:$0xf]
  %v7247 = vld [vmem:[%s9 + $0x1b0] sm:$0xff]
  %v7248 = vld [vmem:[%s9 + $0x1b8] sm:$0xf]
  %v7249 = vld [vmem:[%s9 + $0x1bc] sm:$0xff]
  %v7250 = vld [vmem:[%s9 + $0x1c4] sm:$0xf]
  %v7251 = vld [vmem:[%s9 + $0x1c8] sm:$0xff]
  %v7252 = vld [vmem:[%s9 + $0x1d0] sm:$0xf]
  %v7253 = vld [vmem:[%s9 + $0x1d4] sm:$0xff]
  %v7254 = vld [vmem:[%s9 + $0x1dc] sm:$0xf]
  %v7255 = vld [vmem:[%s9 + $0x1e0] sm:$0xff]
  %v7256 = vld [vmem:[%s9 + $0x1e8] sm:$0xf]
  %v7257 = vld [vmem:[%s9 + $0x1ec] sm:$0xff]
  %v7258 = vld [vmem:[%s9 + $0x1f4] sm:$0xf]
  %v7259 = vld [vmem:[%s9 + $0x1f8] sm:$0xff]
  %v7260 = vld [vmem:[%s9 + $0x200] sm:$0xf]
  %v7261 = vld [vmem:[%s9 + $0x204] sm:$0xff]
  %v7262 = vld [vmem:[%s9 + $0x20c] sm:$0xf]
  %v7263 = vld [vmem:[%s9 + $0x210] sm:$0xff]
  %v7264 = vld [vmem:[%s9 + $0x218] sm:$0xf]
  %v7265 = vld [vmem:[%s9 + $0x21c] sm:$0xff]
  %v7266 = vld [vmem:[%s9 + $0x224] sm:$0xf]
  %v7267 = vld [vmem:[%s9 + $0x228] sm:$0xff]
  %v7268 = vld [vmem:[%s9 + $0x230] sm:$0xf]
  %v7269 = vld [vmem:[%s9 + $0x234] sm:$0xff]
  %v7270 = vld [vmem:[%s9 + $0x23c] sm:$0xf]
  %v7271 = vld [vmem:[%s9 + $0x240] sm:$0xff]
  %v7272 = vld [vmem:[%s9 + $0x248] sm:$0xf]
  %v7273 = vld [vmem:[%s9 + $0x24c] sm:$0xff]
  %v7274 = vld [vmem:[%s9 + $0x254] sm:$0xf]
  %v7275 = vld [vmem:[%s9 + $0x258] sm:$0xff]
  %v7276 = vld [vmem:[%s9 + $0x260] sm:$0xf]
  %v7277 = vld [vmem:[%s9 + $0x264] sm:$0xff]
  %v7278 = vld [vmem:[%s9 + $0x26c] sm:$0xf]
  %v7279 = vld [vmem:[%s9 + $0x270] sm:$0xff]
  %v7280 = vld [vmem:[%s9 + $0x278] sm:$0xf]
  %v7281 = vld [vmem:[%s9 + $0x27c] sm:$0xff]
  %v7282 = vld [vmem:[%s9 + $0x284] sm:$0xf]
  %v7283 = vld [vmem:[%s9 + $0x288] sm:$0xff]
  %v7284 = vld [vmem:[%s9 + $0x290] sm:$0xf]
  %v7285 = vld [vmem:[%s9 + $0x294] sm:$0xff]
  %v7286 = vld [vmem:[%s9 + $0x29c] sm:$0xf]
  %v7287 = vld [vmem:[%s9 + $0x2a0] sm:$0xff]
  %v7288 = vld [vmem:[%s9 + $0x2a8] sm:$0xf]
  %v7289 = vld [vmem:[%s9 + $0x2ac] sm:$0xff]
  %v7290 = vld [vmem:[%s9 + $0x2b4] sm:$0xf]
  %v7291 = vld [vmem:[%s9 + $0x2b8] sm:$0xff]
  %v7292 = vld [vmem:[%s9 + $0x2c0] sm:$0xf]
  %v7293 = vld [vmem:[%s9 + $0x2c4] sm:$0xff]
  %v7294 = vld [vmem:[%s9 + $0x2cc] sm:$0xf]
  %v7295 = vld [vmem:[%s9 + $0x2d0] sm:$0xff]
  %v7296 = vld [vmem:[%s9 + $0x2d8] sm:$0xf]
  %v7297 = vld [vmem:[%s9 + $0x2dc] sm:$0xff]
  %v7298 = vld [vmem:[%s9 + $0x2e4] sm:$0xf]
  %v7299 = vld [vmem:[%s9 + $0x2e8] sm:$0xff]
  %v7300 = vld [vmem:[%s9 + $0x2f0] sm:$0xf]
  %v7301 = vld [vmem:[%s9 + $0x2f4] sm:$0xff]
  %v7302 = vld [vmem:[%s9 + $0x2fc] sm:$0xf]
  %v7303 = vld [vmem:[%s9 + $0x300] sm:$0xff]
  %v7304 = vld [vmem:[%s9 + $0x308] sm:$0xf]
  %v7305 = vld [vmem:[%s9 + $0x30c] sm:$0xff]
  %v7306 = vld [vmem:[%s9 + $0x314] sm:$0xf]
  %v7307 = vld [vmem:[%s9 + $0x318] sm:$0xff]
  %v7308 = vld [vmem:[%s9 + $0x320] sm:$0xf]
  %v7309 = vld [vmem:[%s9 + $0x324] sm:$0xff]
  %v7310 = vld [vmem:[%s9 + $0x32c] sm:$0xf]
  %v7311 = vld [vmem:[%s9 + $0x330] sm:$0xff]
  %v7312 = vld [vmem:[%s9 + $0x338] sm:$0xf]
  %v7313 = vld [vmem:[%s9 + $0x33c] sm:$0xff]
  %v7314 = vld [vmem:[%s9 + $0x344] sm:$0xf]
  %v7315 = vld [vmem:[%s9 + $0x348] sm:$0xff]
  %v7316 = vld [vmem:[%s9 + $0x350] sm:$0xf]
  %v7317 = vld [vmem:[%s9 + $0x354] sm:$0xff]
  %v7318 = vld [vmem:[%s9 + $0x35c] sm:$0xf]
  %v7319 = vld [vmem:[%s9 + $0x360] sm:$0xff]
  %v7320 = vld [vmem:[%s9 + $0x368] sm:$0xf]
  %v7321 = vld [vmem:[%s9 + $0x36c] sm:$0xff]
  %v7322 = vld [vmem:[%s9 + $0x374] sm:$0xf]
  %v7323 = vld [vmem:[%s9 + $0x378] sm:$0xff]
  %v7324 = vld [vmem:[%s9 + $0x380] sm:$0xf]
  %v7325 = vld [vmem:[%s9 + $0x384] sm:$0xff]
  %v7326 = vld [vmem:[%s9 + $0x38c] sm:$0xf]
  %v7327 = vld [vmem:[%s9 + $0x390] sm:$0xff]
  %v7328 = vld [vmem:[%s9 + $0x398] sm:$0xf]
  %v7329 = vld [vmem:[%s9 + $0x39c] sm:$0xff]
  %v7330 = vld [vmem:[%s9 + $0x3a4] sm:$0xf]
  %v7331 = vld [vmem:[%s9 + $0x3a8] sm:$0xff]
  %v7332 = vld [vmem:[%s9 + $0x3b0] sm:$0xf]
  %v7333 = vld [vmem:[%s9 + $0x3b4] sm:$0xff]
  %v7334 = vld [vmem:[%s9 + $0x3bc] sm:$0xf]
  %v7335 = vld [vmem:[%s9 + $0x3c0] sm:$0xff]
  %v7336 = vld [vmem:[%s9 + $0x3c8] sm:$0xf]
  %v7337 = vld [vmem:[%s9 + $0x3cc] sm:$0xff]
  %v7338 = vld [vmem:[%s9 + $0x3d4] sm:$0xf]
  %v7339 = vld [vmem:[%s9 + $0x3d8] sm:$0xff]
  %v7340 = vld [vmem:[%s9 + $0x3e0] sm:$0xf]
  %v7341 = vld [vmem:[%s9 + $0x3e4] sm:$0xff]
  %v7342 = vld [vmem:[%s9 + $0x3ec] sm:$0xf]
  %v7343 = vld [vmem:[%s9 + $0x3f0] sm:$0xff]
  %v7344 = vld [vmem:[%s9 + $0x3f8] sm:$0xf]
  %v7345 = vld [vmem:[%s9 + $0x3fc] sm:$0xff]
  %v7346 = vld [vmem:[%s9 + $0x404] sm:$0xf]
  %v7347 = vld [vmem:[%s9 + $0x408] sm:$0xff]
  %v7348 = vld [vmem:[%s9 + $0x410] sm:$0xf]
  %v7349 = vld [vmem:[%s9 + $0x414] sm:$0xff]
  %v7350 = vld [vmem:[%s9 + $0x41c] sm:$0xf]
  %v7351 = vld [vmem:[%s9 + $0x420] sm:$0xff]
  %v7352 = vld [vmem:[%s9 + $0x428] sm:$0xf]
  %v7353 = vld [vmem:[%s9 + $0x42c] sm:$0xff]
  %v7354 = vld [vmem:[%s9 + $0x434] sm:$0xf]
  %v7355 = vld [vmem:[%s9 + $0x438] sm:$0xff]
  %v7356 = vld [vmem:[%s9 + $0x440] sm:$0xf]
  %v7357 = vld [vmem:[%s9 + $0x444] sm:$0xff]
  %v7358 = vld [vmem:[%s9 + $0x44c] sm:$0xf]
  %v7359 = vld [vmem:[%s9 + $0x450] sm:$0xff]
  %v7360 = vld [vmem:[%s9 + $0x458] sm:$0xf]
  %v7361 = vld [vmem:[%s9 + $0x45c] sm:$0xff]
  %v7362 = vld [vmem:[%s9 + $0x464] sm:$0xf]
  %v7363 = vld [vmem:[%s9 + $0x468] sm:$0xff]
  %v7364 = vld [vmem:[%s9 + $0x470] sm:$0xf]
  %v7365 = vld [vmem:[%s9 + $0x474] sm:$0xff]
  %v7366 = vld [vmem:[%s9 + $0x47c] sm:$0xf]
  %v7367 = vld [vmem:[%s10] sm:$0x7]
  %v7369 = vlaneseq
  %v7370 = vshrl.u32 %v7369, 7
  %v7371 = vsub.s32 0, %v7370
  %v7372 = vrot.slane %v7367, %v7371
  %v7373 = vlaneseq
  %v7374 = vshrl.u32 %v7373, 7
  %v7375 = vsub.s32 1, %v7374
  %v7376 = vrot.slane %v7367, %v7375
  %v7377 = vlaneseq
  %v7378 = vshrl.u32 %v7377, 7
  %v7379 = vsub.s32 2, %v7378
  %v7380 = vrot.slane %v7367, %v7379
  %v7576 = vunpack.c.l.b16 %v7175
  %v7577 = vunpack.c.h.b16 %v7175
  %v7578 = vunpack.c.l.b16 %v7176
  %v7579 = vunpack.c.l.b16 %v7177
  %v7580 = vunpack.c.h.b16 %v7177
  %v7581 = vunpack.c.l.b16 %v7178
  %v7582 = vunpack.c.l.b16 %v7179
  %v7583 = vunpack.c.h.b16 %v7179
  %v7584 = vunpack.c.l.b16 %v7180
  %v7585 = vunpack.c.l.b16 %v7181
  %v7586 = vunpack.c.h.b16 %v7181
  %v7587 = vunpack.c.l.b16 %v7182
  %v7588 = vunpack.c.l.b16 %v7183
  %v7589 = vunpack.c.h.b16 %v7183
  %v7590 = vunpack.c.l.b16 %v7184
  %v7591 = vunpack.c.l.b16 %v7185
  %v7592 = vunpack.c.h.b16 %v7185
  %v7593 = vunpack.c.l.b16 %v7186
  %v7594 = vunpack.c.l.b16 %v7187
  %v7595 = vunpack.c.h.b16 %v7187
  %v7596 = vunpack.c.l.b16 %v7188
  %v7597 = vunpack.c.l.b16 %v7189
  %v7598 = vunpack.c.h.b16 %v7189
  %v7599 = vunpack.c.l.b16 %v7190
  %v7600 = vunpack.c.l.b16 %v7191
  %v7601 = vunpack.c.h.b16 %v7191
  %v7602 = vunpack.c.l.b16 %v7192
  %v7603 = vunpack.c.l.b16 %v7193
  %v7604 = vunpack.c.h.b16 %v7193
  %v7605 = vunpack.c.l.b16 %v7194
  %v7606 = vunpack.c.l.b16 %v7195
  %v7607 = vunpack.c.h.b16 %v7195
  %v7608 = vunpack.c.l.b16 %v7196
  %v7609 = vunpack.c.l.b16 %v7197
  %v7610 = vunpack.c.h.b16 %v7197
  %v7611 = vunpack.c.l.b16 %v7198
  %v7612 = vunpack.c.l.b16 %v7199
  %v7613 = vunpack.c.h.b16 %v7199
  %v7614 = vunpack.c.l.b16 %v7200
  %v7615 = vunpack.c.l.b16 %v7201
  %v7616 = vunpack.c.h.b16 %v7201
  %v7617 = vunpack.c.l.b16 %v7202
  %v7618 = vunpack.c.l.b16 %v7203
  %v7619 = vunpack.c.h.b16 %v7203
  %v7620 = vunpack.c.l.b16 %v7204
  %v7621 = vunpack.c.l.b16 %v7205
  %v7622 = vunpack.c.h.b16 %v7205
  %v7623 = vunpack.c.l.b16 %v7206
  %v7624 = vunpack.c.l.b16 %v7207
  %v7625 = vunpack.c.h.b16 %v7207
  %v7626 = vunpack.c.l.b16 %v7208
  %v7627 = vunpack.c.l.b16 %v7209
  %v7628 = vunpack.c.h.b16 %v7209
  %v7629 = vunpack.c.l.b16 %v7210
  %v7630 = vunpack.c.l.b16 %v7211
  %v7631 = vunpack.c.h.b16 %v7211
  %v7632 = vunpack.c.l.b16 %v7212
  %v7633 = vunpack.c.l.b16 %v7213
  %v7634 = vunpack.c.h.b16 %v7213
  %v7635 = vunpack.c.l.b16 %v7214
  %v7636 = vunpack.c.l.b16 %v7215
  %v7637 = vunpack.c.h.b16 %v7215
  %v7638 = vunpack.c.l.b16 %v7216
  %v7639 = vunpack.c.l.b16 %v7217
  %v7640 = vunpack.c.h.b16 %v7217
  %v7641 = vunpack.c.l.b16 %v7218
  %v7642 = vunpack.c.l.b16 %v7219
  %v7643 = vunpack.c.h.b16 %v7219
  %v7644 = vunpack.c.l.b16 %v7220
  %v7645 = vunpack.c.l.b16 %v7221
  %v7646 = vunpack.c.h.b16 %v7221
  %v7647 = vunpack.c.l.b16 %v7222
  %v7648 = vunpack.c.l.b16 %v7223
  %v7649 = vunpack.c.h.b16 %v7223
  %v7650 = vunpack.c.l.b16 %v7224
  %v7651 = vunpack.c.l.b16 %v7225
  %v7652 = vunpack.c.h.b16 %v7225
  %v7653 = vunpack.c.l.b16 %v7226
  %v7654 = vunpack.c.l.b16 %v7227
  %v7655 = vunpack.c.h.b16 %v7227
  %v7656 = vunpack.c.l.b16 %v7228
  %v7657 = vunpack.c.l.b16 %v7229
  %v7658 = vunpack.c.h.b16 %v7229
  %v7659 = vunpack.c.l.b16 %v7230
  %v7660 = vunpack.c.l.b16 %v7231
  %v7661 = vunpack.c.h.b16 %v7231
  %v7662 = vunpack.c.l.b16 %v7232
  %v7663 = vunpack.c.l.b16 %v7233
  %v7664 = vunpack.c.h.b16 %v7233
  %v7665 = vunpack.c.l.b16 %v7234
  %v7666 = vunpack.c.l.b16 %v7235
  %v7667 = vunpack.c.h.b16 %v7235
  %v7668 = vunpack.c.l.b16 %v7236
  %v7669 = vunpack.c.l.b16 %v7237
  %v7670 = vunpack.c.h.b16 %v7237
  %v7671 = vunpack.c.l.b16 %v7238
  %v7672 = vunpack.c.l.b16 %v7239
  %v7673 = vunpack.c.h.b16 %v7239
  %v7674 = vunpack.c.l.b16 %v7240
  %v7675 = vunpack.c.l.b16 %v7241
  %v7676 = vunpack.c.h.b16 %v7241
  %v7677 = vunpack.c.l.b16 %v7242
  %v7678 = vunpack.c.l.b16 %v7243
  %v7679 = vunpack.c.h.b16 %v7243
  %v7680 = vunpack.c.l.b16 %v7244
  %v7681 = vunpack.c.l.b16 %v7245
  %v7682 = vunpack.c.h.b16 %v7245
  %v7683 = vunpack.c.l.b16 %v7246
  %v7684 = vunpack.c.l.b16 %v7247
  %v7685 = vunpack.c.h.b16 %v7247
  %v7686 = vunpack.c.l.b16 %v7248
  %v7687 = vunpack.c.l.b16 %v7249
  %v7688 = vunpack.c.h.b16 %v7249
  %v7689 = vunpack.c.l.b16 %v7250
  %v7690 = vunpack.c.l.b16 %v7251
  %v7691 = vunpack.c.h.b16 %v7251
  %v7692 = vunpack.c.l.b16 %v7252
  %v7693 = vunpack.c.l.b16 %v7253
  %v7694 = vunpack.c.h.b16 %v7253
  %v7695 = vunpack.c.l.b16 %v7254
  %v7696 = vunpack.c.l.b16 %v7255
  %v7697 = vunpack.c.h.b16 %v7255
  %v7698 = vunpack.c.l.b16 %v7256
  %v7699 = vunpack.c.l.b16 %v7257
  %v7700 = vunpack.c.h.b16 %v7257
  %v7701 = vunpack.c.l.b16 %v7258
  %v7702 = vunpack.c.l.b16 %v7259
  %v7703 = vunpack.c.h.b16 %v7259
  %v7704 = vunpack.c.l.b16 %v7260
  %v7705 = vunpack.c.l.b16 %v7261
  %v7706 = vunpack.c.h.b16 %v7261
  %v7707 = vunpack.c.l.b16 %v7262
  %v7708 = vunpack.c.l.b16 %v7263
  %v7709 = vunpack.c.h.b16 %v7263
  %v7710 = vunpack.c.l.b16 %v7264
  %v7711 = vunpack.c.l.b16 %v7265
  %v7712 = vunpack.c.h.b16 %v7265
  %v7713 = vunpack.c.l.b16 %v7266
  %v7714 = vunpack.c.l.b16 %v7267
  %v7715 = vunpack.c.h.b16 %v7267
  %v7716 = vunpack.c.l.b16 %v7268
  %v7717 = vunpack.c.l.b16 %v7269
  %v7718 = vunpack.c.h.b16 %v7269
  %v7719 = vunpack.c.l.b16 %v7270
  %v7720 = vunpack.c.l.b16 %v7271
  %v7721 = vunpack.c.h.b16 %v7271
  %v7722 = vunpack.c.l.b16 %v7272
  %v7723 = vunpack.c.l.b16 %v7273
  %v7724 = vunpack.c.h.b16 %v7273
  %v7725 = vunpack.c.l.b16 %v7274
  %v7726 = vunpack.c.l.b16 %v7275
  %v7727 = vunpack.c.h.b16 %v7275
  %v7728 = vunpack.c.l.b16 %v7276
  %v7729 = vunpack.c.l.b16 %v7277
  %v7730 = vunpack.c.h.b16 %v7277
  %v7731 = vunpack.c.l.b16 %v7278
  %v7732 = vunpack.c.l.b16 %v7279
  %v7733 = vunpack.c.h.b16 %v7279
  %v7734 = vunpack.c.l.b16 %v7280
  %v7735 = vunpack.c.l.b16 %v7281
  %v7736 = vunpack.c.h.b16 %v7281
  %v7737 = vunpack.c.l.b16 %v7282
  %v7738 = vunpack.c.l.b16 %v7283
  %v7739 = vunpack.c.h.b16 %v7283
  %v7740 = vunpack.c.l.b16 %v7284
  %v7741 = vunpack.c.l.b16 %v7285
  %v7742 = vunpack.c.h.b16 %v7285
  %v7743 = vunpack.c.l.b16 %v7286
  %v7744 = vunpack.c.l.b16 %v7287
  %v7745 = vunpack.c.h.b16 %v7287
  %v7746 = vunpack.c.l.b16 %v7288
  %v7747 = vunpack.c.l.b16 %v7289
  %v7748 = vunpack.c.h.b16 %v7289
  %v7749 = vunpack.c.l.b16 %v7290
  %v7750 = vunpack.c.l.b16 %v7291
  %v7751 = vunpack.c.h.b16 %v7291
  %v7752 = vunpack.c.l.b16 %v7292
  %v7753 = vunpack.c.l.b16 %v7293
  %v7754 = vunpack.c.h.b16 %v7293
  %v7755 = vunpack.c.l.b16 %v7294
  %v7756 = vunpack.c.l.b16 %v7295
  %v7757 = vunpack.c.h.b16 %v7295
  %v7758 = vunpack.c.l.b16 %v7296
  %v7759 = vunpack.c.l.b16 %v7297
  %v7760 = vunpack.c.h.b16 %v7297
  %v7761 = vunpack.c.l.b16 %v7298
  %v7762 = vunpack.c.l.b16 %v7299
  %v7763 = vunpack.c.h.b16 %v7299
  %v7764 = vunpack.c.l.b16 %v7300
  %v7765 = vunpack.c.l.b16 %v7301
  %v7766 = vunpack.c.h.b16 %v7301
  %v7767 = vunpack.c.l.b16 %v7302
  %v7768 = vunpack.c.l.b16 %v7303
  %v7769 = vunpack.c.h.b16 %v7303
  %v7770 = vunpack.c.l.b16 %v7304
  %v7771 = vunpack.c.l.b16 %v7305
  %v7772 = vunpack.c.h.b16 %v7305
  %v7773 = vunpack.c.l.b16 %v7306
  %v7774 = vunpack.c.l.b16 %v7307
  %v7775 = vunpack.c.h.b16 %v7307
  %v7776 = vunpack.c.l.b16 %v7308
  %v7777 = vunpack.c.l.b16 %v7309
  %v7778 = vunpack.c.h.b16 %v7309
  %v7779 = vunpack.c.l.b16 %v7310
  %v7780 = vunpack.c.l.b16 %v7311
  %v7781 = vunpack.c.h.b16 %v7311
  %v7782 = vunpack.c.l.b16 %v7312
  %v7783 = vunpack.c.l.b16 %v7313
  %v7784 = vunpack.c.h.b16 %v7313
  %v7785 = vunpack.c.l.b16 %v7314
  %v7786 = vunpack.c.l.b16 %v7315
  %v7787 = vunpack.c.h.b16 %v7315
  %v7788 = vunpack.c.l.b16 %v7316
  %v7789 = vunpack.c.l.b16 %v7317
  %v7790 = vunpack.c.h.b16 %v7317
  %v7791 = vunpack.c.l.b16 %v7318
  %v7792 = vunpack.c.l.b16 %v7319
  %v7793 = vunpack.c.h.b16 %v7319
  %v7794 = vunpack.c.l.b16 %v7320
  %v7795 = vunpack.c.l.b16 %v7321
  %v7796 = vunpack.c.h.b16 %v7321
  %v7797 = vunpack.c.l.b16 %v7322
  %v7798 = vunpack.c.l.b16 %v7323
  %v7799 = vunpack.c.h.b16 %v7323
  %v7800 = vunpack.c.l.b16 %v7324
  %v7801 = vunpack.c.l.b16 %v7325
  %v7802 = vunpack.c.h.b16 %v7325
  %v7803 = vunpack.c.l.b16 %v7326
  %v7804 = vunpack.c.l.b16 %v7327
  %v7805 = vunpack.c.h.b16 %v7327
  %v7806 = vunpack.c.l.b16 %v7328
  %v7807 = vunpack.c.l.b16 %v7329
  %v7808 = vunpack.c.h.b16 %v7329
  %v7809 = vunpack.c.l.b16 %v7330
  %v7810 = vunpack.c.l.b16 %v7331
  %v7811 = vunpack.c.h.b16 %v7331
  %v7812 = vunpack.c.l.b16 %v7332
  %v7813 = vunpack.c.l.b16 %v7333
  %v7814 = vunpack.c.h.b16 %v7333
  %v7815 = vunpack.c.l.b16 %v7334
  %v7816 = vunpack.c.l.b16 %v7335
  %v7817 = vunpack.c.h.b16 %v7335
  %v7818 = vunpack.c.l.b16 %v7336
  %v7819 = vunpack.c.l.b16 %v7337
  %v7820 = vunpack.c.h.b16 %v7337
  %v7821 = vunpack.c.l.b16 %v7338
  %v7822 = vunpack.c.l.b16 %v7339
  %v7823 = vunpack.c.h.b16 %v7339
  %v7824 = vunpack.c.l.b16 %v7340
  %v7825 = vunpack.c.l.b16 %v7341
  %v7826 = vunpack.c.h.b16 %v7341
  %v7827 = vunpack.c.l.b16 %v7342
  %v7828 = vunpack.c.l.b16 %v7343
  %v7829 = vunpack.c.h.b16 %v7343
  %v7830 = vunpack.c.l.b16 %v7344
  %v7831 = vunpack.c.l.b16 %v7345
  %v7832 = vunpack.c.h.b16 %v7345
  %v7833 = vunpack.c.l.b16 %v7346
  %v7834 = vunpack.c.l.b16 %v7347
  %v7835 = vunpack.c.h.b16 %v7347
  %v7836 = vunpack.c.l.b16 %v7348
  %v7837 = vunpack.c.l.b16 %v7349
  %v7838 = vunpack.c.h.b16 %v7349
  %v7839 = vunpack.c.l.b16 %v7350
  %v7840 = vunpack.c.l.b16 %v7351
  %v7841 = vunpack.c.h.b16 %v7351
  %v7842 = vunpack.c.l.b16 %v7352
  %v7843 = vunpack.c.l.b16 %v7353
  %v7844 = vunpack.c.h.b16 %v7353
  %v7845 = vunpack.c.l.b16 %v7354
  %v7846 = vunpack.c.l.b16 %v7355
  %v7847 = vunpack.c.h.b16 %v7355
  %v7848 = vunpack.c.l.b16 %v7356
  %v7849 = vunpack.c.l.b16 %v7357
  %v7850 = vunpack.c.h.b16 %v7357
  %v7851 = vunpack.c.l.b16 %v7358
  %v7852 = vunpack.c.l.b16 %v7359
  %v7853 = vunpack.c.h.b16 %v7359
  %v7854 = vunpack.c.l.b16 %v7360
  %v7855 = vunpack.c.l.b16 %v7361
  %v7856 = vunpack.c.h.b16 %v7361
  %v7857 = vunpack.c.l.b16 %v7362
  %v7858 = vunpack.c.l.b16 %v7363
  %v7859 = vunpack.c.h.b16 %v7363
  %v7860 = vunpack.c.l.b16 %v7364
  %v7861 = vunpack.c.l.b16 %v7365
  %v7862 = vunpack.c.h.b16 %v7365
  %v7863 = vunpack.c.l.b16 %v7366
  %v7864 = vpack.c.b16 %v7579, %v7576
  %v7865 = vpack.c.b16 %v7580, %v7577
  %v7866 = vpack.c.b16 %v7581, %v7578
  %v7867 = vpack.c.b16 %v7585, %v7582
  %v7868 = vpack.c.b16 %v7586, %v7583
  %v7869 = vpack.c.b16 %v7587, %v7584
  %v7870 = vpack.c.b16 %v7591, %v7588
  %v7871 = vpack.c.b16 %v7592, %v7589
  %v7872 = vpack.c.b16 %v7593, %v7590
  %v7873 = vpack.c.b16 %v7597, %v7594
  %v7874 = vpack.c.b16 %v7598, %v7595
  %v7875 = vpack.c.b16 %v7599, %v7596
  %v7876 = vpack.c.b16 %v7603, %v7600
  %v7877 = vpack.c.b16 %v7604, %v7601
  %v7878 = vpack.c.b16 %v7605, %v7602
  %v7879 = vpack.c.b16 %v7609, %v7606
  %v7880 = vpack.c.b16 %v7610, %v7607
  %v7881 = vpack.c.b16 %v7611, %v7608
  %v7882 = vpack.c.b16 %v7615, %v7612
  %v7883 = vpack.c.b16 %v7616, %v7613
  %v7884 = vpack.c.b16 %v7617, %v7614
  %v7885 = vpack.c.b16 %v7621, %v7618
  %v7886 = vpack.c.b16 %v7622, %v7619
  %v7887 = vpack.c.b16 %v7623, %v7620
  %v7888 = vpack.c.b16 %v7627, %v7624
  %v7889 = vpack.c.b16 %v7628, %v7625
  %v7890 = vpack.c.b16 %v7629, %v7626
  %v7891 = vpack.c.b16 %v7633, %v7630
  %v7892 = vpack.c.b16 %v7634, %v7631
  %v7893 = vpack.c.b16 %v7635, %v7632
  %v7894 = vpack.c.b16 %v7639, %v7636
  %v7895 = vpack.c.b16 %v7640, %v7637
  %v7896 = vpack.c.b16 %v7641, %v7638
  %v7897 = vpack.c.b16 %v7645, %v7642
  %v7898 = vpack.c.b16 %v7646, %v7643
  %v7899 = vpack.c.b16 %v7647, %v7644
  %v7900 = vpack.c.b16 %v7651, %v7648
  %v7901 = vpack.c.b16 %v7652, %v7649
  %v7902 = vpack.c.b16 %v7653, %v7650
  %v7903 = vpack.c.b16 %v7657, %v7654
  %v7904 = vpack.c.b16 %v7658, %v7655
  %v7905 = vpack.c.b16 %v7659, %v7656
  %v7906 = vpack.c.b16 %v7663, %v7660
  %v7907 = vpack.c.b16 %v7664, %v7661
  %v7908 = vpack.c.b16 %v7665, %v7662
  %v7909 = vpack.c.b16 %v7669, %v7666
  %v7910 = vpack.c.b16 %v7670, %v7667
  %v7911 = vpack.c.b16 %v7671, %v7668
  %v7912 = vpack.c.b16 %v7675, %v7672
  %v7913 = vpack.c.b16 %v7676, %v7673
  %v7914 = vpack.c.b16 %v7677, %v7674
  %v7915 = vpack.c.b16 %v7681, %v7678
  %v7916 = vpack.c.b16 %v7682, %v7679
  %v7917 = vpack.c.b16 %v7683, %v7680
  %v7918 = vpack.c.b16 %v7687, %v7684
  %v7919 = vpack.c.b16 %v7688, %v7685
  %v7920 = vpack.c.b16 %v7689, %v7686
  %v7921 = vpack.c.b16 %v7693, %v7690
  %v7922 = vpack.c.b16 %v7694, %v7691
  %v7923 = vpack.c.b16 %v7695, %v7692
  %v7924 = vpack.c.b16 %v7699, %v7696
  %v7925 = vpack.c.b16 %v7700, %v7697
  %v7926 = vpack.c.b16 %v7701, %v7698
  %v7927 = vpack.c.b16 %v7705, %v7702
  %v7928 = vpack.c.b16 %v7706, %v7703
  %v7929 = vpack.c.b16 %v7707, %v7704
  %v7930 = vpack.c.b16 %v7711, %v7708
  %v7931 = vpack.c.b16 %v7712, %v7709
  %v7932 = vpack.c.b16 %v7713, %v7710
  %v7933 = vpack.c.b16 %v7717, %v7714
  %v7934 = vpack.c.b16 %v7718, %v7715
  %v7935 = vpack.c.b16 %v7719, %v7716
  %v7936 = vpack.c.b16 %v7723, %v7720
  %v7937 = vpack.c.b16 %v7724, %v7721
  %v7938 = vpack.c.b16 %v7725, %v7722
  %v7939 = vpack.c.b16 %v7729, %v7726
  %v7940 = vpack.c.b16 %v7730, %v7727
  %v7941 = vpack.c.b16 %v7731, %v7728
  %v7942 = vpack.c.b16 %v7735, %v7732
  %v7943 = vpack.c.b16 %v7736, %v7733
  %v7944 = vpack.c.b16 %v7737, %v7734
  %v7945 = vpack.c.b16 %v7741, %v7738
  %v7946 = vpack.c.b16 %v7742, %v7739
  %v7947 = vpack.c.b16 %v7743, %v7740
  %v7948 = vpack.c.b16 %v7747, %v7744
  %v7949 = vpack.c.b16 %v7748, %v7745
  %v7950 = vpack.c.b16 %v7749, %v7746
  %v7951 = vpack.c.b16 %v7753, %v7750
  %v7952 = vpack.c.b16 %v7754, %v7751
  %v7953 = vpack.c.b16 %v7755, %v7752
  %v7954 = vpack.c.b16 %v7759, %v7756
  %v7955 = vpack.c.b16 %v7760, %v7757
  %v7956 = vpack.c.b16 %v7761, %v7758
  %v7957 = vpack.c.b16 %v7765, %v7762
  %v7958 = vpack.c.b16 %v7766, %v7763
  %v7959 = vpack.c.b16 %v7767, %v7764
  %v7960 = vpack.c.b16 %v7771, %v7768
  %v7961 = vpack.c.b16 %v7772, %v7769
  %v7962 = vpack.c.b16 %v7773, %v7770
  %v7963 = vpack.c.b16 %v7777, %v7774
  %v7964 = vpack.c.b16 %v7778, %v7775
  %v7965 = vpack.c.b16 %v7779, %v7776
  %v7966 = vpack.c.b16 %v7783, %v7780
  %v7967 = vpack.c.b16 %v7784, %v7781
  %v7968 = vpack.c.b16 %v7785, %v7782
  %v7969 = vpack.c.b16 %v7789, %v7786
  %v7970 = vpack.c.b16 %v7790, %v7787
  %v7971 = vpack.c.b16 %v7791, %v7788
  %v7972 = vpack.c.b16 %v7795, %v7792
  %v7973 = vpack.c.b16 %v7796, %v7793
  %v7974 = vpack.c.b16 %v7797, %v7794
  %v7975 = vpack.c.b16 %v7801, %v7798
  %v7976 = vpack.c.b16 %v7802, %v7799
  %v7977 = vpack.c.b16 %v7803, %v7800
  %v7978 = vpack.c.b16 %v7807, %v7804
  %v7979 = vpack.c.b16 %v7808, %v7805
  %v7980 = vpack.c.b16 %v7809, %v7806
  %v7981 = vpack.c.b16 %v7813, %v7810
  %v7982 = vpack.c.b16 %v7814, %v7811
  %v7983 = vpack.c.b16 %v7815, %v7812
  %v7984 = vpack.c.b16 %v7819, %v7816
  %v7985 = vpack.c.b16 %v7820, %v7817
  %v7986 = vpack.c.b16 %v7821, %v7818
  %v7987 = vpack.c.b16 %v7825, %v7822
  %v7988 = vpack.c.b16 %v7826, %v7823
  %v7989 = vpack.c.b16 %v7827, %v7824
  %v7990 = vpack.c.b16 %v7831, %v7828
  %v7991 = vpack.c.b16 %v7832, %v7829
  %v7992 = vpack.c.b16 %v7833, %v7830
  %v7993 = vpack.c.b16 %v7837, %v7834
  %v7994 = vpack.c.b16 %v7838, %v7835
  %v7995 = vpack.c.b16 %v7839, %v7836
  %v7996 = vpack.c.b16 %v7843, %v7840
  %v7997 = vpack.c.b16 %v7844, %v7841
  %v7998 = vpack.c.b16 %v7845, %v7842
  %v7999 = vpack.c.b16 %v7849, %v7846
  %v8000 = vpack.c.b16 %v7850, %v7847
  %v8001 = vpack.c.b16 %v7851, %v7848
  %v8002 = vpack.c.b16 %v7855, %v7852
  %v8003 = vpack.c.b16 %v7856, %v7853
  %v8004 = vpack.c.b16 %v7857, %v7854
  %v8005 = vpack.c.b16 %v7861, %v7858
  %v8006 = vpack.c.b16 %v7862, %v7859
  %v8007 = vpack.c.b16 %v7863, %v7860
  %8152 = vmatprep.subr.bf16.mxu0 %v7865
  %8153 = vmatpush1.bf16.msra.mxu0 %v7864
  %8154 = vmatprep.subr.bf16.mxu0 %v7868
  %8155 = vmatpush1.bf16.msra.mxu0 %v7867
  %8156 = vmatprep.subr.bf16.mxu0 %v7871
  %8157 = vmatpush1.bf16.msra.mxu0 %v7870
  %8158 = vmatprep.subr.bf16.mxu0 %v7874
  %8159 = vmatpush1.bf16.msra.mxu0 %v7873
  %8160 = vmatprep.subr.bf16.mxu0 %v7877
  %8161 = vmatpush1.bf16.msra.mxu0 %v7876
  %8162 = vmatprep.subr.bf16.mxu0 %v7880
  %8163 = vmatpush1.bf16.msra.mxu0 %v7879
  %8164 = vmatprep.subr.bf16.mxu0 %v7883
  %8165 = vmatpush1.bf16.msra.mxu0 %v7882
  %8166 = vmatprep.subr.bf16.mxu0 %v7886
  %8167 = vmatpush1.bf16.msra.mxu0 %v7885
  %8168 = vmatprep.subr.bf16.mxu0 %v7889
  %8169 = vmatpush1.bf16.msra.mxu0 %v7888
  %8170 = vmatprep.subr.bf16.mxu0 %v7892
  %8171 = vmatpush1.bf16.msra.mxu0 %v7891
  %8172 = vmatprep.subr.bf16.mxu0 %v7895
  %8173 = vmatpush1.bf16.msra.mxu0 %v7894
  %8174 = vmatprep.subr.bf16.mxu0 %v7898
  %8175 = vmatpush1.bf16.msra.mxu0 %v7897
  %8176 = vmatprep.subr.bf16.mxu0 %v7901
  %8177 = vmatpush1.bf16.msra.mxu0 %v7900
  %8178 = vmatprep.subr.bf16.mxu0 %v7904
  %8179 = vmatpush1.bf16.msra.mxu0 %v7903
  %8180 = vmatprep.subr.bf16.mxu0 %v7907
  %8181 = vmatpush1.bf16.msra.mxu0 %v7906
  %8182 = vmatprep.subr.bf16.mxu0 %v7910
  %8183 = vmatpush1.bf16.msra.mxu0 %v7909
  %8184 = vmatprep.mubr.bf16.mxu0 %v7170
  %8185 = vmatmul.mubr.bf16.gmra.mrb[0].mxu0 %v7169
  %v8186 = vpop.f32.mrb[0].mxu0
  %v8187 = vadd.f32 %v7372, %v8186
  %v8188 = vpop.f32.mrb[0].mxu0
  %v8189 = vadd.f32 %v7376, %v8188
  %v8190 = vpop.f32.mrb[0].mxu0
  %v8191 = vpop.f32.mrb[0].mxu0
  %8192 = vdwg.mxu0
  %8193 = vmatprep.subr.bf16.mxu0 %v7913
  %8194 = vmatpush1.bf16.msra.mxu0 %v7912
  %8195 = vmatprep.subr.bf16.mxu0 %v7916
  %8196 = vmatpush1.bf16.msra.mxu0 %v7915
  %8197 = vmatprep.subr.bf16.mxu0 %v7919
  %8198 = vmatpush1.bf16.msra.mxu0 %v7918
  %8199 = vmatprep.subr.bf16.mxu0 %v7922
  %8200 = vmatpush1.bf16.msra.mxu0 %v7921
  %8201 = vmatprep.subr.bf16.mxu0 %v7925
  %8202 = vmatpush1.bf16.msra.mxu0 %v7924
  %8203 = vmatprep.subr.bf16.mxu0 %v7928
  %8204 = vmatpush1.bf16.msra.mxu0 %v7927
  %8205 = vmatprep.subr.bf16.mxu0 %v7931
  %8206 = vmatpush1.bf16.msra.mxu0 %v7930
  %8207 = vmatprep.subr.bf16.mxu0 %v7934
  %8208 = vmatpush1.bf16.msra.mxu0 %v7933
  %8209 = vmatprep.subr.bf16.mxu0 %v7937
  %8210 = vmatpush1.bf16.msra.mxu0 %v7936
  %8211 = vmatprep.subr.bf16.mxu0 %v7940
  %8212 = vmatpush1.bf16.msra.mxu0 %v7939
  %8213 = vmatprep.subr.bf16.mxu0 %v7943
  %8214 = vmatpush1.bf16.msra.mxu0 %v7942
  %8215 = vmatprep.subr.bf16.mxu0 %v7946
  %8216 = vmatpush1.bf16.msra.mxu0 %v7945
  %8217 = vmatprep.subr.bf16.mxu0 %v7949
  %8218 = vmatpush1.bf16.msra.mxu0 %v7948
  %8219 = vmatprep.subr.bf16.mxu0 %v7952
  %8220 = vmatpush1.bf16.msra.mxu0 %v7951
  %8221 = vmatprep.subr.bf16.mxu0 %v7955
  %8222 = vmatpush1.bf16.msra.mxu0 %v7954
  %8223 = vmatprep.subr.bf16.mxu0 %v7958
  %8224 = vmatpush1.bf16.msra.mxu0 %v7957
  %8225 = vmatprep.mubr.bf16.mxu0 %v7172
  %8226 = vmatmul.mubr.bf16.gmra.mrb[0].mxu0 %v7171
  %v8227 = vpop.f32.mrb[0].mxu0
  %v8228 = vadd.f32 %v8187, %v8227
  %v8229 = vpop.f32.mrb[0].mxu0
  %v8230 = vadd.f32 %v8189, %v8229
  %v8231 = vpop.f32.mrb[0].mxu0
  %v8232 = vpop.f32.mrb[0].mxu0
  %8233 = vdwg.mxu0
  %8234 = vmatprep.subr.bf16.mxu0 %v7961
  %8235 = vmatpush1.bf16.msra.mxu0 %v7960
  %8236 = vmatprep.subr.bf16.mxu0 %v7964
  %8237 = vmatpush1.bf16.msra.mxu0 %v7963
  %8238 = vmatprep.subr.bf16.mxu0 %v7967
  %8239 = vmatpush1.bf16.msra.mxu0 %v7966
  %8240 = vmatprep.subr.bf16.mxu0 %v7970
  %8241 = vmatpush1.bf16.msra.mxu0 %v7969
  %8242 = vmatprep.subr.bf16.mxu0 %v7973
  %8243 = vmatpush1.bf16.msra.mxu0 %v7972
  %8244 = vmatprep.subr.bf16.mxu0 %v7976
  %8245 = vmatpush1.bf16.msra.mxu0 %v7975
  %8246 = vmatprep.subr.bf16.mxu0 %v7979
  %8247 = vmatpush1.bf16.msra.mxu0 %v7978
  %8248 = vmatprep.subr.bf16.mxu0 %v7982
  %8249 = vmatpush1.bf16.msra.mxu0 %v7981
  %8250 = vmatprep.subr.bf16.mxu0 %v7985
  %8251 = vmatpush1.bf16.msra.mxu0 %v7984
  %8252 = vmatprep.subr.bf16.mxu0 %v7988
  %8253 = vmatpush1.bf16.msra.mxu0 %v7987
  %8254 = vmatprep.subr.bf16.mxu0 %v7991
  %8255 = vmatpush1.bf16.msra.mxu0 %v7990
  %8256 = vmatprep.subr.bf16.mxu0 %v7994
  %8257 = vmatpush1.bf16.msra.mxu0 %v7993
  %8258 = vmatprep.subr.bf16.mxu0 %v7997
  %8259 = vmatpush1.bf16.msra.mxu0 %v7996
  %8260 = vmatprep.subr.bf16.mxu0 %v8000
  %8261 = vmatpush1.bf16.msra.mxu0 %v7999
  %8262 = vmatprep.subr.bf16.mxu0 %v8003
  %8263 = vmatpush1.bf16.msra.mxu0 %v8002
  %8264 = vmatprep.subr.bf16.mxu0 %v8006
  %8265 = vmatpush1.bf16.msra.mxu0 %v8005
  %8266 = vmatprep.mubr.bf16.mxu0 %v7174
  %8267 = vmatmul.mubr.bf16.gmra.mrb[0].mxu0 %v7173
  %v8268 = vpop.f32.mrb[0].mxu0
  %v8269 = vadd.f32 %v8228, %v8268
  %v8270 = vpop.f32.mrb[0].mxu0
  %v8271 = vadd.f32 %v8230, %v8270
  %v8272 = vpop.f32.mrb[0].mxu0
  %v8273 = vpop.f32.mrb[0].mxu0
  %8274 = vdwg.mxu0
  %8275 = vmatprep.subr.bf16.mxu0 0
  %8276 = vmatpush1.bf16.msra.mxu0 %v7866
  %8277 = vmatprep.subr.bf16.mxu0 0
  %8278 = vmatpush1.bf16.msra.mxu0 %v7869
  %8279 = vmatprep.subr.bf16.mxu0 0
  %8280 = vmatpush1.bf16.msra.mxu0 %v7872
  %8281 = vmatprep.subr.bf16.mxu0 0
  %8282 = vmatpush1.bf16.msra.mxu0 %v7875
  %8283 = vmatprep.subr.bf16.mxu0 0
  %8284 = vmatpush1.bf16.msra.mxu0 %v7878
  %8285 = vmatprep.subr.bf16.mxu0 0
  %8286 = vmatpush1.bf16.msra.mxu0 %v7881
  %8287 = vmatprep.subr.bf16.mxu0 0
  %8288 = vmatpush1.bf16.msra.mxu0 %v7884
  %8289 = vmatprep.subr.bf16.mxu0 0
  %8290 = vmatpush1.bf16.msra.mxu0 %v7887
  %8291 = vmatprep.subr.bf16.mxu0 0
  %8292 = vmatpush1.bf16.msra.mxu0 %v7890
  %8293 = vmatprep.subr.bf16.mxu0 0
  %8294 = vmatpush1.bf16.msra.mxu0 %v7893
  %8295 = vmatprep.subr.bf16.mxu0 0
  %8296 = vmatpush1.bf16.msra.mxu0 %v7896
  %8297 = vmatprep.subr.bf16.mxu0 0
  %8298 = vmatpush1.bf16.msra.mxu0 %v7899
  %8299 = vmatprep.subr.bf16.mxu0 0
  %8300 = vmatpush1.bf16.msra.mxu0 %v7902
  %8301 = vmatprep.subr.bf16.mxu0 0
  %8302 = vmatpush1.bf16.msra.mxu0 %v7905
  %8303 = vmatprep.subr.bf16.mxu0 0
  %8304 = vmatpush1.bf16.msra.mxu0 %v7908
  %8305 = vmatprep.subr.bf16.mxu0 0
  %8306 = vmatpush1.bf16.msra.mxu0 %v7911
  %8307 = vmatprep.mubr.bf16.mxu0 %v7170
  %8308 = vmatmul.mubr.bf16.gmra.mrb[0].mxu0 %v7169
  %v8309 = vpop.f32.mrb[0].mxu0
  %v8310 = vadd.f32 %v7380, %v8309
  %v8311 = vpop.f32.mrb[0].mxu0
  %v8312 = vpop.f32.mrb[0].mxu0
  %v8313 = vpop.f32.mrb[0].mxu0
  %8314 = vdwg.mxu0
  %8315 = vmatprep.subr.bf16.mxu0 0
  %8316 = vmatpush1.bf16.msra.mxu0 %v7914
  %8317 = vmatprep.subr.bf16.mxu0 0
  %8318 = vmatpush1.bf16.msra.mxu0 %v7917
  %8319 = vmatprep.subr.bf16.mxu0 0
  %8320 = vmatpush1.bf16.msra.mxu0 %v7920
  %8321 = vmatprep.subr.bf16.mxu0 0
  %8322 = vmatpush1.bf16.msra.mxu0 %v7923
  %8323 = vmatprep.subr.bf16.mxu0 0
  %8324 = vmatpush1.bf16.msra.mxu0 %v7926
  %8325 = vmatprep.subr.bf16.mxu0 0
  %8326 = vmatpush1.bf16.msra.mxu0 %v7929
  %8327 = vmatprep.subr.bf16.mxu0 0
  %8328 = vmatpush1.bf16.msra.mxu0 %v7932
  %8329 = vmatprep.subr.bf16.mxu0 0
  %8330 = vmatpush1.bf16.msra.mxu0 %v7935
  %8331 = vmatprep.subr.bf16.mxu0 0
  %8332 = vmatpush1.bf16.msra.mxu0 %v7938
  %8333 = vmatprep.subr.bf16.mxu0 0
  %8334 = vmatpush1.bf16.msra.mxu0 %v7941
  %8335 = vmatprep.subr.bf16.mxu0 0
  %8336 = vmatpush1.bf16.msra.mxu0 %v7944
  %8337 = vmatprep.subr.bf16.mxu0 0
  %8338 = vmatpush1.bf16.msra.mxu0 %v7947
  %8339 = vmatprep.subr.bf16.mxu0 0
  %8340 = vmatpush1.bf16.msra.mxu0 %v7950
  %8341 = vmatprep.subr.bf16.mxu0 0
  %8342 = vmatpush1.bf16.msra.mxu0 %v7953
  %8343 = vmatprep.subr.bf16.mxu0 0
  %8344 = vmatpush1.bf16.msra.mxu0 %v7956
  %8345 = vmatprep.subr.bf16.mxu0 0
  %8346 = vmatpush1.bf16.msra.mxu0 %v7959
  %8347 = vmatprep.mubr.bf16.mxu0 %v7172
  %8348 = vmatmul.mubr.bf16.gmra.mrb[0].mxu0 %v7171
  %v8349 = vpop.f32.mrb[0].mxu0
  %v8350 = vadd.f32 %v8310, %v8349
  %v8351 = vpop.f32.mrb[0].mxu0
  %v8352 = vpop.f32.mrb[0].mxu0
  %v8353 = vpop.f32.mrb[0].mxu0
  %8354 = vdwg.mxu0
  %8355 = vmatprep.subr.bf16.mxu0 0
  %8356 = vmatpush1.bf16.msra.mxu0 %v7962
  %8357 = vmatprep.subr.bf16.mxu0 0
  %8358 = vmatpush1.bf16.msra.mxu0 %v7965
  %8359 = vmatprep.subr.bf16.mxu0 0
  %8360 = vmatpush1.bf16.msra.mxu0 %v7968
  %8361 = vmatprep.subr.bf16.mxu0 0
  %8362 = vmatpush1.bf16.msra.mxu0 %v7971
  %8363 = vmatprep.subr.bf16.mxu0 0
  %8364 = vmatpush1.bf16.msra.mxu0 %v7974
  %8365 = vmatprep.subr.bf16.mxu0 0
  %8366 = vmatpush1.bf16.msra.mxu0 %v7977
  %8367 = vmatprep.subr.bf16.mxu0 0
  %8368 = vmatpush1.bf16.msra.mxu0 %v7980
  %8369 = vmatprep.subr.bf16.mxu0 0
  %8370 = vmatpush1.bf16.msra.mxu0 %v7983
  %8371 = vmatprep.subr.bf16.mxu0 0
  %8372 = vmatpush1.bf16.msra.mxu0 %v7986
  %8373 = vmatprep.subr.bf16.mxu0 0
  %8374 = vmatpush1.bf16.msra.mxu0 %v7989
  %8375 = vmatprep.subr.bf16.mxu0 0
  %8376 = vmatpush1.bf16.msra.mxu0 %v7992
  %8377 = vmatprep.subr.bf16.mxu0 0
  %8378 = vmatpush1.bf16.msra.mxu0 %v7995
  %8379 = vmatprep.subr.bf16.mxu0 0
  %8380 = vmatpush1.bf16.msra.mxu0 %v7998
  %8381 = vmatprep.subr.bf16.mxu0 0
  %8382 = vmatpush1.bf16.msra.mxu0 %v8001
  %8383 = vmatprep.subr.bf16.mxu0 0
  %8384 = vmatpush1.bf16.msra.mxu0 %v8004
  %8385 = vmatprep.subr.bf16.mxu0 0
  %8386 = vmatpush1.bf16.msra.mxu0 %v8007
  %8387 = vmatprep.mubr.bf16.mxu0 %v7174
  %8388 = vmatmul.mubr.bf16.gmra.mrb[0].mxu0 %v7173
  %v8389 = vpop.f32.mrb[0].mxu0
  %v8390 = vadd.f32 %v8350, %v8389
  %v8391 = vpop.f32.mrb[0].mxu0
  %v8392 = vpop.f32.mrb[0].mxu0
  %v8393 = vpop.f32.mrb[0].mxu0
  %8394 = vdwg.mxu0
  %v8395 = vmul.f32 %v8269, %v6820
  %v8396 = vmul.f32 %v8271, %v6822
  %v8397 = vmul.f32 %v8390, %v6891
  %v8398 = vld [vmem:[%s22] sm:$0xff]
  %v8399 = vld [vmem:[%s22 + $0x8] sm:$0xff]
  %v8400 = vld [vmem:[%s22 + $0x10] sm:$0xff]
  %v8401 = vld [vmem:[%s22 + $0x18] sm:$0xff]
  %v8402 = vld [vmem:[%s22 + $0x20] sm:$0xff]
  %v8403 = vld [vmem:[%s22 + $0x28] sm:$0xff]
  %v8404 = vld [vmem:[%s22 + $0x30] sm:$0xff]
  %v8405 = vld [vmem:[%s22 + $0x38] sm:$0xff]
  %v8406 = vld [vmem:[%s22 + $0x40] sm:$0xff]
  %v8407 = vld [vmem:[%s22 + $0x48] sm:$0xff]
  %v8408 = vld [vmem:[%s22 + $0x50] sm:$0xff]
  %v8409 = vld [vmem:[%s22 + $0x58] sm:$0xff]
  %v8410 = vld [vmem:[%s22 + $0x60] sm:$0xff]
  %v8411 = vld [vmem:[%s22 + $0x68] sm:$0xff]
  %v8412 = vld [vmem:[%s22 + $0x70] sm:$0xff]
  %v8413 = vld [vmem:[%s22 + $0x78] sm:$0xff]
  %v8414 = vld [vmem:[%s22 + $0x80] sm:$0xff]
  %v8415 = vld [vmem:[%s22 + $0x88] sm:$0xff]
  %v8416 = vld [vmem:[%s22 + $0x90] sm:$0xff]
  %v8417 = vld [vmem:[%s22 + $0x98] sm:$0xff]
  %v8418 = vld [vmem:[%s22 + $0xa0] sm:$0xff]
  %v8419 = vld [vmem:[%s22 + $0xa8] sm:$0xff]
  %v8420 = vld [vmem:[%s22 + $0xb0] sm:$0xff]
  %v8421 = vld [vmem:[%s22 + $0xb8] sm:$0xff]
  %v8422 = vld [vmem:[%s22 + $0xc0] sm:$0xff]
  %v8423 = vld [vmem:[%s22 + $0xc8] sm:$0xff]
  %v8424 = vld [vmem:[%s22 + $0xd0] sm:$0xff]
  %v8425 = vld [vmem:[%s22 + $0xd8] sm:$0xff]
  %v8426 = vld [vmem:[%s22 + $0xe0] sm:$0xff]
  %v8427 = vld [vmem:[%s22 + $0xe8] sm:$0xff]
  %v8428 = vld [vmem:[%s22 + $0xf0] sm:$0xff]
  %v8429 = vld [vmem:[%s22 + $0xf8] sm:$0xff]
  %v8430 = vld [vmem:[%s22 + $0x100] sm:$0xff]
  %v8431 = vld [vmem:[%s22 + $0x108] sm:$0xff]
  %v8432 = vld [vmem:[%s22 + $0x110] sm:$0xff]
  %v8433 = vld [vmem:[%s22 + $0x118] sm:$0xff]
  %v8434 = vld [vmem:[%s22 + $0x120] sm:$0xff]
  %v8435 = vld [vmem:[%s22 + $0x128] sm:$0xff]
  %v8436 = vld [vmem:[%s22 + $0x130] sm:$0xff]
  %v8437 = vld [vmem:[%s22 + $0x138] sm:$0xff]
  %v8438 = vld [vmem:[%s22 + $0x140] sm:$0xff]
  %v8439 = vld [vmem:[%s22 + $0x148] sm:$0xff]
  %v8440 = vld [vmem:[%s22 + $0x150] sm:$0xff]
  %v8441 = vld [vmem:[%s22 + $0x158] sm:$0xff]
  %v8442 = vld [vmem:[%s22 + $0x160] sm:$0xff]
  %v8443 = vld [vmem:[%s22 + $0x168] sm:$0xff]
  %v8444 = vld [vmem:[%s22 + $0x170] sm:$0xff]
  %v8445 = vld [vmem:[%s22 + $0x178] sm:$0xff]
  %8446 = vmatprep.subr.mxu0 0.0
  %8447 = vmatpush1.msra.mxu0 %v8398
  %8448 = vmatprep.subr.mxu0 0.0
  %8449 = vmatpush1.msra.mxu0 %v8399
  %8450 = vmatprep.subr.mxu0 0.0
  %8451 = vmatpush1.msra.mxu0 %v8400
  %8452 = vmatprep.subr.mxu0 0.0
  %8453 = vmatpush1.msra.mxu0 %v8401
  %8454 = vmatprep.subr.mxu0 0.0
  %8455 = vmatpush1.msra.mxu0 %v8402
  %8456 = vmatprep.subr.mxu0 0.0
  %8457 = vmatpush1.msra.mxu0 %v8403
  %8458 = vmatprep.subr.mxu0 0.0
  %8459 = vmatpush1.msra.mxu0 %v8404
  %8460 = vmatprep.subr.mxu0 0.0
  %8461 = vmatpush1.msra.mxu0 %v8405
  %8462 = vmatprep.subr.mxu0 0.0
  %8463 = vmatpush1.msra.mxu0 %v8406
  %8464 = vmatprep.subr.mxu0 0.0
  %8465 = vmatpush1.msra.mxu0 %v8407
  %8466 = vmatprep.subr.mxu0 0.0
  %8467 = vmatpush1.msra.mxu0 %v8408
  %8468 = vmatprep.subr.mxu0 0.0
  %8469 = vmatpush1.msra.mxu0 %v8409
  %8470 = vmatprep.subr.mxu0 0.0
  %8471 = vmatpush1.msra.mxu0 %v8410
  %8472 = vmatprep.subr.mxu0 0.0
  %8473 = vmatpush1.msra.mxu0 %v8411
  %8474 = vmatprep.subr.mxu0 0.0
  %8475 = vmatpush1.msra.mxu0 %v8412
  %8476 = vmatprep.subr.mxu0 0.0
  %8477 = vmatpush1.msra.mxu0 %v8413
  %8478 = vmatprep.subr.mxu0 0.0
  %8479 = vmatpush1.msra.mxu0 %v8414
  %8480 = vmatprep.subr.mxu0 0.0
  %8481 = vmatpush1.msra.mxu0 %v8415
  %8482 = vmatprep.subr.mxu0 0.0
  %8483 = vmatpush1.msra.mxu0 %v8416
  %8484 = vmatprep.subr.mxu0 0.0
  %8485 = vmatpush1.msra.mxu0 %v8417
  %8486 = vmatprep.subr.mxu0 0.0
  %8487 = vmatpush1.msra.mxu0 %v8418
  %8488 = vmatprep.subr.mxu0 0.0
  %8489 = vmatpush1.msra.mxu0 %v8419
  %8490 = vmatprep.subr.mxu0 0.0
  %8491 = vmatpush1.msra.mxu0 %v8420
  %8492 = vmatprep.subr.mxu0 0.0
  %8493 = vmatpush1.msra.mxu0 %v8421
  %8494 = vmatprep.subr.mxu0 0.0
  %8495 = vmatpush1.msra.mxu0 %v8422
  %8496 = vmatprep.subr.mxu0 0.0
  %8497 = vmatpush1.msra.mxu0 %v8423
  %8498 = vmatprep.subr.mxu0 0.0
  %8499 = vmatpush1.msra.mxu0 %v8424
  %8500 = vmatprep.subr.mxu0 0.0
  %8501 = vmatpush1.msra.mxu0 %v8425
  %8502 = vmatprep.subr.mxu0 0.0
  %8503 = vmatpush1.msra.mxu0 %v8426
  %8504 = vmatprep.subr.mxu0 0.0
  %8505 = vmatpush1.msra.mxu0 %v8427
  %8506 = vmatprep.subr.mxu0 0.0
  %8507 = vmatpush1.msra.mxu0 %v8428
  %8508 = vmatprep.subr.mxu0 0.0
  %8509 = vmatpush1.msra.mxu0 %v8429
  %8510 = vmatprep.mubr.f32.mxu0 %v8396
  %8511 = vmatmul.mubr.f32.gmra.mrb[0].mxu0 %v8395
  %v8512 = vpop.f32.mrb[0].mxu0
  %v8513 = vadd.f32 0.0, %v8512
  %v8514 = vpop.f32.mrb[0].mxu0
  %8515 = vdwg.mxu0
  %8516 = vmatprep.subr.mxu0 0.0
  %8517 = vmatpush1.msra.mxu0 %v8430
  %8518 = vmatprep.subr.mxu0 0.0
  %8519 = vmatpush1.msra.mxu0 %v8431
  %8520 = vmatprep.subr.mxu0 0.0
  %8521 = vmatpush1.msra.mxu0 %v8432
  %8522 = vmatprep.subr.mxu0 0.0
  %8523 = vmatpush1.msra.mxu0 %v8433
  %8524 = vmatprep.subr.mxu0 0.0
  %8525 = vmatpush1.msra.mxu0 %v8434
  %8526 = vmatprep.subr.mxu0 0.0
  %8527 = vmatpush1.msra.mxu0 %v8435
  %8528 = vmatprep.subr.mxu0 0.0
  %8529 = vmatpush1.msra.mxu0 %v8436
  %8530 = vmatprep.subr.mxu0 0.0
  %8531 = vmatpush1.msra.mxu0 %v8437
  %8532 = vmatprep.subr.mxu0 0.0
  %8533 = vmatpush1.msra.mxu0 %v8438
  %8534 = vmatprep.subr.mxu0 0.0
  %8535 = vmatpush1.msra.mxu0 %v8439
  %8536 = vmatprep.subr.mxu0 0.0
  %8537 = vmatpush1.msra.mxu0 %v8440
  %8538 = vmatprep.subr.mxu0 0.0
  %8539 = vmatpush1.msra.mxu0 %v8441
  %8540 = vmatprep.subr.mxu0 0.0
  %8541 = vmatpush1.msra.mxu0 %v8442
  %8542 = vmatprep.subr.mxu0 0.0
  %8543 = vmatpush1.msra.mxu0 %v8443
  %8544 = vmatprep.subr.mxu0 0.0
  %8545 = vmatpush1.msra.mxu0 %v8444
  %8546 = vmatprep.subr.mxu0 0.0
  %8547 = vmatpush1.msra.mxu0 %v8445
  %8548 = vmatprep.subr.mxu0 0.0
  %8549 = vmatpush1.msra.mxu0 0.0
  %8550 = vmatprep.subr.mxu0 0.0
  %8551 = vmatpush1.msra.mxu0 0.0
  %8552 = vmatprep.subr.mxu0 0.0
  %8553 = vmatpush1.msra.mxu0 0.0
  %8554 = vmatprep.subr.mxu0 0.0
  %8555 = vmatpush1.msra.mxu0 0.0
  %8556 = vmatprep.subr.mxu0 0.0
  %8557 = vmatpush1.msra.mxu0 0.0
  %8558 = vmatprep.subr.mxu0 0.0
  %8559 = vmatpush1.msra.mxu0 0.0
  %8560 = vmatprep.subr.mxu0 0.0
  %8561 = vmatpush1.msra.mxu0 0.0
  %8562 = vmatprep.subr.mxu0 0.0
  %8563 = vmatpush1.msra.mxu0 0.0
  %8564 = vmatprep.subr.mxu0 0.0
  %8565 = vmatpush1.msra.mxu0 0.0
  %8566 = vmatprep.subr.mxu0 0.0
  %8567 = vmatpush1.msra.mxu0 0.0
  %8568 = vmatprep.subr.mxu0 0.0
  %8569 = vmatpush1.msra.mxu0 0.0
  %8570 = vmatprep.subr.mxu0 0.0
  %8571 = vmatpush1.msra.mxu0 0.0
  %8572 = vmatprep.subr.mxu0 0.0
  %8573 = vmatpush1.msra.mxu0 0.0
  %8574 = vmatprep.subr.mxu0 0.0
  %8575 = vmatpush1.msra.mxu0 0.0
  %8576 = vmatprep.subr.mxu0 0.0
  %8577 = vmatpush1.msra.mxu0 0.0
  %8578 = vmatprep.subr.mxu0 0.0
  %8579 = vmatpush1.msra.mxu0 0.0
  %8580 = vmatprep.mubr.f32.mxu0 0.0
  %8581 = vmatmul.mubr.f32.gmra.mrb[0].mxu0 %v8397
  %v8582 = vpop.f32.mrb[0].mxu0
  %v8583 = vadd.f32 %v8513, %v8582
  %v8584 = vpop.f32.mrb[0].mxu0
  %8585 = vdwg.mxu0
  %vm8586 = vcmask 17408
  %v8587 = vsel %vm8586, %v8583, -inf
  %8588 = vmax.xlane.f32.xlu0 %v8587
  %v8589 = vpop.xlane.xlu0 %8588
  %v8590 = vsub.f32 %v8583, %v8589
  %v8591 = vmul.f32 %v8590, 1.442695
  %v8592 = vpow.pop %v8591
  %v8593 = vsel %vm8586, %v8592, 0.0
  %8594 = vadd.xlane.f32.xlu0 %v8593
  %v8595 = vpop.xlane.xlu0 %8594
  %v8596 = vlog2.pop %v8595
  %v8597 = vmul.f32 %v8596, 0.6931472
  %v8598 = vadd.f32 %v8597, %v8589
  %v8599 = vsub.f32 %v8583, %v8598
  %vm8600 = vcmask 42008
  %v8601 = vsel %vm8600, %v8583, -inf
  %8602 = vmax.xlane.f32.xlu0 %v8601
  %v8603 = vpop.xlane.xlu0 %8602
  %v8604 = vsub.f32 %v8583, %v8603
  %v8605 = vmul.f32 %v8604, 1.442695
  %v8606 = vpow.pop %v8605
  %8608 = vrot.lane.b32.xlu0 %v8606, 125
  %v8609 = vpop.permute.xlu0 %8608
  %v8611 = vsel %vm8586, %v8609, 0.0
  %8612 = vadd.xlane.f32.xlu0 %v8611
  %v8613 = vpop.xlane.xlu0 %8612
  %v8614 = vlog2.pop %v8613
  %v8615 = vmul.f32 %v8614, 0.6931472
  %v8616 = vadd.f32 %v8615, %v8603
  %v8617 = vsub.f32 %v8583, %v8616
  %vm8618 = vcmask 23552
  %v8619 = vsel %vm8618, %v8599, %v8617
  %vm8620 = vcmask 48128
  %v8621 = vsel %vm8620, %v8619, 0.0
  %8622 = vst [vmem:[%s24] sm:$0x3] %v8621
  // Predicated region
  $region94: #{_forward_core.1} parent=0 // pred_check
    _
  $region95: #{_forward_core.1} parent=0 // pred_check_branch
    %8624 = sbr.rel (0) target = $region97
  $region96: #{_forward_core.1} parent=0 // pred_region
    _
  $region97: #{_forward_core.1} parent=0 // pred_fallthru
    _
  // Predicated region
  $region98: #{_forward_core.1} parent=0 // pred_check
    _
  $region99: #{_forward_core.1} parent=0 // pred_check_branch
    %8626 = sbr.rel (0) target = $region101
  $region100: #{_forward_core.1} parent=0 // pred_region
    _
  $region101: #{_forward_core.1} parent=0 // pred_fallthru
    _
  // Predicated region
  $region102: #{_forward_core.1} parent=0 // pred_check
    _
  $region103: #{_forward_core.1} parent=0 // pred_check_branch
    %8628 = sbr.rel (0) target = $region105
  $region104: #{_forward_core.1} parent=0 // pred_region
    _
  $region105: #{_forward_core.1} parent=0 // pred_fallthru
    _
  // Predicated region
  $region106: #{_forward_core.1} parent=0 // pred_check
    _
  $region107: #{_forward_core.1} parent=0 // pred_check_branch
    %8630 = sbr.rel (0) target = $region109
  $region108: #{_forward_core.1} parent=0 // pred_region
    _
  $region109: #{_forward_core.1} parent=0 // pred_fallthru
    _

</llo_original>
